<compile_context>
chip_gen: v6e
topology: v6e:2x2x1
jax: 0.10.0
libtpu: 0.0.40
codegen_flags: <defaults>
</compile_context>

<pallas_src>
import numpy as np
import jax
import jax.numpy as jnp
from jax import lax
from jax.experimental import pallas as pl
from jax.experimental.pallas import tpu as pltpu


# ----------------------------------------------------------------------------
# Fused kernel body (layers unrolled -> all channel offsets are static).
# ----------------------------------------------------------------------------
def _make_csp_dense_kernel(num_layers, H, W, C2, Cmid, G):
    M = H * W
    n_in = 1 + 4 * num_layers

    def kernel(*refs):
        part2_ref = refs[0]
        layer_refs = refs[1:n_in]
        out_ref = refs[n_in]          # (1, H, W, C2 + L*G) -- the grown slab
        pad_ref = refs[n_in + 1]      # (1, H+2, W+2, Cmid) bf16 zero-padded buf

        # Seed the output slab with this image's part2 channels (accumulate the
        # dense-block features directly in out_ref -- no separate VMEM slab).
        out_ref[:, :, :, 0:C2] = part2_ref[...]

        # Zero ONLY the 1-pixel halo of the padded-conv buffer (the interior is
        # fully overwritten every layer; re-establishing the halo each grid
        # step keeps it correct across batch steps / cores).
        pad_ref[:, 0:1, :, :] = jnp.zeros((1, 1, W + 2, Cmid), jnp.bfloat16)
        pad_ref[:, H + 1:H + 2, :, :] = jnp.zeros((1, 1, W + 2, Cmid), jnp.bfloat16)
        pad_ref[:, :, 0:1, :] = jnp.zeros((1, H + 2, 1, Cmid), jnp.bfloat16)
        pad_ref[:, :, W + 1:W + 2, :] = jnp.zeros((1, H + 2, 1, Cmid), jnp.bfloat16)

        for l in range(num_layers):
            b1_ref, w1_ref, b2_ref, w2_ref = layer_refs[4 * l:4 * l + 4]
            cin = C2 + l * G

            # BN1 (eval, scale folded into w1 on the host) + ReLU.
            x = out_ref[:, :, :, 0:cin]                           # (1,H,W,cin) f32
            h = jnp.maximum(x + b1_ref[...], 0.0)

            # 1x1 conv (BN1/BN2 scales pre-folded into w1) == channel matmul.
            h2 = jnp.dot(h.reshape(M, cin).astype(jnp.bfloat16), w1_ref[...],
                         preferred_element_type=jnp.float32)      # (M, Cmid)

            # BN2 bias + ReLU (f32 elementwise).
            h2 = jnp.maximum(h2 + b2_ref[...], 0.0)

            # Write the interior of the zero-padded buffer in bf16 (halo = 0).
            # TODO(synk): the +1 W offset is a masked/rotated store; an aligned
            # store + edge masking of the dot operands would remove it.
            pad_ref[:, 1:H + 1, 1:W + 1, :] = \
                h2.reshape(1, H, W, Cmid).astype(jnp.bfloat16)

            # 3x3 conv: 9 MXU dots straight from the padded buffer, kx (sublane)
            # shift hoisted -- no patch_ref VMEM round-trip.
            acc = jnp.zeros((M, G), jnp.float32)
            for kx in range(3):
                shifted = pad_ref[:, :, kx:kx + W, :]             # (1,H+2,W,Cmid) bf16
                for ky in range(3):
                    win = shifted[:, ky:ky + H, :, :].reshape(M, Cmid)
                    acc = acc + jnp.dot(win, w2_ref[ky * 3 + kx],
                                        preferred_element_type=jnp.float32)

            # Append the new growth_rate features at a STATIC channel offset.
            out_ref[:, :, :, cin:cin + G] = acc.reshape(1, H, W, G)
            # TODO(synk): per-layer Dropout(droprate) is identity in eval mode; omitted.
        # TODO(synk): self.spatial_dropout is defined but never applied in forward().
        # TODO(synk): for deep blocks, switch the unrolled layer loop to a
        # uniform-K lax.fori_loop with stacked weights to bound vreg pressure.

    return kernel


def _vmem_limit_bytes(need_bytes):
    """Generation-aware scoped-VMEM limit with a safe fallback."""
    cap_phys = 64 * 2**20
    try:
        info = pltpu.get_tpu_info()
        cap_phys = int(getattr(info, "vmem_capacity_bytes", cap_phys) or cap_phys)
    except Exception:
        pass
    # v7x has 64 MiB/TC -> keep headroom at 48 MiB; 128-MiB parts (v5e/v6e)
    # can afford a larger scoped limit.
    cap = 48 * 2**20 if cap_phys <= 64 * 2**20 else 64 * 2**20
    return int(min(max(int(need_bytes), 4 * 2**20), cap))


# ----------------------------------------------------------------------------
# csp_dense_block forward (NCHW in / NCHW out, matching the PyTorch module).
# ----------------------------------------------------------------------------
def csp_dense_block_forward(x_nchw, params, part1_chnls):
    x_nchw = x_nchw.astype(jnp.float32)
    N, C, H, W = x_nchw.shape
    C1 = int(part1_chnls)
    C2 = C - C1
    L = len(params)
    Cmid = params[0]["w1"].shape[1]
    G = params[0]["w2"].shape[2]
    C2_total = C2 + L * G
    M = H * W

    # Only part2 enters the kernel (part1 is pure passthrough).
    # TODO(synk): keep NHWC end-to-end in the surrounding model to drop these
    # transposes entirely.
    part2 = jnp.transpose(x_nchw[:, C1:], (0, 2, 3, 1))           # (N,H,W,C2)

    inputs = [part2]
    in_specs = [pl.BlockSpec((1, H, W, C2), lambda n: (n, 0, 0, 0))]

    weight_bytes = 0
    for l, p in enumerate(params):
        cin = C2 + l * G
        s1 = p["s1"].reshape(cin).astype(jnp.float32)
        b1 = p["b1"].reshape(cin).astype(jnp.float32)
        s2 = p["s2"].reshape(Cmid).astype(jnp.float32)
        b2 = p["b2"].reshape(Cmid).astype(jnp.float32)
        # Fold BN1 scale through the ReLU into w1 rows (requires gamma > 0,
        # true for eval-default stats) and BN2 scale into w1 columns (exact).
        # TODO(synk): fall back to an in-kernel scale multiply if any gamma<=0.
        b1p = (b1 / s1).reshape(1, 1, 1, cin)                      # f32 bias
        w1f = ((s1[:, None] * p["w1"].astype(jnp.float32))
               * s2[None, :]).astype(jnp.bfloat16)                 # (cin, Cmid)
        b2p = b2.reshape(1, Cmid)                                  # f32 bias
        w2b = p["w2"].astype(jnp.bfloat16)                         # (9, Cmid, G)

        layer_inputs = [b1p, w1f, b2p, w2b]
        inputs += layer_inputs
        weight_bytes += sum(int(a.size) * a.dtype.itemsize for a in layer_inputs)
        # Constant index_map => weights DMA'd once, VMEM-resident across batch.
        # TODO(synk): pipeline_mode=pl.Buffered(1) on these specs would halve
        # their VMEM footprint for deep blocks.
        in_specs += [
            pl.BlockSpec((1, 1, 1, cin), lambda n: (0, 0, 0, 0)),
            pl.BlockSpec((cin, Cmid), lambda n: (0, 0)),
            pl.BlockSpec((1, Cmid), lambda n: (0, 0)),
            pl.BlockSpec((9, Cmid, G), lambda n: (0, 0, 0)),
        ]

    out_spec = pl.BlockSpec((1, H, W, C2_total), lambda n: (n, 0, 0, 0))
    scratch_shapes = [
        pltpu.VMEM((1, H + 2, W + 2, Cmid), jnp.bfloat16),   # zero-padded conv input
    ]

    # VMEM budget: double-buffered per-step blocks + (double-buffered) resident
    # weights + scratch + headroom, capped per generation.
    block_bytes = 4 * H * W * (C2 + C2_total)
    pad_bytes = 2 * (H + 2) * (W + 2) * Cmid
    vmem_limit = _vmem_limit_bytes(2 * block_bytes + 2 * weight_bytes
                                   + pad_bytes + (2 << 20))

    flops = 0
    for l in range(L):
        cin = C2 + l * G
        flops += 2 * M * cin * Cmid + 2 * M * (9 * Cmid) * G
    flops *= N
    bytes_accessed = int(part2.size * 4 + N * H * W * C2_total * 4 + weight_bytes)

    grid_spec = pltpu.PrefetchScalarGridSpec(
        num_scalar_prefetch=0,
        grid=(N,),
        in_specs=in_specs,
        out_specs=out_spec,
        scratch_shapes=scratch_shapes,
    )

    kernel = _make_csp_dense_kernel(L, H, W, C2, Cmid, G)
    part2_grown = pl.pallas_call(
        kernel,
        out_shape=jax.ShapeDtypeStruct((N, H, W, C2_total), jnp.float32),
        grid_spec=grid_spec,
        compiler_params=pltpu.CompilerParams(
            dimension_semantics=("parallel",),   # batch steps shard across TCs
            vmem_limit_bytes=vmem_limit,
        ),
        cost_estimate=pl.CostEstimate(flops=int(flops), transcendentals=0,
                                      bytes_accessed=bytes_accessed),
    )(*inputs)
    # TODO(synk): for large H*W (v7x 64 MiB VMEM) add a spatial grid axis with a
    # layer-accumulated halo so the fused block also pipelines spatially.

    part2_grown_nchw = jnp.transpose(part2_grown, (0, 3, 1, 2))   # NHWC -> NCHW
    if C1 > 0:
        # torch.cat((part1, part2), 1): part1 passthrough handled in the wrapper
        # so the kernel's output store is lane-dense (starts at channel 0).
        return jnp.concatenate([x_nchw[:, :C1], part2_grown_nchw], axis=1)
    return part2_grown_nchw


# ----------------------------------------------------------------------------
# Deterministic parameter initialization (per module __init__ shapes).
# ----------------------------------------------------------------------------
def init_params(key, num_input_features, num_layers, expansion_rate,
                growth_rate, part_ratio=0.5):
    part1_chnls = int(num_input_features * part_ratio)
    part2_chnls = num_input_features - part1_chnls
    eps = 1e-5
    bn_scale = float(1.0 / np.sqrt(1.0 + eps))   # gamma=1, var=1, mean=0, beta=0
    params = []
    for i in range(num_layers):
        cin = part2_chnls + i * growth_rate
        cmid = expansion_rate * growth_rate
        key, k1, k2 = jax.random.split(key, 3)
        params.append(dict(
            s1=jnp.full((1, 1, 1, cin), bn_scale, jnp.float32),
            b1=jnp.zeros((1, 1, 1, cin), jnp.float32),
            w1=jax.random.normal(k1, (cin, cmid), jnp.float32) / np.sqrt(cin),
            s2=jnp.full((1, cmid), bn_scale, jnp.float32),
            b2=jnp.zeros((1, cmid), jnp.float32),
            w2=jax.random.normal(k2, (9, cmid, growth_rate), jnp.float32)
               / np.sqrt(9.0 * cmid),
        ))
    return params, part1_chnls


# ----------------------------------------------------------------------------
# Pure-JAX reference (correctness check, f32 end-to-end).
# ----------------------------------------------------------------------------
def _ref_dense_layer(x, p):
    cin, cmid = p["w1"].shape
    g = p["w2"].shape[2]
    h = jnp.maximum(x * p["s1"] + p["b1"], 0.0)
    h = lax.conv_general_dilated(h, p["w1"].reshape(1, 1, cin, cmid), (1, 1),
                                 "VALID", dimension_numbers=("NHWC", "HWIO", "NHWC"))
    h = jnp.maximum(h * p["s2"].reshape(1, 1, 1, cmid)
                    + p["b2"].reshape(1, 1, 1, cmid), 0.0)
    h = lax.conv_general_dilated(h, p["w2"].reshape(3, 3, cmid, g), (1, 1),
                                 "SAME", dimension_numbers=("NHWC", "HWIO", "NHWC"))
    return h


def _ref_forward(x_nchw, params, part1_chnls):
    x = jnp.transpose(x_nchw, (0, 2, 3, 1))
    part1 = x[..., :part1_chnls]
    part2 = x[..., part1_chnls:]
    for p in params:
        part2 = jnp.concatenate([part2, _ref_dense_layer(part2, p)], axis=-1)
    out = jnp.concatenate([part1, part2], axis=-1)
    return jnp.transpose(out, (0, 3, 1, 2))


if __name__ == "__main__":
    # Small shapes consistent with the module: N=2, C=4, H=W=16.
    N, C, H, W = 2, 4, 16, 16
    num_layers, expansion_rate, growth_rate, droprate = 2, 4, 4, 0.0

    key = jax.random.PRNGKey(0)
    kx, kp = jax.random.split(key)
    x = jax.random.normal(kx, (N, C, H, W), jnp.float32)

    params, part1_chnls = init_params(kp, C, num_layers, expansion_rate,
                                      growth_rate, part_ratio=0.5)

    out = csp_dense_block_forward(x, params, part1_chnls)
    out = jax.block_until_ready(out)

    part2_chnls = C - part1_chnls
    expected_channels = part1_chnls + part2_chnls + num_layers * growth_rate
    assert out.shape == (N, expected_channels, H, W), out.shape

    ref = jax.block_until_ready(_ref_forward(x, params, part1_chnls))
    # bf16 MXU operands vs f32 reference -> loosened tolerance.
    np.testing.assert_allclose(np.asarray(out), np.asarray(ref),
                               rtol=5e-2, atol=5e-2)
    print("KERNEL_OK")
</pallas_src>

<mosaic_0001>
module attributes {stable_mosaic.version = 11 : i64} {
  func.func @kernel(%arg0: i32, %arg1: memref<1x16x16x2xf32, #tpu.memory_space<vmem>>, %arg2: memref<1x1x1x2xf32, #tpu.memory_space<vmem>>, %arg3: memref<2x16xbf16, #tpu.memory_space<vmem>>, %arg4: memref<1x16xf32, #tpu.memory_space<vmem>>, %arg5: memref<9x16x4xbf16, #tpu.memory_space<vmem>>, %arg6: memref<1x1x1x6xf32, #tpu.memory_space<vmem>>, %arg7: memref<6x16xbf16, #tpu.memory_space<vmem>>, %arg8: memref<1x16xf32, #tpu.memory_space<vmem>>, %arg9: memref<9x16x4xbf16, #tpu.memory_space<vmem>>, %arg10: memref<1x16x16x10xf32, #tpu.memory_space<vmem>>, %arg11: memref<1x18x18x16xbf16, #tpu.memory_space<vmem>>) attributes {dimension_semantics = [#tpu.dimension_semantics<parallel>], iteration_bounds = array<i64: 2>, scalar_prefetch = 0 : i64, scratch_operands = 1 : i64, tpu.core_type = #tpu.core_type<tc>, window_params = [{transform_indices = @transform_0, window_bounds = array<i64: 1, 16, 16, 2>}, {pipeline_mode = #tpu.pipeline_mode<synchronous>, transform_indices = @transform_1, window_bounds = array<i64: 1, 1, 1, 2>}, {pipeline_mode = #tpu.pipeline_mode<synchronous>, transform_indices = @transform_2, window_bounds = array<i64: 2, 16>}, {pipeline_mode = #tpu.pipeline_mode<synchronous>, transform_indices = @transform_3, window_bounds = array<i64: 1, 16>}, {pipeline_mode = #tpu.pipeline_mode<synchronous>, transform_indices = @transform_4, window_bounds = array<i64: 9, 16, 4>}, {pipeline_mode = #tpu.pipeline_mode<synchronous>, transform_indices = @transform_5, window_bounds = array<i64: 1, 1, 1, 6>}, {pipeline_mode = #tpu.pipeline_mode<synchronous>, transform_indices = @transform_6, window_bounds = array<i64: 6, 16>}, {pipeline_mode = #tpu.pipeline_mode<synchronous>, transform_indices = @transform_7, window_bounds = array<i64: 1, 16>}, {pipeline_mode = #tpu.pipeline_mode<synchronous>, transform_indices = @transform_8, window_bounds = array<i64: 9, 16, 4>}, {transform_indices = @transform_9, window_bounds = array<i64: 1, 16, 16, 10>}]} {
    %c0 = arith.constant 0 : index
    %c0_0 = arith.constant 0 : index
    %c0_1 = arith.constant 0 : index
    %c0_2 = arith.constant 0 : index
    %0 = vector.load %arg1[%c0, %c0_0, %c0_1, %c0_2] : memref<1x16x16x2xf32, #tpu.memory_space<vmem>>, vector<1x16x16x2xf32>
    %c0_3 = arith.constant 0 : index
    %c0_4 = arith.constant 0 : index
    %c0_5 = arith.constant 0 : index
    %c0_6 = arith.constant 0 : index
    %1 = vector.load %arg10[%c0_3, %c0_4, %c0_5, %c0_6] : memref<1x16x16x10xf32, #tpu.memory_space<vmem>>, vector<1x16x16x2xf32>
    tpu.vector_store %arg10[%c0_3, %c0_4, %c0_5, %c0_6], %0 {strides = array<i32>} : memref<1x16x16x10xf32, #tpu.memory_space<vmem>>, vector<1x16x16x2xf32>,
    %cst = arith.constant 0.000000e+00 : bf16
    %2 = vector.broadcast %cst : bf16 to vector<1x1x18x16xbf16>
    %c0_7 = arith.constant 0 : index
    %c0_8 = arith.constant 0 : index
    %c0_9 = arith.constant 0 : index
    %c0_10 = arith.constant 0 : index
    %3 = vector.load %arg11[%c0_7, %c0_8, %c0_9, %c0_10] : memref<1x18x18x16xbf16, #tpu.memory_space<vmem>>, vector<1x1x18x16xbf16>
    tpu.vector_store %arg11[%c0_7, %c0_8, %c0_9, %c0_10], %2 {strides = array<i32>} : memref<1x18x18x16xbf16, #tpu.memory_space<vmem>>, vector<1x1x18x16xbf16>,
    %cst_11 = arith.constant 0.000000e+00 : bf16
    %4 = vector.broadcast %cst_11 : bf16 to vector<1x1x18x16xbf16>
    %c0_12 = arith.constant 0 : index
    %c17 = arith.constant 17 : index
    %c0_13 = arith.constant 0 : index
    %c0_14 = arith.constant 0 : index
    %5 = vector.load %arg11[%c0_12, %c17, %c0_13, %c0_14] : memref<1x18x18x16xbf16, #tpu.memory_space<vmem>>, vector<1x1x18x16xbf16>
    tpu.vector_store %arg11[%c0_12, %c17, %c0_13, %c0_14], %4 {strides = array<i32>} : memref<1x18x18x16xbf16, #tpu.memory_space<vmem>>, vector<1x1x18x16xbf16>,
    %cst_15 = arith.constant 0.000000e+00 : bf16
    %6 = vector.broadcast %cst_15 : bf16 to vector<1x18x1x16xbf16>
    %c0_16 = arith.constant 0 : index
    %c0_17 = arith.constant 0 : index
    %c0_18 = arith.constant 0 : index
    %c0_19 = arith.constant 0 : index
    %7 = vector.load %arg11[%c0_16, %c0_17, %c0_18, %c0_19] : memref<1x18x18x16xbf16, #tpu.memory_space<vmem>>, vector<1x18x1x16xbf16>
    tpu.vector_store %arg11[%c0_16, %c0_17, %c0_18, %c0_19], %6 {strides = array<i32>} : memref<1x18x18x16xbf16, #tpu.memory_space<vmem>>, vector<1x18x1x16xbf16>,
    %cst_20 = arith.constant 0.000000e+00 : bf16
    %8 = vector.broadcast %cst_20 : bf16 to vector<1x18x1x16xbf16>
    %c0_21 = arith.constant 0 : index
    %c0_22 = arith.constant 0 : index
    %c17_23 = arith.constant 17 : index
    %c0_24 = arith.constant 0 : index
    %9 = vector.load %arg11[%c0_21, %c0_22, %c17_23, %c0_24] : memref<1x18x18x16xbf16, #tpu.memory_space<vmem>>, vector<1x18x1x16xbf16>
    tpu.vector_store %arg11[%c0_21, %c0_22, %c17_23, %c0_24], %8 {strides = array<i32>} : memref<1x18x18x16xbf16, #tpu.memory_space<vmem>>, vector<1x18x1x16xbf16>,
    %c0_25 = arith.constant 0 : index
    %c0_26 = arith.constant 0 : index
    %c0_27 = arith.constant 0 : index
    %c0_28 = arith.constant 0 : index
    %10 = vector.load %arg10[%c0_25, %c0_26, %c0_27, %c0_28] : memref<1x16x16x10xf32, #tpu.memory_space<vmem>>, vector<1x16x16x2xf32>
    %c0_29 = arith.constant 0 : index
    %c0_30 = arith.constant 0 : index
    %c0_31 = arith.constant 0 : index
    %c0_32 = arith.constant 0 : index
    %11 = vector.load %arg2[%c0_29, %c0_30, %c0_31, %c0_32] : memref<1x1x1x2xf32, #tpu.memory_space<vmem>>, vector<1x1x1x2xf32>
    %12 = vector.broadcast %11 : vector<1x1x1x2xf32> to vector<1x16x16x2xf32>
    %13 = arith.addf %10, %12 : vector<1x16x16x2xf32>
    %cst_33 = arith.constant 0.000000e+00 : f32
    %14 = vector.broadcast %cst_33 : f32 to vector<1x16x16x2xf32>
    %15 = arith.maximumf %13, %14 : vector<1x16x16x2xf32>
    %16 = vector.shape_cast %15 : vector<1x16x16x2xf32> to vector<256x2xf32>
    %17 = arith.truncf %16 : vector<256x2xf32> to vector<256x2xbf16>
    %c0_34 = arith.constant 0 : index
    %c0_35 = arith.constant 0 : index
    %18 = vector.load %arg3[%c0_34, %c0_35] : memref<2x16xbf16, #tpu.memory_space<vmem>>, vector<2x16xbf16>
    %cst_36 = arith.constant dense<0.000000e+00> : vector<256x16xf32>
    %19 = tpu.matmul %17, %18, %cst_36 {dimension_numbers = #tpu.dot_dimension_numbers<[1], [0], [0], [1], [0, 0, 1, 1], [], []>} : vector<256x2xbf16>, vector<2x16xbf16>, vector<256x16xf32> -> vector<256x16xf32>
    %c0_37 = arith.constant 0 : index
    %c0_38 = arith.constant 0 : index
    %20 = vector.load %arg4[%c0_37, %c0_38] : memref<1x16xf32, #tpu.memory_space<vmem>>, vector<1x16xf32>
    %21 = vector.broadcast %20 : vector<1x16xf32> to vector<256x16xf32>
    %22 = arith.addf %19, %21 : vector<256x16xf32>
    %cst_39 = arith.constant 0.000000e+00 : f32
    %23 = vector.broadcast %cst_39 : f32 to vector<256x16xf32>
    %24 = arith.maximumf %22, %23 : vector<256x16xf32>
    %25 = vector.shape_cast %24 : vector<256x16xf32> to vector<1x16x16x16xf32>
    %26 = arith.truncf %25 : vector<1x16x16x16xf32> to vector<1x16x16x16xbf16>
    %c0_40 = arith.constant 0 : index
    %c1 = arith.constant 1 : index
    %c1_41 = arith.constant 1 : index
    %c0_42 = arith.constant 0 : index
    %27 = vector.load %arg11[%c0_40, %c1, %c1_41, %c0_42] : memref<1x18x18x16xbf16, #tpu.memory_space<vmem>>, vector<1x16x16x16xbf16>
    tpu.vector_store %arg11[%c0_40, %c1, %c1_41, %c0_42], %26 {strides = array<i32>} : memref<1x18x18x16xbf16, #tpu.memory_space<vmem>>, vector<1x16x16x16xbf16>,
    %cst_43 = arith.constant 0.000000e+00 : f32
    %28 = vector.broadcast %cst_43 : f32 to vector<256x4xf32>
    %c0_44 = arith.constant 0 : index
    %c0_45 = arith.constant 0 : index
    %c0_46 = arith.constant 0 : index
    %c0_47 = arith.constant 0 : index
    %29 = vector.load %arg11[%c0_44, %c0_45, %c0_46, %c0_47] : memref<1x18x18x16xbf16, #tpu.memory_space<vmem>>, vector<1x18x16x16xbf16>
    %30 = vector.extract_strided_slice %29 {offsets = [0, 0, 0, 0], sizes = [1, 16, 16, 16], strides = [1, 1, 1, 1]} : vector<1x18x16x16xbf16> to vector<1x16x16x16xbf16>
    %31 = vector.shape_cast %30 : vector<1x16x16x16xbf16> to vector<256x16xbf16>
    %c0_48 = arith.constant 0 : index
    %c0_49 = arith.constant 0 : index
    %c0_50 = arith.constant 0 : index
    %32 = vector.load %arg5[%c0_48, %c0_49, %c0_50] : memref<9x16x4xbf16, #tpu.memory_space<vmem>>, vector<1x16x4xbf16>
    %33 = vector.shape_cast %32 : vector<1x16x4xbf16> to vector<16x4xbf16>
    %cst_51 = arith.constant dense<0.000000e+00> : vector<256x4xf32>
    %34 = tpu.matmul %31, %33, %cst_51 {dimension_numbers = #tpu.dot_dimension_numbers<[1], [0], [0], [1], [0, 0, 1, 1], [], []>} : vector<256x16xbf16>, vector<16x4xbf16>, vector<256x4xf32> -> vector<256x4xf32>
    %35 = arith.addf %28, %34 : vector<256x4xf32>
    %36 = vector.extract_strided_slice %29 {offsets = [0, 1, 0, 0], sizes = [1, 16, 16, 16], strides = [1, 1, 1, 1]} : vector<1x18x16x16xbf16> to vector<1x16x16x16xbf16>
    %37 = vector.shape_cast %36 : vector<1x16x16x16xbf16> to vector<256x16xbf16>
    %c3 = arith.constant 3 : index
    %c0_52 = arith.constant 0 : index
    %c0_53 = arith.constant 0 : index
    %38 = vector.load %arg5[%c3, %c0_52, %c0_53] : memref<9x16x4xbf16, #tpu.memory_space<vmem>>, vector<1x16x4xbf16>
    %39 = vector.shape_cast %38 : vector<1x16x4xbf16> to vector<16x4xbf16>
    %cst_54 = arith.constant dense<0.000000e+00> : vector<256x4xf32>
    %40 = tpu.matmul %37, %39, %cst_54 {dimension_numbers = #tpu.dot_dimension_numbers<[1], [0], [0], [1], [0, 0, 1, 1], [], []>} : vector<256x16xbf16>, vector<16x4xbf16>, vector<256x4xf32> -> vector<256x4xf32>
    %41 = arith.addf %35, %40 : vector<256x4xf32>
    %42 = vector.extract_strided_slice %29 {offsets = [0, 2, 0, 0], sizes = [1, 16, 16, 16], strides = [1, 1, 1, 1]} : vector<1x18x16x16xbf16> to vector<1x16x16x16xbf16>
    %43 = vector.shape_cast %42 : vector<1x16x16x16xbf16> to vector<256x16xbf16>
    %c6 = arith.constant 6 : index
    %c0_55 = arith.constant 0 : index
    %c0_56 = arith.constant 0 : index
    %44 = vector.load %arg5[%c6, %c0_55, %c0_56] : memref<9x16x4xbf16, #tpu.memory_space<vmem>>, vector<1x16x4xbf16>
    %45 = vector.shape_cast %44 : vector<1x16x4xbf16> to vector<16x4xbf16>
    %cst_57 = arith.constant dense<0.000000e+00> : vector<256x4xf32>
    %46 = tpu.matmul %43, %45, %cst_57 {dimension_numbers = #tpu.dot_dimension_numbers<[1], [0], [0], [1], [0, 0, 1, 1], [], []>} : vector<256x16xbf16>, vector<16x4xbf16>, vector<256x4xf32> -> vector<256x4xf32>
    %47 = arith.addf %41, %46 : vector<256x4xf32>
    %c0_58 = arith.constant 0 : index
    %c0_59 = arith.constant 0 : index
    %c1_60 = arith.constant 1 : index
    %c0_61 = arith.constant 0 : index
    %48 = vector.load %arg11[%c0_58, %c0_59, %c1_60, %c0_61] : memref<1x18x18x16xbf16, #tpu.memory_space<vmem>>, vector<1x18x16x16xbf16>
    %49 = vector.extract_strided_slice %48 {offsets = [0, 0, 0, 0], sizes = [1, 16, 16, 16], strides = [1, 1, 1, 1]} : vector<1x18x16x16xbf16> to vector<1x16x16x16xbf16>
    %50 = vector.shape_cast %49 : vector<1x16x16x16xbf16> to vector<256x16xbf16>
    %c1_62 = arith.constant 1 : index
    %c0_63 = arith.constant 0 : index
    %c0_64 = arith.constant 0 : index
    %51 = vector.load %arg5[%c1_62, %c0_63, %c0_64] : memref<9x16x4xbf16, #tpu.memory_space<vmem>>, vector<1x16x4xbf16>
    %52 = vector.shape_cast %51 : vector<1x16x4xbf16> to vector<16x4xbf16>
    %cst_65 = arith.constant dense<0.000000e+00> : vector<256x4xf32>
    %53 = tpu.matmul %50, %52, %cst_65 {dimension_numbers = #tpu.dot_dimension_numbers<[1], [0], [0], [1], [0, 0, 1, 1], [], []>} : vector<256x16xbf16>, vector<16x4xbf16>, vector<256x4xf32> -> vector<256x4xf32>
    %54 = arith.addf %47, %53 : vector<256x4xf32>
    %55 = vector.extract_strided_slice %48 {offsets = [0, 1, 0, 0], sizes = [1, 16, 16, 16], strides = [1, 1, 1, 1]} : vector<1x18x16x16xbf16> to vector<1x16x16x16xbf16>
    %56 = vector.shape_cast %55 : vector<1x16x16x16xbf16> to vector<256x16xbf16>
    %c4 = arith.constant 4 : index
    %c0_66 = arith.constant 0 : index
    %c0_67 = arith.constant 0 : index
    %57 = vector.load %arg5[%c4, %c0_66, %c0_67] : memref<9x16x4xbf16, #tpu.memory_space<vmem>>, vector<1x16x4xbf16>
    %58 = vector.shape_cast %57 : vector<1x16x4xbf16> to vector<16x4xbf16>
    %cst_68 = arith.constant dense<0.000000e+00> : vector<256x4xf32>
    %59 = tpu.matmul %56, %58, %cst_68 {dimension_numbers = #tpu.dot_dimension_numbers<[1], [0], [0], [1], [0, 0, 1, 1], [], []>} : vector<256x16xbf16>, vector<16x4xbf16>, vector<256x4xf32> -> vector<256x4xf32>
    %60 = arith.addf %54, %59 : vector<256x4xf32>
    %61 = vector.extract_strided_slice %48 {offsets = [0, 2, 0, 0], sizes = [1, 16, 16, 16], strides = [1, 1, 1, 1]} : vector<1x18x16x16xbf16> to vector<1x16x16x16xbf16>
    %62 = vector.shape_cast %61 : vector<1x16x16x16xbf16> to vector<256x16xbf16>
    %c7 = arith.constant 7 : index
    %c0_69 = arith.constant 0 : index
    %c0_70 = arith.constant 0 : index
    %63 = vector.load %arg5[%c7, %c0_69, %c0_70] : memref<9x16x4xbf16, #tpu.memory_space<vmem>>, vector<1x16x4xbf16>
    %64 = vector.shape_cast %63 : vector<1x16x4xbf16> to vector<16x4xbf16>
    %cst_71 = arith.constant dense<0.000000e+00> : vector<256x4xf32>
    %65 = tpu.matmul %62, %64, %cst_71 {dimension_numbers = #tpu.dot_dimension_numbers<[1], [0], [0], [1], [0, 0, 1, 1], [], []>} : vector<256x16xbf16>, vector<16x4xbf16>, vector<256x4xf32> -> vector<256x4xf32>
    %66 = arith.addf %60, %65 : vector<256x4xf32>
    %c0_72 = arith.constant 0 : index
    %c0_73 = arith.constant 0 : index
    %c2 = arith.constant 2 : index
    %c0_74 = arith.constant 0 : index
    %67 = vector.load %arg11[%c0_72, %c0_73, %c2, %c0_74] : memref<1x18x18x16xbf16, #tpu.memory_space<vmem>>, vector<1x18x16x16xbf16>
    %68 = vector.extract_strided_slice %67 {offsets = [0, 0, 0, 0], sizes = [1, 16, 16, 16], strides = [1, 1, 1, 1]} : vector<1x18x16x16xbf16> to vector<1x16x16x16xbf16>
    %69 = vector.shape_cast %68 : vector<1x16x16x16xbf16> to vector<256x16xbf16>
    %c2_75 = arith.constant 2 : index
    %c0_76 = arith.constant 0 : index
    %c0_77 = arith.constant 0 : index
    %70 = vector.load %arg5[%c2_75, %c0_76, %c0_77] : memref<9x16x4xbf16, #tpu.memory_space<vmem>>, vector<1x16x4xbf16>
    %71 = vector.shape_cast %70 : vector<1x16x4xbf16> to vector<16x4xbf16>
    %cst_78 = arith.constant dense<0.000000e+00> : vector<256x4xf32>
    %72 = tpu.matmul %69, %71, %cst_78 {dimension_numbers = #tpu.dot_dimension_numbers<[1], [0], [0], [1], [0, 0, 1, 1], [], []>} : vector<256x16xbf16>, vector<16x4xbf16>, vector<256x4xf32> -> vector<256x4xf32>
    %73 = arith.addf %66, %72 : vector<256x4xf32>
    %74 = vector.extract_strided_slice %67 {offsets = [0, 1, 0, 0], sizes = [1, 16, 16, 16], strides = [1, 1, 1, 1]} : vector<1x18x16x16xbf16> to vector<1x16x16x16xbf16>
    %75 = vector.shape_cast %74 : vector<1x16x16x16xbf16> to vector<256x16xbf16>
    %c5 = arith.constant 5 : index
    %c0_79 = arith.constant 0 : index
    %c0_80 = arith.constant 0 : index
    %76 = vector.load %arg5[%c5, %c0_79, %c0_80] : memref<9x16x4xbf16, #tpu.memory_space<vmem>>, vector<1x16x4xbf16>
    %77 = vector.shape_cast %76 : vector<1x16x4xbf16> to vector<16x4xbf16>
    %cst_81 = arith.constant dense<0.000000e+00> : vector<256x4xf32>
    %78 = tpu.matmul %75, %77, %cst_81 {dimension_numbers = #tpu.dot_dimension_numbers<[1], [0], [0], [1], [0, 0, 1, 1], [], []>} : vector<256x16xbf16>, vector<16x4xbf16>, vector<256x4xf32> -> vector<256x4xf32>
    %79 = arith.addf %73, %78 : vector<256x4xf32>
    %80 = vector.extract_strided_slice %67 {offsets = [0, 2, 0, 0], sizes = [1, 16, 16, 16], strides = [1, 1, 1, 1]} : vector<1x18x16x16xbf16> to vector<1x16x16x16xbf16>
    %81 = vector.shape_cast %80 : vector<1x16x16x16xbf16> to vector<256x16xbf16>
    %c8 = arith.constant 8 : index
    %c0_82 = arith.constant 0 : index
    %c0_83 = arith.constant 0 : index
    %82 = vector.load %arg5[%c8, %c0_82, %c0_83] : memref<9x16x4xbf16, #tpu.memory_space<vmem>>, vector<1x16x4xbf16>
    %83 = vector.shape_cast %82 : vector<1x16x4xbf16> to vector<16x4xbf16>
    %cst_84 = arith.constant dense<0.000000e+00> : vector<256x4xf32>
    %84 = tpu.matmul %81, %83, %cst_84 {dimension_numbers = #tpu.dot_dimension_numbers<[1], [0], [0], [1], [0, 0, 1, 1], [], []>} : vector<256x16xbf16>, vector<16x4xbf16>, vector<256x4xf32> -> vector<256x4xf32>
    %85 = arith.addf %79, %84 : vector<256x4xf32>
    %86 = vector.shape_cast %85 : vector<256x4xf32> to vector<1x16x16x4xf32>
    %c0_85 = arith.constant 0 : index
    %c0_86 = arith.constant 0 : index
    %c0_87 = arith.constant 0 : index
    %c2_88 = arith.constant 2 : index
    %87 = vector.load %arg10[%c0_85, %c0_86, %c0_87, %c2_88] : memref<1x16x16x10xf32, #tpu.memory_space<vmem>>, vector<1x16x16x4xf32>
    tpu.vector_store %arg10[%c0_85, %c0_86, %c0_87, %c2_88], %86 {strides = array<i32>} : memref<1x16x16x10xf32, #tpu.memory_space<vmem>>, vector<1x16x16x4xf32>,
    %c0_89 = arith.constant 0 : index
    %c0_90 = arith.constant 0 : index
    %c0_91 = arith.constant 0 : index
    %c0_92 = arith.constant 0 : index
    %88 = vector.load %arg10[%c0_89, %c0_90, %c0_91, %c0_92] : memref<1x16x16x10xf32, #tpu.memory_space<vmem>>, vector<1x16x16x6xf32>
    %c0_93 = arith.constant 0 : index
    %c0_94 = arith.constant 0 : index
    %c0_95 = arith.constant 0 : index
    %c0_96 = arith.constant 0 : index
    %89 = vector.load %arg6[%c0_93, %c0_94, %c0_95, %c0_96] : memref<1x1x1x6xf32, #tpu.memory_space<vmem>>, vector<1x1x1x6xf32>
    %90 = vector.broadcast %89 : vector<1x1x1x6xf32> to vector<1x16x16x6xf32>
    %91 = arith.addf %88, %90 : vector<1x16x16x6xf32>
    %cst_97 = arith.constant 0.000000e+00 : f32
    %92 = vector.broadcast %cst_97 : f32 to vector<1x16x16x6xf32>
    %93 = arith.maximumf %91, %92 : vector<1x16x16x6xf32>
    %94 = vector.shape_cast %93 : vector<1x16x16x6xf32> to vector<256x6xf32>
    %95 = arith.truncf %94 : vector<256x6xf32> to vector<256x6xbf16>
    %c0_98 = arith.constant 0 : index
    %c0_99 = arith.constant 0 : index
    %96 = vector.load %arg7[%c0_98, %c0_99] : memref<6x16xbf16, #tpu.memory_space<vmem>>, vector<6x16xbf16>
    %cst_100 = arith.constant dense<0.000000e+00> : vector<256x16xf32>
    %97 = tpu.matmul %95, %96, %cst_100 {dimension_numbers = #tpu.dot_dimension_numbers<[1], [0], [0], [1], [0, 0, 1, 1], [], []>} : vector<256x6xbf16>, vector<6x16xbf16>, vector<256x16xf32> -> vector<256x16xf32>
    %c0_101 = arith.constant 0 : index
    %c0_102 = arith.constant 0 : index
    %98 = vector.load %arg8[%c0_101, %c0_102] : memref<1x16xf32, #tpu.memory_space<vmem>>, vector<1x16xf32>
    %99 = vector.broadcast %98 : vector<1x16xf32> to vector<256x16xf32>
    %100 = arith.addf %97, %99 : vector<256x16xf32>
    %cst_103 = arith.constant 0.000000e+00 : f32
    %101 = vector.broadcast %cst_103 : f32 to vector<256x16xf32>
    %102 = arith.maximumf %100, %101 : vector<256x16xf32>
    %103 = vector.shape_cast %102 : vector<256x16xf32> to vector<1x16x16x16xf32>
    %104 = arith.truncf %103 : vector<1x16x16x16xf32> to vector<1x16x16x16xbf16>
    %c0_104 = arith.constant 0 : index
    %c1_105 = arith.constant 1 : index
    %c1_106 = arith.constant 1 : index
    %c0_107 = arith.constant 0 : index
    %105 = vector.load %arg11[%c0_104, %c1_105, %c1_106, %c0_107] : memref<1x18x18x16xbf16, #tpu.memory_space<vmem>>, vector<1x16x16x16xbf16>
    tpu.vector_store %arg11[%c0_104, %c1_105, %c1_106, %c0_107], %104 {strides = array<i32>} : memref<1x18x18x16xbf16, #tpu.memory_space<vmem>>, vector<1x16x16x16xbf16>,
    %cst_108 = arith.constant 0.000000e+00 : f32
    %106 = vector.broadcast %cst_108 : f32 to vector<256x4xf32>
    %c0_109 = arith.constant 0 : index
    %c0_110 = arith.constant 0 : index
    %c0_111 = arith.constant 0 : index
    %c0_112 = arith.constant 0 : index
    %107 = vector.load %arg11[%c0_109, %c0_110, %c0_111, %c0_112] : memref<1x18x18x16xbf16, #tpu.memory_space<vmem>>, vector<1x18x16x16xbf16>
    %108 = vector.extract_strided_slice %107 {offsets = [0, 0, 0, 0], sizes = [1, 16, 16, 16], strides = [1, 1, 1, 1]} : vector<1x18x16x16xbf16> to vector<1x16x16x16xbf16>
    %109 = vector.shape_cast %108 : vector<1x16x16x16xbf16> to vector<256x16xbf16>
    %c0_113 = arith.constant 0 : index
    %c0_114 = arith.constant 0 : index
    %c0_115 = arith.constant 0 : index
    %110 = vector.load %arg9[%c0_113, %c0_114, %c0_115] : memref<9x16x4xbf16, #tpu.memory_space<vmem>>, vector<1x16x4xbf16>
    %111 = vector.shape_cast %110 : vector<1x16x4xbf16> to vector<16x4xbf16>
    %cst_116 = arith.constant dense<0.000000e+00> : vector<256x4xf32>
    %112 = tpu.matmul %109, %111, %cst_116 {dimension_numbers = #tpu.dot_dimension_numbers<[1], [0], [0], [1], [0, 0, 1, 1], [], []>} : vector<256x16xbf16>, vector<16x4xbf16>, vector<256x4xf32> -> vector<256x4xf32>
    %113 = arith.addf %106, %112 : vector<256x4xf32>
    %114 = vector.extract_strided_slice %107 {offsets = [0, 1, 0, 0], sizes = [1, 16, 16, 16], strides = [1, 1, 1, 1]} : vector<1x18x16x16xbf16> to vector<1x16x16x16xbf16>
    %115 = vector.shape_cast %114 : vector<1x16x16x16xbf16> to vector<256x16xbf16>
    %c3_117 = arith.constant 3 : index
    %c0_118 = arith.constant 0 : index
    %c0_119 = arith.constant 0 : index
    %116 = vector.load %arg9[%c3_117, %c0_118, %c0_119] : memref<9x16x4xbf16, #tpu.memory_space<vmem>>, vector<1x16x4xbf16>
    %117 = vector.shape_cast %116 : vector<1x16x4xbf16> to vector<16x4xbf16>
    %cst_120 = arith.constant dense<0.000000e+00> : vector<256x4xf32>
    %118 = tpu.matmul %115, %117, %cst_120 {dimension_numbers = #tpu.dot_dimension_numbers<[1], [0], [0], [1], [0, 0, 1, 1], [], []>} : vector<256x16xbf16>, vector<16x4xbf16>, vector<256x4xf32> -> vector<256x4xf32>
    %119 = arith.addf %113, %118 : vector<256x4xf32>
    %120 = vector.extract_strided_slice %107 {offsets = [0, 2, 0, 0], sizes = [1, 16, 16, 16], strides = [1, 1, 1, 1]} : vector<1x18x16x16xbf16> to vector<1x16x16x16xbf16>
    %121 = vector.shape_cast %120 : vector<1x16x16x16xbf16> to vector<256x16xbf16>
    %c6_121 = arith.constant 6 : index
    %c0_122 = arith.constant 0 : index
    %c0_123 = arith.constant 0 : index
    %122 = vector.load %arg9[%c6_121, %c0_122, %c0_123] : memref<9x16x4xbf16, #tpu.memory_space<vmem>>, vector<1x16x4xbf16>
    %123 = vector.shape_cast %122 : vector<1x16x4xbf16> to vector<16x4xbf16>
    %cst_124 = arith.constant dense<0.000000e+00> : vector<256x4xf32>
    %124 = tpu.matmul %121, %123, %cst_124 {dimension_numbers = #tpu.dot_dimension_numbers<[1], [0], [0], [1], [0, 0, 1, 1], [], []>} : vector<256x16xbf16>, vector<16x4xbf16>, vector<256x4xf32> -> vector<256x4xf32>
    %125 = arith.addf %119, %124 : vector<256x4xf32>
    %c0_125 = arith.constant 0 : index
    %c0_126 = arith.constant 0 : index
    %c1_127 = arith.constant 1 : index
    %c0_128 = arith.constant 0 : index
    %126 = vector.load %arg11[%c0_125, %c0_126, %c1_127, %c0_128] : memref<1x18x18x16xbf16, #tpu.memory_space<vmem>>, vector<1x18x16x16xbf16>
    %127 = vector.extract_strided_slice %126 {offsets = [0, 0, 0, 0], sizes = [1, 16, 16, 16], strides = [1, 1, 1, 1]} : vector<1x18x16x16xbf16> to vector<1x16x16x16xbf16>
    %128 = vector.shape_cast %127 : vector<1x16x16x16xbf16> to vector<256x16xbf16>
    %c1_129 = arith.constant 1 : index
    %c0_130 = arith.constant 0 : index
    %c0_131 = arith.constant 0 : index
    %129 = vector.load %arg9[%c1_129, %c0_130, %c0_131] : memref<9x16x4xbf16, #tpu.memory_space<vmem>>, vector<1x16x4xbf16>
    %130 = vector.shape_cast %129 : vector<1x16x4xbf16> to vector<16x4xbf16>
    %cst_132 = arith.constant dense<0.000000e+00> : vector<256x4xf32>
    %131 = tpu.matmul %128, %130, %cst_132 {dimension_numbers = #tpu.dot_dimension_numbers<[1], [0], [0], [1], [0, 0, 1, 1], [], []>} : vector<256x16xbf16>, vector<16x4xbf16>, vector<256x4xf32> -> vector<256x4xf32>
    %132 = arith.addf %125, %131 : vector<256x4xf32>
    %133 = vector.extract_strided_slice %126 {offsets = [0, 1, 0, 0], sizes = [1, 16, 16, 16], strides = [1, 1, 1, 1]} : vector<1x18x16x16xbf16> to vector<1x16x16x16xbf16>
    %134 = vector.shape_cast %133 : vector<1x16x16x16xbf16> to vector<256x16xbf16>
    %c4_133 = arith.constant 4 : index
    %c0_134 = arith.constant 0 : index
    %c0_135 = arith.constant 0 : index
    %135 = vector.load %arg9[%c4_133, %c0_134, %c0_135] : memref<9x16x4xbf16, #tpu.memory_space<vmem>>, vector<1x16x4xbf16>
    %136 = vector.shape_cast %135 : vector<1x16x4xbf16> to vector<16x4xbf16>
    %cst_136 = arith.constant dense<0.000000e+00> : vector<256x4xf32>
    %137 = tpu.matmul %134, %136, %cst_136 {dimension_numbers = #tpu.dot_dimension_numbers<[1], [0], [0], [1], [0, 0, 1, 1], [], []>} : vector<256x16xbf16>, vector<16x4xbf16>, vector<256x4xf32> -> vector<256x4xf32>
    %138 = arith.addf %132, %137 : vector<256x4xf32>
    %139 = vector.extract_strided_slice %126 {offsets = [0, 2, 0, 0], sizes = [1, 16, 16, 16], strides = [1, 1, 1, 1]} : vector<1x18x16x16xbf16> to vector<1x16x16x16xbf16>
    %140 = vector.shape_cast %139 : vector<1x16x16x16xbf16> to vector<256x16xbf16>
    %c7_137 = arith.constant 7 : index
    %c0_138 = arith.constant 0 : index
    %c0_139 = arith.constant 0 : index
    %141 = vector.load %arg9[%c7_137, %c0_138, %c0_139] : memref<9x16x4xbf16, #tpu.memory_space<vmem>>, vector<1x16x4xbf16>
    %142 = vector.shape_cast %141 : vector<1x16x4xbf16> to vector<16x4xbf16>
    %cst_140 = arith.constant dense<0.000000e+00> : vector<256x4xf32>
    %143 = tpu.matmul %140, %142, %cst_140 {dimension_numbers = #tpu.dot_dimension_numbers<[1], [0], [0], [1], [0, 0, 1, 1], [], []>} : vector<256x16xbf16>, vector<16x4xbf16>, vector<256x4xf32> -> vector<256x4xf32>
    %144 = arith.addf %138, %143 : vector<256x4xf32>
    %c0_141 = arith.constant 0 : index
    %c0_142 = arith.constant 0 : index
    %c2_143 = arith.constant 2 : index
    %c0_144 = arith.constant 0 : index
    %145 = vector.load %arg11[%c0_141, %c0_142, %c2_143, %c0_144] : memref<1x18x18x16xbf16, #tpu.memory_space<vmem>>, vector<1x18x16x16xbf16>
    %146 = vector.extract_strided_slice %145 {offsets = [0, 0, 0, 0], sizes = [1, 16, 16, 16], strides = [1, 1, 1, 1]} : vector<1x18x16x16xbf16> to vector<1x16x16x16xbf16>
    %147 = vector.shape_cast %146 : vector<1x16x16x16xbf16> to vector<256x16xbf16>
    %c2_145 = arith.constant 2 : index
    %c0_146 = arith.constant 0 : index
    %c0_147 = arith.constant 0 : index
    %148 = vector.load %arg9[%c2_145, %c0_146, %c0_147] : memref<9x16x4xbf16, #tpu.memory_space<vmem>>, vector<1x16x4xbf16>
    %149 = vector.shape_cast %148 : vector<1x16x4xbf16> to vector<16x4xbf16>
    %cst_148 = arith.constant dense<0.000000e+00> : vector<256x4xf32>
    %150 = tpu.matmul %147, %149, %cst_148 {dimension_numbers = #tpu.dot_dimension_numbers<[1], [0], [0], [1], [0, 0, 1, 1], [], []>} : vector<256x16xbf16>, vector<16x4xbf16>, vector<256x4xf32> -> vector<256x4xf32>
    %151 = arith.addf %144, %150 : vector<256x4xf32>
    %152 = vector.extract_strided_slice %145 {offsets = [0, 1, 0, 0], sizes = [1, 16, 16, 16], strides = [1, 1, 1, 1]} : vector<1x18x16x16xbf16> to vector<1x16x16x16xbf16>
    %153 = vector.shape_cast %152 : vector<1x16x16x16xbf16> to vector<256x16xbf16>
    %c5_149 = arith.constant 5 : index
    %c0_150 = arith.constant 0 : index
    %c0_151 = arith.constant 0 : index
    %154 = vector.load %arg9[%c5_149, %c0_150, %c0_151] : memref<9x16x4xbf16, #tpu.memory_space<vmem>>, vector<1x16x4xbf16>
    %155 = vector.shape_cast %154 : vector<1x16x4xbf16> to vector<16x4xbf16>
    %cst_152 = arith.constant dense<0.000000e+00> : vector<256x4xf32>
    %156 = tpu.matmul %153, %155, %cst_152 {dimension_numbers = #tpu.dot_dimension_numbers<[1], [0], [0], [1], [0, 0, 1, 1], [], []>} : vector<256x16xbf16>, vector<16x4xbf16>, vector<256x4xf32> -> vector<256x4xf32>
    %157 = arith.addf %151, %156 : vector<256x4xf32>
    %158 = vector.extract_strided_slice %145 {offsets = [0, 2, 0, 0], sizes = [1, 16, 16, 16], strides = [1, 1, 1, 1]} : vector<1x18x16x16xbf16> to vector<1x16x16x16xbf16>
    %159 = vector.shape_cast %158 : vector<1x16x16x16xbf16> to vector<256x16xbf16>
    %c8_153 = arith.constant 8 : index
    %c0_154 = arith.constant 0 : index
    %c0_155 = arith.constant 0 : index
    %160 = vector.load %arg9[%c8_153, %c0_154, %c0_155] : memref<9x16x4xbf16, #tpu.memory_space<vmem>>, vector<1x16x4xbf16>
    %161 = vector.shape_cast %160 : vector<1x16x4xbf16> to vector<16x4xbf16>
    %cst_156 = arith.constant dense<0.000000e+00> : vector<256x4xf32>
    %162 = tpu.matmul %159, %161, %cst_156 {dimension_numbers = #tpu.dot_dimension_numbers<[1], [0], [0], [1], [0, 0, 1, 1], [], []>} : vector<256x16xbf16>, vector<16x4xbf16>, vector<256x4xf32> -> vector<256x4xf32>
    %163 = arith.addf %157, %162 : vector<256x4xf32>
    %164 = vector.shape_cast %163 : vector<256x4xf32> to vector<1x16x16x4xf32>
    %c0_157 = arith.constant 0 : index
    %c0_158 = arith.constant 0 : index
    %c0_159 = arith.constant 0 : index
    %c6_160 = arith.constant 6 : index
    %165 = vector.load %arg10[%c0_157, %c0_158, %c0_159, %c6_160] : memref<1x16x16x10xf32, #tpu.memory_space<vmem>>, vector<1x16x16x4xf32>
    tpu.vector_store %arg10[%c0_157, %c0_158, %c0_159, %c6_160], %164 {strides = array<i32>} : memref<1x16x16x10xf32, #tpu.memory_space<vmem>>, vector<1x16x16x4xf32>,
    return
  }
  func.func @transform_0(%arg0: i32) -> (i32, i32, i32, i32) {
    %c0_i32 = arith.constant 0 : i32
    %c0_i32_0 = arith.constant 0 : i32
    %c0_i32_1 = arith.constant 0 : i32
    %c0_i32_2 = arith.constant 0 : i32
    return %arg0, %c0_i32, %c0_i32_0, %c0_i32_1 : i32, i32, i32, i32
  }
  func.func @transform_1(%arg0: i32) -> (i32, i32, i32, i32) {
    %c0_i32 = arith.constant 0 : i32
    %c0_i32_0 = arith.constant 0 : i32
    %c0_i32_1 = arith.constant 0 : i32
    %c0_i32_2 = arith.constant 0 : i32
    %c0_i32_3 = arith.constant 0 : i32
    return %c0_i32, %c0_i32_0, %c0_i32_1, %c0_i32_2 : i32, i32, i32, i32
  }
  func.func @transform_2(%arg0: i32) -> (i32, i32) {
    %c0_i32 = arith.constant 0 : i32
    %c0_i32_0 = arith.constant 0 : i32
    %c0_i32_1 = arith.constant 0 : i32
    return %c0_i32, %c0_i32_0 : i32, i32
  }
  func.func @transform_3(%arg0: i32) -> (i32, i32) {
    %c0_i32 = arith.constant 0 : i32
    %c0_i32_0 = arith.constant 0 : i32
    %c0_i32_1 = arith.constant 0 : i32
    return %c0_i32, %c0_i32_0 : i32, i32
  }
  func.func @transform_4(%arg0: i32) -> (i32, i32, i32) {
    %c0_i32 = arith.constant 0 : i32
    %c0_i32_0 = arith.constant 0 : i32
    %c0_i32_1 = arith.constant 0 : i32
    %c0_i32_2 = arith.constant 0 : i32
    return %c0_i32, %c0_i32_0, %c0_i32_1 : i32, i32, i32
  }
  func.func @transform_5(%arg0: i32) -> (i32, i32, i32, i32) {
    %c0_i32 = arith.constant 0 : i32
    %c0_i32_0 = arith.constant 0 : i32
    %c0_i32_1 = arith.constant 0 : i32
    %c0_i32_2 = arith.constant 0 : i32
    %c0_i32_3 = arith.constant 0 : i32
    return %c0_i32, %c0_i32_0, %c0_i32_1, %c0_i32_2 : i32, i32, i32, i32
  }
  func.func @transform_6(%arg0: i32) -> (i32, i32) {
    %c0_i32 = arith.constant 0 : i32
    %c0_i32_0 = arith.constant 0 : i32
    %c0_i32_1 = arith.constant 0 : i32
    return %c0_i32, %c0_i32_0 : i32, i32
  }
  func.func @transform_7(%arg0: i32) -> (i32, i32) {
    %c0_i32 = arith.constant 0 : i32
    %c0_i32_0 = arith.constant 0 : i32
    %c0_i32_1 = arith.constant 0 : i32
    return %c0_i32, %c0_i32_0 : i32, i32
  }
  func.func @transform_8(%arg0: i32) -> (i32, i32, i32) {
    %c0_i32 = arith.constant 0 : i32
    %c0_i32_0 = arith.constant 0 : i32
    %c0_i32_1 = arith.constant 0 : i32
    %c0_i32_2 = arith.constant 0 : i32
    return %c0_i32, %c0_i32_0, %c0_i32_1 : i32, i32, i32
  }
  func.func @transform_9(%arg0: i32) -> (i32, i32, i32, i32) {
    %c0_i32 = arith.constant 0 : i32
    %c0_i32_0 = arith.constant 0 : i32
    %c0_i32_1 = arith.constant 0 : i32
    %c0_i32_2 = arith.constant 0 : i32
    return %arg0, %c0_i32, %c0_i32_0, %c0_i32_1 : i32, i32, i32, i32
  }
}

</mosaic_0001>

<llo_original>
// kernel: tpu_custom_call.1
$region0: #{tpu_custom_call.1}
  #allocation0 [shape = 'u32[]', space=smem, size = 0x4, offset = 0x4, fixed_abs, tag = 'smem constant byte address 0x4 - core index']
  #allocation1 [shape = 'u32[144,128]{1,0:T(1,128)}', space=vmem, size = 0x12000, scoped, tag = 'internal scratch']
  #allocation2 [shape = 'bf16[1,18,18,16]{3,2,1,0:T(8,128)(2,1)}', space=vmem, size = 0x1b000, scoped, tag = 'scratch operand']
  %s0 = inlined_call_operand.vmem [shape: f32[2,16,16,2], index: 0, kind: input, shape index: {}]
  %s1 = inlined_call_operand.vmem [shape: f32[1,1,1,2], index: 1, kind: input, shape index: {}]
  %s2 = inlined_call_operand.vmem [shape: bf16[2,16], index: 2, kind: input, shape index: {}]
  %s3 = inlined_call_operand.vmem [shape: f32[1,16], index: 3, kind: input, shape index: {}]
  %s4 = inlined_call_operand.vmem [shape: bf16[9,16,4], index: 4, kind: input, shape index: {}]
  %s5 = inlined_call_operand.vmem [shape: f32[1,1,1,6], index: 5, kind: input, shape index: {}]
  %s6 = inlined_call_operand.vmem [shape: bf16[6,16], index: 6, kind: input, shape index: {}]
  %s7 = inlined_call_operand.vmem [shape: f32[1,16], index: 7, kind: input, shape index: {}]
  %s8 = inlined_call_operand.vmem [shape: bf16[9,16,4], index: 8, kind: input, shape index: {}]
  %s9 = inlined_call_operand.vmem [shape: f32[2,16,16,10], index: 9, kind: output, shape index: {}]
  %s10 = sld [smem:[#allocation0]]
  $region69: #{tpu_custom_call.1} parent=0
    _
  %s12 = ssub.s32 1, %s10
  %s13 = scalar_select 0, %s12, %s10
  loop: start=0, step=1, limit=4
  $region2: #{tpu_custom_call.1} parent=0 // loop_pre_header
    _
  $region3: #{tpu_custom_call.1} parent=0 // loop_header
    %s15 = sphi 0, %s19
    %p16 = scmp.ge.s32.totalorder %s15, 4
    %s25 = sphi 0, %s27
    %s28 = sphi 0, %s25
    %s29 = sphi 0, %s28
    %s45 = sphi 0, %s29
    %s49 = sphi 0, %s49
    %s51 = sphi 0, %s49
    %s52 = sphi 0, %s51
    %s66 = sphi 0, %s52
    %s70 = sphi 0, %s70
    %s72 = sphi 0, %s70
    %s73 = sphi 0, %s72
    %s87 = sphi 0, %s73
    %s91 = sphi 0, %s91
    %s93 = sphi 0, %s91
    %s94 = sphi 0, %s93
    %s108 = sphi 0, %s94
    %s112 = sphi 0, %s112
    %s114 = sphi 0, %s112
    %s115 = sphi 0, %s114
    %s129 = sphi 0, %s115
    %s133 = sphi 0, %s133
    %s135 = sphi 0, %s133
    %s136 = sphi 0, %s135
    %s150 = sphi 0, %s136
    %s154 = sphi 0, %s154
    %s156 = sphi 0, %s154
    %s157 = sphi 0, %s156
    %s171 = sphi 0, %s157
    %s175 = sphi 0, %s175
    %s177 = sphi 0, %s175
    %s178 = sphi 0, %s177
    %s192 = sphi 0, %s178
    %s196 = sphi 0, %s196
    %s198 = sphi 0, %s196
    %s199 = sphi 0, %s198
    %s213 = sphi 0, %s199
    %s219 = sphi 0, %s221
    %s222 = sphi 0, %s219
    %s223 = sphi 0, %s222
    %s239 = sphi 0, %s223
  $region4: #{tpu_custom_call.1} parent=0 // loop_header_branch
    %18 = sbr.rel (%p16) target = $region8
  $region5: #{tpu_custom_call.1} parent=0 // loop_body
    %s20 = ssub.s32 %s15, 1
    %s21 = ssub.s32 %s15, 2
    %s22 = sadd.s32 %s15, 1
    %s23 = ssub.s32 %s15, %s22
    %p24 = scmp.eq.s32.totalorder %s23, 0
    %s26 = sadd.s32 %s25, 1
    %s27 = scalar_select %p24, %s25, %s26
    %p30 = pneg %p24
    %p31 = scmp.eq.s32.totalorder %s15, 1
    %p32 = por %p30, %p31
    %p33 = scmp.ne.s32.totalorder %s25, %s28
    %p34 = scmp.eq.s32.totalorder %s15, 0
    %p35 = por %p33, %p34
    %p36 = scmp.ne.s32.totalorder %s25, %s28
    %p37 = scmp.eq.s32.totalorder %s20, 1
    %p38 = por %p36, %p37
    %p39 = scmp.ne.s32.totalorder %s28, %s29
    %p40 = scmp.eq.s32.totalorder %s20, 0
    %p41 = por %p39, %p40
    %p42 = scmp.ne.s32.totalorder %s28, %s29
    %p43 = scmp.eq.s32.totalorder %s21, 1
    %p44 = por %p42, %p43
    %p46 = scmp.ne.s32.totalorder %s29, %s45
    %p47 = scmp.eq.s32.totalorder %s21, 0
    %p48 = por %p46, %p47
    %s50 = sadd.s32 %s49, 1
    %p53 = scmp.eq.s32.totalorder %s15, 1
    %p54 = scmp.ne.s32.totalorder %s49, %s51
    %p55 = scmp.eq.s32.totalorder %s15, 0
    %p56 = por %p54, %p55
    %p57 = scmp.ne.s32.totalorder %s49, %s51
    %p58 = scmp.eq.s32.totalorder %s20, 1
    %p59 = por %p57, %p58
    %p60 = scmp.ne.s32.totalorder %s51, %s52
    %p61 = scmp.eq.s32.totalorder %s20, 0
    %p62 = por %p60, %p61
    %p63 = scmp.ne.s32.totalorder %s51, %s52
    %p64 = scmp.eq.s32.totalorder %s21, 1
    %p65 = por %p63, %p64
    %p67 = scmp.ne.s32.totalorder %s52, %s66
    %p68 = scmp.eq.s32.totalorder %s21, 0
    %p69 = por %p67, %p68
    %s71 = sadd.s32 %s70, 1
    %p74 = scmp.eq.s32.totalorder %s15, 1
    %p75 = scmp.ne.s32.totalorder %s70, %s72
    %p76 = scmp.eq.s32.totalorder %s15, 0
    %p77 = por %p75, %p76
    %p78 = scmp.ne.s32.totalorder %s70, %s72
    %p79 = scmp.eq.s32.totalorder %s20, 1
    %p80 = por %p78, %p79
    %p81 = scmp.ne.s32.totalorder %s72, %s73
    %p82 = scmp.eq.s32.totalorder %s20, 0
    %p83 = por %p81, %p82
    %p84 = scmp.ne.s32.totalorder %s72, %s73
    %p85 = scmp.eq.s32.totalorder %s21, 1
    %p86 = por %p84, %p85
    %p88 = scmp.ne.s32.totalorder %s73, %s87
    %p89 = scmp.eq.s32.totalorder %s21, 0
    %p90 = por %p88, %p89
    %s92 = sadd.s32 %s91, 1
    %p95 = scmp.eq.s32.totalorder %s15, 1
    %p96 = scmp.ne.s32.totalorder %s91, %s93
    %p97 = scmp.eq.s32.totalorder %s15, 0
    %p98 = por %p96, %p97
    %p99 = scmp.ne.s32.totalorder %s91, %s93
    %p100 = scmp.eq.s32.totalorder %s20, 1
    %p101 = por %p99, %p100
    %p102 = scmp.ne.s32.totalorder %s93, %s94
    %p103 = scmp.eq.s32.totalorder %s20, 0
    %p104 = por %p102, %p103
    %p105 = scmp.ne.s32.totalorder %s93, %s94
    %p106 = scmp.eq.s32.totalorder %s21, 1
    %p107 = por %p105, %p106
    %p109 = scmp.ne.s32.totalorder %s94, %s108
    %p110 = scmp.eq.s32.totalorder %s21, 0
    %p111 = por %p109, %p110
    %s113 = sadd.s32 %s112, 1
    %p116 = scmp.eq.s32.totalorder %s15, 1
    %p117 = scmp.ne.s32.totalorder %s112, %s114
    %p118 = scmp.eq.s32.totalorder %s15, 0
    %p119 = por %p117, %p118
    %p120 = scmp.ne.s32.totalorder %s112, %s114
    %p121 = scmp.eq.s32.totalorder %s20, 1
    %p122 = por %p120, %p121
    %p123 = scmp.ne.s32.totalorder %s114, %s115
    %p124 = scmp.eq.s32.totalorder %s20, 0
    %p125 = por %p123, %p124
    %p126 = scmp.ne.s32.totalorder %s114, %s115
    %p127 = scmp.eq.s32.totalorder %s21, 1
    %p128 = por %p126, %p127
    %p130 = scmp.ne.s32.totalorder %s115, %s129
    %p131 = scmp.eq.s32.totalorder %s21, 0
    %p132 = por %p130, %p131
    %s134 = sadd.s32 %s133, 1
    %p137 = scmp.eq.s32.totalorder %s15, 1
    %p138 = scmp.ne.s32.totalorder %s133, %s135
    %p139 = scmp.eq.s32.totalorder %s15, 0
    %p140 = por %p138, %p139
    %p141 = scmp.ne.s32.totalorder %s133, %s135
    %p142 = scmp.eq.s32.totalorder %s20, 1
    %p143 = por %p141, %p142
    %p144 = scmp.ne.s32.totalorder %s135, %s136
    %p145 = scmp.eq.s32.totalorder %s20, 0
    %p146 = por %p144, %p145
    %p147 = scmp.ne.s32.totalorder %s135, %s136
    %p148 = scmp.eq.s32.totalorder %s21, 1
    %p149 = por %p147, %p148
    %p151 = scmp.ne.s32.totalorder %s136, %s150
    %p152 = scmp.eq.s32.totalorder %s21, 0
    %p153 = por %p151, %p152
    %s155 = sadd.s32 %s154, 1
    %p158 = scmp.eq.s32.totalorder %s15, 1
    %p159 = scmp.ne.s32.totalorder %s154, %s156
    %p160 = scmp.eq.s32.totalorder %s15, 0
    %p161 = por %p159, %p160
    %p162 = scmp.ne.s32.totalorder %s154, %s156
    %p163 = scmp.eq.s32.totalorder %s20, 1
    %p164 = por %p162, %p163
    %p165 = scmp.ne.s32.totalorder %s156, %s157
    %p166 = scmp.eq.s32.totalorder %s20, 0
    %p167 = por %p165, %p166
    %p168 = scmp.ne.s32.totalorder %s156, %s157
    %p169 = scmp.eq.s32.totalorder %s21, 1
    %p170 = por %p168, %p169
    %p172 = scmp.ne.s32.totalorder %s157, %s171
    %p173 = scmp.eq.s32.totalorder %s21, 0
    %p174 = por %p172, %p173
    %s176 = sadd.s32 %s175, 1
    %p179 = scmp.eq.s32.totalorder %s15, 1
    %p180 = scmp.ne.s32.totalorder %s175, %s177
    %p181 = scmp.eq.s32.totalorder %s15, 0
    %p182 = por %p180, %p181
    %p183 = scmp.ne.s32.totalorder %s175, %s177
    %p184 = scmp.eq.s32.totalorder %s20, 1
    %p185 = por %p183, %p184
    %p186 = scmp.ne.s32.totalorder %s177, %s178
    %p187 = scmp.eq.s32.totalorder %s20, 0
    %p188 = por %p186, %p187
    %p189 = scmp.ne.s32.totalorder %s177, %s178
    %p190 = scmp.eq.s32.totalorder %s21, 1
    %p191 = por %p189, %p190
    %p193 = scmp.ne.s32.totalorder %s178, %s192
    %p194 = scmp.eq.s32.totalorder %s21, 0
    %p195 = por %p193, %p194
    %s197 = sadd.s32 %s196, 1
    %p200 = scmp.eq.s32.totalorder %s15, 1
    %p201 = scmp.ne.s32.totalorder %s196, %s198
    %p202 = scmp.eq.s32.totalorder %s15, 0
    %p203 = por %p201, %p202
    %p204 = scmp.ne.s32.totalorder %s196, %s198
    %p205 = scmp.eq.s32.totalorder %s20, 1
    %p206 = por %p204, %p205
    %p207 = scmp.ne.s32.totalorder %s198, %s199
    %p208 = scmp.eq.s32.totalorder %s20, 0
    %p209 = por %p207, %p208
    %p210 = scmp.ne.s32.totalorder %s198, %s199
    %p211 = scmp.eq.s32.totalorder %s21, 1
    %p212 = por %p210, %p211
    %p214 = scmp.ne.s32.totalorder %s199, %s213
    %p215 = scmp.eq.s32.totalorder %s21, 0
    %p216 = por %p214, %p215
    %s217 = ssub.s32 %s15, %s22
    %p218 = scmp.eq.s32.totalorder %s217, 0
    %s220 = sadd.s32 %s219, 1
    %s221 = scalar_select %p218, %s219, %s220
    %p224 = pneg %p218
    %p225 = scmp.eq.s32.totalorder %s15, 1
    %p226 = por %p224, %p225
    %p227 = scmp.ne.s32.totalorder %s219, %s222
    %p228 = scmp.eq.s32.totalorder %s15, 0
    %p229 = por %p227, %p228
    %p230 = scmp.ne.s32.totalorder %s219, %s222
    %p231 = scmp.eq.s32.totalorder %s20, 1
    %p232 = por %p230, %p231
    %p233 = scmp.ne.s32.totalorder %s222, %s223
    %p234 = scmp.eq.s32.totalorder %s20, 0
    %p235 = por %p233, %p234
    %p236 = scmp.ne.s32.totalorder %s222, %s223
    %p237 = scmp.eq.s32.totalorder %s21, 1
    %p238 = por %p236, %p237
    %p240 = scmp.ne.s32.totalorder %s223, %s239
    %p241 = scmp.eq.s32.totalorder %s21, 0
    %p242 = por %p240, %p241
    %p243 = scmp.le.s32.totalorder 1, %s15
    %p244 = scmp.lt.s32.totalorder %s15, 3
    %p245 = pnand %p243, %p244
    %p246 = pneg %p245
    // Predicated region
    $region9: #{tpu_custom_call.1} parent=5 // pred_check
      _
    $region10: #{tpu_custom_call.1} parent=5 // pred_check_branch
      %248 = sbr.rel (%p245) target = $region12
    $region11: #{tpu_custom_call.1} parent=5 // pred_region
      %s249 = ssub.s32 %s15, 1
      // Predicated region
      $region13: #{tpu_custom_call.1} parent=11 // pred_check
        %p250 = pneg %p62
      $region14: #{tpu_custom_call.1} parent=11 // pred_check_branch
        %252 = sbr.rel (%p250) target = $region16
      $region15: #{tpu_custom_call.1} parent=11 // pred_region
        _
      $region16: #{tpu_custom_call.1} parent=11 // pred_fallthru
        _
      // Predicated region
      $region17: #{tpu_custom_call.1} parent=11 // pred_check
        %p253 = pneg %p83
      $region18: #{tpu_custom_call.1} parent=11 // pred_check_branch
        %255 = sbr.rel (%p253) target = $region20
      $region19: #{tpu_custom_call.1} parent=11 // pred_region
        _
      $region20: #{tpu_custom_call.1} parent=11 // pred_fallthru
        _
      // Predicated region
      $region21: #{tpu_custom_call.1} parent=11 // pred_check
        %p256 = pneg %p104
      $region22: #{tpu_custom_call.1} parent=11 // pred_check_branch
        %258 = sbr.rel (%p256) target = $region24
      $region23: #{tpu_custom_call.1} parent=11 // pred_region
        _
      $region24: #{tpu_custom_call.1} parent=11 // pred_fallthru
        _
      // Predicated region
      $region25: #{tpu_custom_call.1} parent=11 // pred_check
        %p259 = pneg %p125
      $region26: #{tpu_custom_call.1} parent=11 // pred_check_branch
        %261 = sbr.rel (%p259) target = $region28
      $region27: #{tpu_custom_call.1} parent=11 // pred_region
        _
      $region28: #{tpu_custom_call.1} parent=11 // pred_fallthru
        _
      // Predicated region
      $region29: #{tpu_custom_call.1} parent=11 // pred_check
        %p262 = pneg %p146
      $region30: #{tpu_custom_call.1} parent=11 // pred_check_branch
        %264 = sbr.rel (%p262) target = $region32
      $region31: #{tpu_custom_call.1} parent=11 // pred_region
        _
      $region32: #{tpu_custom_call.1} parent=11 // pred_fallthru
        _
      // Predicated region
      $region33: #{tpu_custom_call.1} parent=11 // pred_check
        %p265 = pneg %p167
      $region34: #{tpu_custom_call.1} parent=11 // pred_check_branch
        %267 = sbr.rel (%p265) target = $region36
      $region35: #{tpu_custom_call.1} parent=11 // pred_region
        _
      $region36: #{tpu_custom_call.1} parent=11 // pred_fallthru
        _
      // Predicated region
      $region37: #{tpu_custom_call.1} parent=11 // pred_check
        %p268 = pneg %p188
      $region38: #{tpu_custom_call.1} parent=11 // pred_check_branch
        %270 = sbr.rel (%p268) target = $region40
      $region39: #{tpu_custom_call.1} parent=11 // pred_region
        _
      $region40: #{tpu_custom_call.1} parent=11 // pred_fallthru
        _
      // Predicated region
      $region41: #{tpu_custom_call.1} parent=11 // pred_check
        %p271 = pneg %p209
      $region42: #{tpu_custom_call.1} parent=11 // pred_check_branch
        %273 = sbr.rel (%p271) target = $region44
      $region43: #{tpu_custom_call.1} parent=11 // pred_region
        _
      $region44: #{tpu_custom_call.1} parent=11 // pred_fallthru
        _
    $region12: #{tpu_custom_call.1} parent=5 // pred_fallthru
      _
    %p274 = scmp.lt.s32.totalorder %s15, 2
    // Predicated region
    $region45: #{tpu_custom_call.1} parent=5 // pred_check
      %p275 = pneg %p274
    $region46: #{tpu_custom_call.1} parent=5 // pred_check_branch
      %277 = sbr.rel (%p275) target = $region48
    $region47: #{tpu_custom_call.1} parent=5 // pred_region
      // Predicated region
      $region49: #{tpu_custom_call.1} parent=47 // pred_check
        %p278 = pneg %p35
      $region50: #{tpu_custom_call.1} parent=47 // pred_check_branch
        %280 = sbr.rel (%p278) target = $region52
      $region51: #{tpu_custom_call.1} parent=47 // pred_region
        %p281 = scmp.lt.s32.totalorder %s15, 1
        %s282 = scalar_select %p281, %s15, 1
        %s283 = smul.addr %s282, 32
        %s284 = smul.addr %s283, 8
        %s285 = scalar_lea.vmem %s0, %s284
      $region52: #{tpu_custom_call.1} parent=47 // pred_fallthru
        _
    $region48: #{tpu_custom_call.1} parent=5 // pred_fallthru
      _
    %p286 = scmp.le.s32.totalorder 1, %s15
    %p287 = scmp.lt.s32.totalorder %s15, 3
    %p288 = pnand %p286, %p287
    %p289 = pneg %p288
    // Predicated region
    $region53: #{tpu_custom_call.1} parent=5 // pred_check
      _
    $region54: #{tpu_custom_call.1} parent=5 // pred_check_branch
      %291 = sbr.rel (%p288) target = $region56
    $region55: #{tpu_custom_call.1} parent=5 // pred_region
      %s292 = ssub.s32 %s15, 1
      %p293 = scmp.lt.s32.totalorder %s20, 1
      %s294 = scalar_select %p293, %s20, 1
      %s295 = smul.addr %s294, 32
      %s296 = smul.addr %s295, 8
      %s297 = scalar_lea.vmem %s0, %s296
      %p298 = pneg %p41
      %p299 = pneg %p38
      %p300 = pneg %p62
      %p301 = pneg %p59
      %p302 = pneg %p83
      %p303 = pneg %p80
      %p304 = pneg %p104
      %p305 = pneg %p101
      %p306 = pneg %p125
      %p307 = pneg %p122
      %p308 = pneg %p146
      %p309 = pneg %p143
      %p310 = pneg %p167
      %p311 = pneg %p164
      %p312 = pneg %p188
      %p313 = pneg %p185
      %p314 = pneg %p209
      %p315 = pneg %p206
      %p316 = pneg %p235
      %p317 = pneg %p232
      %p318 = scmp.lt.s32.totalorder %s20, 1
      %s319 = scalar_select %p318, %s20, 1
      %s320 = smul.addr %s319, 32
      %s321 = smul.addr %s320, 8
      %s322 = scalar_lea.vmem %s9, %s321
      %p323 = scmp.lt.s32.totalorder %s20, 1
      %s324 = scalar_select %p323, %s20, 1
      %s325 = smul.addr %s324, 32
      %s326 = smul.addr %s325, 8
      %s327 = scalar_lea.vmem %s0, %s326
      %p328 = scmp.lt.s32.totalorder %s20, 1
      %s329 = scalar_select %p328, %s20, 1
      %s330 = smul.addr %s329, 32
      %s331 = smul.addr %s330, 8
      %s332 = scalar_lea.vmem %s9, %s331
      %v334 = vld [vmem:[%s327] sm:$0xff]
      %v335 = vld [vmem:[%s327 + $0x8] sm:$0xff]
      %v336 = vld [vmem:[%s327 + $0x10] sm:$0xff]
      %v337 = vld [vmem:[%s327 + $0x18] sm:$0xff]
      %v338 = vld [vmem:[%s327 + $0x20] sm:$0xff]
      %v339 = vld [vmem:[%s327 + $0x28] sm:$0xff]
      %v340 = vld [vmem:[%s327 + $0x30] sm:$0xff]
      %v341 = vld [vmem:[%s327 + $0x38] sm:$0xff]
      %v342 = vld [vmem:[%s327 + $0x40] sm:$0xff]
      %v343 = vld [vmem:[%s327 + $0x48] sm:$0xff]
      %v344 = vld [vmem:[%s327 + $0x50] sm:$0xff]
      %v345 = vld [vmem:[%s327 + $0x58] sm:$0xff]
      %v346 = vld [vmem:[%s327 + $0x60] sm:$0xff]
      %v347 = vld [vmem:[%s327 + $0x68] sm:$0xff]
      %v348 = vld [vmem:[%s327 + $0x70] sm:$0xff]
      %v349 = vld [vmem:[%s327 + $0x78] sm:$0xff]
      %v350 = vld [vmem:[%s327 + $0x80] sm:$0xff]
      %v351 = vld [vmem:[%s327 + $0x88] sm:$0xff]
      %v352 = vld [vmem:[%s327 + $0x90] sm:$0xff]
      %v353 = vld [vmem:[%s327 + $0x98] sm:$0xff]
      %v354 = vld [vmem:[%s327 + $0xa0] sm:$0xff]
      %v355 = vld [vmem:[%s327 + $0xa8] sm:$0xff]
      %v356 = vld [vmem:[%s327 + $0xb0] sm:$0xff]
      %v357 = vld [vmem:[%s327 + $0xb8] sm:$0xff]
      %v358 = vld [vmem:[%s327 + $0xc0] sm:$0xff]
      %v359 = vld [vmem:[%s327 + $0xc8] sm:$0xff]
      %v360 = vld [vmem:[%s327 + $0xd0] sm:$0xff]
      %v361 = vld [vmem:[%s327 + $0xd8] sm:$0xff]
      %v362 = vld [vmem:[%s327 + $0xe0] sm:$0xff]
      %v363 = vld [vmem:[%s327 + $0xe8] sm:$0xff]
      %v364 = vld [vmem:[%s327 + $0xf0] sm:$0xff]
      %v365 = vld [vmem:[%s327 + $0xf8] sm:$0xff]
      %vm366 = vcmask 15360
      %367 = vst.msk [vmem:[%s332] sm:$0xff] %vm366, %v334
      %368 = vst.msk [vmem:[%s332 + $0x8] sm:$0xff] %vm366, %v335
      %369 = vst.msk [vmem:[%s332 + $0x10] sm:$0xff] %vm366, %v336
      %370 = vst.msk [vmem:[%s332 + $0x18] sm:$0xff] %vm366, %v337
      %371 = vst.msk [vmem:[%s332 + $0x20] sm:$0xff] %vm366, %v338
      %372 = vst.msk [vmem:[%s332 + $0x28] sm:$0xff] %vm366, %v339
      %373 = vst.msk [vmem:[%s332 + $0x30] sm:$0xff] %vm366, %v340
      %374 = vst.msk [vmem:[%s332 + $0x38] sm:$0xff] %vm366, %v341
      %375 = vst.msk [vmem:[%s332 + $0x40] sm:$0xff] %vm366, %v342
      %376 = vst.msk [vmem:[%s332 + $0x48] sm:$0xff] %vm366, %v343
      %377 = vst.msk [vmem:[%s332 + $0x50] sm:$0xff] %vm366, %v344
      %378 = vst.msk [vmem:[%s332 + $0x58] sm:$0xff] %vm366, %v345
      %379 = vst.msk [vmem:[%s332 + $0x60] sm:$0xff] %vm366, %v346
      %380 = vst.msk [vmem:[%s332 + $0x68] sm:$0xff] %vm366, %v347
      %381 = vst.msk [vmem:[%s332 + $0x70] sm:$0xff] %vm366, %v348
      %382 = vst.msk [vmem:[%s332 + $0x78] sm:$0xff] %vm366, %v349
      %383 = vst.msk [vmem:[%s332 + $0x80] sm:$0xff] %vm366, %v350
      %384 = vst.msk [vmem:[%s332 + $0x88] sm:$0xff] %vm366, %v351
      %385 = vst.msk [vmem:[%s332 + $0x90] sm:$0xff] %vm366, %v352
      %386 = vst.msk [vmem:[%s332 + $0x98] sm:$0xff] %vm366, %v353
      %387 = vst.msk [vmem:[%s332 + $0xa0] sm:$0xff] %vm366, %v354
      %388 = vst.msk [vmem:[%s332 + $0xa8] sm:$0xff] %vm366, %v355
      %389 = vst.msk [vmem:[%s332 + $0xb0] sm:$0xff] %vm366, %v356
      %390 = vst.msk [vmem:[%s332 + $0xb8] sm:$0xff] %vm366, %v357
      %391 = vst.msk [vmem:[%s332 + $0xc0] sm:$0xff] %vm366, %v358
      %392 = vst.msk [vmem:[%s332 + $0xc8] sm:$0xff] %vm366, %v359
      %393 = vst.msk [vmem:[%s332 + $0xd0] sm:$0xff] %vm366, %v360
      %394 = vst.msk [vmem:[%s332 + $0xd8] sm:$0xff] %vm366, %v361
      %395 = vst.msk [vmem:[%s332 + $0xe0] sm:$0xff] %vm366, %v362
      %396 = vst.msk [vmem:[%s332 + $0xe8] sm:$0xff] %vm366, %v363
      %397 = vst.msk [vmem:[%s332 + $0xf0] sm:$0xff] %vm366, %v364
      %398 = vst.msk [vmem:[%s332 + $0xf8] sm:$0xff] %vm366, %v365
      %vm399 = vcmask 125952
      %400 = vst.msk [vmem:[#allocation2] sm:$0xf] %vm399, 0
      %401 = vst.msk [vmem:[#allocation2 + $0x4] sm:$0xf] %vm399, 0
      %vm402 = vcmask 122880
      %403 = vst.msk [vmem:[#allocation2 + $0x8] sm:$0x1] %vm402, 0
      %s404 = scalar_lea.vmem [#allocation2], 204
      %405 = vst.msk [vmem:[%s404] sm:$0xf] %vm399, 0
      %406 = vst.msk [vmem:[%s404 + $0x4] sm:$0xf] %vm399, 0
      %407 = vst.msk [vmem:[%s404 + $0x8] sm:$0x1] %vm402, 0
      %vm408 = vcmask 122880
      %vm409 = vsmask.f32 256
      %vm410 = vmand %vm408, %vm409
      %v411 = vld [vmem:[#allocation2] sm:$0x1]
      %v412 = vsel %vm410, 0, %v411
      %413 = vst [vmem:[#allocation2] sm:$0x1] %v412
      %v414 = vld [vmem:[#allocation2 + $0xc] sm:$0x1]
      %v415 = vsel %vm410, 0, %v414
      %416 = vst [vmem:[#allocation2 + $0xc] sm:$0x1] %v415
      %v417 = vld [vmem:[#allocation2 + $0x18] sm:$0x1]
      %v418 = vsel %vm410, 0, %v417
      %419 = vst [vmem:[#allocation2 + $0x18] sm:$0x1] %v418
      %v420 = vld [vmem:[#allocation2 + $0x24] sm:$0x1]
      %v421 = vsel %vm410, 0, %v420
      %422 = vst [vmem:[#allocation2 + $0x24] sm:$0x1] %v421
      %v423 = vld [vmem:[#allocation2 + $0x30] sm:$0x1]
      %v424 = vsel %vm410, 0, %v423
      %425 = vst [vmem:[#allocation2 + $0x30] sm:$0x1] %v424
      %v426 = vld [vmem:[#allocation2 + $0x3c] sm:$0x1]
      %v427 = vsel %vm410, 0, %v426
      %428 = vst [vmem:[#allocation2 + $0x3c] sm:$0x1] %v427
      %v429 = vld [vmem:[#allocation2 + $0x48] sm:$0x1]
      %v430 = vsel %vm410, 0, %v429
      %431 = vst [vmem:[#allocation2 + $0x48] sm:$0x1] %v430
      %v432 = vld [vmem:[#allocation2 + $0x54] sm:$0x1]
      %v433 = vsel %vm410, 0, %v432
      %434 = vst [vmem:[#allocation2 + $0x54] sm:$0x1] %v433
      %v435 = vld [vmem:[#allocation2 + $0x60] sm:$0x1]
      %v436 = vsel %vm410, 0, %v435
      %437 = vst [vmem:[#allocation2 + $0x60] sm:$0x1] %v436
      %v438 = vld [vmem:[#allocation2 + $0x6c] sm:$0x1]
      %v439 = vsel %vm410, 0, %v438
      %440 = vst [vmem:[#allocation2 + $0x6c] sm:$0x1] %v439
      %v441 = vld [vmem:[#allocation2 + $0x78] sm:$0x1]
      %v442 = vsel %vm410, 0, %v441
      %443 = vst [vmem:[#allocation2 + $0x78] sm:$0x1] %v442
      %v444 = vld [vmem:[#allocation2 + $0x84] sm:$0x1]
      %v445 = vsel %vm410, 0, %v444
      %446 = vst [vmem:[#allocation2 + $0x84] sm:$0x1] %v445
      %v447 = vld [vmem:[#allocation2 + $0x90] sm:$0x1]
      %v448 = vsel %vm410, 0, %v447
      %449 = vst [vmem:[#allocation2 + $0x90] sm:$0x1] %v448
      %v450 = vld [vmem:[#allocation2 + $0x9c] sm:$0x1]
      %v451 = vsel %vm410, 0, %v450
      %452 = vst [vmem:[#allocation2 + $0x9c] sm:$0x1] %v451
      %v453 = vld [vmem:[#allocation2 + $0xa8] sm:$0x1]
      %v454 = vsel %vm410, 0, %v453
      %455 = vst [vmem:[#allocation2 + $0xa8] sm:$0x1] %v454
      %v456 = vld [vmem:[#allocation2 + $0xb4] sm:$0x1]
      %v457 = vsel %vm410, 0, %v456
      %458 = vst [vmem:[#allocation2 + $0xb4] sm:$0x1] %v457
      %v459 = vld [vmem:[#allocation2 + $0xc0] sm:$0x1]
      %v460 = vsel %vm410, 0, %v459
      %461 = vst [vmem:[#allocation2 + $0xc0] sm:$0x1] %v460
      %v462 = vld [vmem:[#allocation2 + $0xcc] sm:$0x1]
      %v463 = vsel %vm410, 0, %v462
      %464 = vst [vmem:[#allocation2 + $0xcc] sm:$0x1] %v463
      %vm465 = vsmask.f32 7938
      %vm466 = vmand %vm408, %vm465
      %v467 = vld [vmem:[#allocation2 + $0x8] sm:$0x1]
      %v468 = vsel %vm466, 0, %v467
      %469 = vst [vmem:[#allocation2 + $0x8] sm:$0x1] %v468
      %v470 = vld [vmem:[#allocation2 + $0x14] sm:$0x1]
      %v471 = vsel %vm466, 0, %v470
      %472 = vst [vmem:[#allocation2 + $0x14] sm:$0x1] %v471
      %v473 = vld [vmem:[#allocation2 + $0x20] sm:$0x1]
      %v474 = vsel %vm466, 0, %v473
      %475 = vst [vmem:[#allocation2 + $0x20] sm:$0x1] %v474
      %v476 = vld [vmem:[#allocation2 + $0x2c] sm:$0x1]
      %v477 = vsel %vm466, 0, %v476
      %478 = vst [vmem:[#allocation2 + $0x2c] sm:$0x1] %v477
      %v479 = vld [vmem:[#allocation2 + $0x38] sm:$0x1]
      %v480 = vsel %vm466, 0, %v479
      %481 = vst [vmem:[#allocation2 + $0x38] sm:$0x1] %v480
      %v482 = vld [vmem:[#allocation2 + $0x44] sm:$0x1]
      %v483 = vsel %vm466, 0, %v482
      %484 = vst [vmem:[#allocation2 + $0x44] sm:$0x1] %v483
      %v485 = vld [vmem:[#allocation2 + $0x50] sm:$0x1]
      %v486 = vsel %vm466, 0, %v485
      %487 = vst [vmem:[#allocation2 + $0x50] sm:$0x1] %v486
      %v488 = vld [vmem:[#allocation2 + $0x5c] sm:$0x1]
      %v489 = vsel %vm466, 0, %v488
      %490 = vst [vmem:[#allocation2 + $0x5c] sm:$0x1] %v489
      %v491 = vld [vmem:[#allocation2 + $0x68] sm:$0x1]
      %v492 = vsel %vm466, 0, %v491
      %493 = vst [vmem:[#allocation2 + $0x68] sm:$0x1] %v492
      %v494 = vld [vmem:[#allocation2 + $0x74] sm:$0x1]
      %v495 = vsel %vm466, 0, %v494
      %496 = vst [vmem:[#allocation2 + $0x74] sm:$0x1] %v495
      %v497 = vld [vmem:[#allocation2 + $0x80] sm:$0x1]
      %v498 = vsel %vm466, 0, %v497
      %499 = vst [vmem:[#allocation2 + $0x80] sm:$0x1] %v498
      %v500 = vld [vmem:[#allocation2 + $0x8c] sm:$0x1]
      %v501 = vsel %vm466, 0, %v500
      %502 = vst [vmem:[#allocation2 + $0x8c] sm:$0x1] %v501
      %v503 = vld [vmem:[#allocation2 + $0x98] sm:$0x1]
      %v504 = vsel %vm466, 0, %v503
      %505 = vst [vmem:[#allocation2 + $0x98] sm:$0x1] %v504
      %v506 = vld [vmem:[#allocation2 + $0xa4] sm:$0x1]
      %v507 = vsel %vm466, 0, %v506
      %508 = vst [vmem:[#allocation2 + $0xa4] sm:$0x1] %v507
      %v509 = vld [vmem:[#allocation2 + $0xb0] sm:$0x1]
      %v510 = vsel %vm466, 0, %v509
      %511 = vst [vmem:[#allocation2 + $0xb0] sm:$0x1] %v510
      %v512 = vld [vmem:[#allocation2 + $0xbc] sm:$0x1]
      %v513 = vsel %vm466, 0, %v512
      %514 = vst [vmem:[#allocation2 + $0xbc] sm:$0x1] %v513
      %v515 = vld [vmem:[#allocation2 + $0xc8] sm:$0x1]
      %v516 = vsel %vm466, 0, %v515
      %517 = vst [vmem:[#allocation2 + $0xc8] sm:$0x1] %v516
      %v518 = vld [vmem:[#allocation2 + $0xd4] sm:$0x1]
      %v519 = vsel %vm466, 0, %v518
      %520 = vst [vmem:[#allocation2 + $0xd4] sm:$0x1] %v519
      %v521 = vld [vmem:[%s332] sm:$0xff]
      %v522 = vld [vmem:[%s332 + $0x8] sm:$0xff]
      %v523 = vld [vmem:[%s332 + $0x10] sm:$0xff]
      %v524 = vld [vmem:[%s332 + $0x18] sm:$0xff]
      %v525 = vld [vmem:[%s332 + $0x20] sm:$0xff]
      %v526 = vld [vmem:[%s332 + $0x28] sm:$0xff]
      %v527 = vld [vmem:[%s332 + $0x30] sm:$0xff]
      %v528 = vld [vmem:[%s332 + $0x38] sm:$0xff]
      %v529 = vld [vmem:[%s332 + $0x40] sm:$0xff]
      %v530 = vld [vmem:[%s332 + $0x48] sm:$0xff]
      %v531 = vld [vmem:[%s332 + $0x50] sm:$0xff]
      %v532 = vld [vmem:[%s332 + $0x58] sm:$0xff]
      %v533 = vld [vmem:[%s332 + $0x60] sm:$0xff]
      %v534 = vld [vmem:[%s332 + $0x68] sm:$0xff]
      %v535 = vld [vmem:[%s332 + $0x70] sm:$0xff]
      %v536 = vld [vmem:[%s332 + $0x78] sm:$0xff]
      %v537 = vld [vmem:[%s332 + $0x80] sm:$0xff]
      %v538 = vld [vmem:[%s332 + $0x88] sm:$0xff]
      %v539 = vld [vmem:[%s332 + $0x90] sm:$0xff]
      %v540 = vld [vmem:[%s332 + $0x98] sm:$0xff]
      %v541 = vld [vmem:[%s332 + $0xa0] sm:$0xff]
      %v542 = vld [vmem:[%s332 + $0xa8] sm:$0xff]
      %v543 = vld [vmem:[%s332 + $0xb0] sm:$0xff]
      %v544 = vld [vmem:[%s332 + $0xb8] sm:$0xff]
      %v545 = vld [vmem:[%s332 + $0xc0] sm:$0xff]
      %v546 = vld [vmem:[%s332 + $0xc8] sm:$0xff]
      %v547 = vld [vmem:[%s332 + $0xd0] sm:$0xff]
      %v548 = vld [vmem:[%s332 + $0xd8] sm:$0xff]
      %v549 = vld [vmem:[%s332 + $0xe0] sm:$0xff]
      %v550 = vld [vmem:[%s332 + $0xe8] sm:$0xff]
      %v551 = vld [vmem:[%s332 + $0xf0] sm:$0xff]
      %v552 = vld [vmem:[%s332 + $0xf8] sm:$0xff]
      %v553 = vld [vmem:[%s1] sm:$0x1]
      %v555 = vlaneseq
      %v556 = vshrl.u32 %v555, 7
      %v557 = vsub.s32 0, %v556
      %v558 = vrot.slane %v553, %v557
      %v560 = vadd.f32 %v521, %v558
      %v561 = vadd.f32 %v522, %v558
      %v562 = vadd.f32 %v523, %v558
      %v563 = vadd.f32 %v524, %v558
      %v564 = vadd.f32 %v525, %v558
      %v565 = vadd.f32 %v526, %v558
      %v566 = vadd.f32 %v527, %v558
      %v567 = vadd.f32 %v528, %v558
      %v568 = vadd.f32 %v529, %v558
      %v569 = vadd.f32 %v530, %v558
      %v570 = vadd.f32 %v531, %v558
      %v571 = vadd.f32 %v532, %v558
      %v572 = vadd.f32 %v533, %v558
      %v573 = vadd.f32 %v534, %v558
      %v574 = vadd.f32 %v535, %v558
      %v575 = vadd.f32 %v536, %v558
      %v576 = vadd.f32 %v537, %v558
      %v577 = vadd.f32 %v538, %v558
      %v578 = vadd.f32 %v539, %v558
      %v579 = vadd.f32 %v540, %v558
      %v580 = vadd.f32 %v541, %v558
      %v581 = vadd.f32 %v542, %v558
      %v582 = vadd.f32 %v543, %v558
      %v583 = vadd.f32 %v544, %v558
      %v584 = vadd.f32 %v545, %v558
      %v585 = vadd.f32 %v546, %v558
      %v586 = vadd.f32 %v547, %v558
      %v587 = vadd.f32 %v548, %v558
      %v588 = vadd.f32 %v549, %v558
      %v589 = vadd.f32 %v550, %v558
      %v590 = vadd.f32 %v551, %v558
      %v591 = vadd.f32 %v552, %v558
      %v592 = vmax.f32 %v560, 0.0
      %v593 = vmax.f32 %v561, 0.0
      %v594 = vmax.f32 %v562, 0.0
      %v595 = vmax.f32 %v563, 0.0
      %v596 = vmax.f32 %v564, 0.0
      %v597 = vmax.f32 %v565, 0.0
      %v598 = vmax.f32 %v566, 0.0
      %v599 = vmax.f32 %v567, 0.0
      %v600 = vmax.f32 %v568, 0.0
      %v601 = vmax.f32 %v569, 0.0
      %v602 = vmax.f32 %v570, 0.0
      %v603 = vmax.f32 %v571, 0.0
      %v604 = vmax.f32 %v572, 0.0
      %v605 = vmax.f32 %v573, 0.0
      %v606 = vmax.f32 %v574, 0.0
      %v607 = vmax.f32 %v575, 0.0
      %v608 = vmax.f32 %v576, 0.0
      %v609 = vmax.f32 %v577, 0.0
      %v610 = vmax.f32 %v578, 0.0
      %v611 = vmax.f32 %v579, 0.0
      %v612 = vmax.f32 %v580, 0.0
      %v613 = vmax.f32 %v581, 0.0
      %v614 = vmax.f32 %v582, 0.0
      %v615 = vmax.f32 %v583, 0.0
      %v616 = vmax.f32 %v584, 0.0
      %v617 = vmax.f32 %v585, 0.0
      %v618 = vmax.f32 %v586, 0.0
      %v619 = vmax.f32 %v587, 0.0
      %v620 = vmax.f32 %v588, 0.0
      %v621 = vmax.f32 %v589, 0.0
      %v622 = vmax.f32 %v590, 0.0
      %v623 = vmax.f32 %v591, 0.0
      %v624 = vpack.c.bf16 %v593, %v592
      %v625 = vpack.c.bf16 %v595, %v594
      %v626 = vpack.c.bf16 %v597, %v596
      %v627 = vpack.c.bf16 %v599, %v598
      %v628 = vpack.c.bf16 %v601, %v600
      %v629 = vpack.c.bf16 %v603, %v602
      %v630 = vpack.c.bf16 %v605, %v604
      %v631 = vpack.c.bf16 %v607, %v606
      %v632 = vpack.c.bf16 %v609, %v608
      %v633 = vpack.c.bf16 %v611, %v610
      %v634 = vpack.c.bf16 %v613, %v612
      %v635 = vpack.c.bf16 %v615, %v614
      %v636 = vpack.c.bf16 %v617, %v616
      %v637 = vpack.c.bf16 %v619, %v618
      %v638 = vpack.c.bf16 %v621, %v620
      %v639 = vpack.c.bf16 %v623, %v622
      %v640 = vld [vmem:[%s2] sm:$0x1]
      %v641 = vld [vmem:[%s3] sm:$0x1]
      %v643 = vlaneseq
      %v644 = vshrl.u32 %v643, 7
      %v645 = vsub.s32 0, %v644
      %v646 = vrot.slane %v641, %v645
      %v649 = vsel %vm366, %v624, 0
      %v652 = vsel %vm366, %v625, 0
      %v655 = vsel %vm366, %v626, 0
      %v658 = vsel %vm366, %v627, 0
      %v661 = vsel %vm366, %v628, 0
      %v664 = vsel %vm366, %v629, 0
      %v667 = vsel %vm366, %v630, 0
      %v670 = vsel %vm366, %v631, 0
      %v673 = vsel %vm366, %v632, 0
      %v676 = vsel %vm366, %v633, 0
      %v679 = vsel %vm366, %v634, 0
      %v682 = vsel %vm366, %v635, 0
      %v685 = vsel %vm366, %v636, 0
      %v688 = vsel %vm366, %v637, 0
      %v691 = vsel %vm366, %v638, 0
      %v694 = vsel %vm366, %v639, 0
      %vm696 = vcmask 1040384
      %v698 = vsel %vm696, %v640, 0
      %700 = vmatprep.subr.bf16.mxu0 0
      %701 = vmatpush1.bf16.msra.mxu0 0
      %702 = vmatprep.subr.bf16.mxu0 0
      %703 = vmatpush1.bf16.msra.mxu0 0
      %704 = vmatprep.subr.bf16.mxu0 0
      %705 = vmatpush1.bf16.msra.mxu0 0
      %706 = vmatprep.subr.bf16.mxu0 0
      %707 = vmatpush1.bf16.msra.mxu0 0
      %708 = vmatprep.subr.bf16.mxu0 0
      %709 = vmatpush1.bf16.msra.mxu0 0
      %710 = vmatprep.subr.bf16.mxu0 0
      %711 = vmatpush1.bf16.msra.mxu0 0
      %712 = vmatprep.subr.bf16.mxu0 0
      %713 = vmatpush1.bf16.msra.mxu0 0
      %714 = vmatprep.subr.bf16.mxu0 0
      %715 = vmatpush1.bf16.msra.mxu0 %v698
      %716 = vmatprep.subr.bf16.mxu0 0
      %717 = vmatpush2.bf16.msra.mxu0 0
      %718 = vmatprep.subr.bf16.mxu0 0
      %719 = vmatpush2.bf16.msra.mxu0 0
      %720 = vmatprep.subr.bf16.mxu0 0
      %721 = vmatpush2.bf16.msra.mxu0 0
      %722 = vmatprep.subr.bf16.mxu0 0
      %723 = vmatpush2.bf16.msra.mxu0 0
      %724 = vmatprep.subr.bf16.mxu0 0
      %725 = vmatpush2.bf16.msra.mxu0 0
      %726 = vmatprep.subr.bf16.mxu0 0
      %727 = vmatpush2.bf16.msra.mxu0 0
      %728 = vmatprep.subr.bf16.mxu0 0
      %729 = vmatpush2.bf16.msra.mxu0 0
      %730 = vmatprep.subr.bf16.mxu0 0
      %731 = vmatpush2.bf16.msra.mxu0 0
      %732 = vmatprep.mubr.bf16.mxu0 0
      %733 = vmatmul.mubr.bf16.gmra.mxu0 %v649
      %v734 = vpop.f32.mrf.mxu0
      %v735 = vadd.f32 %v646, %v734
      %v736 = vpop.f32.mrf.mxu0
      %v737 = vpop.f32.mrf.mxu0
      %v738 = vadd.f32 %v646, %v737
      %v739 = vpop.f32.mrf.mxu0
      %740 = vmatprep.mubr.bf16.mxu0 0
      %741 = vmatmul.mubr.bf16.gmra.mxu0 %v652
      %v742 = vpop.f32.mrf.mxu0
      %v743 = vadd.f32 %v646, %v742
      %v744 = vpop.f32.mrf.mxu0
      %v745 = vpop.f32.mrf.mxu0
      %v746 = vadd.f32 %v646, %v745
      %v747 = vpop.f32.mrf.mxu0
      %748 = vmatprep.mubr.bf16.mxu0 0
      %749 = vmatmul.mubr.bf16.gmra.mxu0 %v655
      %v750 = vpop.f32.mrf.mxu0
      %v751 = vadd.f32 %v646, %v750
      %v752 = vpop.f32.mrf.mxu0
      %v753 = vpop.f32.mrf.mxu0
      %v754 = vadd.f32 %v646, %v753
      %v755 = vpop.f32.mrf.mxu0
      %756 = vmatprep.mubr.bf16.mxu0 0
      %757 = vmatmul.mubr.bf16.gmra.mxu0 %v658
      %v758 = vpop.f32.mrf.mxu0
      %v759 = vadd.f32 %v646, %v758
      %v760 = vpop.f32.mrf.mxu0
      %v761 = vpop.f32.mrf.mxu0
      %v762 = vadd.f32 %v646, %v761
      %v763 = vpop.f32.mrf.mxu0
      %764 = vmatprep.mubr.bf16.mxu0 0
      %765 = vmatmul.mubr.bf16.gmra.mxu0 %v661
      %v766 = vpop.f32.mrf.mxu0
      %v767 = vadd.f32 %v646, %v766
      %v768 = vpop.f32.mrf.mxu0
      %v769 = vpop.f32.mrf.mxu0
      %v770 = vadd.f32 %v646, %v769
      %v771 = vpop.f32.mrf.mxu0
      %772 = vmatprep.mubr.bf16.mxu0 0
      %773 = vmatmul.mubr.bf16.gmra.mxu0 %v664
      %v774 = vpop.f32.mrf.mxu0
      %v775 = vadd.f32 %v646, %v774
      %v776 = vpop.f32.mrf.mxu0
      %v777 = vpop.f32.mrf.mxu0
      %v778 = vadd.f32 %v646, %v777
      %v779 = vpop.f32.mrf.mxu0
      %780 = vmatprep.mubr.bf16.mxu0 0
      %781 = vmatmul.mubr.bf16.gmra.mxu0 %v667
      %v782 = vpop.f32.mrf.mxu0
      %v783 = vadd.f32 %v646, %v782
      %v784 = vpop.f32.mrf.mxu0
      %v785 = vpop.f32.mrf.mxu0
      %v786 = vadd.f32 %v646, %v785
      %v787 = vpop.f32.mrf.mxu0
      %788 = vmatprep.mubr.bf16.mxu0 0
      %789 = vmatmul.mubr.bf16.gmra.mxu0 %v670
      %v790 = vpop.f32.mrf.mxu0
      %v791 = vadd.f32 %v646, %v790
      %v792 = vpop.f32.mrf.mxu0
      %v793 = vpop.f32.mrf.mxu0
      %v794 = vadd.f32 %v646, %v793
      %v795 = vpop.f32.mrf.mxu0
      %796 = vmatprep.mubr.bf16.mxu0 0
      %797 = vmatmul.mubr.bf16.gmra.mxu0 %v673
      %v798 = vpop.f32.mrf.mxu0
      %v799 = vadd.f32 %v646, %v798
      %v800 = vpop.f32.mrf.mxu0
      %v801 = vpop.f32.mrf.mxu0
      %v802 = vadd.f32 %v646, %v801
      %v803 = vpop.f32.mrf.mxu0
      %804 = vmatprep.mubr.bf16.mxu0 0
      %805 = vmatmul.mubr.bf16.gmra.mxu0 %v676
      %v806 = vpop.f32.mrf.mxu0
      %v807 = vadd.f32 %v646, %v806
      %v808 = vpop.f32.mrf.mxu0
      %v809 = vpop.f32.mrf.mxu0
      %v810 = vadd.f32 %v646, %v809
      %v811 = vpop.f32.mrf.mxu0
      %812 = vmatprep.mubr.bf16.mxu0 0
      %813 = vmatmul.mubr.bf16.gmra.mxu0 %v679
      %v814 = vpop.f32.mrf.mxu0
      %v815 = vadd.f32 %v646, %v814
      %v816 = vpop.f32.mrf.mxu0
      %v817 = vpop.f32.mrf.mxu0
      %v818 = vadd.f32 %v646, %v817
      %v819 = vpop.f32.mrf.mxu0
      %820 = vmatprep.mubr.bf16.mxu0 0
      %821 = vmatmul.mubr.bf16.gmra.mxu0 %v682
      %v822 = vpop.f32.mrf.mxu0
      %v823 = vadd.f32 %v646, %v822
      %v824 = vpop.f32.mrf.mxu0
      %v825 = vpop.f32.mrf.mxu0
      %v826 = vadd.f32 %v646, %v825
      %v827 = vpop.f32.mrf.mxu0
      %828 = vmatprep.mubr.bf16.mxu0 0
      %829 = vmatmul.mubr.bf16.gmra.mxu0 %v685
      %v830 = vpop.f32.mrf.mxu0
      %v831 = vadd.f32 %v646, %v830
      %v832 = vpop.f32.mrf.mxu0
      %v833 = vpop.f32.mrf.mxu0
      %v834 = vadd.f32 %v646, %v833
      %v835 = vpop.f32.mrf.mxu0
      %836 = vmatprep.mubr.bf16.mxu0 0
      %837 = vmatmul.mubr.bf16.gmra.mxu0 %v688
      %v838 = vpop.f32.mrf.mxu0
      %v839 = vadd.f32 %v646, %v838
      %v840 = vpop.f32.mrf.mxu0
      %v841 = vpop.f32.mrf.mxu0
      %v842 = vadd.f32 %v646, %v841
      %v843 = vpop.f32.mrf.mxu0
      %844 = vmatprep.mubr.bf16.mxu0 0
      %845 = vmatmul.mubr.bf16.gmra.mxu0 %v691
      %v846 = vpop.f32.mrf.mxu0
      %v847 = vadd.f32 %v646, %v846
      %v848 = vpop.f32.mrf.mxu0
      %v849 = vpop.f32.mrf.mxu0
      %v850 = vadd.f32 %v646, %v849
      %v851 = vpop.f32.mrf.mxu0
      %852 = vmatprep.mubr.bf16.mxu0 0
      %853 = vmatmul.mubr.bf16.gmra.mxu0 %v694
      %v854 = vpop.f32.mrf.mxu0
      %v855 = vadd.f32 %v646, %v854
      %v856 = vpop.f32.mrf.mxu0
      %v857 = vpop.f32.mrf.mxu0
      %v858 = vadd.f32 %v646, %v857
      %v859 = vpop.f32.mrf.mxu0
      %860 = vdwg.mxu0
      %v861 = vmax.f32 %v735, 0.0
      %v862 = vmax.f32 %v738, 0.0
      %v863 = vmax.f32 %v743, 0.0
      %v864 = vmax.f32 %v746, 0.0
      %v865 = vmax.f32 %v751, 0.0
      %v866 = vmax.f32 %v754, 0.0
      %v867 = vmax.f32 %v759, 0.0
      %v868 = vmax.f32 %v762, 0.0
      %v869 = vmax.f32 %v767, 0.0
      %v870 = vmax.f32 %v770, 0.0
      %v871 = vmax.f32 %v775, 0.0
      %v872 = vmax.f32 %v778, 0.0
      %v873 = vmax.f32 %v783, 0.0
      %v874 = vmax.f32 %v786, 0.0
      %v875 = vmax.f32 %v791, 0.0
      %v876 = vmax.f32 %v794, 0.0
      %v877 = vmax.f32 %v799, 0.0
      %v878 = vmax.f32 %v802, 0.0
      %v879 = vmax.f32 %v807, 0.0
      %v880 = vmax.f32 %v810, 0.0
      %v881 = vmax.f32 %v815, 0.0
      %v882 = vmax.f32 %v818, 0.0
      %v883 = vmax.f32 %v823, 0.0
      %v884 = vmax.f32 %v826, 0.0
      %v885 = vmax.f32 %v831, 0.0
      %v886 = vmax.f32 %v834, 0.0
      %v887 = vmax.f32 %v839, 0.0
      %v888 = vmax.f32 %v842, 0.0
      %v889 = vmax.f32 %v847, 0.0
      %v890 = vmax.f32 %v850, 0.0
      %v891 = vmax.f32 %v855, 0.0
      %v892 = vmax.f32 %v858, 0.0
      %v893 = vpack.c.bf16 %v862, %v861
      %v894 = vpack.c.bf16 %v864, %v863
      %v895 = vpack.c.bf16 %v866, %v865
      %v896 = vpack.c.bf16 %v868, %v867
      %v897 = vpack.c.bf16 %v870, %v869
      %v898 = vpack.c.bf16 %v872, %v871
      %v899 = vpack.c.bf16 %v874, %v873
      %v900 = vpack.c.bf16 %v876, %v875
      %v901 = vpack.c.bf16 %v878, %v877
      %v902 = vpack.c.bf16 %v880, %v879
      %v903 = vpack.c.bf16 %v882, %v881
      %v904 = vpack.c.bf16 %v884, %v883
      %v905 = vpack.c.bf16 %v886, %v885
      %v906 = vpack.c.bf16 %v888, %v887
      %v907 = vpack.c.bf16 %v890, %v889
      %v908 = vpack.c.bf16 %v892, %v891
      %v925 = vunpack.c.l.b16 %v893
      %v926 = vunpack.c.h.b16 %v893
      %v927 = vunpack.c.l.b16 %v894
      %v928 = vunpack.c.h.b16 %v894
      %v929 = vunpack.c.l.b16 %v895
      %v930 = vunpack.c.h.b16 %v895
      %v931 = vunpack.c.l.b16 %v896
      %v932 = vunpack.c.h.b16 %v896
      %v933 = vunpack.c.l.b16 %v897
      %v934 = vunpack.c.h.b16 %v897
      %v935 = vunpack.c.l.b16 %v898
      %v936 = vunpack.c.h.b16 %v898
      %v937 = vunpack.c.l.b16 %v899
      %v938 = vunpack.c.h.b16 %v899
      %v939 = vunpack.c.l.b16 %v900
      %v940 = vunpack.c.h.b16 %v900
      %v941 = vunpack.c.l.b16 %v901
      %v942 = vunpack.c.h.b16 %v901
      %v943 = vunpack.c.l.b16 %v902
      %v944 = vunpack.c.h.b16 %v902
      %v945 = vunpack.c.l.b16 %v903
      %v946 = vunpack.c.h.b16 %v903
      %v947 = vunpack.c.l.b16 %v904
      %v948 = vunpack.c.h.b16 %v904
      %v949 = vunpack.c.l.b16 %v905
      %v950 = vunpack.c.h.b16 %v905
      %v951 = vunpack.c.l.b16 %v906
      %v952 = vunpack.c.h.b16 %v906
      %v953 = vunpack.c.l.b16 %v907
      %v954 = vunpack.c.h.b16 %v907
      %v955 = vunpack.c.l.b16 %v908
      %v956 = vunpack.c.h.b16 %v908
      %v957 = vpack.c.b16 %v925, %v925
      %v958 = vpack.c.b16 %v926, %v926
      %v959 = vpack.c.b16 %v927, %v927
      %v960 = vpack.c.b16 %v928, %v928
      %v961 = vpack.c.b16 %v929, %v929
      %v962 = vpack.c.b16 %v930, %v930
      %v963 = vpack.c.b16 %v931, %v931
      %v964 = vpack.c.b16 %v932, %v932
      %v965 = vpack.c.b16 %v933, %v933
      %v966 = vpack.c.b16 %v934, %v934
      %v967 = vpack.c.b16 %v935, %v935
      %v968 = vpack.c.b16 %v936, %v936
      %v969 = vpack.c.b16 %v937, %v937
      %v970 = vpack.c.b16 %v938, %v938
      %v971 = vpack.c.b16 %v939, %v939
      %v972 = vpack.c.b16 %v940, %v940
      %v973 = vpack.c.b16 %v941, %v941
      %v974 = vpack.c.b16 %v942, %v942
      %v975 = vpack.c.b16 %v943, %v943
      %v976 = vpack.c.b16 %v944, %v944
      %v977 = vpack.c.b16 %v945, %v945
      %v978 = vpack.c.b16 %v946, %v946
      %v979 = vpack.c.b16 %v947, %v947
      %v980 = vpack.c.b16 %v948, %v948
      %v981 = vpack.c.b16 %v949, %v949
      %v982 = vpack.c.b16 %v950, %v950
      %v983 = vpack.c.b16 %v951, %v951
      %v984 = vpack.c.b16 %v952, %v952
      %v985 = vpack.c.b16 %v953, %v953
      %v986 = vpack.c.b16 %v954, %v954
      %v987 = vpack.c.b16 %v955, %v955
      %v988 = vpack.c.b16 %v956, %v956
      %vm989 = vsmask.f32 4368
      %vm990 = vmor %vm409, %vm989
      %v992 = vshrl.u32 %v957, 16
      %v994 = vrot.slane %v992, 7
      %v995 = vshll.u32 %v957, 16
      %v997 = vor.u32 %v994, %v995
      %v998 = vrot.slane %v994, 4
      %v1000 = vshrl.u32 %v958, 16
      %v1002 = vrot.slane %v1000, 7
      %v1003 = vshll.u32 %v958, 16
      %v1005 = vor.u32 %v1002, %v1003
      %v1006 = vsel %vm990, %v998, %v1005
      %v1007 = vrot.slane %v1002, 4
      %v1009 = vshrl.u32 %v959, 16
      %v1011 = vrot.slane %v1009, 7
      %v1012 = vshll.u32 %v959, 16
      %v1014 = vor.u32 %v1011, %v1012
      %v1015 = vrot.slane %v1011, 4
      %v1017 = vshrl.u32 %v960, 16
      %v1019 = vrot.slane %v1017, 7
      %v1020 = vshll.u32 %v960, 16
      %v1022 = vor.u32 %v1019, %v1020
      %v1023 = vsel %vm990, %v1015, %v1022
      %v1024 = vrot.slane %v1019, 4
      %v1026 = vshrl.u32 %v961, 16
      %v1028 = vrot.slane %v1026, 7
      %v1029 = vshll.u32 %v961, 16
      %v1031 = vor.u32 %v1028, %v1029
      %v1032 = vrot.slane %v1028, 4
      %v1034 = vshrl.u32 %v962, 16
      %v1036 = vrot.slane %v1034, 7
      %v1037 = vshll.u32 %v962, 16
      %v1039 = vor.u32 %v1036, %v1037
      %v1040 = vsel %vm990, %v1032, %v1039
      %v1041 = vrot.slane %v1036, 4
      %v1043 = vshrl.u32 %v963, 16
      %v1045 = vrot.slane %v1043, 7
      %v1046 = vshll.u32 %v963, 16
      %v1048 = vor.u32 %v1045, %v1046
      %v1049 = vrot.slane %v1045, 4
      %v1051 = vshrl.u32 %v964, 16
      %v1053 = vrot.slane %v1051, 7
      %v1054 = vshll.u32 %v964, 16
      %v1056 = vor.u32 %v1053, %v1054
      %v1057 = vsel %vm990, %v1049, %v1056
      %v1058 = vrot.slane %v1053, 4
      %v1060 = vshrl.u32 %v965, 16
      %v1062 = vrot.slane %v1060, 7
      %v1063 = vshll.u32 %v965, 16
      %v1065 = vor.u32 %v1062, %v1063
      %v1066 = vrot.slane %v1062, 4
      %v1068 = vshrl.u32 %v966, 16
      %v1070 = vrot.slane %v1068, 7
      %v1071 = vshll.u32 %v966, 16
      %v1073 = vor.u32 %v1070, %v1071
      %v1074 = vsel %vm990, %v1066, %v1073
      %v1075 = vrot.slane %v1070, 4
      %v1077 = vshrl.u32 %v967, 16
      %v1079 = vrot.slane %v1077, 7
      %v1080 = vshll.u32 %v967, 16
      %v1082 = vor.u32 %v1079, %v1080
      %v1083 = vrot.slane %v1079, 4
      %v1085 = vshrl.u32 %v968, 16
      %v1087 = vrot.slane %v1085, 7
      %v1088 = vshll.u32 %v968, 16
      %v1090 = vor.u32 %v1087, %v1088
      %v1091 = vsel %vm990, %v1083, %v1090
      %v1092 = vrot.slane %v1087, 4
      %v1094 = vshrl.u32 %v969, 16
      %v1096 = vrot.slane %v1094, 7
      %v1097 = vshll.u32 %v969, 16
      %v1099 = vor.u32 %v1096, %v1097
      %v1100 = vrot.slane %v1096, 4
      %v1102 = vshrl.u32 %v970, 16
      %v1104 = vrot.slane %v1102, 7
      %v1105 = vshll.u32 %v970, 16
      %v1107 = vor.u32 %v1104, %v1105
      %v1108 = vsel %vm990, %v1100, %v1107
      %v1109 = vrot.slane %v1104, 4
      %v1111 = vshrl.u32 %v971, 16
      %v1113 = vrot.slane %v1111, 7
      %v1114 = vshll.u32 %v971, 16
      %v1116 = vor.u32 %v1113, %v1114
      %v1117 = vrot.slane %v1113, 4
      %v1119 = vshrl.u32 %v972, 16
      %v1121 = vrot.slane %v1119, 7
      %v1122 = vshll.u32 %v972, 16
      %v1124 = vor.u32 %v1121, %v1122
      %v1125 = vsel %vm990, %v1117, %v1124
      %v1126 = vrot.slane %v1121, 4
      %v1128 = vshrl.u32 %v973, 16
      %v1130 = vrot.slane %v1128, 7
      %v1131 = vshll.u32 %v973, 16
      %v1133 = vor.u32 %v1130, %v1131
      %v1134 = vrot.slane %v1130, 4
      %v1136 = vshrl.u32 %v974, 16
      %v1138 = vrot.slane %v1136, 7
      %v1139 = vshll.u32 %v974, 16
      %v1141 = vor.u32 %v1138, %v1139
      %v1142 = vsel %vm990, %v1134, %v1141
      %v1143 = vrot.slane %v1138, 4
      %v1145 = vshrl.u32 %v975, 16
      %v1147 = vrot.slane %v1145, 7
      %v1148 = vshll.u32 %v975, 16
      %v1150 = vor.u32 %v1147, %v1148
      %v1151 = vrot.slane %v1147, 4
      %v1153 = vshrl.u32 %v976, 16
      %v1155 = vrot.slane %v1153, 7
      %v1156 = vshll.u32 %v976, 16
      %v1158 = vor.u32 %v1155, %v1156
      %v1159 = vsel %vm990, %v1151, %v1158
      %v1160 = vrot.slane %v1155, 4
      %v1162 = vshrl.u32 %v977, 16
      %v1164 = vrot.slane %v1162, 7
      %v1165 = vshll.u32 %v977, 16
      %v1167 = vor.u32 %v1164, %v1165
      %v1168 = vrot.slane %v1164, 4
      %v1170 = vshrl.u32 %v978, 16
      %v1172 = vrot.slane %v1170, 7
      %v1173 = vshll.u32 %v978, 16
      %v1175 = vor.u32 %v1172, %v1173
      %v1176 = vsel %vm990, %v1168, %v1175
      %v1177 = vrot.slane %v1172, 4
      %v1179 = vshrl.u32 %v979, 16
      %v1181 = vrot.slane %v1179, 7
      %v1182 = vshll.u32 %v979, 16
      %v1184 = vor.u32 %v1181, %v1182
      %v1185 = vrot.slane %v1181, 4
      %v1187 = vshrl.u32 %v980, 16
      %v1189 = vrot.slane %v1187, 7
      %v1190 = vshll.u32 %v980, 16
      %v1192 = vor.u32 %v1189, %v1190
      %v1193 = vsel %vm990, %v1185, %v1192
      %v1194 = vrot.slane %v1189, 4
      %v1196 = vshrl.u32 %v981, 16
      %v1198 = vrot.slane %v1196, 7
      %v1199 = vshll.u32 %v981, 16
      %v1201 = vor.u32 %v1198, %v1199
      %v1202 = vrot.slane %v1198, 4
      %v1204 = vshrl.u32 %v982, 16
      %v1206 = vrot.slane %v1204, 7
      %v1207 = vshll.u32 %v982, 16
      %v1209 = vor.u32 %v1206, %v1207
      %v1210 = vsel %vm990, %v1202, %v1209
      %v1211 = vrot.slane %v1206, 4
      %v1213 = vshrl.u32 %v983, 16
      %v1215 = vrot.slane %v1213, 7
      %v1216 = vshll.u32 %v983, 16
      %v1218 = vor.u32 %v1215, %v1216
      %v1219 = vrot.slane %v1215, 4
      %v1221 = vshrl.u32 %v984, 16
      %v1223 = vrot.slane %v1221, 7
      %v1224 = vshll.u32 %v984, 16
      %v1226 = vor.u32 %v1223, %v1224
      %v1227 = vsel %vm990, %v1219, %v1226
      %v1228 = vrot.slane %v1223, 4
      %v1230 = vshrl.u32 %v985, 16
      %v1232 = vrot.slane %v1230, 7
      %v1233 = vshll.u32 %v985, 16
      %v1235 = vor.u32 %v1232, %v1233
      %v1236 = vrot.slane %v1232, 4
      %v1238 = vshrl.u32 %v986, 16
      %v1240 = vrot.slane %v1238, 7
      %v1241 = vshll.u32 %v986, 16
      %v1243 = vor.u32 %v1240, %v1241
      %v1244 = vsel %vm990, %v1236, %v1243
      %v1245 = vrot.slane %v1240, 4
      %v1247 = vshrl.u32 %v987, 16
      %v1249 = vrot.slane %v1247, 7
      %v1250 = vshll.u32 %v987, 16
      %v1252 = vor.u32 %v1249, %v1250
      %v1253 = vrot.slane %v1249, 4
      %v1255 = vshrl.u32 %v988, 16
      %v1257 = vrot.slane %v1255, 7
      %v1258 = vshll.u32 %v988, 16
      %v1260 = vor.u32 %v1257, %v1258
      %v1261 = vsel %vm990, %v1253, %v1260
      %v1262 = vrot.slane %v1257, 4
      %s1311 = scalar_lea.vmem [#allocation2], 12
      %vm1312 = vcmask 125952
      %vm1313 = vmand %vm1312, %vm465
      %v1314 = vld [vmem:[%s1311] sm:$0xf]
      %v1315 = vsel %vm1313, %v997, %v1314
      %1316 = vst [vmem:[%s1311] sm:$0xf] %v1315
      %1317 = vst.msk [vmem:[%s1311 + $0x4] sm:$0xf] %vm399, %v1006
      %v1318 = vld [vmem:[%s1311 + $0x8] sm:$0x1]
      %v1319 = vsel %vm410, %v1007, %v1318
      %1320 = vst [vmem:[%s1311 + $0x8] sm:$0x1] %v1319
      %v1321 = vld [vmem:[%s1311 + $0xc] sm:$0xf]
      %v1322 = vsel %vm1313, %v1014, %v1321
      %1323 = vst [vmem:[%s1311 + $0xc] sm:$0xf] %v1322
      %1324 = vst.msk [vmem:[%s1311 + $0x10] sm:$0xf] %vm399, %v1023
      %v1325 = vld [vmem:[%s1311 + $0x14] sm:$0x1]
      %v1326 = vsel %vm410, %v1024, %v1325
      %1327 = vst [vmem:[%s1311 + $0x14] sm:$0x1] %v1326
      %v1328 = vld [vmem:[%s1311 + $0x18] sm:$0xf]
      %v1329 = vsel %vm1313, %v1031, %v1328
      %1330 = vst [vmem:[%s1311 + $0x18] sm:$0xf] %v1329
      %1331 = vst.msk [vmem:[%s1311 + $0x1c] sm:$0xf] %vm399, %v1040
      %v1332 = vld [vmem:[%s1311 + $0x20] sm:$0x1]
      %v1333 = vsel %vm410, %v1041, %v1332
      %1334 = vst [vmem:[%s1311 + $0x20] sm:$0x1] %v1333
      %v1335 = vld [vmem:[%s1311 + $0x24] sm:$0xf]
      %v1336 = vsel %vm1313, %v1048, %v1335
      %1337 = vst [vmem:[%s1311 + $0x24] sm:$0xf] %v1336
      %1338 = vst.msk [vmem:[%s1311 + $0x28] sm:$0xf] %vm399, %v1057
      %v1339 = vld [vmem:[%s1311 + $0x2c] sm:$0x1]
      %v1340 = vsel %vm410, %v1058, %v1339
      %1341 = vst [vmem:[%s1311 + $0x2c] sm:$0x1] %v1340
      %v1342 = vld [vmem:[%s1311 + $0x30] sm:$0xf]
      %v1343 = vsel %vm1313, %v1065, %v1342
      %1344 = vst [vmem:[%s1311 + $0x30] sm:$0xf] %v1343
      %1345 = vst.msk [vmem:[%s1311 + $0x34] sm:$0xf] %vm399, %v1074
      %v1346 = vld [vmem:[%s1311 + $0x38] sm:$0x1]
      %v1347 = vsel %vm410, %v1075, %v1346
      %1348 = vst [vmem:[%s1311 + $0x38] sm:$0x1] %v1347
      %v1349 = vld [vmem:[%s1311 + $0x3c] sm:$0xf]
      %v1350 = vsel %vm1313, %v1082, %v1349
      %1351 = vst [vmem:[%s1311 + $0x3c] sm:$0xf] %v1350
      %1352 = vst.msk [vmem:[%s1311 + $0x40] sm:$0xf] %vm399, %v1091
      %v1353 = vld [vmem:[%s1311 + $0x44] sm:$0x1]
      %v1354 = vsel %vm410, %v1092, %v1353
      %1355 = vst [vmem:[%s1311 + $0x44] sm:$0x1] %v1354
      %v1356 = vld [vmem:[%s1311 + $0x48] sm:$0xf]
      %v1357 = vsel %vm1313, %v1099, %v1356
      %1358 = vst [vmem:[%s1311 + $0x48] sm:$0xf] %v1357
      %1359 = vst.msk [vmem:[%s1311 + $0x4c] sm:$0xf] %vm399, %v1108
      %v1360 = vld [vmem:[%s1311 + $0x50] sm:$0x1]
      %v1361 = vsel %vm410, %v1109, %v1360
      %1362 = vst [vmem:[%s1311 + $0x50] sm:$0x1] %v1361
      %v1363 = vld [vmem:[%s1311 + $0x54] sm:$0xf]
      %v1364 = vsel %vm1313, %v1116, %v1363
      %1365 = vst [vmem:[%s1311 + $0x54] sm:$0xf] %v1364
      %1366 = vst.msk [vmem:[%s1311 + $0x58] sm:$0xf] %vm399, %v1125
      %v1367 = vld [vmem:[%s1311 + $0x5c] sm:$0x1]
      %v1368 = vsel %vm410, %v1126, %v1367
      %1369 = vst [vmem:[%s1311 + $0x5c] sm:$0x1] %v1368
      %v1370 = vld [vmem:[%s1311 + $0x60] sm:$0xf]
      %v1371 = vsel %vm1313, %v1133, %v1370
      %1372 = vst [vmem:[%s1311 + $0x60] sm:$0xf] %v1371
      %1373 = vst.msk [vmem:[%s1311 + $0x64] sm:$0xf] %vm399, %v1142
      %v1374 = vld [vmem:[%s1311 + $0x68] sm:$0x1]
      %v1375 = vsel %vm410, %v1143, %v1374
      %1376 = vst [vmem:[%s1311 + $0x68] sm:$0x1] %v1375
      %v1377 = vld [vmem:[%s1311 + $0x6c] sm:$0xf]
      %v1378 = vsel %vm1313, %v1150, %v1377
      %1379 = vst [vmem:[%s1311 + $0x6c] sm:$0xf] %v1378
      %1380 = vst.msk [vmem:[%s1311 + $0x70] sm:$0xf] %vm399, %v1159
      %v1381 = vld [vmem:[%s1311 + $0x74] sm:$0x1]
      %v1382 = vsel %vm410, %v1160, %v1381
      %1383 = vst [vmem:[%s1311 + $0x74] sm:$0x1] %v1382
      %v1384 = vld [vmem:[%s1311 + $0x78] sm:$0xf]
      %v1385 = vsel %vm1313, %v1167, %v1384
      %1386 = vst [vmem:[%s1311 + $0x78] sm:$0xf] %v1385
      %1387 = vst.msk [vmem:[%s1311 + $0x7c] sm:$0xf] %vm399, %v1176
      %v1388 = vld [vmem:[%s1311 + $0x80] sm:$0x1]
      %v1389 = vsel %vm410, %v1177, %v1388
      %1390 = vst [vmem:[%s1311 + $0x80] sm:$0x1] %v1389
      %v1391 = vld [vmem:[%s1311 + $0x84] sm:$0xf]
      %v1392 = vsel %vm1313, %v1184, %v1391
      %1393 = vst [vmem:[%s1311 + $0x84] sm:$0xf] %v1392
      %1394 = vst.msk [vmem:[%s1311 + $0x88] sm:$0xf] %vm399, %v1193
      %v1395 = vld [vmem:[%s1311 + $0x8c] sm:$0x1]
      %v1396 = vsel %vm410, %v1194, %v1395
      %1397 = vst [vmem:[%s1311 + $0x8c] sm:$0x1] %v1396
      %v1398 = vld [vmem:[%s1311 + $0x90] sm:$0xf]
      %v1399 = vsel %vm1313, %v1201, %v1398
      %1400 = vst [vmem:[%s1311 + $0x90] sm:$0xf] %v1399
      %1401 = vst.msk [vmem:[%s1311 + $0x94] sm:$0xf] %vm399, %v1210
      %v1402 = vld [vmem:[%s1311 + $0x98] sm:$0x1]
      %v1403 = vsel %vm410, %v1211, %v1402
      %1404 = vst [vmem:[%s1311 + $0x98] sm:$0x1] %v1403
      %v1405 = vld [vmem:[%s1311 + $0x9c] sm:$0xf]
      %v1406 = vsel %vm1313, %v1218, %v1405
      %1407 = vst [vmem:[%s1311 + $0x9c] sm:$0xf] %v1406
      %1408 = vst.msk [vmem:[%s1311 + $0xa0] sm:$0xf] %vm399, %v1227
      %v1409 = vld [vmem:[%s1311 + $0xa4] sm:$0x1]
      %v1410 = vsel %vm410, %v1228, %v1409
      %1411 = vst [vmem:[%s1311 + $0xa4] sm:$0x1] %v1410
      %v1412 = vld [vmem:[%s1311 + $0xa8] sm:$0xf]
      %v1413 = vsel %vm1313, %v1235, %v1412
      %1414 = vst [vmem:[%s1311 + $0xa8] sm:$0xf] %v1413
      %1415 = vst.msk [vmem:[%s1311 + $0xac] sm:$0xf] %vm399, %v1244
      %v1416 = vld [vmem:[%s1311 + $0xb0] sm:$0x1]
      %v1417 = vsel %vm410, %v1245, %v1416
      %1418 = vst [vmem:[%s1311 + $0xb0] sm:$0x1] %v1417
      %v1419 = vld [vmem:[%s1311 + $0xb4] sm:$0xf]
      %v1420 = vsel %vm1313, %v1252, %v1419
      %1421 = vst [vmem:[%s1311 + $0xb4] sm:$0xf] %v1420
      %1422 = vst.msk [vmem:[%s1311 + $0xb8] sm:$0xf] %vm399, %v1261
      %v1423 = vld [vmem:[%s1311 + $0xbc] sm:$0x1]
      %v1424 = vsel %vm410, %v1262, %v1423
      %1425 = vst [vmem:[%s1311 + $0xbc] sm:$0x1] %v1424
      %v1426 = vld [vmem:[#allocation2] sm:$0xf]
      %v1427 = vld [vmem:[#allocation2 + $0x4] sm:$0xf]
      %v1428 = vld [vmem:[#allocation2 + $0xc] sm:$0xf]
      %v1429 = vld [vmem:[#allocation2 + $0x10] sm:$0xf]
      %v1430 = vld [vmem:[#allocation2 + $0x18] sm:$0xf]
      %v1431 = vld [vmem:[#allocation2 + $0x1c] sm:$0xf]
      %v1432 = vld [vmem:[#allocation2 + $0x24] sm:$0xf]
      %v1433 = vld [vmem:[#allocation2 + $0x28] sm:$0xf]
      %v1434 = vld [vmem:[#allocation2 + $0x30] sm:$0xf]
      %v1435 = vld [vmem:[#allocation2 + $0x34] sm:$0xf]
      %v1436 = vld [vmem:[#allocation2 + $0x3c] sm:$0xf]
      %v1437 = vld [vmem:[#allocation2 + $0x40] sm:$0xf]
      %v1438 = vld [vmem:[#allocation2 + $0x48] sm:$0xf]
      %v1439 = vld [vmem:[#allocation2 + $0x4c] sm:$0xf]
      %v1440 = vld [vmem:[#allocation2 + $0x54] sm:$0xf]
      %v1441 = vld [vmem:[#allocation2 + $0x58] sm:$0xf]
      %v1442 = vld [vmem:[#allocation2 + $0x60] sm:$0xf]
      %v1443 = vld [vmem:[#allocation2 + $0x64] sm:$0xf]
      %v1444 = vld [vmem:[#allocation2 + $0x6c] sm:$0xf]
      %v1445 = vld [vmem:[#allocation2 + $0x70] sm:$0xf]
      %v1446 = vld [vmem:[#allocation2 + $0x78] sm:$0xf]
      %v1447 = vld [vmem:[#allocation2 + $0x7c] sm:$0xf]
      %v1448 = vld [vmem:[#allocation2 + $0x84] sm:$0xf]
      %v1449 = vld [vmem:[#allocation2 + $0x88] sm:$0xf]
      %v1450 = vld [vmem:[#allocation2 + $0x90] sm:$0xf]
      %v1451 = vld [vmem:[#allocation2 + $0x94] sm:$0xf]
      %v1452 = vld [vmem:[#allocation2 + $0x9c] sm:$0xf]
      %v1453 = vld [vmem:[#allocation2 + $0xa0] sm:$0xf]
      %v1454 = vld [vmem:[#allocation2 + $0xa8] sm:$0xf]
      %v1455 = vld [vmem:[#allocation2 + $0xac] sm:$0xf]
      %v1456 = vld [vmem:[#allocation2 + $0xb4] sm:$0xf]
      %v1457 = vld [vmem:[#allocation2 + $0xb8] sm:$0xf]
      %v1458 = vld [vmem:[#allocation2 + $0xc0] sm:$0xf]
      %v1459 = vld [vmem:[#allocation2 + $0xc4] sm:$0xf]
      %v1460 = vld [vmem:[#allocation2 + $0xcc] sm:$0xf]
      %v1461 = vld [vmem:[#allocation2 + $0xd0] sm:$0xf]
      %v1462 = vld [vmem:[%s4] sm:$0xf]
      %v1463 = vld [vmem:[%s4 + $0x4] sm:$0xf]
      %s1464 = scalar_lea.vmem %s4, 24
      %v1465 = vld [vmem:[%s1464] sm:$0xf]
      %v1466 = vld [vmem:[%s1464 + $0x4] sm:$0xf]
      %v1499 = vunpack.c.l.b16 %v1428
      %v1500 = vunpack.c.l.b16 %v1429
      %v1501 = vunpack.c.l.b16 %v1430
      %v1502 = vunpack.c.l.b16 %v1431
      %v1503 = vunpack.c.l.b16 %v1432
      %v1504 = vunpack.c.l.b16 %v1433
      %v1505 = vunpack.c.l.b16 %v1434
      %v1506 = vunpack.c.l.b16 %v1435
      %v1507 = vunpack.c.l.b16 %v1436
      %v1508 = vunpack.c.l.b16 %v1437
      %v1509 = vunpack.c.l.b16 %v1438
      %v1510 = vunpack.c.l.b16 %v1439
      %v1511 = vunpack.c.l.b16 %v1440
      %v1512 = vunpack.c.l.b16 %v1441
      %v1513 = vunpack.c.l.b16 %v1442
      %v1514 = vunpack.c.l.b16 %v1443
      %v1515 = vunpack.c.l.b16 %v1444
      %v1516 = vunpack.c.l.b16 %v1445
      %v1517 = vunpack.c.l.b16 %v1446
      %v1518 = vunpack.c.l.b16 %v1447
      %v1519 = vunpack.c.l.b16 %v1448
      %v1520 = vunpack.c.l.b16 %v1449
      %v1521 = vunpack.c.l.b16 %v1450
      %v1522 = vunpack.c.l.b16 %v1451
      %v1523 = vunpack.c.l.b16 %v1452
      %v1524 = vunpack.c.l.b16 %v1453
      %v1525 = vunpack.c.l.b16 %v1454
      %v1526 = vunpack.c.l.b16 %v1455
      %v1527 = vunpack.c.l.b16 %v1456
      %v1528 = vunpack.c.l.b16 %v1457
      %v1529 = vunpack.c.l.b16 %v1458
      %v1530 = vunpack.c.l.b16 %v1459
      %v1531 = vpack.c.b16 %v1500, %v1499
      %v1532 = vpack.c.b16 %v1502, %v1501
      %v1533 = vpack.c.b16 %v1504, %v1503
      %v1534 = vpack.c.b16 %v1506, %v1505
      %v1535 = vpack.c.b16 %v1508, %v1507
      %v1536 = vpack.c.b16 %v1510, %v1509
      %v1537 = vpack.c.b16 %v1512, %v1511
      %v1538 = vpack.c.b16 %v1514, %v1513
      %v1539 = vpack.c.b16 %v1516, %v1515
      %v1540 = vpack.c.b16 %v1518, %v1517
      %v1541 = vpack.c.b16 %v1520, %v1519
      %v1542 = vpack.c.b16 %v1522, %v1521
      %v1543 = vpack.c.b16 %v1524, %v1523
      %v1544 = vpack.c.b16 %v1526, %v1525
      %v1545 = vpack.c.b16 %v1528, %v1527
      %v1546 = vpack.c.b16 %v1530, %v1529
      %v1549 = vunpack.c.l.b16 %v1465
      %v1550 = vunpack.c.l.b16 %v1466
      %v1551 = vpack.c.b16 %v1550, %v1549
      %vm1553 = vcmask 130048
      %v1555 = vsel %vm1553, %v1531, 0
      %v1558 = vsel %vm1553, %v1532, 0
      %v1561 = vsel %vm1553, %v1533, 0
      %v1564 = vsel %vm1553, %v1534, 0
      %v1567 = vsel %vm1553, %v1535, 0
      %v1570 = vsel %vm1553, %v1536, 0
      %v1573 = vsel %vm1553, %v1537, 0
      %v1576 = vsel %vm1553, %v1538, 0
      %v1579 = vsel %vm1553, %v1539, 0
      %v1582 = vsel %vm1553, %v1540, 0
      %v1585 = vsel %vm1553, %v1541, 0
      %v1588 = vsel %vm1553, %v1542, 0
      %v1591 = vsel %vm1553, %v1543, 0
      %v1594 = vsel %vm1553, %v1544, 0
      %v1597 = vsel %vm1553, %v1545, 0
      %v1600 = vsel %vm1553, %v1546, 0
      %1602 = vmatprep.subr.bf16.mxu0 0
      %1603 = vmatpush1.bf16.msra.mxu0 0
      %1604 = vmatprep.subr.bf16.mxu0 0
      %1605 = vmatpush1.bf16.msra.mxu0 0
      %1606 = vmatprep.subr.bf16.mxu0 0
      %1607 = vmatpush1.bf16.msra.mxu0 0
      %1608 = vmatprep.subr.bf16.mxu0 0
      %1609 = vmatpush1.bf16.msra.mxu0 0
      %1610 = vmatprep.subr.bf16.mxu0 0
      %1611 = vmatpush1.bf16.msra.mxu0 0
      %1612 = vmatprep.subr.bf16.mxu0 0
      %1613 = vmatpush1.bf16.msra.mxu0 0
      %1614 = vmatprep.subr.bf16.mxu0 0
      %1615 = vmatpush1.bf16.msra.mxu0 0
      %1616 = vmatprep.subr.bf16.mxu0 0
      %1617 = vmatpush1.bf16.msra.mxu0 %v1551
      %1618 = vmatprep.subr.bf16.mxu0 0
      %1619 = vmatpush2.bf16.msra.mxu0 0
      %1620 = vmatprep.subr.bf16.mxu0 0
      %1621 = vmatpush2.bf16.msra.mxu0 0
      %1622 = vmatprep.subr.bf16.mxu0 0
      %1623 = vmatpush2.bf16.msra.mxu0 0
      %1624 = vmatprep.subr.bf16.mxu0 0
      %1625 = vmatpush2.bf16.msra.mxu0 0
      %1626 = vmatprep.subr.bf16.mxu0 0
      %1627 = vmatpush2.bf16.msra.mxu0 0
      %1628 = vmatprep.subr.bf16.mxu0 0
      %1629 = vmatpush2.bf16.msra.mxu0 0
      %1630 = vmatprep.subr.bf16.mxu0 0
      %1631 = vmatpush2.bf16.msra.mxu0 0
      %1632 = vmatprep.subr.bf16.mxu0 0
      %1633 = vmatpush2.bf16.msra.mxu0 0
      %1634 = vmatprep.mubr.bf16.mxu0 0
      %1635 = vmatmul.mubr.bf16.gmra.mxu0 %v1555
      %v1636 = vpop.f32.mrf.mxu0
      %v1637 = vadd.f32 0.0, %v1636
      %v1638 = vpop.f32.mrf.mxu0
      %v1639 = vpop.f32.mrf.mxu0
      %v1640 = vadd.f32 0.0, %v1639
      %v1641 = vpop.f32.mrf.mxu0
      %1642 = vmatprep.mubr.bf16.mxu0 0
      %1643 = vmatmul.mubr.bf16.gmra.mxu0 %v1558
      %v1644 = vpop.f32.mrf.mxu0
      %v1645 = vadd.f32 0.0, %v1644
      %v1646 = vpop.f32.mrf.mxu0
      %v1647 = vpop.f32.mrf.mxu0
      %v1648 = vadd.f32 0.0, %v1647
      %v1649 = vpop.f32.mrf.mxu0
      %1650 = vmatprep.mubr.bf16.mxu0 0
      %1651 = vmatmul.mubr.bf16.gmra.mxu0 %v1561
      %v1652 = vpop.f32.mrf.mxu0
      %v1653 = vadd.f32 0.0, %v1652
      %v1654 = vpop.f32.mrf.mxu0
      %v1655 = vpop.f32.mrf.mxu0
      %v1656 = vadd.f32 0.0, %v1655
      %v1657 = vpop.f32.mrf.mxu0
      %1658 = vmatprep.mubr.bf16.mxu0 0
      %1659 = vmatmul.mubr.bf16.gmra.mxu0 %v1564
      %v1660 = vpop.f32.mrf.mxu0
      %v1661 = vadd.f32 0.0, %v1660
      %v1662 = vpop.f32.mrf.mxu0
      %v1663 = vpop.f32.mrf.mxu0
      %v1664 = vadd.f32 0.0, %v1663
      %v1665 = vpop.f32.mrf.mxu0
      %1666 = vmatprep.mubr.bf16.mxu0 0
      %1667 = vmatmul.mubr.bf16.gmra.mxu0 %v1567
      %v1668 = vpop.f32.mrf.mxu0
      %v1669 = vadd.f32 0.0, %v1668
      %v1670 = vpop.f32.mrf.mxu0
      %v1671 = vpop.f32.mrf.mxu0
      %v1672 = vadd.f32 0.0, %v1671
      %v1673 = vpop.f32.mrf.mxu0
      %1674 = vmatprep.mubr.bf16.mxu0 0
      %1675 = vmatmul.mubr.bf16.gmra.mxu0 %v1570
      %v1676 = vpop.f32.mrf.mxu0
      %v1677 = vadd.f32 0.0, %v1676
      %v1678 = vpop.f32.mrf.mxu0
      %v1679 = vpop.f32.mrf.mxu0
      %v1680 = vadd.f32 0.0, %v1679
      %v1681 = vpop.f32.mrf.mxu0
      %1682 = vmatprep.mubr.bf16.mxu0 0
      %1683 = vmatmul.mubr.bf16.gmra.mxu0 %v1573
      %v1684 = vpop.f32.mrf.mxu0
      %v1685 = vadd.f32 0.0, %v1684
      %v1686 = vpop.f32.mrf.mxu0
      %v1687 = vpop.f32.mrf.mxu0
      %v1688 = vadd.f32 0.0, %v1687
      %v1689 = vpop.f32.mrf.mxu0
      %1690 = vmatprep.mubr.bf16.mxu0 0
      %1691 = vmatmul.mubr.bf16.gmra.mxu0 %v1576
      %v1692 = vpop.f32.mrf.mxu0
      %v1693 = vadd.f32 0.0, %v1692
      %v1694 = vpop.f32.mrf.mxu0
      %v1695 = vpop.f32.mrf.mxu0
      %v1696 = vadd.f32 0.0, %v1695
      %v1697 = vpop.f32.mrf.mxu0
      %1698 = vmatprep.mubr.bf16.mxu0 0
      %1699 = vmatmul.mubr.bf16.gmra.mxu0 %v1579
      %v1700 = vpop.f32.mrf.mxu0
      %v1701 = vadd.f32 0.0, %v1700
      %v1702 = vpop.f32.mrf.mxu0
      %v1703 = vpop.f32.mrf.mxu0
      %v1704 = vadd.f32 0.0, %v1703
      %v1705 = vpop.f32.mrf.mxu0
      %1706 = vmatprep.mubr.bf16.mxu0 0
      %1707 = vmatmul.mubr.bf16.gmra.mxu0 %v1582
      %v1708 = vpop.f32.mrf.mxu0
      %v1709 = vadd.f32 0.0, %v1708
      %v1710 = vpop.f32.mrf.mxu0
      %v1711 = vpop.f32.mrf.mxu0
      %v1712 = vadd.f32 0.0, %v1711
      %v1713 = vpop.f32.mrf.mxu0
      %1714 = vmatprep.mubr.bf16.mxu0 0
      %1715 = vmatmul.mubr.bf16.gmra.mxu0 %v1585
      %v1716 = vpop.f32.mrf.mxu0
      %v1717 = vadd.f32 0.0, %v1716
      %v1718 = vpop.f32.mrf.mxu0
      %v1719 = vpop.f32.mrf.mxu0
      %v1720 = vadd.f32 0.0, %v1719
      %v1721 = vpop.f32.mrf.mxu0
      %1722 = vmatprep.mubr.bf16.mxu0 0
      %1723 = vmatmul.mubr.bf16.gmra.mxu0 %v1588
      %v1724 = vpop.f32.mrf.mxu0
      %v1725 = vadd.f32 0.0, %v1724
      %v1726 = vpop.f32.mrf.mxu0
      %v1727 = vpop.f32.mrf.mxu0
      %v1728 = vadd.f32 0.0, %v1727
      %v1729 = vpop.f32.mrf.mxu0
      %1730 = vmatprep.mubr.bf16.mxu0 0
      %1731 = vmatmul.mubr.bf16.gmra.mxu0 %v1591
      %v1732 = vpop.f32.mrf.mxu0
      %v1733 = vadd.f32 0.0, %v1732
      %v1734 = vpop.f32.mrf.mxu0
      %v1735 = vpop.f32.mrf.mxu0
      %v1736 = vadd.f32 0.0, %v1735
      %v1737 = vpop.f32.mrf.mxu0
      %1738 = vmatprep.mubr.bf16.mxu0 0
      %1739 = vmatmul.mubr.bf16.gmra.mxu0 %v1594
      %v1740 = vpop.f32.mrf.mxu0
      %v1741 = vadd.f32 0.0, %v1740
      %v1742 = vpop.f32.mrf.mxu0
      %v1743 = vpop.f32.mrf.mxu0
      %v1744 = vadd.f32 0.0, %v1743
      %v1745 = vpop.f32.mrf.mxu0
      %1746 = vmatprep.mubr.bf16.mxu0 0
      %1747 = vmatmul.mubr.bf16.gmra.mxu0 %v1597
      %v1748 = vpop.f32.mrf.mxu0
      %v1749 = vadd.f32 0.0, %v1748
      %v1750 = vpop.f32.mrf.mxu0
      %v1751 = vpop.f32.mrf.mxu0
      %v1752 = vadd.f32 0.0, %v1751
      %v1753 = vpop.f32.mrf.mxu0
      %1754 = vmatprep.mubr.bf16.mxu0 0
      %1755 = vmatmul.mubr.bf16.gmra.mxu0 %v1600
      %v1756 = vpop.f32.mrf.mxu0
      %v1757 = vadd.f32 0.0, %v1756
      %v1758 = vpop.f32.mrf.mxu0
      %v1759 = vpop.f32.mrf.mxu0
      %v1760 = vadd.f32 0.0, %v1759
      %v1761 = vpop.f32.mrf.mxu0
      %1762 = vdwg.mxu0
      %v1765 = vunpack.c.l.b16 %v1426
      %v1766 = vunpack.c.l.b16 %v1427
      %v1767 = vpack.c.b16 %v1766, %v1765
      %v1770 = vunpack.c.l.b16 %v1462
      %v1771 = vunpack.c.l.b16 %v1463
      %v1772 = vpack.c.b16 %v1771, %v1770
      %v1775 = vsel %vm1553, %v1767, 0
      %1777 = vmatprep.subr.bf16.mxu0 0
      %1778 = vmatpush1.bf16.msra.mxu0 0
      %1779 = vmatprep.subr.bf16.mxu0 0
      %1780 = vmatpush1.bf16.msra.mxu0 0
      %1781 = vmatprep.subr.bf16.mxu0 0
      %1782 = vmatpush1.bf16.msra.mxu0 0
      %1783 = vmatprep.subr.bf16.mxu0 0
      %1784 = vmatpush1.bf16.msra.mxu0 0
      %1785 = vmatprep.subr.bf16.mxu0 0
      %1786 = vmatpush1.bf16.msra.mxu0 0
      %1787 = vmatprep.subr.bf16.mxu0 0
      %1788 = vmatpush1.bf16.msra.mxu0 0
      %1789 = vmatprep.subr.bf16.mxu0 0
      %1790 = vmatpush1.bf16.msra.mxu0 0
      %1791 = vmatprep.subr.bf16.mxu0 0
      %1792 = vmatpush1.bf16.msra.mxu0 %v1772
      %1793 = vmatprep.subr.bf16.mxu0 0
      %1794 = vmatpush2.bf16.msra.mxu0 0
      %1795 = vmatprep.subr.bf16.mxu0 0
      %1796 = vmatpush2.bf16.msra.mxu0 0
      %1797 = vmatprep.subr.bf16.mxu0 0
      %1798 = vmatpush2.bf16.msra.mxu0 0
      %1799 = vmatprep.subr.bf16.mxu0 0
      %1800 = vmatpush2.bf16.msra.mxu0 0
      %1801 = vmatprep.subr.bf16.mxu0 0
      %1802 = vmatpush2.bf16.msra.mxu0 0
      %1803 = vmatprep.subr.bf16.mxu0 0
      %1804 = vmatpush2.bf16.msra.mxu0 0
      %1805 = vmatprep.subr.bf16.mxu0 0
      %1806 = vmatpush2.bf16.msra.mxu0 0
      %1807 = vmatprep.subr.bf16.mxu0 0
      %1808 = vmatpush2.bf16.msra.mxu0 0
      %1809 = vmatprep.mubr.bf16.mxu0 0
      %1810 = vmatmul.mubr.bf16.gmra.mxu0 %v1775
      %v1811 = vpop.f32.mrf.mxu0
      %v1812 = vadd.f32 %v1637, %v1811
      %v1813 = vpop.f32.mrf.mxu0
      %v1814 = vpop.f32.mrf.mxu0
      %v1815 = vadd.f32 %v1640, %v1814
      %v1816 = vpop.f32.mrf.mxu0
      %1817 = vmatprep.mubr.bf16.mxu0 0
      %1818 = vmatmul.mubr.bf16.gmra.mxu0 %v1555
      %v1819 = vpop.f32.mrf.mxu0
      %v1820 = vadd.f32 %v1645, %v1819
      %v1821 = vpop.f32.mrf.mxu0
      %v1822 = vpop.f32.mrf.mxu0
      %v1823 = vadd.f32 %v1648, %v1822
      %v1824 = vpop.f32.mrf.mxu0
      %1825 = vmatprep.mubr.bf16.mxu0 0
      %1826 = vmatmul.mubr.bf16.gmra.mxu0 %v1558
      %v1827 = vpop.f32.mrf.mxu0
      %v1828 = vadd.f32 %v1653, %v1827
      %v1829 = vpop.f32.mrf.mxu0
      %v1830 = vpop.f32.mrf.mxu0
      %v1831 = vadd.f32 %v1656, %v1830
      %v1832 = vpop.f32.mrf.mxu0
      %1833 = vmatprep.mubr.bf16.mxu0 0
      %1834 = vmatmul.mubr.bf16.gmra.mxu0 %v1561
      %v1835 = vpop.f32.mrf.mxu0
      %v1836 = vadd.f32 %v1661, %v1835
      %v1837 = vpop.f32.mrf.mxu0
      %v1838 = vpop.f32.mrf.mxu0
      %v1839 = vadd.f32 %v1664, %v1838
      %v1840 = vpop.f32.mrf.mxu0
      %1841 = vmatprep.mubr.bf16.mxu0 0
      %1842 = vmatmul.mubr.bf16.gmra.mxu0 %v1564
      %v1843 = vpop.f32.mrf.mxu0
      %v1844 = vadd.f32 %v1669, %v1843
      %v1845 = vpop.f32.mrf.mxu0
      %v1846 = vpop.f32.mrf.mxu0
      %v1847 = vadd.f32 %v1672, %v1846
      %v1848 = vpop.f32.mrf.mxu0
      %1849 = vmatprep.mubr.bf16.mxu0 0
      %1850 = vmatmul.mubr.bf16.gmra.mxu0 %v1567
      %v1851 = vpop.f32.mrf.mxu0
      %v1852 = vadd.f32 %v1677, %v1851
      %v1853 = vpop.f32.mrf.mxu0
      %v1854 = vpop.f32.mrf.mxu0
      %v1855 = vadd.f32 %v1680, %v1854
      %v1856 = vpop.f32.mrf.mxu0
      %1857 = vmatprep.mubr.bf16.mxu0 0
      %1858 = vmatmul.mubr.bf16.gmra.mxu0 %v1570
      %v1859 = vpop.f32.mrf.mxu0
      %v1860 = vadd.f32 %v1685, %v1859
      %v1861 = vpop.f32.mrf.mxu0
      %v1862 = vpop.f32.mrf.mxu0
      %v1863 = vadd.f32 %v1688, %v1862
      %v1864 = vpop.f32.mrf.mxu0
      %1865 = vmatprep.mubr.bf16.mxu0 0
      %1866 = vmatmul.mubr.bf16.gmra.mxu0 %v1573
      %v1867 = vpop.f32.mrf.mxu0
      %v1868 = vadd.f32 %v1693, %v1867
      %v1869 = vpop.f32.mrf.mxu0
      %v1870 = vpop.f32.mrf.mxu0
      %v1871 = vadd.f32 %v1696, %v1870
      %v1872 = vpop.f32.mrf.mxu0
      %1873 = vmatprep.mubr.bf16.mxu0 0
      %1874 = vmatmul.mubr.bf16.gmra.mxu0 %v1576
      %v1875 = vpop.f32.mrf.mxu0
      %v1876 = vadd.f32 %v1701, %v1875
      %v1877 = vpop.f32.mrf.mxu0
      %v1878 = vpop.f32.mrf.mxu0
      %v1879 = vadd.f32 %v1704, %v1878
      %v1880 = vpop.f32.mrf.mxu0
      %1881 = vmatprep.mubr.bf16.mxu0 0
      %1882 = vmatmul.mubr.bf16.gmra.mxu0 %v1579
      %v1883 = vpop.f32.mrf.mxu0
      %v1884 = vadd.f32 %v1709, %v1883
      %v1885 = vpop.f32.mrf.mxu0
      %v1886 = vpop.f32.mrf.mxu0
      %v1887 = vadd.f32 %v1712, %v1886
      %v1888 = vpop.f32.mrf.mxu0
      %1889 = vmatprep.mubr.bf16.mxu0 0
      %1890 = vmatmul.mubr.bf16.gmra.mxu0 %v1582
      %v1891 = vpop.f32.mrf.mxu0
      %v1892 = vadd.f32 %v1717, %v1891
      %v1893 = vpop.f32.mrf.mxu0
      %v1894 = vpop.f32.mrf.mxu0
      %v1895 = vadd.f32 %v1720, %v1894
      %v1896 = vpop.f32.mrf.mxu0
      %1897 = vmatprep.mubr.bf16.mxu0 0
      %1898 = vmatmul.mubr.bf16.gmra.mxu0 %v1585
      %v1899 = vpop.f32.mrf.mxu0
      %v1900 = vadd.f32 %v1725, %v1899
      %v1901 = vpop.f32.mrf.mxu0
      %v1902 = vpop.f32.mrf.mxu0
      %v1903 = vadd.f32 %v1728, %v1902
      %v1904 = vpop.f32.mrf.mxu0
      %1905 = vmatprep.mubr.bf16.mxu0 0
      %1906 = vmatmul.mubr.bf16.gmra.mxu0 %v1588
      %v1907 = vpop.f32.mrf.mxu0
      %v1908 = vadd.f32 %v1733, %v1907
      %v1909 = vpop.f32.mrf.mxu0
      %v1910 = vpop.f32.mrf.mxu0
      %v1911 = vadd.f32 %v1736, %v1910
      %v1912 = vpop.f32.mrf.mxu0
      %1913 = vmatprep.mubr.bf16.mxu0 0
      %1914 = vmatmul.mubr.bf16.gmra.mxu0 %v1591
      %v1915 = vpop.f32.mrf.mxu0
      %v1916 = vadd.f32 %v1741, %v1915
      %v1917 = vpop.f32.mrf.mxu0
      %v1918 = vpop.f32.mrf.mxu0
      %v1919 = vadd.f32 %v1744, %v1918
      %v1920 = vpop.f32.mrf.mxu0
      %1921 = vmatprep.mubr.bf16.mxu0 0
      %1922 = vmatmul.mubr.bf16.gmra.mxu0 %v1594
      %v1923 = vpop.f32.mrf.mxu0
      %v1924 = vadd.f32 %v1749, %v1923
      %v1925 = vpop.f32.mrf.mxu0
      %v1926 = vpop.f32.mrf.mxu0
      %v1927 = vadd.f32 %v1752, %v1926
      %v1928 = vpop.f32.mrf.mxu0
      %1929 = vmatprep.mubr.bf16.mxu0 0
      %1930 = vmatmul.mubr.bf16.gmra.mxu0 %v1597
      %v1931 = vpop.f32.mrf.mxu0
      %v1932 = vadd.f32 %v1757, %v1931
      %v1933 = vpop.f32.mrf.mxu0
      %v1934 = vpop.f32.mrf.mxu0
      %v1935 = vadd.f32 %v1760, %v1934
      %v1936 = vpop.f32.mrf.mxu0
      %1937 = vdwg.mxu0
      %s1938 = scalar_lea.vmem %s4, 48
      %v1939 = vld [vmem:[%s1938] sm:$0xf]
      %v1940 = vld [vmem:[%s1938 + $0x4] sm:$0xf]
      %v1943 = vunpack.c.l.b16 %v1460
      %v1944 = vunpack.c.l.b16 %v1461
      %v1945 = vpack.c.b16 %v1944, %v1943
      %v1948 = vunpack.c.l.b16 %v1939
      %v1949 = vunpack.c.l.b16 %v1940
      %v1950 = vpack.c.b16 %v1949, %v1948
      %v1953 = vsel %vm1553, %v1945, 0
      %1955 = vmatprep.subr.bf16.mxu0 0
      %1956 = vmatpush1.bf16.msra.mxu0 0
      %1957 = vmatprep.subr.bf16.mxu0 0
      %1958 = vmatpush1.bf16.msra.mxu0 0
      %1959 = vmatprep.subr.bf16.mxu0 0
      %1960 = vmatpush1.bf16.msra.mxu0 0
      %1961 = vmatprep.subr.bf16.mxu0 0
      %1962 = vmatpush1.bf16.msra.mxu0 0
      %1963 = vmatprep.subr.bf16.mxu0 0
      %1964 = vmatpush1.bf16.msra.mxu0 0
      %1965 = vmatprep.subr.bf16.mxu0 0
      %1966 = vmatpush1.bf16.msra.mxu0 0
      %1967 = vmatprep.subr.bf16.mxu0 0
      %1968 = vmatpush1.bf16.msra.mxu0 0
      %1969 = vmatprep.subr.bf16.mxu0 0
      %1970 = vmatpush1.bf16.msra.mxu0 %v1950
      %1971 = vmatprep.subr.bf16.mxu0 0
      %1972 = vmatpush2.bf16.msra.mxu0 0
      %1973 = vmatprep.subr.bf16.mxu0 0
      %1974 = vmatpush2.bf16.msra.mxu0 0
      %1975 = vmatprep.subr.bf16.mxu0 0
      %1976 = vmatpush2.bf16.msra.mxu0 0
      %1977 = vmatprep.subr.bf16.mxu0 0
      %1978 = vmatpush2.bf16.msra.mxu0 0
      %1979 = vmatprep.subr.bf16.mxu0 0
      %1980 = vmatpush2.bf16.msra.mxu0 0
      %1981 = vmatprep.subr.bf16.mxu0 0
      %1982 = vmatpush2.bf16.msra.mxu0 0
      %1983 = vmatprep.subr.bf16.mxu0 0
      %1984 = vmatpush2.bf16.msra.mxu0 0
      %1985 = vmatprep.subr.bf16.mxu0 0
      %1986 = vmatpush2.bf16.msra.mxu0 0
      %1987 = vmatprep.mubr.bf16.mxu0 0
      %1988 = vmatmul.mubr.bf16.gmra.mxu0 %v1558
      %v1989 = vpop.f32.mrf.mxu0
      %v1990 = vadd.f32 0.0, %v1989
      %v1991 = vpop.f32.mrf.mxu0
      %v1992 = vpop.f32.mrf.mxu0
      %v1993 = vadd.f32 0.0, %v1992
      %v1994 = vpop.f32.mrf.mxu0
      %1995 = vmatprep.mubr.bf16.mxu0 0
      %1996 = vmatmul.mubr.bf16.gmra.mxu0 %v1561
      %v1997 = vpop.f32.mrf.mxu0
      %v1998 = vadd.f32 0.0, %v1997
      %v1999 = vpop.f32.mrf.mxu0
      %v2000 = vpop.f32.mrf.mxu0
      %v2001 = vadd.f32 0.0, %v2000
      %v2002 = vpop.f32.mrf.mxu0
      %2003 = vmatprep.mubr.bf16.mxu0 0
      %2004 = vmatmul.mubr.bf16.gmra.mxu0 %v1564
      %v2005 = vpop.f32.mrf.mxu0
      %v2006 = vadd.f32 0.0, %v2005
      %v2007 = vpop.f32.mrf.mxu0
      %v2008 = vpop.f32.mrf.mxu0
      %v2009 = vadd.f32 0.0, %v2008
      %v2010 = vpop.f32.mrf.mxu0
      %2011 = vmatprep.mubr.bf16.mxu0 0
      %2012 = vmatmul.mubr.bf16.gmra.mxu0 %v1567
      %v2013 = vpop.f32.mrf.mxu0
      %v2014 = vadd.f32 0.0, %v2013
      %v2015 = vpop.f32.mrf.mxu0
      %v2016 = vpop.f32.mrf.mxu0
      %v2017 = vadd.f32 0.0, %v2016
      %v2018 = vpop.f32.mrf.mxu0
      %2019 = vmatprep.mubr.bf16.mxu0 0
      %2020 = vmatmul.mubr.bf16.gmra.mxu0 %v1570
      %v2021 = vpop.f32.mrf.mxu0
      %v2022 = vadd.f32 0.0, %v2021
      %v2023 = vpop.f32.mrf.mxu0
      %v2024 = vpop.f32.mrf.mxu0
      %v2025 = vadd.f32 0.0, %v2024
      %v2026 = vpop.f32.mrf.mxu0
      %2027 = vmatprep.mubr.bf16.mxu0 0
      %2028 = vmatmul.mubr.bf16.gmra.mxu0 %v1573
      %v2029 = vpop.f32.mrf.mxu0
      %v2030 = vadd.f32 0.0, %v2029
      %v2031 = vpop.f32.mrf.mxu0
      %v2032 = vpop.f32.mrf.mxu0
      %v2033 = vadd.f32 0.0, %v2032
      %v2034 = vpop.f32.mrf.mxu0
      %2035 = vmatprep.mubr.bf16.mxu0 0
      %2036 = vmatmul.mubr.bf16.gmra.mxu0 %v1576
      %v2037 = vpop.f32.mrf.mxu0
      %v2038 = vadd.f32 0.0, %v2037
      %v2039 = vpop.f32.mrf.mxu0
      %v2040 = vpop.f32.mrf.mxu0
      %v2041 = vadd.f32 0.0, %v2040
      %v2042 = vpop.f32.mrf.mxu0
      %2043 = vmatprep.mubr.bf16.mxu0 0
      %2044 = vmatmul.mubr.bf16.gmra.mxu0 %v1579
      %v2045 = vpop.f32.mrf.mxu0
      %v2046 = vadd.f32 0.0, %v2045
      %v2047 = vpop.f32.mrf.mxu0
      %v2048 = vpop.f32.mrf.mxu0
      %v2049 = vadd.f32 0.0, %v2048
      %v2050 = vpop.f32.mrf.mxu0
      %2051 = vmatprep.mubr.bf16.mxu0 0
      %2052 = vmatmul.mubr.bf16.gmra.mxu0 %v1582
      %v2053 = vpop.f32.mrf.mxu0
      %v2054 = vadd.f32 0.0, %v2053
      %v2055 = vpop.f32.mrf.mxu0
      %v2056 = vpop.f32.mrf.mxu0
      %v2057 = vadd.f32 0.0, %v2056
      %v2058 = vpop.f32.mrf.mxu0
      %2059 = vmatprep.mubr.bf16.mxu0 0
      %2060 = vmatmul.mubr.bf16.gmra.mxu0 %v1585
      %v2061 = vpop.f32.mrf.mxu0
      %v2062 = vadd.f32 0.0, %v2061
      %v2063 = vpop.f32.mrf.mxu0
      %v2064 = vpop.f32.mrf.mxu0
      %v2065 = vadd.f32 0.0, %v2064
      %v2066 = vpop.f32.mrf.mxu0
      %2067 = vmatprep.mubr.bf16.mxu0 0
      %2068 = vmatmul.mubr.bf16.gmra.mxu0 %v1588
      %v2069 = vpop.f32.mrf.mxu0
      %v2070 = vadd.f32 0.0, %v2069
      %v2071 = vpop.f32.mrf.mxu0
      %v2072 = vpop.f32.mrf.mxu0
      %v2073 = vadd.f32 0.0, %v2072
      %v2074 = vpop.f32.mrf.mxu0
      %2075 = vmatprep.mubr.bf16.mxu0 0
      %2076 = vmatmul.mubr.bf16.gmra.mxu0 %v1591
      %v2077 = vpop.f32.mrf.mxu0
      %v2078 = vadd.f32 0.0, %v2077
      %v2079 = vpop.f32.mrf.mxu0
      %v2080 = vpop.f32.mrf.mxu0
      %v2081 = vadd.f32 0.0, %v2080
      %v2082 = vpop.f32.mrf.mxu0
      %2083 = vmatprep.mubr.bf16.mxu0 0
      %2084 = vmatmul.mubr.bf16.gmra.mxu0 %v1594
      %v2085 = vpop.f32.mrf.mxu0
      %v2086 = vadd.f32 0.0, %v2085
      %v2087 = vpop.f32.mrf.mxu0
      %v2088 = vpop.f32.mrf.mxu0
      %v2089 = vadd.f32 0.0, %v2088
      %v2090 = vpop.f32.mrf.mxu0
      %2091 = vmatprep.mubr.bf16.mxu0 0
      %2092 = vmatmul.mubr.bf16.gmra.mxu0 %v1597
      %v2093 = vpop.f32.mrf.mxu0
      %v2094 = vadd.f32 0.0, %v2093
      %v2095 = vpop.f32.mrf.mxu0
      %v2096 = vpop.f32.mrf.mxu0
      %v2097 = vadd.f32 0.0, %v2096
      %v2098 = vpop.f32.mrf.mxu0
      %2099 = vmatprep.mubr.bf16.mxu0 0
      %2100 = vmatmul.mubr.bf16.gmra.mxu0 %v1600
      %v2101 = vpop.f32.mrf.mxu0
      %v2102 = vadd.f32 0.0, %v2101
      %v2103 = vpop.f32.mrf.mxu0
      %v2104 = vpop.f32.mrf.mxu0
      %v2105 = vadd.f32 0.0, %v2104
      %v2106 = vpop.f32.mrf.mxu0
      %2107 = vmatprep.mubr.bf16.mxu0 0
      %2108 = vmatmul.mubr.bf16.gmra.mxu0 %v1953
      %v2109 = vpop.f32.mrf.mxu0
      %v2110 = vadd.f32 0.0, %v2109
      %v2111 = vpop.f32.mrf.mxu0
      %v2112 = vpop.f32.mrf.mxu0
      %v2113 = vadd.f32 0.0, %v2112
      %v2114 = vpop.f32.mrf.mxu0
      %2115 = vdwg.mxu0
      %v2116 = vadd.f32 %v1812, %v1990
      %v2117 = vadd.f32 %v1815, %v1993
      %v2118 = vadd.f32 %v1820, %v1998
      %v2119 = vadd.f32 %v1823, %v2001
      %v2120 = vadd.f32 %v1828, %v2006
      %v2121 = vadd.f32 %v1831, %v2009
      %v2122 = vadd.f32 %v1836, %v2014
      %v2123 = vadd.f32 %v1839, %v2017
      %v2124 = vadd.f32 %v1844, %v2022
      %v2125 = vadd.f32 %v1847, %v2025
      %v2126 = vadd.f32 %v1852, %v2030
      %v2127 = vadd.f32 %v1855, %v2033
      %v2128 = vadd.f32 %v1860, %v2038
      %v2129 = vadd.f32 %v1863, %v2041
      %v2130 = vadd.f32 %v1868, %v2046
      %v2131 = vadd.f32 %v1871, %v2049
      %v2132 = vadd.f32 %v1876, %v2054
      %v2133 = vadd.f32 %v1879, %v2057
      %v2134 = vadd.f32 %v1884, %v2062
      %v2135 = vadd.f32 %v1887, %v2065
      %v2136 = vadd.f32 %v1892, %v2070
      %v2137 = vadd.f32 %v1895, %v2073
      %v2138 = vadd.f32 %v1900, %v2078
      %v2139 = vadd.f32 %v1903, %v2081
      %v2140 = vadd.f32 %v1908, %v2086
      %v2141 = vadd.f32 %v1911, %v2089
      %v2142 = vadd.f32 %v1916, %v2094
      %v2143 = vadd.f32 %v1919, %v2097
      %v2144 = vadd.f32 %v1924, %v2102
      %v2145 = vadd.f32 %v1927, %v2105
      %v2146 = vadd.f32 %v1932, %v2110
      %v2147 = vadd.f32 %v1935, %v2113
      %v2148 = vld [vmem:[#allocation2] sm:$0xf]
      %v2149 = vld [vmem:[#allocation2 + $0x4] sm:$0xf]
      %v2150 = vld [vmem:[#allocation2 + $0x8] sm:$0x1]
      %v2151 = vld [vmem:[#allocation2 + $0xc] sm:$0xf]
      %v2152 = vld [vmem:[#allocation2 + $0x10] sm:$0xf]
      %v2153 = vld [vmem:[#allocation2 + $0x14] sm:$0x1]
      %v2154 = vld [vmem:[#allocation2 + $0x18] sm:$0xf]
      %v2155 = vld [vmem:[#allocation2 + $0x1c] sm:$0xf]
      %v2156 = vld [vmem:[#allocation2 + $0x20] sm:$0x1]
      %v2157 = vld [vmem:[#allocation2 + $0x24] sm:$0xf]
      %v2158 = vld [vmem:[#allocation2 + $0x28] sm:$0xf]
      %v2159 = vld [vmem:[#allocation2 + $0x2c] sm:$0x1]
      %v2160 = vld [vmem:[#allocation2 + $0x30] sm:$0xf]
      %v2161 = vld [vmem:[#allocation2 + $0x34] sm:$0xf]
      %v2162 = vld [vmem:[#allocation2 + $0x38] sm:$0x1]
      %v2163 = vld [vmem:[#allocation2 + $0x3c] sm:$0xf]
      %v2164 = vld [vmem:[#allocation2 + $0x40] sm:$0xf]
      %v2165 = vld [vmem:[#allocation2 + $0x44] sm:$0x1]
      %v2166 = vld [vmem:[#allocation2 + $0x48] sm:$0xf]
      %v2167 = vld [vmem:[#allocation2 + $0x4c] sm:$0xf]
      %v2168 = vld [vmem:[#allocation2 + $0x50] sm:$0x1]
      %v2169 = vld [vmem:[#allocation2 + $0x54] sm:$0xf]
      %v2170 = vld [vmem:[#allocation2 + $0x58] sm:$0xf]
      %v2171 = vld [vmem:[#allocation2 + $0x5c] sm:$0x1]
      %v2172 = vld [vmem:[#allocation2 + $0x60] sm:$0xf]
      %v2173 = vld [vmem:[#allocation2 + $0x64] sm:$0xf]
      %v2174 = vld [vmem:[#allocation2 + $0x68] sm:$0x1]
      %v2175 = vld [vmem:[#allocation2 + $0x6c] sm:$0xf]
      %v2176 = vld [vmem:[#allocation2 + $0x70] sm:$0xf]
      %v2177 = vld [vmem:[#allocation2 + $0x74] sm:$0x1]
      %v2178 = vld [vmem:[#allocation2 + $0x78] sm:$0xf]
      %v2179 = vld [vmem:[#allocation2 + $0x7c] sm:$0xf]
      %v2180 = vld [vmem:[#allocation2 + $0x80] sm:$0x1]
      %v2181 = vld [vmem:[#allocation2 + $0x84] sm:$0xf]
      %v2182 = vld [vmem:[#allocation2 + $0x88] sm:$0xf]
      %v2183 = vld [vmem:[#allocation2 + $0x8c] sm:$0x1]
      %v2184 = vld [vmem:[#allocation2 + $0x90] sm:$0xf]
      %v2185 = vld [vmem:[#allocation2 + $0x94] sm:$0xf]
      %v2186 = vld [vmem:[#allocation2 + $0x98] sm:$0x1]
      %v2187 = vld [vmem:[#allocation2 + $0x9c] sm:$0xf]
      %v2188 = vld [vmem:[#allocation2 + $0xa0] sm:$0xf]
      %v2189 = vld [vmem:[#allocation2 + $0xa4] sm:$0x1]
      %v2190 = vld [vmem:[#allocation2 + $0xa8] sm:$0xf]
      %v2191 = vld [vmem:[#allocation2 + $0xac] sm:$0xf]
      %v2192 = vld [vmem:[#allocation2 + $0xb0] sm:$0x1]
      %v2193 = vld [vmem:[#allocation2 + $0xb4] sm:$0xf]
      %v2194 = vld [vmem:[#allocation2 + $0xb8] sm:$0xf]
      %v2195 = vld [vmem:[#allocation2 + $0xbc] sm:$0x1]
      %v2196 = vld [vmem:[#allocation2 + $0xc0] sm:$0xf]
      %v2197 = vld [vmem:[#allocation2 + $0xc4] sm:$0xf]
      %v2198 = vld [vmem:[#allocation2 + $0xc8] sm:$0x1]
      %v2199 = vld [vmem:[#allocation2 + $0xcc] sm:$0xf]
      %v2200 = vld [vmem:[#allocation2 + $0xd0] sm:$0xf]
      %v2201 = vld [vmem:[#allocation2 + $0xd4] sm:$0x1]
      %vm2202 = vsmask.f32 3328
      %vm2203 = vsmask.f32 7440
      %vm2204 = vmor %vm2202, %vm2203
      %v2206 = vshrl.u32 %v2148, 16
      %v2208 = vrot.slane %v2206, 4
      %v2209 = vshll.u32 %v2148, 16
      %v2211 = vrot.slane %v2209, 5
      %v2212 = vor.u32 %v2208, %v2211
      %v2213 = vrot.slane %v2212, 4
      %v2215 = vshll.u32 %v2149, 16
      %v2217 = vrot.slane %v2215, 5
      %v2218 = vsel %vm2204, %v2213, %v2217
      %v2219 = vshrl.u32 %v2149, 16
      %v2221 = vrot.slane %v2219, 4
      %v2222 = vor.u32 %v2221, %v2217
      %v2223 = vrot.slane %v2222, 4
      %v2225 = vshll.u32 %v2150, 16
      %v2227 = vrot.slane %v2225, 5
      %v2228 = vsel %vm2204, %v2223, %v2227
      %v2230 = vshrl.u32 %v2151, 16
      %v2232 = vrot.slane %v2230, 4
      %v2233 = vshll.u32 %v2151, 16
      %v2235 = vrot.slane %v2233, 5
      %v2236 = vor.u32 %v2232, %v2235
      %v2237 = vrot.slane %v2236, 4
      %v2239 = vshll.u32 %v2152, 16
      %v2241 = vrot.slane %v2239, 5
      %v2242 = vsel %vm2204, %v2237, %v2241
      %v2243 = vshrl.u32 %v2152, 16
      %v2245 = vrot.slane %v2243, 4
      %v2246 = vor.u32 %v2245, %v2241
      %v2247 = vrot.slane %v2246, 4
      %v2249 = vshll.u32 %v2153, 16
      %v2251 = vrot.slane %v2249, 5
      %v2252 = vsel %vm2204, %v2247, %v2251
      %v2254 = vshrl.u32 %v2154, 16
      %v2256 = vrot.slane %v2254, 4
      %v2257 = vshll.u32 %v2154, 16
      %v2259 = vrot.slane %v2257, 5
      %v2260 = vor.u32 %v2256, %v2259
      %v2261 = vrot.slane %v2260, 4
      %v2263 = vshll.u32 %v2155, 16
      %v2265 = vrot.slane %v2263, 5
      %v2266 = vsel %vm2204, %v2261, %v2265
      %v2267 = vshrl.u32 %v2155, 16
      %v2269 = vrot.slane %v2267, 4
      %v2270 = vor.u32 %v2269, %v2265
      %v2271 = vrot.slane %v2270, 4
      %v2273 = vshll.u32 %v2156, 16
      %v2275 = vrot.slane %v2273, 5
      %v2276 = vsel %vm2204, %v2271, %v2275
      %v2278 = vshrl.u32 %v2157, 16
      %v2280 = vrot.slane %v2278, 4
      %v2281 = vshll.u32 %v2157, 16
      %v2283 = vrot.slane %v2281, 5
      %v2284 = vor.u32 %v2280, %v2283
      %v2285 = vrot.slane %v2284, 4
      %v2287 = vshll.u32 %v2158, 16
      %v2289 = vrot.slane %v2287, 5
      %v2290 = vsel %vm2204, %v2285, %v2289
      %v2291 = vshrl.u32 %v2158, 16
      %v2293 = vrot.slane %v2291, 4
      %v2294 = vor.u32 %v2293, %v2289
      %v2295 = vrot.slane %v2294, 4
      %v2297 = vshll.u32 %v2159, 16
      %v2299 = vrot.slane %v2297, 5
      %v2300 = vsel %vm2204, %v2295, %v2299
      %v2302 = vshrl.u32 %v2160, 16
      %v2304 = vrot.slane %v2302, 4
      %v2305 = vshll.u32 %v2160, 16
      %v2307 = vrot.slane %v2305, 5
      %v2308 = vor.u32 %v2304, %v2307
      %v2309 = vrot.slane %v2308, 4
      %v2311 = vshll.u32 %v2161, 16
      %v2313 = vrot.slane %v2311, 5
      %v2314 = vsel %vm2204, %v2309, %v2313
      %v2315 = vshrl.u32 %v2161, 16
      %v2317 = vrot.slane %v2315, 4
      %v2318 = vor.u32 %v2317, %v2313
      %v2319 = vrot.slane %v2318, 4
      %v2321 = vshll.u32 %v2162, 16
      %v2323 = vrot.slane %v2321, 5
      %v2324 = vsel %vm2204, %v2319, %v2323
      %v2326 = vshrl.u32 %v2163, 16
      %v2328 = vrot.slane %v2326, 4
      %v2329 = vshll.u32 %v2163, 16
      %v2331 = vrot.slane %v2329, 5
      %v2332 = vor.u32 %v2328, %v2331
      %v2333 = vrot.slane %v2332, 4
      %v2335 = vshll.u32 %v2164, 16
      %v2337 = vrot.slane %v2335, 5
      %v2338 = vsel %vm2204, %v2333, %v2337
      %v2339 = vshrl.u32 %v2164, 16
      %v2341 = vrot.slane %v2339, 4
      %v2342 = vor.u32 %v2341, %v2337
      %v2343 = vrot.slane %v2342, 4
      %v2345 = vshll.u32 %v2165, 16
      %v2347 = vrot.slane %v2345, 5
      %v2348 = vsel %vm2204, %v2343, %v2347
      %v2350 = vshrl.u32 %v2166, 16
      %v2352 = vrot.slane %v2350, 4
      %v2353 = vshll.u32 %v2166, 16
      %v2355 = vrot.slane %v2353, 5
      %v2356 = vor.u32 %v2352, %v2355
      %v2357 = vrot.slane %v2356, 4
      %v2359 = vshll.u32 %v2167, 16
      %v2361 = vrot.slane %v2359, 5
      %v2362 = vsel %vm2204, %v2357, %v2361
      %v2363 = vshrl.u32 %v2167, 16
      %v2365 = vrot.slane %v2363, 4
      %v2366 = vor.u32 %v2365, %v2361
      %v2367 = vrot.slane %v2366, 4
      %v2369 = vshll.u32 %v2168, 16
      %v2371 = vrot.slane %v2369, 5
      %v2372 = vsel %vm2204, %v2367, %v2371
      %v2374 = vshrl.u32 %v2169, 16
      %v2376 = vrot.slane %v2374, 4
      %v2377 = vshll.u32 %v2169, 16
      %v2379 = vrot.slane %v2377, 5
      %v2380 = vor.u32 %v2376, %v2379
      %v2381 = vrot.slane %v2380, 4
      %v2383 = vshll.u32 %v2170, 16
      %v2385 = vrot.slane %v2383, 5
      %v2386 = vsel %vm2204, %v2381, %v2385
      %v2387 = vshrl.u32 %v2170, 16
      %v2389 = vrot.slane %v2387, 4
      %v2390 = vor.u32 %v2389, %v2385
      %v2391 = vrot.slane %v2390, 4
      %v2393 = vshll.u32 %v2171, 16
      %v2395 = vrot.slane %v2393, 5
      %v2396 = vsel %vm2204, %v2391, %v2395
      %v2398 = vshrl.u32 %v2172, 16
      %v2400 = vrot.slane %v2398, 4
      %v2401 = vshll.u32 %v2172, 16
      %v2403 = vrot.slane %v2401, 5
      %v2404 = vor.u32 %v2400, %v2403
      %v2405 = vrot.slane %v2404, 4
      %v2407 = vshll.u32 %v2173, 16
      %v2409 = vrot.slane %v2407, 5
      %v2410 = vsel %vm2204, %v2405, %v2409
      %v2411 = vshrl.u32 %v2173, 16
      %v2413 = vrot.slane %v2411, 4
      %v2414 = vor.u32 %v2413, %v2409
      %v2415 = vrot.slane %v2414, 4
      %v2417 = vshll.u32 %v2174, 16
      %v2419 = vrot.slane %v2417, 5
      %v2420 = vsel %vm2204, %v2415, %v2419
      %v2422 = vshrl.u32 %v2175, 16
      %v2424 = vrot.slane %v2422, 4
      %v2425 = vshll.u32 %v2175, 16
      %v2427 = vrot.slane %v2425, 5
      %v2428 = vor.u32 %v2424, %v2427
      %v2429 = vrot.slane %v2428, 4
      %v2431 = vshll.u32 %v2176, 16
      %v2433 = vrot.slane %v2431, 5
      %v2434 = vsel %vm2204, %v2429, %v2433
      %v2435 = vshrl.u32 %v2176, 16
      %v2437 = vrot.slane %v2435, 4
      %v2438 = vor.u32 %v2437, %v2433
      %v2439 = vrot.slane %v2438, 4
      %v2441 = vshll.u32 %v2177, 16
      %v2443 = vrot.slane %v2441, 5
      %v2444 = vsel %vm2204, %v2439, %v2443
      %v2446 = vshrl.u32 %v2178, 16
      %v2448 = vrot.slane %v2446, 4
      %v2449 = vshll.u32 %v2178, 16
      %v2451 = vrot.slane %v2449, 5
      %v2452 = vor.u32 %v2448, %v2451
      %v2453 = vrot.slane %v2452, 4
      %v2455 = vshll.u32 %v2179, 16
      %v2457 = vrot.slane %v2455, 5
      %v2458 = vsel %vm2204, %v2453, %v2457
      %v2459 = vshrl.u32 %v2179, 16
      %v2461 = vrot.slane %v2459, 4
      %v2462 = vor.u32 %v2461, %v2457
      %v2463 = vrot.slane %v2462, 4
      %v2465 = vshll.u32 %v2180, 16
      %v2467 = vrot.slane %v2465, 5
      %v2468 = vsel %vm2204, %v2463, %v2467
      %v2470 = vshrl.u32 %v2181, 16
      %v2472 = vrot.slane %v2470, 4
      %v2473 = vshll.u32 %v2181, 16
      %v2475 = vrot.slane %v2473, 5
      %v2476 = vor.u32 %v2472, %v2475
      %v2477 = vrot.slane %v2476, 4
      %v2479 = vshll.u32 %v2182, 16
      %v2481 = vrot.slane %v2479, 5
      %v2482 = vsel %vm2204, %v2477, %v2481
      %v2483 = vshrl.u32 %v2182, 16
      %v2485 = vrot.slane %v2483, 4
      %v2486 = vor.u32 %v2485, %v2481
      %v2487 = vrot.slane %v2486, 4
      %v2489 = vshll.u32 %v2183, 16
      %v2491 = vrot.slane %v2489, 5
      %v2492 = vsel %vm2204, %v2487, %v2491
      %v2494 = vshrl.u32 %v2184, 16
      %v2496 = vrot.slane %v2494, 4
      %v2497 = vshll.u32 %v2184, 16
      %v2499 = vrot.slane %v2497, 5
      %v2500 = vor.u32 %v2496, %v2499
      %v2501 = vrot.slane %v2500, 4
      %v2503 = vshll.u32 %v2185, 16
      %v2505 = vrot.slane %v2503, 5
      %v2506 = vsel %vm2204, %v2501, %v2505
      %v2507 = vshrl.u32 %v2185, 16
      %v2509 = vrot.slane %v2507, 4
      %v2510 = vor.u32 %v2509, %v2505
      %v2511 = vrot.slane %v2510, 4
      %v2513 = vshll.u32 %v2186, 16
      %v2515 = vrot.slane %v2513, 5
      %v2516 = vsel %vm2204, %v2511, %v2515
      %v2518 = vshrl.u32 %v2187, 16
      %v2520 = vrot.slane %v2518, 4
      %v2521 = vshll.u32 %v2187, 16
      %v2523 = vrot.slane %v2521, 5
      %v2524 = vor.u32 %v2520, %v2523
      %v2525 = vrot.slane %v2524, 4
      %v2527 = vshll.u32 %v2188, 16
      %v2529 = vrot.slane %v2527, 5
      %v2530 = vsel %vm2204, %v2525, %v2529
      %v2531 = vshrl.u32 %v2188, 16
      %v2533 = vrot.slane %v2531, 4
      %v2534 = vor.u32 %v2533, %v2529
      %v2535 = vrot.slane %v2534, 4
      %v2537 = vshll.u32 %v2189, 16
      %v2539 = vrot.slane %v2537, 5
      %v2540 = vsel %vm2204, %v2535, %v2539
      %v2542 = vshrl.u32 %v2190, 16
      %v2544 = vrot.slane %v2542, 4
      %v2545 = vshll.u32 %v2190, 16
      %v2547 = vrot.slane %v2545, 5
      %v2548 = vor.u32 %v2544, %v2547
      %v2549 = vrot.slane %v2548, 4
      %v2551 = vshll.u32 %v2191, 16
      %v2553 = vrot.slane %v2551, 5
      %v2554 = vsel %vm2204, %v2549, %v2553
      %v2555 = vshrl.u32 %v2191, 16
      %v2557 = vrot.slane %v2555, 4
      %v2558 = vor.u32 %v2557, %v2553
      %v2559 = vrot.slane %v2558, 4
      %v2561 = vshll.u32 %v2192, 16
      %v2563 = vrot.slane %v2561, 5
      %v2564 = vsel %vm2204, %v2559, %v2563
      %v2566 = vshrl.u32 %v2193, 16
      %v2568 = vrot.slane %v2566, 4
      %v2569 = vshll.u32 %v2193, 16
      %v2571 = vrot.slane %v2569, 5
      %v2572 = vor.u32 %v2568, %v2571
      %v2573 = vrot.slane %v2572, 4
      %v2575 = vshll.u32 %v2194, 16
      %v2577 = vrot.slane %v2575, 5
      %v2578 = vsel %vm2204, %v2573, %v2577
      %v2579 = vshrl.u32 %v2194, 16
      %v2581 = vrot.slane %v2579, 4
      %v2582 = vor.u32 %v2581, %v2577
      %v2583 = vrot.slane %v2582, 4
      %v2585 = vshll.u32 %v2195, 16
      %v2587 = vrot.slane %v2585, 5
      %v2588 = vsel %vm2204, %v2583, %v2587
      %s2589 = scalar_lea.vmem %s4, 8
      %v2590 = vld [vmem:[%s2589] sm:$0xf]
      %v2591 = vld [vmem:[%s2589 + $0x4] sm:$0xf]
      %v2592 = vunpack.c.l.b16 %v2218
      %v2593 = vunpack.c.l.b16 %v2228
      %v2594 = vunpack.c.l.b16 %v2242
      %v2595 = vunpack.c.l.b16 %v2252
      %v2596 = vunpack.c.l.b16 %v2266
      %v2597 = vunpack.c.l.b16 %v2276
      %v2598 = vunpack.c.l.b16 %v2290
      %v2599 = vunpack.c.l.b16 %v2300
      %v2600 = vunpack.c.l.b16 %v2314
      %v2601 = vunpack.c.l.b16 %v2324
      %v2602 = vunpack.c.l.b16 %v2338
      %v2603 = vunpack.c.l.b16 %v2348
      %v2604 = vunpack.c.l.b16 %v2362
      %v2605 = vunpack.c.l.b16 %v2372
      %v2606 = vunpack.c.l.b16 %v2386
      %v2607 = vunpack.c.l.b16 %v2396
      %v2608 = vunpack.c.l.b16 %v2410
      %v2609 = vunpack.c.l.b16 %v2420
      %v2610 = vunpack.c.l.b16 %v2434
      %v2611 = vunpack.c.l.b16 %v2444
      %v2612 = vunpack.c.l.b16 %v2458
      %v2613 = vunpack.c.l.b16 %v2468
      %v2614 = vunpack.c.l.b16 %v2482
      %v2615 = vunpack.c.l.b16 %v2492
      %v2616 = vunpack.c.l.b16 %v2506
      %v2617 = vunpack.c.l.b16 %v2516
      %v2618 = vunpack.c.l.b16 %v2530
      %v2619 = vunpack.c.l.b16 %v2540
      %v2620 = vunpack.c.l.b16 %v2554
      %v2621 = vunpack.c.l.b16 %v2564
      %v2622 = vunpack.c.l.b16 %v2578
      %v2623 = vunpack.c.l.b16 %v2588
      %v2624 = vpack.c.b16 %v2593, %v2592
      %v2625 = vpack.c.b16 %v2595, %v2594
      %v2626 = vpack.c.b16 %v2597, %v2596
      %v2627 = vpack.c.b16 %v2599, %v2598
      %v2628 = vpack.c.b16 %v2601, %v2600
      %v2629 = vpack.c.b16 %v2603, %v2602
      %v2630 = vpack.c.b16 %v2605, %v2604
      %v2631 = vpack.c.b16 %v2607, %v2606
      %v2632 = vpack.c.b16 %v2609, %v2608
      %v2633 = vpack.c.b16 %v2611, %v2610
      %v2634 = vpack.c.b16 %v2613, %v2612
      %v2635 = vpack.c.b16 %v2615, %v2614
      %v2636 = vpack.c.b16 %v2617, %v2616
      %v2637 = vpack.c.b16 %v2619, %v2618
      %v2638 = vpack.c.b16 %v2621, %v2620
      %v2639 = vpack.c.b16 %v2623, %v2622
      %v2642 = vunpack.c.l.b16 %v2590
      %v2643 = vunpack.c.l.b16 %v2591
      %v2644 = vpack.c.b16 %v2643, %v2642
      %v2647 = vsel %vm1553, %v2624, 0
      %v2650 = vsel %vm1553, %v2625, 0
      %v2653 = vsel %vm1553, %v2626, 0
      %v2656 = vsel %vm1553, %v2627, 0
      %v2659 = vsel %vm1553, %v2628, 0
      %v2662 = vsel %vm1553, %v2629, 0
      %v2665 = vsel %vm1553, %v2630, 0
      %v2668 = vsel %vm1553, %v2631, 0
      %v2671 = vsel %vm1553, %v2632, 0
      %v2674 = vsel %vm1553, %v2633, 0
      %v2677 = vsel %vm1553, %v2634, 0
      %v2680 = vsel %vm1553, %v2635, 0
      %v2683 = vsel %vm1553, %v2636, 0
      %v2686 = vsel %vm1553, %v2637, 0
      %v2689 = vsel %vm1553, %v2638, 0
      %v2692 = vsel %vm1553, %v2639, 0
      %2694 = vmatprep.subr.bf16.mxu0 0
      %2695 = vmatpush1.bf16.msra.mxu0 0
      %2696 = vmatprep.subr.bf16.mxu0 0
      %2697 = vmatpush1.bf16.msra.mxu0 0
      %2698 = vmatprep.subr.bf16.mxu0 0
      %2699 = vmatpush1.bf16.msra.mxu0 0
      %2700 = vmatprep.subr.bf16.mxu0 0
      %2701 = vmatpush1.bf16.msra.mxu0 0
      %2702 = vmatprep.subr.bf16.mxu0 0
      %2703 = vmatpush1.bf16.msra.mxu0 0
      %2704 = vmatprep.subr.bf16.mxu0 0
      %2705 = vmatpush1.bf16.msra.mxu0 0
      %2706 = vmatprep.subr.bf16.mxu0 0
      %2707 = vmatpush1.bf16.msra.mxu0 0
      %2708 = vmatprep.subr.bf16.mxu0 0
      %2709 = vmatpush1.bf16.msra.mxu0 %v2644
      %2710 = vmatprep.subr.bf16.mxu0 0
      %2711 = vmatpush2.bf16.msra.mxu0 0
      %2712 = vmatprep.subr.bf16.mxu0 0
      %2713 = vmatpush2.bf16.msra.mxu0 0
      %2714 = vmatprep.subr.bf16.mxu0 0
      %2715 = vmatpush2.bf16.msra.mxu0 0
      %2716 = vmatprep.subr.bf16.mxu0 0
      %2717 = vmatpush2.bf16.msra.mxu0 0
      %2718 = vmatprep.subr.bf16.mxu0 0
      %2719 = vmatpush2.bf16.msra.mxu0 0
      %2720 = vmatprep.subr.bf16.mxu0 0
      %2721 = vmatpush2.bf16.msra.mxu0 0
      %2722 = vmatprep.subr.bf16.mxu0 0
      %2723 = vmatpush2.bf16.msra.mxu0 0
      %2724 = vmatprep.subr.bf16.mxu0 0
      %2725 = vmatpush2.bf16.msra.mxu0 0
      %2726 = vmatprep.mubr.bf16.mxu0 0
      %2727 = vmatmul.mubr.bf16.gmra.mxu0 %v2647
      %v2728 = vpop.f32.mrf.mxu0
      %v2729 = vadd.f32 0.0, %v2728
      %v2730 = vpop.f32.mrf.mxu0
      %v2731 = vpop.f32.mrf.mxu0
      %v2732 = vadd.f32 0.0, %v2731
      %v2733 = vpop.f32.mrf.mxu0
      %2734 = vmatprep.mubr.bf16.mxu0 0
      %2735 = vmatmul.mubr.bf16.gmra.mxu0 %v2650
      %v2736 = vpop.f32.mrf.mxu0
      %v2737 = vadd.f32 0.0, %v2736
      %v2738 = vpop.f32.mrf.mxu0
      %v2739 = vpop.f32.mrf.mxu0
      %v2740 = vadd.f32 0.0, %v2739
      %v2741 = vpop.f32.mrf.mxu0
      %2742 = vmatprep.mubr.bf16.mxu0 0
      %2743 = vmatmul.mubr.bf16.gmra.mxu0 %v2653
      %v2744 = vpop.f32.mrf.mxu0
      %v2745 = vadd.f32 0.0, %v2744
      %v2746 = vpop.f32.mrf.mxu0
      %v2747 = vpop.f32.mrf.mxu0
      %v2748 = vadd.f32 0.0, %v2747
      %v2749 = vpop.f32.mrf.mxu0
      %2750 = vmatprep.mubr.bf16.mxu0 0
      %2751 = vmatmul.mubr.bf16.gmra.mxu0 %v2656
      %v2752 = vpop.f32.mrf.mxu0
      %v2753 = vadd.f32 0.0, %v2752
      %v2754 = vpop.f32.mrf.mxu0
      %v2755 = vpop.f32.mrf.mxu0
      %v2756 = vadd.f32 0.0, %v2755
      %v2757 = vpop.f32.mrf.mxu0
      %2758 = vmatprep.mubr.bf16.mxu0 0
      %2759 = vmatmul.mubr.bf16.gmra.mxu0 %v2659
      %v2760 = vpop.f32.mrf.mxu0
      %v2761 = vadd.f32 0.0, %v2760
      %v2762 = vpop.f32.mrf.mxu0
      %v2763 = vpop.f32.mrf.mxu0
      %v2764 = vadd.f32 0.0, %v2763
      %v2765 = vpop.f32.mrf.mxu0
      %2766 = vmatprep.mubr.bf16.mxu0 0
      %2767 = vmatmul.mubr.bf16.gmra.mxu0 %v2662
      %v2768 = vpop.f32.mrf.mxu0
      %v2769 = vadd.f32 0.0, %v2768
      %v2770 = vpop.f32.mrf.mxu0
      %v2771 = vpop.f32.mrf.mxu0
      %v2772 = vadd.f32 0.0, %v2771
      %v2773 = vpop.f32.mrf.mxu0
      %2774 = vmatprep.mubr.bf16.mxu0 0
      %2775 = vmatmul.mubr.bf16.gmra.mxu0 %v2665
      %v2776 = vpop.f32.mrf.mxu0
      %v2777 = vadd.f32 0.0, %v2776
      %v2778 = vpop.f32.mrf.mxu0
      %v2779 = vpop.f32.mrf.mxu0
      %v2780 = vadd.f32 0.0, %v2779
      %v2781 = vpop.f32.mrf.mxu0
      %2782 = vmatprep.mubr.bf16.mxu0 0
      %2783 = vmatmul.mubr.bf16.gmra.mxu0 %v2668
      %v2784 = vpop.f32.mrf.mxu0
      %v2785 = vadd.f32 0.0, %v2784
      %v2786 = vpop.f32.mrf.mxu0
      %v2787 = vpop.f32.mrf.mxu0
      %v2788 = vadd.f32 0.0, %v2787
      %v2789 = vpop.f32.mrf.mxu0
      %2790 = vmatprep.mubr.bf16.mxu0 0
      %2791 = vmatmul.mubr.bf16.gmra.mxu0 %v2671
      %v2792 = vpop.f32.mrf.mxu0
      %v2793 = vadd.f32 0.0, %v2792
      %v2794 = vpop.f32.mrf.mxu0
      %v2795 = vpop.f32.mrf.mxu0
      %v2796 = vadd.f32 0.0, %v2795
      %v2797 = vpop.f32.mrf.mxu0
      %2798 = vmatprep.mubr.bf16.mxu0 0
      %2799 = vmatmul.mubr.bf16.gmra.mxu0 %v2674
      %v2800 = vpop.f32.mrf.mxu0
      %v2801 = vadd.f32 0.0, %v2800
      %v2802 = vpop.f32.mrf.mxu0
      %v2803 = vpop.f32.mrf.mxu0
      %v2804 = vadd.f32 0.0, %v2803
      %v2805 = vpop.f32.mrf.mxu0
      %2806 = vmatprep.mubr.bf16.mxu0 0
      %2807 = vmatmul.mubr.bf16.gmra.mxu0 %v2677
      %v2808 = vpop.f32.mrf.mxu0
      %v2809 = vadd.f32 0.0, %v2808
      %v2810 = vpop.f32.mrf.mxu0
      %v2811 = vpop.f32.mrf.mxu0
      %v2812 = vadd.f32 0.0, %v2811
      %v2813 = vpop.f32.mrf.mxu0
      %2814 = vmatprep.mubr.bf16.mxu0 0
      %2815 = vmatmul.mubr.bf16.gmra.mxu0 %v2680
      %v2816 = vpop.f32.mrf.mxu0
      %v2817 = vadd.f32 0.0, %v2816
      %v2818 = vpop.f32.mrf.mxu0
      %v2819 = vpop.f32.mrf.mxu0
      %v2820 = vadd.f32 0.0, %v2819
      %v2821 = vpop.f32.mrf.mxu0
      %2822 = vmatprep.mubr.bf16.mxu0 0
      %2823 = vmatmul.mubr.bf16.gmra.mxu0 %v2683
      %v2824 = vpop.f32.mrf.mxu0
      %v2825 = vadd.f32 0.0, %v2824
      %v2826 = vpop.f32.mrf.mxu0
      %v2827 = vpop.f32.mrf.mxu0
      %v2828 = vadd.f32 0.0, %v2827
      %v2829 = vpop.f32.mrf.mxu0
      %2830 = vmatprep.mubr.bf16.mxu0 0
      %2831 = vmatmul.mubr.bf16.gmra.mxu0 %v2686
      %v2832 = vpop.f32.mrf.mxu0
      %v2833 = vadd.f32 0.0, %v2832
      %v2834 = vpop.f32.mrf.mxu0
      %v2835 = vpop.f32.mrf.mxu0
      %v2836 = vadd.f32 0.0, %v2835
      %v2837 = vpop.f32.mrf.mxu0
      %2838 = vmatprep.mubr.bf16.mxu0 0
      %2839 = vmatmul.mubr.bf16.gmra.mxu0 %v2689
      %v2840 = vpop.f32.mrf.mxu0
      %v2841 = vadd.f32 0.0, %v2840
      %v2842 = vpop.f32.mrf.mxu0
      %v2843 = vpop.f32.mrf.mxu0
      %v2844 = vadd.f32 0.0, %v2843
      %v2845 = vpop.f32.mrf.mxu0
      %2846 = vmatprep.mubr.bf16.mxu0 0
      %2847 = vmatmul.mubr.bf16.gmra.mxu0 %v2692
      %v2848 = vpop.f32.mrf.mxu0
      %v2849 = vadd.f32 0.0, %v2848
      %v2850 = vpop.f32.mrf.mxu0
      %v2851 = vpop.f32.mrf.mxu0
      %v2852 = vadd.f32 0.0, %v2851
      %v2853 = vpop.f32.mrf.mxu0
      %2854 = vdwg.mxu0
      %v2855 = vadd.f32 %v2116, %v2729
      %v2856 = vadd.f32 %v2117, %v2732
      %v2857 = vadd.f32 %v2118, %v2737
      %v2858 = vadd.f32 %v2119, %v2740
      %v2859 = vadd.f32 %v2120, %v2745
      %v2860 = vadd.f32 %v2121, %v2748
      %v2861 = vadd.f32 %v2122, %v2753
      %v2862 = vadd.f32 %v2123, %v2756
      %v2863 = vadd.f32 %v2124, %v2761
      %v2864 = vadd.f32 %v2125, %v2764
      %v2865 = vadd.f32 %v2126, %v2769
      %v2866 = vadd.f32 %v2127, %v2772
      %v2867 = vadd.f32 %v2128, %v2777
      %v2868 = vadd.f32 %v2129, %v2780
      %v2869 = vadd.f32 %v2130, %v2785
      %v2870 = vadd.f32 %v2131, %v2788
      %v2871 = vadd.f32 %v2132, %v2793
      %v2872 = vadd.f32 %v2133, %v2796
      %v2873 = vadd.f32 %v2134, %v2801
      %v2874 = vadd.f32 %v2135, %v2804
      %v2875 = vadd.f32 %v2136, %v2809
      %v2876 = vadd.f32 %v2137, %v2812
      %v2877 = vadd.f32 %v2138, %v2817
      %v2878 = vadd.f32 %v2139, %v2820
      %v2879 = vadd.f32 %v2140, %v2825
      %v2880 = vadd.f32 %v2141, %v2828
      %v2881 = vadd.f32 %v2142, %v2833
      %v2882 = vadd.f32 %v2143, %v2836
      %v2883 = vadd.f32 %v2144, %v2841
      %v2884 = vadd.f32 %v2145, %v2844
      %v2885 = vadd.f32 %v2146, %v2849
      %v2886 = vadd.f32 %v2147, %v2852
      %v2888 = vshrl.u32 %v2196, 16
      %v2890 = vrot.slane %v2888, 4
      %v2891 = vshll.u32 %v2196, 16
      %v2893 = vrot.slane %v2891, 5
      %v2894 = vor.u32 %v2890, %v2893
      %v2895 = vrot.slane %v2894, 4
      %v2897 = vshll.u32 %v2197, 16
      %v2899 = vrot.slane %v2897, 5
      %v2900 = vsel %vm2204, %v2895, %v2899
      %v2901 = vshrl.u32 %v2197, 16
      %v2903 = vrot.slane %v2901, 4
      %v2904 = vor.u32 %v2903, %v2899
      %v2905 = vrot.slane %v2904, 4
      %v2907 = vshll.u32 %v2198, 16
      %v2909 = vrot.slane %v2907, 5
      %v2910 = vsel %vm2204, %v2905, %v2909
      %s2911 = scalar_lea.vmem %s4, 32
      %v2912 = vld [vmem:[%s2911] sm:$0xf]
      %v2913 = vld [vmem:[%s2911 + $0x4] sm:$0xf]
      %v2914 = vunpack.c.l.b16 %v2900
      %v2915 = vunpack.c.l.b16 %v2910
      %v2916 = vpack.c.b16 %v2915, %v2914
      %v2919 = vunpack.c.l.b16 %v2912
      %v2920 = vunpack.c.l.b16 %v2913
      %v2921 = vpack.c.b16 %v2920, %v2919
      %v2924 = vsel %vm1553, %v2916, 0
      %2926 = vmatprep.subr.bf16.mxu0 0
      %2927 = vmatpush1.bf16.msra.mxu0 0
      %2928 = vmatprep.subr.bf16.mxu0 0
      %2929 = vmatpush1.bf16.msra.mxu0 0
      %2930 = vmatprep.subr.bf16.mxu0 0
      %2931 = vmatpush1.bf16.msra.mxu0 0
      %2932 = vmatprep.subr.bf16.mxu0 0
      %2933 = vmatpush1.bf16.msra.mxu0 0
      %2934 = vmatprep.subr.bf16.mxu0 0
      %2935 = vmatpush1.bf16.msra.mxu0 0
      %2936 = vmatprep.subr.bf16.mxu0 0
      %2937 = vmatpush1.bf16.msra.mxu0 0
      %2938 = vmatprep.subr.bf16.mxu0 0
      %2939 = vmatpush1.bf16.msra.mxu0 0
      %2940 = vmatprep.subr.bf16.mxu0 0
      %2941 = vmatpush1.bf16.msra.mxu0 %v2921
      %2942 = vmatprep.subr.bf16.mxu0 0
      %2943 = vmatpush2.bf16.msra.mxu0 0
      %2944 = vmatprep.subr.bf16.mxu0 0
      %2945 = vmatpush2.bf16.msra.mxu0 0
      %2946 = vmatprep.subr.bf16.mxu0 0
      %2947 = vmatpush2.bf16.msra.mxu0 0
      %2948 = vmatprep.subr.bf16.mxu0 0
      %2949 = vmatpush2.bf16.msra.mxu0 0
      %2950 = vmatprep.subr.bf16.mxu0 0
      %2951 = vmatpush2.bf16.msra.mxu0 0
      %2952 = vmatprep.subr.bf16.mxu0 0
      %2953 = vmatpush2.bf16.msra.mxu0 0
      %2954 = vmatprep.subr.bf16.mxu0 0
      %2955 = vmatpush2.bf16.msra.mxu0 0
      %2956 = vmatprep.subr.bf16.mxu0 0
      %2957 = vmatpush2.bf16.msra.mxu0 0
      %2958 = vmatprep.mubr.bf16.mxu0 0
      %2959 = vmatmul.mubr.bf16.gmra.mxu0 %v2650
      %v2960 = vpop.f32.mrf.mxu0
      %v2961 = vadd.f32 0.0, %v2960
      %v2962 = vpop.f32.mrf.mxu0
      %v2963 = vpop.f32.mrf.mxu0
      %v2964 = vadd.f32 0.0, %v2963
      %v2965 = vpop.f32.mrf.mxu0
      %2966 = vmatprep.mubr.bf16.mxu0 0
      %2967 = vmatmul.mubr.bf16.gmra.mxu0 %v2653
      %v2968 = vpop.f32.mrf.mxu0
      %v2969 = vadd.f32 0.0, %v2968
      %v2970 = vpop.f32.mrf.mxu0
      %v2971 = vpop.f32.mrf.mxu0
      %v2972 = vadd.f32 0.0, %v2971
      %v2973 = vpop.f32.mrf.mxu0
      %2974 = vmatprep.mubr.bf16.mxu0 0
      %2975 = vmatmul.mubr.bf16.gmra.mxu0 %v2656
      %v2976 = vpop.f32.mrf.mxu0
      %v2977 = vadd.f32 0.0, %v2976
      %v2978 = vpop.f32.mrf.mxu0
      %v2979 = vpop.f32.mrf.mxu0
      %v2980 = vadd.f32 0.0, %v2979
      %v2981 = vpop.f32.mrf.mxu0
      %2982 = vmatprep.mubr.bf16.mxu0 0
      %2983 = vmatmul.mubr.bf16.gmra.mxu0 %v2659
      %v2984 = vpop.f32.mrf.mxu0
      %v2985 = vadd.f32 0.0, %v2984
      %v2986 = vpop.f32.mrf.mxu0
      %v2987 = vpop.f32.mrf.mxu0
      %v2988 = vadd.f32 0.0, %v2987
      %v2989 = vpop.f32.mrf.mxu0
      %2990 = vmatprep.mubr.bf16.mxu0 0
      %2991 = vmatmul.mubr.bf16.gmra.mxu0 %v2662
      %v2992 = vpop.f32.mrf.mxu0
      %v2993 = vadd.f32 0.0, %v2992
      %v2994 = vpop.f32.mrf.mxu0
      %v2995 = vpop.f32.mrf.mxu0
      %v2996 = vadd.f32 0.0, %v2995
      %v2997 = vpop.f32.mrf.mxu0
      %2998 = vmatprep.mubr.bf16.mxu0 0
      %2999 = vmatmul.mubr.bf16.gmra.mxu0 %v2665
      %v3000 = vpop.f32.mrf.mxu0
      %v3001 = vadd.f32 0.0, %v3000
      %v3002 = vpop.f32.mrf.mxu0
      %v3003 = vpop.f32.mrf.mxu0
      %v3004 = vadd.f32 0.0, %v3003
      %v3005 = vpop.f32.mrf.mxu0
      %3006 = vmatprep.mubr.bf16.mxu0 0
      %3007 = vmatmul.mubr.bf16.gmra.mxu0 %v2668
      %v3008 = vpop.f32.mrf.mxu0
      %v3009 = vadd.f32 0.0, %v3008
      %v3010 = vpop.f32.mrf.mxu0
      %v3011 = vpop.f32.mrf.mxu0
      %v3012 = vadd.f32 0.0, %v3011
      %v3013 = vpop.f32.mrf.mxu0
      %3014 = vmatprep.mubr.bf16.mxu0 0
      %3015 = vmatmul.mubr.bf16.gmra.mxu0 %v2671
      %v3016 = vpop.f32.mrf.mxu0
      %v3017 = vadd.f32 0.0, %v3016
      %v3018 = vpop.f32.mrf.mxu0
      %v3019 = vpop.f32.mrf.mxu0
      %v3020 = vadd.f32 0.0, %v3019
      %v3021 = vpop.f32.mrf.mxu0
      %3022 = vmatprep.mubr.bf16.mxu0 0
      %3023 = vmatmul.mubr.bf16.gmra.mxu0 %v2674
      %v3024 = vpop.f32.mrf.mxu0
      %v3025 = vadd.f32 0.0, %v3024
      %v3026 = vpop.f32.mrf.mxu0
      %v3027 = vpop.f32.mrf.mxu0
      %v3028 = vadd.f32 0.0, %v3027
      %v3029 = vpop.f32.mrf.mxu0
      %3030 = vmatprep.mubr.bf16.mxu0 0
      %3031 = vmatmul.mubr.bf16.gmra.mxu0 %v2677
      %v3032 = vpop.f32.mrf.mxu0
      %v3033 = vadd.f32 0.0, %v3032
      %v3034 = vpop.f32.mrf.mxu0
      %v3035 = vpop.f32.mrf.mxu0
      %v3036 = vadd.f32 0.0, %v3035
      %v3037 = vpop.f32.mrf.mxu0
      %3038 = vmatprep.mubr.bf16.mxu0 0
      %3039 = vmatmul.mubr.bf16.gmra.mxu0 %v2680
      %v3040 = vpop.f32.mrf.mxu0
      %v3041 = vadd.f32 0.0, %v3040
      %v3042 = vpop.f32.mrf.mxu0
      %v3043 = vpop.f32.mrf.mxu0
      %v3044 = vadd.f32 0.0, %v3043
      %v3045 = vpop.f32.mrf.mxu0
      %3046 = vmatprep.mubr.bf16.mxu0 0
      %3047 = vmatmul.mubr.bf16.gmra.mxu0 %v2683
      %v3048 = vpop.f32.mrf.mxu0
      %v3049 = vadd.f32 0.0, %v3048
      %v3050 = vpop.f32.mrf.mxu0
      %v3051 = vpop.f32.mrf.mxu0
      %v3052 = vadd.f32 0.0, %v3051
      %v3053 = vpop.f32.mrf.mxu0
      %3054 = vmatprep.mubr.bf16.mxu0 0
      %3055 = vmatmul.mubr.bf16.gmra.mxu0 %v2686
      %v3056 = vpop.f32.mrf.mxu0
      %v3057 = vadd.f32 0.0, %v3056
      %v3058 = vpop.f32.mrf.mxu0
      %v3059 = vpop.f32.mrf.mxu0
      %v3060 = vadd.f32 0.0, %v3059
      %v3061 = vpop.f32.mrf.mxu0
      %3062 = vmatprep.mubr.bf16.mxu0 0
      %3063 = vmatmul.mubr.bf16.gmra.mxu0 %v2689
      %v3064 = vpop.f32.mrf.mxu0
      %v3065 = vadd.f32 0.0, %v3064
      %v3066 = vpop.f32.mrf.mxu0
      %v3067 = vpop.f32.mrf.mxu0
      %v3068 = vadd.f32 0.0, %v3067
      %v3069 = vpop.f32.mrf.mxu0
      %3070 = vmatprep.mubr.bf16.mxu0 0
      %3071 = vmatmul.mubr.bf16.gmra.mxu0 %v2692
      %v3072 = vpop.f32.mrf.mxu0
      %v3073 = vadd.f32 0.0, %v3072
      %v3074 = vpop.f32.mrf.mxu0
      %v3075 = vpop.f32.mrf.mxu0
      %v3076 = vadd.f32 0.0, %v3075
      %v3077 = vpop.f32.mrf.mxu0
      %3078 = vmatprep.mubr.bf16.mxu0 0
      %3079 = vmatmul.mubr.bf16.gmra.mxu0 %v2924
      %v3080 = vpop.f32.mrf.mxu0
      %v3081 = vadd.f32 0.0, %v3080
      %v3082 = vpop.f32.mrf.mxu0
      %v3083 = vpop.f32.mrf.mxu0
      %v3084 = vadd.f32 0.0, %v3083
      %v3085 = vpop.f32.mrf.mxu0
      %3086 = vdwg.mxu0
      %v3087 = vadd.f32 %v2855, %v2961
      %v3088 = vadd.f32 %v2856, %v2964
      %v3089 = vadd.f32 %v2857, %v2969
      %v3090 = vadd.f32 %v2858, %v2972
      %v3091 = vadd.f32 %v2859, %v2977
      %v3092 = vadd.f32 %v2860, %v2980
      %v3093 = vadd.f32 %v2861, %v2985
      %v3094 = vadd.f32 %v2862, %v2988
      %v3095 = vadd.f32 %v2863, %v2993
      %v3096 = vadd.f32 %v2864, %v2996
      %v3097 = vadd.f32 %v2865, %v3001
      %v3098 = vadd.f32 %v2866, %v3004
      %v3099 = vadd.f32 %v2867, %v3009
      %v3100 = vadd.f32 %v2868, %v3012
      %v3101 = vadd.f32 %v2869, %v3017
      %v3102 = vadd.f32 %v2870, %v3020
      %v3103 = vadd.f32 %v2871, %v3025
      %v3104 = vadd.f32 %v2872, %v3028
      %v3105 = vadd.f32 %v2873, %v3033
      %v3106 = vadd.f32 %v2874, %v3036
      %v3107 = vadd.f32 %v2875, %v3041
      %v3108 = vadd.f32 %v2876, %v3044
      %v3109 = vadd.f32 %v2877, %v3049
      %v3110 = vadd.f32 %v2878, %v3052
      %v3111 = vadd.f32 %v2879, %v3057
      %v3112 = vadd.f32 %v2880, %v3060
      %v3113 = vadd.f32 %v2881, %v3065
      %v3114 = vadd.f32 %v2882, %v3068
      %v3115 = vadd.f32 %v2883, %v3073
      %v3116 = vadd.f32 %v2884, %v3076
      %v3117 = vadd.f32 %v2885, %v3081
      %v3118 = vadd.f32 %v2886, %v3084
      %v3120 = vshrl.u32 %v2199, 16
      %v3122 = vrot.slane %v3120, 4
      %v3123 = vshll.u32 %v2199, 16
      %v3125 = vrot.slane %v3123, 5
      %v3126 = vor.u32 %v3122, %v3125
      %v3127 = vrot.slane %v3126, 4
      %v3129 = vshll.u32 %v2200, 16
      %v3131 = vrot.slane %v3129, 5
      %v3132 = vsel %vm2204, %v3127, %v3131
      %v3133 = vshrl.u32 %v2200, 16
      %v3135 = vrot.slane %v3133, 4
      %v3136 = vor.u32 %v3135, %v3131
      %v3137 = vrot.slane %v3136, 4
      %v3139 = vshll.u32 %v2201, 16
      %v3141 = vrot.slane %v3139, 5
      %v3142 = vsel %vm2204, %v3137, %v3141
      %s3143 = scalar_lea.vmem %s4, 56
      %v3144 = vld [vmem:[%s3143] sm:$0xf]
      %v3145 = vld [vmem:[%s3143 + $0x4] sm:$0xf]
      %v3146 = vunpack.c.l.b16 %v3132
      %v3147 = vunpack.c.l.b16 %v3142
      %v3148 = vpack.c.b16 %v3147, %v3146
      %v3151 = vunpack.c.l.b16 %v3144
      %v3152 = vunpack.c.l.b16 %v3145
      %v3153 = vpack.c.b16 %v3152, %v3151
      %v3156 = vsel %vm1553, %v3148, 0
      %3158 = vmatprep.subr.bf16.mxu0 0
      %3159 = vmatpush1.bf16.msra.mxu0 0
      %3160 = vmatprep.subr.bf16.mxu0 0
      %3161 = vmatpush1.bf16.msra.mxu0 0
      %3162 = vmatprep.subr.bf16.mxu0 0
      %3163 = vmatpush1.bf16.msra.mxu0 0
      %3164 = vmatprep.subr.bf16.mxu0 0
      %3165 = vmatpush1.bf16.msra.mxu0 0
      %3166 = vmatprep.subr.bf16.mxu0 0
      %3167 = vmatpush1.bf16.msra.mxu0 0
      %3168 = vmatprep.subr.bf16.mxu0 0
      %3169 = vmatpush1.bf16.msra.mxu0 0
      %3170 = vmatprep.subr.bf16.mxu0 0
      %3171 = vmatpush1.bf16.msra.mxu0 0
      %3172 = vmatprep.subr.bf16.mxu0 0
      %3173 = vmatpush1.bf16.msra.mxu0 %v3153
      %3174 = vmatprep.subr.bf16.mxu0 0
      %3175 = vmatpush2.bf16.msra.mxu0 0
      %3176 = vmatprep.subr.bf16.mxu0 0
      %3177 = vmatpush2.bf16.msra.mxu0 0
      %3178 = vmatprep.subr.bf16.mxu0 0
      %3179 = vmatpush2.bf16.msra.mxu0 0
      %3180 = vmatprep.subr.bf16.mxu0 0
      %3181 = vmatpush2.bf16.msra.mxu0 0
      %3182 = vmatprep.subr.bf16.mxu0 0
      %3183 = vmatpush2.bf16.msra.mxu0 0
      %3184 = vmatprep.subr.bf16.mxu0 0
      %3185 = vmatpush2.bf16.msra.mxu0 0
      %3186 = vmatprep.subr.bf16.mxu0 0
      %3187 = vmatpush2.bf16.msra.mxu0 0
      %3188 = vmatprep.subr.bf16.mxu0 0
      %3189 = vmatpush2.bf16.msra.mxu0 0
      %3190 = vmatprep.mubr.bf16.mxu0 0
      %3191 = vmatmul.mubr.bf16.gmra.mxu0 %v2653
      %v3192 = vpop.f32.mrf.mxu0
      %v3193 = vadd.f32 0.0, %v3192
      %v3194 = vpop.f32.mrf.mxu0
      %v3195 = vpop.f32.mrf.mxu0
      %v3196 = vadd.f32 0.0, %v3195
      %v3197 = vpop.f32.mrf.mxu0
      %3198 = vmatprep.mubr.bf16.mxu0 0
      %3199 = vmatmul.mubr.bf16.gmra.mxu0 %v2656
      %v3200 = vpop.f32.mrf.mxu0
      %v3201 = vadd.f32 0.0, %v3200
      %v3202 = vpop.f32.mrf.mxu0
      %v3203 = vpop.f32.mrf.mxu0
      %v3204 = vadd.f32 0.0, %v3203
      %v3205 = vpop.f32.mrf.mxu0
      %3206 = vmatprep.mubr.bf16.mxu0 0
      %3207 = vmatmul.mubr.bf16.gmra.mxu0 %v2659
      %v3208 = vpop.f32.mrf.mxu0
      %v3209 = vadd.f32 0.0, %v3208
      %v3210 = vpop.f32.mrf.mxu0
      %v3211 = vpop.f32.mrf.mxu0
      %v3212 = vadd.f32 0.0, %v3211
      %v3213 = vpop.f32.mrf.mxu0
      %3214 = vmatprep.mubr.bf16.mxu0 0
      %3215 = vmatmul.mubr.bf16.gmra.mxu0 %v2662
      %v3216 = vpop.f32.mrf.mxu0
      %v3217 = vadd.f32 0.0, %v3216
      %v3218 = vpop.f32.mrf.mxu0
      %v3219 = vpop.f32.mrf.mxu0
      %v3220 = vadd.f32 0.0, %v3219
      %v3221 = vpop.f32.mrf.mxu0
      %3222 = vmatprep.mubr.bf16.mxu0 0
      %3223 = vmatmul.mubr.bf16.gmra.mxu0 %v2665
      %v3224 = vpop.f32.mrf.mxu0
      %v3225 = vadd.f32 0.0, %v3224
      %v3226 = vpop.f32.mrf.mxu0
      %v3227 = vpop.f32.mrf.mxu0
      %v3228 = vadd.f32 0.0, %v3227
      %v3229 = vpop.f32.mrf.mxu0
      %3230 = vmatprep.mubr.bf16.mxu0 0
      %3231 = vmatmul.mubr.bf16.gmra.mxu0 %v2668
      %v3232 = vpop.f32.mrf.mxu0
      %v3233 = vadd.f32 0.0, %v3232
      %v3234 = vpop.f32.mrf.mxu0
      %v3235 = vpop.f32.mrf.mxu0
      %v3236 = vadd.f32 0.0, %v3235
      %v3237 = vpop.f32.mrf.mxu0
      %3238 = vmatprep.mubr.bf16.mxu0 0
      %3239 = vmatmul.mubr.bf16.gmra.mxu0 %v2671
      %v3240 = vpop.f32.mrf.mxu0
      %v3241 = vadd.f32 0.0, %v3240
      %v3242 = vpop.f32.mrf.mxu0
      %v3243 = vpop.f32.mrf.mxu0
      %v3244 = vadd.f32 0.0, %v3243
      %v3245 = vpop.f32.mrf.mxu0
      %3246 = vmatprep.mubr.bf16.mxu0 0
      %3247 = vmatmul.mubr.bf16.gmra.mxu0 %v2674
      %v3248 = vpop.f32.mrf.mxu0
      %v3249 = vadd.f32 0.0, %v3248
      %v3250 = vpop.f32.mrf.mxu0
      %v3251 = vpop.f32.mrf.mxu0
      %v3252 = vadd.f32 0.0, %v3251
      %v3253 = vpop.f32.mrf.mxu0
      %3254 = vmatprep.mubr.bf16.mxu0 0
      %3255 = vmatmul.mubr.bf16.gmra.mxu0 %v2677
      %v3256 = vpop.f32.mrf.mxu0
      %v3257 = vadd.f32 0.0, %v3256
      %v3258 = vpop.f32.mrf.mxu0
      %v3259 = vpop.f32.mrf.mxu0
      %v3260 = vadd.f32 0.0, %v3259
      %v3261 = vpop.f32.mrf.mxu0
      %3262 = vmatprep.mubr.bf16.mxu0 0
      %3263 = vmatmul.mubr.bf16.gmra.mxu0 %v2680
      %v3264 = vpop.f32.mrf.mxu0
      %v3265 = vadd.f32 0.0, %v3264
      %v3266 = vpop.f32.mrf.mxu0
      %v3267 = vpop.f32.mrf.mxu0
      %v3268 = vadd.f32 0.0, %v3267
      %v3269 = vpop.f32.mrf.mxu0
      %3270 = vmatprep.mubr.bf16.mxu0 0
      %3271 = vmatmul.mubr.bf16.gmra.mxu0 %v2683
      %v3272 = vpop.f32.mrf.mxu0
      %v3273 = vadd.f32 0.0, %v3272
      %v3274 = vpop.f32.mrf.mxu0
      %v3275 = vpop.f32.mrf.mxu0
      %v3276 = vadd.f32 0.0, %v3275
      %v3277 = vpop.f32.mrf.mxu0
      %3278 = vmatprep.mubr.bf16.mxu0 0
      %3279 = vmatmul.mubr.bf16.gmra.mxu0 %v2686
      %v3280 = vpop.f32.mrf.mxu0
      %v3281 = vadd.f32 0.0, %v3280
      %v3282 = vpop.f32.mrf.mxu0
      %v3283 = vpop.f32.mrf.mxu0
      %v3284 = vadd.f32 0.0, %v3283
      %v3285 = vpop.f32.mrf.mxu0
      %3286 = vmatprep.mubr.bf16.mxu0 0
      %3287 = vmatmul.mubr.bf16.gmra.mxu0 %v2689
      %v3288 = vpop.f32.mrf.mxu0
      %v3289 = vadd.f32 0.0, %v3288
      %v3290 = vpop.f32.mrf.mxu0
      %v3291 = vpop.f32.mrf.mxu0
      %v3292 = vadd.f32 0.0, %v3291
      %v3293 = vpop.f32.mrf.mxu0
      %3294 = vmatprep.mubr.bf16.mxu0 0
      %3295 = vmatmul.mubr.bf16.gmra.mxu0 %v2692
      %v3296 = vpop.f32.mrf.mxu0
      %v3297 = vadd.f32 0.0, %v3296
      %v3298 = vpop.f32.mrf.mxu0
      %v3299 = vpop.f32.mrf.mxu0
      %v3300 = vadd.f32 0.0, %v3299
      %v3301 = vpop.f32.mrf.mxu0
      %3302 = vmatprep.mubr.bf16.mxu0 0
      %3303 = vmatmul.mubr.bf16.gmra.mxu0 %v2924
      %v3304 = vpop.f32.mrf.mxu0
      %v3305 = vadd.f32 0.0, %v3304
      %v3306 = vpop.f32.mrf.mxu0
      %v3307 = vpop.f32.mrf.mxu0
      %v3308 = vadd.f32 0.0, %v3307
      %v3309 = vpop.f32.mrf.mxu0
      %3310 = vmatprep.mubr.bf16.mxu0 0
      %3311 = vmatmul.mubr.bf16.gmra.mxu0 %v3156
      %v3312 = vpop.f32.mrf.mxu0
      %v3313 = vadd.f32 0.0, %v3312
      %v3314 = vpop.f32.mrf.mxu0
      %v3315 = vpop.f32.mrf.mxu0
      %v3316 = vadd.f32 0.0, %v3315
      %v3317 = vpop.f32.mrf.mxu0
      %3318 = vdwg.mxu0
      %v3319 = vadd.f32 %v3087, %v3193
      %v3320 = vadd.f32 %v3088, %v3196
      %v3321 = vadd.f32 %v3089, %v3201
      %v3322 = vadd.f32 %v3090, %v3204
      %v3323 = vadd.f32 %v3091, %v3209
      %v3324 = vadd.f32 %v3092, %v3212
      %v3325 = vadd.f32 %v3093, %v3217
      %v3326 = vadd.f32 %v3094, %v3220
      %v3327 = vadd.f32 %v3095, %v3225
      %v3328 = vadd.f32 %v3096, %v3228
      %v3329 = vadd.f32 %v3097, %v3233
      %v3330 = vadd.f32 %v3098, %v3236
      %v3331 = vadd.f32 %v3099, %v3241
      %v3332 = vadd.f32 %v3100, %v3244
      %v3333 = vadd.f32 %v3101, %v3249
      %v3334 = vadd.f32 %v3102, %v3252
      %v3335 = vadd.f32 %v3103, %v3257
      %v3336 = vadd.f32 %v3104, %v3260
      %v3337 = vadd.f32 %v3105, %v3265
      %v3338 = vadd.f32 %v3106, %v3268
      %v3339 = vadd.f32 %v3107, %v3273
      %v3340 = vadd.f32 %v3108, %v3276
      %v3341 = vadd.f32 %v3109, %v3281
      %v3342 = vadd.f32 %v3110, %v3284
      %v3343 = vadd.f32 %v3111, %v3289
      %v3344 = vadd.f32 %v3112, %v3292
      %v3345 = vadd.f32 %v3113, %v3297
      %v3346 = vadd.f32 %v3114, %v3300
      %v3347 = vadd.f32 %v3115, %v3305
      %v3348 = vadd.f32 %v3116, %v3308
      %v3349 = vadd.f32 %v3117, %v3313
      %v3350 = vadd.f32 %v3118, %v3316
      %v3351 = vld [vmem:[#allocation2] sm:$0xe]
      %v3352 = vld [vmem:[#allocation2 + $0xc] sm:$0xe]
      %v3353 = vld [vmem:[#allocation2 + $0x18] sm:$0xe]
      %v3354 = vld [vmem:[#allocation2 + $0x24] sm:$0xe]
      %v3355 = vld [vmem:[#allocation2 + $0x30] sm:$0xe]
      %v3356 = vld [vmem:[#allocation2 + $0x3c] sm:$0xe]
      %v3357 = vld [vmem:[#allocation2 + $0x48] sm:$0xe]
      %v3358 = vld [vmem:[#allocation2 + $0x54] sm:$0xe]
      %v3359 = vld [vmem:[#allocation2 + $0x60] sm:$0xe]
      %v3360 = vld [vmem:[#allocation2 + $0x6c] sm:$0xe]
      %v3361 = vld [vmem:[#allocation2 + $0x78] sm:$0xe]
      %v3362 = vld [vmem:[#allocation2 + $0x84] sm:$0xe]
      %v3363 = vld [vmem:[#allocation2 + $0x90] sm:$0xe]
      %v3364 = vld [vmem:[#allocation2 + $0x9c] sm:$0xe]
      %v3365 = vld [vmem:[#allocation2 + $0xa8] sm:$0xe]
      %v3366 = vld [vmem:[#allocation2 + $0xb4] sm:$0xe]
      %v3367 = vld [vmem:[#allocation2 + $0xc0] sm:$0xe]
      %v3368 = vld [vmem:[#allocation2 + $0xcc] sm:$0xe]
      %vm3417 = vcmask 1042432
      %vm3418 = vcmask 1046532
      %vm3419 = vmor %vm3417, %vm3418
      %v3420 = vrot.slane %v3351, 5
      %v3421 = vrot.slane %v3420, 4
      %v3422 = vrot.slane %v2149, 5
      %v3423 = vsel %vm3419, %v3421, %v3422
      %v3424 = vrot.slane %v3422, 4
      %v3425 = vrot.slane %v2150, 5
      %v3426 = vsel %vm3419, %v3424, %v3425
      %v3427 = vrot.slane %v3352, 5
      %v3428 = vrot.slane %v3427, 4
      %v3429 = vrot.slane %v2152, 5
      %v3430 = vsel %vm3419, %v3428, %v3429
      %v3431 = vrot.slane %v3429, 4
      %v3432 = vrot.slane %v2153, 5
      %v3433 = vsel %vm3419, %v3431, %v3432
      %v3434 = vrot.slane %v3353, 5
      %v3435 = vrot.slane %v3434, 4
      %v3436 = vrot.slane %v2155, 5
      %v3437 = vsel %vm3419, %v3435, %v3436
      %v3438 = vrot.slane %v3436, 4
      %v3439 = vrot.slane %v2156, 5
      %v3440 = vsel %vm3419, %v3438, %v3439
      %v3441 = vrot.slane %v3354, 5
      %v3442 = vrot.slane %v3441, 4
      %v3443 = vrot.slane %v2158, 5
      %v3444 = vsel %vm3419, %v3442, %v3443
      %v3445 = vrot.slane %v3443, 4
      %v3446 = vrot.slane %v2159, 5
      %v3447 = vsel %vm3419, %v3445, %v3446
      %v3448 = vrot.slane %v3355, 5
      %v3449 = vrot.slane %v3448, 4
      %v3450 = vrot.slane %v2161, 5
      %v3451 = vsel %vm3419, %v3449, %v3450
      %v3452 = vrot.slane %v3450, 4
      %v3453 = vrot.slane %v2162, 5
      %v3454 = vsel %vm3419, %v3452, %v3453
      %v3455 = vrot.slane %v3356, 5
      %v3456 = vrot.slane %v3455, 4
      %v3457 = vrot.slane %v2164, 5
      %v3458 = vsel %vm3419, %v3456, %v3457
      %v3459 = vrot.slane %v3457, 4
      %v3460 = vrot.slane %v2165, 5
      %v3461 = vsel %vm3419, %v3459, %v3460
      %v3462 = vrot.slane %v3357, 5
      %v3463 = vrot.slane %v3462, 4
      %v3464 = vrot.slane %v2167, 5
      %v3465 = vsel %vm3419, %v3463, %v3464
      %v3466 = vrot.slane %v3464, 4
      %v3467 = vrot.slane %v2168, 5
      %v3468 = vsel %vm3419, %v3466, %v3467
      %v3469 = vrot.slane %v3358, 5
      %v3470 = vrot.slane %v3469, 4
      %v3471 = vrot.slane %v2170, 5
      %v3472 = vsel %vm3419, %v3470, %v3471
      %v3473 = vrot.slane %v3471, 4
      %v3474 = vrot.slane %v2171, 5
      %v3475 = vsel %vm3419, %v3473, %v3474
      %v3476 = vrot.slane %v3359, 5
      %v3477 = vrot.slane %v3476, 4
      %v3478 = vrot.slane %v2173, 5
      %v3479 = vsel %vm3419, %v3477, %v3478
      %v3480 = vrot.slane %v3478, 4
      %v3481 = vrot.slane %v2174, 5
      %v3482 = vsel %vm3419, %v3480, %v3481
      %v3483 = vrot.slane %v3360, 5
      %v3484 = vrot.slane %v3483, 4
      %v3485 = vrot.slane %v2176, 5
      %v3486 = vsel %vm3419, %v3484, %v3485
      %v3487 = vrot.slane %v3485, 4
      %v3488 = vrot.slane %v2177, 5
      %v3489 = vsel %vm3419, %v3487, %v3488
      %v3490 = vrot.slane %v3361, 5
      %v3491 = vrot.slane %v3490, 4
      %v3492 = vrot.slane %v2179, 5
      %v3493 = vsel %vm3419, %v3491, %v3492
      %v3494 = vrot.slane %v3492, 4
      %v3495 = vrot.slane %v2180, 5
      %v3496 = vsel %vm3419, %v3494, %v3495
      %v3497 = vrot.slane %v3362, 5
      %v3498 = vrot.slane %v3497, 4
      %v3499 = vrot.slane %v2182, 5
      %v3500 = vsel %vm3419, %v3498, %v3499
      %v3501 = vrot.slane %v3499, 4
      %v3502 = vrot.slane %v2183, 5
      %v3503 = vsel %vm3419, %v3501, %v3502
      %v3504 = vrot.slane %v3363, 5
      %v3505 = vrot.slane %v3504, 4
      %v3506 = vrot.slane %v2185, 5
      %v3507 = vsel %vm3419, %v3505, %v3506
      %v3508 = vrot.slane %v3506, 4
      %v3509 = vrot.slane %v2186, 5
      %v3510 = vsel %vm3419, %v3508, %v3509
      %v3511 = vrot.slane %v3364, 5
      %v3512 = vrot.slane %v3511, 4
      %v3513 = vrot.slane %v2188, 5
      %v3514 = vsel %vm3419, %v3512, %v3513
      %v3515 = vrot.slane %v3513, 4
      %v3516 = vrot.slane %v2189, 5
      %v3517 = vsel %vm3419, %v3515, %v3516
      %v3518 = vrot.slane %v3365, 5
      %v3519 = vrot.slane %v3518, 4
      %v3520 = vrot.slane %v2191, 5
      %v3521 = vsel %vm3419, %v3519, %v3520
      %v3522 = vrot.slane %v3520, 4
      %v3523 = vrot.slane %v2192, 5
      %v3524 = vsel %vm3419, %v3522, %v3523
      %v3525 = vrot.slane %v3366, 5
      %v3526 = vrot.slane %v3525, 4
      %v3527 = vrot.slane %v2194, 5
      %v3528 = vsel %vm3419, %v3526, %v3527
      %v3529 = vrot.slane %v3527, 4
      %v3530 = vrot.slane %v2195, 5
      %v3531 = vsel %vm3419, %v3529, %v3530
      %s3532 = scalar_lea.vmem %s4, 16
      %v3533 = vld [vmem:[%s3532] sm:$0xf]
      %v3534 = vld [vmem:[%s3532 + $0x4] sm:$0xf]
      %v3535 = vunpack.c.l.b16 %v3423
      %v3536 = vunpack.c.l.b16 %v3426
      %v3537 = vunpack.c.l.b16 %v3430
      %v3538 = vunpack.c.l.b16 %v3433
      %v3539 = vunpack.c.l.b16 %v3437
      %v3540 = vunpack.c.l.b16 %v3440
      %v3541 = vunpack.c.l.b16 %v3444
      %v3542 = vunpack.c.l.b16 %v3447
      %v3543 = vunpack.c.l.b16 %v3451
      %v3544 = vunpack.c.l.b16 %v3454
      %v3545 = vunpack.c.l.b16 %v3458
      %v3546 = vunpack.c.l.b16 %v3461
      %v3547 = vunpack.c.l.b16 %v3465
      %v3548 = vunpack.c.l.b16 %v3468
      %v3549 = vunpack.c.l.b16 %v3472
      %v3550 = vunpack.c.l.b16 %v3475
      %v3551 = vunpack.c.l.b16 %v3479
      %v3552 = vunpack.c.l.b16 %v3482
      %v3553 = vunpack.c.l.b16 %v3486
      %v3554 = vunpack.c.l.b16 %v3489
      %v3555 = vunpack.c.l.b16 %v3493
      %v3556 = vunpack.c.l.b16 %v3496
      %v3557 = vunpack.c.l.b16 %v3500
      %v3558 = vunpack.c.l.b16 %v3503
      %v3559 = vunpack.c.l.b16 %v3507
      %v3560 = vunpack.c.l.b16 %v3510
      %v3561 = vunpack.c.l.b16 %v3514
      %v3562 = vunpack.c.l.b16 %v3517
      %v3563 = vunpack.c.l.b16 %v3521
      %v3564 = vunpack.c.l.b16 %v3524
      %v3565 = vunpack.c.l.b16 %v3528
      %v3566 = vunpack.c.l.b16 %v3531
      %v3567 = vpack.c.b16 %v3536, %v3535
      %v3568 = vpack.c.b16 %v3538, %v3537
      %v3569 = vpack.c.b16 %v3540, %v3539
      %v3570 = vpack.c.b16 %v3542, %v3541
      %v3571 = vpack.c.b16 %v3544, %v3543
      %v3572 = vpack.c.b16 %v3546, %v3545
      %v3573 = vpack.c.b16 %v3548, %v3547
      %v3574 = vpack.c.b16 %v3550, %v3549
      %v3575 = vpack.c.b16 %v3552, %v3551
      %v3576 = vpack.c.b16 %v3554, %v3553
      %v3577 = vpack.c.b16 %v3556, %v3555
      %v3578 = vpack.c.b16 %v3558, %v3557
      %v3579 = vpack.c.b16 %v3560, %v3559
      %v3580 = vpack.c.b16 %v3562, %v3561
      %v3581 = vpack.c.b16 %v3564, %v3563
      %v3582 = vpack.c.b16 %v3566, %v3565
      %v3585 = vunpack.c.l.b16 %v3533
      %v3586 = vunpack.c.l.b16 %v3534
      %v3587 = vpack.c.b16 %v3586, %v3585
      %v3590 = vsel %vm1553, %v3567, 0
      %v3593 = vsel %vm1553, %v3568, 0
      %v3596 = vsel %vm1553, %v3569, 0
      %v3599 = vsel %vm1553, %v3570, 0
      %v3602 = vsel %vm1553, %v3571, 0
      %v3605 = vsel %vm1553, %v3572, 0
      %v3608 = vsel %vm1553, %v3573, 0
      %v3611 = vsel %vm1553, %v3574, 0
      %v3614 = vsel %vm1553, %v3575, 0
      %v3617 = vsel %vm1553, %v3576, 0
      %v3620 = vsel %vm1553, %v3577, 0
      %v3623 = vsel %vm1553, %v3578, 0
      %v3626 = vsel %vm1553, %v3579, 0
      %v3629 = vsel %vm1553, %v3580, 0
      %v3632 = vsel %vm1553, %v3581, 0
      %v3635 = vsel %vm1553, %v3582, 0
      %3637 = vmatprep.subr.bf16.mxu0 0
      %3638 = vmatpush1.bf16.msra.mxu0 0
      %3639 = vmatprep.subr.bf16.mxu0 0
      %3640 = vmatpush1.bf16.msra.mxu0 0
      %3641 = vmatprep.subr.bf16.mxu0 0
      %3642 = vmatpush1.bf16.msra.mxu0 0
      %3643 = vmatprep.subr.bf16.mxu0 0
      %3644 = vmatpush1.bf16.msra.mxu0 0
      %3645 = vmatprep.subr.bf16.mxu0 0
      %3646 = vmatpush1.bf16.msra.mxu0 0
      %3647 = vmatprep.subr.bf16.mxu0 0
      %3648 = vmatpush1.bf16.msra.mxu0 0
      %3649 = vmatprep.subr.bf16.mxu0 0
      %3650 = vmatpush1.bf16.msra.mxu0 0
      %3651 = vmatprep.subr.bf16.mxu0 0
      %3652 = vmatpush1.bf16.msra.mxu0 %v3587
      %3653 = vmatprep.subr.bf16.mxu0 0
      %3654 = vmatpush2.bf16.msra.mxu0 0
      %3655 = vmatprep.subr.bf16.mxu0 0
      %3656 = vmatpush2.bf16.msra.mxu0 0
      %3657 = vmatprep.subr.bf16.mxu0 0
      %3658 = vmatpush2.bf16.msra.mxu0 0
      %3659 = vmatprep.subr.bf16.mxu0 0
      %3660 = vmatpush2.bf16.msra.mxu0 0
      %3661 = vmatprep.subr.bf16.mxu0 0
      %3662 = vmatpush2.bf16.msra.mxu0 0
      %3663 = vmatprep.subr.bf16.mxu0 0
      %3664 = vmatpush2.bf16.msra.mxu0 0
      %3665 = vmatprep.subr.bf16.mxu0 0
      %3666 = vmatpush2.bf16.msra.mxu0 0
      %3667 = vmatprep.subr.bf16.mxu0 0
      %3668 = vmatpush2.bf16.msra.mxu0 0
      %3669 = vmatprep.mubr.bf16.mxu0 0
      %3670 = vmatmul.mubr.bf16.gmra.mxu0 %v3590
      %v3671 = vpop.f32.mrf.mxu0
      %v3672 = vadd.f32 0.0, %v3671
      %v3673 = vpop.f32.mrf.mxu0
      %v3674 = vpop.f32.mrf.mxu0
      %v3675 = vadd.f32 0.0, %v3674
      %v3676 = vpop.f32.mrf.mxu0
      %3677 = vmatprep.mubr.bf16.mxu0 0
      %3678 = vmatmul.mubr.bf16.gmra.mxu0 %v3593
      %v3679 = vpop.f32.mrf.mxu0
      %v3680 = vadd.f32 0.0, %v3679
      %v3681 = vpop.f32.mrf.mxu0
      %v3682 = vpop.f32.mrf.mxu0
      %v3683 = vadd.f32 0.0, %v3682
      %v3684 = vpop.f32.mrf.mxu0
      %3685 = vmatprep.mubr.bf16.mxu0 0
      %3686 = vmatmul.mubr.bf16.gmra.mxu0 %v3596
      %v3687 = vpop.f32.mrf.mxu0
      %v3688 = vadd.f32 0.0, %v3687
      %v3689 = vpop.f32.mrf.mxu0
      %v3690 = vpop.f32.mrf.mxu0
      %v3691 = vadd.f32 0.0, %v3690
      %v3692 = vpop.f32.mrf.mxu0
      %3693 = vmatprep.mubr.bf16.mxu0 0
      %3694 = vmatmul.mubr.bf16.gmra.mxu0 %v3599
      %v3695 = vpop.f32.mrf.mxu0
      %v3696 = vadd.f32 0.0, %v3695
      %v3697 = vpop.f32.mrf.mxu0
      %v3698 = vpop.f32.mrf.mxu0
      %v3699 = vadd.f32 0.0, %v3698
      %v3700 = vpop.f32.mrf.mxu0
      %3701 = vmatprep.mubr.bf16.mxu0 0
      %3702 = vmatmul.mubr.bf16.gmra.mxu0 %v3602
      %v3703 = vpop.f32.mrf.mxu0
      %v3704 = vadd.f32 0.0, %v3703
      %v3705 = vpop.f32.mrf.mxu0
      %v3706 = vpop.f32.mrf.mxu0
      %v3707 = vadd.f32 0.0, %v3706
      %v3708 = vpop.f32.mrf.mxu0
      %3709 = vmatprep.mubr.bf16.mxu0 0
      %3710 = vmatmul.mubr.bf16.gmra.mxu0 %v3605
      %v3711 = vpop.f32.mrf.mxu0
      %v3712 = vadd.f32 0.0, %v3711
      %v3713 = vpop.f32.mrf.mxu0
      %v3714 = vpop.f32.mrf.mxu0
      %v3715 = vadd.f32 0.0, %v3714
      %v3716 = vpop.f32.mrf.mxu0
      %3717 = vmatprep.mubr.bf16.mxu0 0
      %3718 = vmatmul.mubr.bf16.gmra.mxu0 %v3608
      %v3719 = vpop.f32.mrf.mxu0
      %v3720 = vadd.f32 0.0, %v3719
      %v3721 = vpop.f32.mrf.mxu0
      %v3722 = vpop.f32.mrf.mxu0
      %v3723 = vadd.f32 0.0, %v3722
      %v3724 = vpop.f32.mrf.mxu0
      %3725 = vmatprep.mubr.bf16.mxu0 0
      %3726 = vmatmul.mubr.bf16.gmra.mxu0 %v3611
      %v3727 = vpop.f32.mrf.mxu0
      %v3728 = vadd.f32 0.0, %v3727
      %v3729 = vpop.f32.mrf.mxu0
      %v3730 = vpop.f32.mrf.mxu0
      %v3731 = vadd.f32 0.0, %v3730
      %v3732 = vpop.f32.mrf.mxu0
      %3733 = vmatprep.mubr.bf16.mxu0 0
      %3734 = vmatmul.mubr.bf16.gmra.mxu0 %v3614
      %v3735 = vpop.f32.mrf.mxu0
      %v3736 = vadd.f32 0.0, %v3735
      %v3737 = vpop.f32.mrf.mxu0
      %v3738 = vpop.f32.mrf.mxu0
      %v3739 = vadd.f32 0.0, %v3738
      %v3740 = vpop.f32.mrf.mxu0
      %3741 = vmatprep.mubr.bf16.mxu0 0
      %3742 = vmatmul.mubr.bf16.gmra.mxu0 %v3617
      %v3743 = vpop.f32.mrf.mxu0
      %v3744 = vadd.f32 0.0, %v3743
      %v3745 = vpop.f32.mrf.mxu0
      %v3746 = vpop.f32.mrf.mxu0
      %v3747 = vadd.f32 0.0, %v3746
      %v3748 = vpop.f32.mrf.mxu0
      %3749 = vmatprep.mubr.bf16.mxu0 0
      %3750 = vmatmul.mubr.bf16.gmra.mxu0 %v3620
      %v3751 = vpop.f32.mrf.mxu0
      %v3752 = vadd.f32 0.0, %v3751
      %v3753 = vpop.f32.mrf.mxu0
      %v3754 = vpop.f32.mrf.mxu0
      %v3755 = vadd.f32 0.0, %v3754
      %v3756 = vpop.f32.mrf.mxu0
      %3757 = vmatprep.mubr.bf16.mxu0 0
      %3758 = vmatmul.mubr.bf16.gmra.mxu0 %v3623
      %v3759 = vpop.f32.mrf.mxu0
      %v3760 = vadd.f32 0.0, %v3759
      %v3761 = vpop.f32.mrf.mxu0
      %v3762 = vpop.f32.mrf.mxu0
      %v3763 = vadd.f32 0.0, %v3762
      %v3764 = vpop.f32.mrf.mxu0
      %3765 = vmatprep.mubr.bf16.mxu0 0
      %3766 = vmatmul.mubr.bf16.gmra.mxu0 %v3626
      %v3767 = vpop.f32.mrf.mxu0
      %v3768 = vadd.f32 0.0, %v3767
      %v3769 = vpop.f32.mrf.mxu0
      %v3770 = vpop.f32.mrf.mxu0
      %v3771 = vadd.f32 0.0, %v3770
      %v3772 = vpop.f32.mrf.mxu0
      %3773 = vmatprep.mubr.bf16.mxu0 0
      %3774 = vmatmul.mubr.bf16.gmra.mxu0 %v3629
      %v3775 = vpop.f32.mrf.mxu0
      %v3776 = vadd.f32 0.0, %v3775
      %v3777 = vpop.f32.mrf.mxu0
      %v3778 = vpop.f32.mrf.mxu0
      %v3779 = vadd.f32 0.0, %v3778
      %v3780 = vpop.f32.mrf.mxu0
      %3781 = vmatprep.mubr.bf16.mxu0 0
      %3782 = vmatmul.mubr.bf16.gmra.mxu0 %v3632
      %v3783 = vpop.f32.mrf.mxu0
      %v3784 = vadd.f32 0.0, %v3783
      %v3785 = vpop.f32.mrf.mxu0
      %v3786 = vpop.f32.mrf.mxu0
      %v3787 = vadd.f32 0.0, %v3786
      %v3788 = vpop.f32.mrf.mxu0
      %3789 = vmatprep.mubr.bf16.mxu0 0
      %3790 = vmatmul.mubr.bf16.gmra.mxu0 %v3635
      %v3791 = vpop.f32.mrf.mxu0
      %v3792 = vadd.f32 0.0, %v3791
      %v3793 = vpop.f32.mrf.mxu0
      %v3794 = vpop.f32.mrf.mxu0
      %v3795 = vadd.f32 0.0, %v3794
      %v3796 = vpop.f32.mrf.mxu0
      %3797 = vdwg.mxu0
      %v3798 = vadd.f32 %v3319, %v3672
      %v3799 = vadd.f32 %v3320, %v3675
      %v3800 = vadd.f32 %v3321, %v3680
      %v3801 = vadd.f32 %v3322, %v3683
      %v3802 = vadd.f32 %v3323, %v3688
      %v3803 = vadd.f32 %v3324, %v3691
      %v3804 = vadd.f32 %v3325, %v3696
      %v3805 = vadd.f32 %v3326, %v3699
      %v3806 = vadd.f32 %v3327, %v3704
      %v3807 = vadd.f32 %v3328, %v3707
      %v3808 = vadd.f32 %v3329, %v3712
      %v3809 = vadd.f32 %v3330, %v3715
      %v3810 = vadd.f32 %v3331, %v3720
      %v3811 = vadd.f32 %v3332, %v3723
      %v3812 = vadd.f32 %v3333, %v3728
      %v3813 = vadd.f32 %v3334, %v3731
      %v3814 = vadd.f32 %v3335, %v3736
      %v3815 = vadd.f32 %v3336, %v3739
      %v3816 = vadd.f32 %v3337, %v3744
      %v3817 = vadd.f32 %v3338, %v3747
      %v3818 = vadd.f32 %v3339, %v3752
      %v3819 = vadd.f32 %v3340, %v3755
      %v3820 = vadd.f32 %v3341, %v3760
      %v3821 = vadd.f32 %v3342, %v3763
      %v3822 = vadd.f32 %v3343, %v3768
      %v3823 = vadd.f32 %v3344, %v3771
      %v3824 = vadd.f32 %v3345, %v3776
      %v3825 = vadd.f32 %v3346, %v3779
      %v3826 = vadd.f32 %v3347, %v3784
      %v3827 = vadd.f32 %v3348, %v3787
      %v3828 = vadd.f32 %v3349, %v3792
      %v3829 = vadd.f32 %v3350, %v3795
      %v3833 = vrot.slane %v3367, 5
      %v3834 = vrot.slane %v3833, 4
      %v3835 = vrot.slane %v2197, 5
      %v3836 = vsel %vm3419, %v3834, %v3835
      %v3837 = vrot.slane %v3835, 4
      %v3838 = vrot.slane %v2198, 5
      %v3839 = vsel %vm3419, %v3837, %v3838
      %s3840 = scalar_lea.vmem %s4, 40
      %v3841 = vld [vmem:[%s3840] sm:$0xf]
      %v3842 = vld [vmem:[%s3840 + $0x4] sm:$0xf]
      %v3843 = vunpack.c.l.b16 %v3836
      %v3844 = vunpack.c.l.b16 %v3839
      %v3845 = vpack.c.b16 %v3844, %v3843
      %v3848 = vunpack.c.l.b16 %v3841
      %v3849 = vunpack.c.l.b16 %v3842
      %v3850 = vpack.c.b16 %v3849, %v3848
      %v3853 = vsel %vm1553, %v3845, 0
      %3855 = vmatprep.subr.bf16.mxu0 0
      %3856 = vmatpush1.bf16.msra.mxu0 0
      %3857 = vmatprep.subr.bf16.mxu0 0
      %3858 = vmatpush1.bf16.msra.mxu0 0
      %3859 = vmatprep.subr.bf16.mxu0 0
      %3860 = vmatpush1.bf16.msra.mxu0 0
      %3861 = vmatprep.subr.bf16.mxu0 0
      %3862 = vmatpush1.bf16.msra.mxu0 0
      %3863 = vmatprep.subr.bf16.mxu0 0
      %3864 = vmatpush1.bf16.msra.mxu0 0
      %3865 = vmatprep.subr.bf16.mxu0 0
      %3866 = vmatpush1.bf16.msra.mxu0 0
      %3867 = vmatprep.subr.bf16.mxu0 0
      %3868 = vmatpush1.bf16.msra.mxu0 0
      %3869 = vmatprep.subr.bf16.mxu0 0
      %3870 = vmatpush1.bf16.msra.mxu0 %v3850
      %3871 = vmatprep.subr.bf16.mxu0 0
      %3872 = vmatpush2.bf16.msra.mxu0 0
      %3873 = vmatprep.subr.bf16.mxu0 0
      %3874 = vmatpush2.bf16.msra.mxu0 0
      %3875 = vmatprep.subr.bf16.mxu0 0
      %3876 = vmatpush2.bf16.msra.mxu0 0
      %3877 = vmatprep.subr.bf16.mxu0 0
      %3878 = vmatpush2.bf16.msra.mxu0 0
      %3879 = vmatprep.subr.bf16.mxu0 0
      %3880 = vmatpush2.bf16.msra.mxu0 0
      %3881 = vmatprep.subr.bf16.mxu0 0
      %3882 = vmatpush2.bf16.msra.mxu0 0
      %3883 = vmatprep.subr.bf16.mxu0 0
      %3884 = vmatpush2.bf16.msra.mxu0 0
      %3885 = vmatprep.subr.bf16.mxu0 0
      %3886 = vmatpush2.bf16.msra.mxu0 0
      %3887 = vmatprep.mubr.bf16.mxu0 0
      %3888 = vmatmul.mubr.bf16.gmra.mxu0 %v3593
      %v3889 = vpop.f32.mrf.mxu0
      %v3890 = vadd.f32 0.0, %v3889
      %v3891 = vpop.f32.mrf.mxu0
      %v3892 = vpop.f32.mrf.mxu0
      %v3893 = vadd.f32 0.0, %v3892
      %v3894 = vpop.f32.mrf.mxu0
      %3895 = vmatprep.mubr.bf16.mxu0 0
      %3896 = vmatmul.mubr.bf16.gmra.mxu0 %v3596
      %v3897 = vpop.f32.mrf.mxu0
      %v3898 = vadd.f32 0.0, %v3897
      %v3899 = vpop.f32.mrf.mxu0
      %v3900 = vpop.f32.mrf.mxu0
      %v3901 = vadd.f32 0.0, %v3900
      %v3902 = vpop.f32.mrf.mxu0
      %3903 = vmatprep.mubr.bf16.mxu0 0
      %3904 = vmatmul.mubr.bf16.gmra.mxu0 %v3599
      %v3905 = vpop.f32.mrf.mxu0
      %v3906 = vadd.f32 0.0, %v3905
      %v3907 = vpop.f32.mrf.mxu0
      %v3908 = vpop.f32.mrf.mxu0
      %v3909 = vadd.f32 0.0, %v3908
      %v3910 = vpop.f32.mrf.mxu0
      %3911 = vmatprep.mubr.bf16.mxu0 0
      %3912 = vmatmul.mubr.bf16.gmra.mxu0 %v3602
      %v3913 = vpop.f32.mrf.mxu0
      %v3914 = vadd.f32 0.0, %v3913
      %v3915 = vpop.f32.mrf.mxu0
      %v3916 = vpop.f32.mrf.mxu0
      %v3917 = vadd.f32 0.0, %v3916
      %v3918 = vpop.f32.mrf.mxu0
      %3919 = vmatprep.mubr.bf16.mxu0 0
      %3920 = vmatmul.mubr.bf16.gmra.mxu0 %v3605
      %v3921 = vpop.f32.mrf.mxu0
      %v3922 = vadd.f32 0.0, %v3921
      %v3923 = vpop.f32.mrf.mxu0
      %v3924 = vpop.f32.mrf.mxu0
      %v3925 = vadd.f32 0.0, %v3924
      %v3926 = vpop.f32.mrf.mxu0
      %3927 = vmatprep.mubr.bf16.mxu0 0
      %3928 = vmatmul.mubr.bf16.gmra.mxu0 %v3608
      %v3929 = vpop.f32.mrf.mxu0
      %v3930 = vadd.f32 0.0, %v3929
      %v3931 = vpop.f32.mrf.mxu0
      %v3932 = vpop.f32.mrf.mxu0
      %v3933 = vadd.f32 0.0, %v3932
      %v3934 = vpop.f32.mrf.mxu0
      %3935 = vmatprep.mubr.bf16.mxu0 0
      %3936 = vmatmul.mubr.bf16.gmra.mxu0 %v3611
      %v3937 = vpop.f32.mrf.mxu0
      %v3938 = vadd.f32 0.0, %v3937
      %v3939 = vpop.f32.mrf.mxu0
      %v3940 = vpop.f32.mrf.mxu0
      %v3941 = vadd.f32 0.0, %v3940
      %v3942 = vpop.f32.mrf.mxu0
      %3943 = vmatprep.mubr.bf16.mxu0 0
      %3944 = vmatmul.mubr.bf16.gmra.mxu0 %v3614
      %v3945 = vpop.f32.mrf.mxu0
      %v3946 = vadd.f32 0.0, %v3945
      %v3947 = vpop.f32.mrf.mxu0
      %v3948 = vpop.f32.mrf.mxu0
      %v3949 = vadd.f32 0.0, %v3948
      %v3950 = vpop.f32.mrf.mxu0
      %3951 = vmatprep.mubr.bf16.mxu0 0
      %3952 = vmatmul.mubr.bf16.gmra.mxu0 %v3617
      %v3953 = vpop.f32.mrf.mxu0
      %v3954 = vadd.f32 0.0, %v3953
      %v3955 = vpop.f32.mrf.mxu0
      %v3956 = vpop.f32.mrf.mxu0
      %v3957 = vadd.f32 0.0, %v3956
      %v3958 = vpop.f32.mrf.mxu0
      %3959 = vmatprep.mubr.bf16.mxu0 0
      %3960 = vmatmul.mubr.bf16.gmra.mxu0 %v3620
      %v3961 = vpop.f32.mrf.mxu0
      %v3962 = vadd.f32 0.0, %v3961
      %v3963 = vpop.f32.mrf.mxu0
      %v3964 = vpop.f32.mrf.mxu0
      %v3965 = vadd.f32 0.0, %v3964
      %v3966 = vpop.f32.mrf.mxu0
      %3967 = vmatprep.mubr.bf16.mxu0 0
      %3968 = vmatmul.mubr.bf16.gmra.mxu0 %v3623
      %v3969 = vpop.f32.mrf.mxu0
      %v3970 = vadd.f32 0.0, %v3969
      %v3971 = vpop.f32.mrf.mxu0
      %v3972 = vpop.f32.mrf.mxu0
      %v3973 = vadd.f32 0.0, %v3972
      %v3974 = vpop.f32.mrf.mxu0
      %3975 = vmatprep.mubr.bf16.mxu0 0
      %3976 = vmatmul.mubr.bf16.gmra.mxu0 %v3626
      %v3977 = vpop.f32.mrf.mxu0
      %v3978 = vadd.f32 0.0, %v3977
      %v3979 = vpop.f32.mrf.mxu0
      %v3980 = vpop.f32.mrf.mxu0
      %v3981 = vadd.f32 0.0, %v3980
      %v3982 = vpop.f32.mrf.mxu0
      %3983 = vmatprep.mubr.bf16.mxu0 0
      %3984 = vmatmul.mubr.bf16.gmra.mxu0 %v3629
      %v3985 = vpop.f32.mrf.mxu0
      %v3986 = vadd.f32 0.0, %v3985
      %v3987 = vpop.f32.mrf.mxu0
      %v3988 = vpop.f32.mrf.mxu0
      %v3989 = vadd.f32 0.0, %v3988
      %v3990 = vpop.f32.mrf.mxu0
      %3991 = vmatprep.mubr.bf16.mxu0 0
      %3992 = vmatmul.mubr.bf16.gmra.mxu0 %v3632
      %v3993 = vpop.f32.mrf.mxu0
      %v3994 = vadd.f32 0.0, %v3993
      %v3995 = vpop.f32.mrf.mxu0
      %v3996 = vpop.f32.mrf.mxu0
      %v3997 = vadd.f32 0.0, %v3996
      %v3998 = vpop.f32.mrf.mxu0
      %3999 = vmatprep.mubr.bf16.mxu0 0
      %4000 = vmatmul.mubr.bf16.gmra.mxu0 %v3635
      %v4001 = vpop.f32.mrf.mxu0
      %v4002 = vadd.f32 0.0, %v4001
      %v4003 = vpop.f32.mrf.mxu0
      %v4004 = vpop.f32.mrf.mxu0
      %v4005 = vadd.f32 0.0, %v4004
      %v4006 = vpop.f32.mrf.mxu0
      %4007 = vmatprep.mubr.bf16.mxu0 0
      %4008 = vmatmul.mubr.bf16.gmra.mxu0 %v3853
      %v4009 = vpop.f32.mrf.mxu0
      %v4010 = vadd.f32 0.0, %v4009
      %v4011 = vpop.f32.mrf.mxu0
      %v4012 = vpop.f32.mrf.mxu0
      %v4013 = vadd.f32 0.0, %v4012
      %v4014 = vpop.f32.mrf.mxu0
      %4015 = vdwg.mxu0
      %v4016 = vadd.f32 %v3798, %v3890
      %v4017 = vadd.f32 %v3799, %v3893
      %v4018 = vadd.f32 %v3800, %v3898
      %v4019 = vadd.f32 %v3801, %v3901
      %v4020 = vadd.f32 %v3802, %v3906
      %v4021 = vadd.f32 %v3803, %v3909
      %v4022 = vadd.f32 %v3804, %v3914
      %v4023 = vadd.f32 %v3805, %v3917
      %v4024 = vadd.f32 %v3806, %v3922
      %v4025 = vadd.f32 %v3807, %v3925
      %v4026 = vadd.f32 %v3808, %v3930
      %v4027 = vadd.f32 %v3809, %v3933
      %v4028 = vadd.f32 %v3810, %v3938
      %v4029 = vadd.f32 %v3811, %v3941
      %v4030 = vadd.f32 %v3812, %v3946
      %v4031 = vadd.f32 %v3813, %v3949
      %v4032 = vadd.f32 %v3814, %v3954
      %v4033 = vadd.f32 %v3815, %v3957
      %v4034 = vadd.f32 %v3816, %v3962
      %v4035 = vadd.f32 %v3817, %v3965
      %v4036 = vadd.f32 %v3818, %v3970
      %v4037 = vadd.f32 %v3819, %v3973
      %v4038 = vadd.f32 %v3820, %v3978
      %v4039 = vadd.f32 %v3821, %v3981
      %v4040 = vadd.f32 %v3822, %v3986
      %v4041 = vadd.f32 %v3823, %v3989
      %v4042 = vadd.f32 %v3824, %v3994
      %v4043 = vadd.f32 %v3825, %v3997
      %v4044 = vadd.f32 %v3826, %v4002
      %v4045 = vadd.f32 %v3827, %v4005
      %v4046 = vadd.f32 %v3828, %v4010
      %v4047 = vadd.f32 %v3829, %v4013
      %v4051 = vrot.slane %v3368, 5
      %v4052 = vrot.slane %v4051, 4
      %v4053 = vrot.slane %v2200, 5
      %v4054 = vsel %vm3419, %v4052, %v4053
      %v4055 = vrot.slane %v4053, 4
      %v4056 = vrot.slane %v2201, 5
      %v4057 = vsel %vm3419, %v4055, %v4056
      %s4058 = scalar_lea.vmem %s4, 64
      %v4059 = vld [vmem:[%s4058] sm:$0xf]
      %v4060 = vld [vmem:[%s4058 + $0x4] sm:$0xf]
      %v4061 = vunpack.c.l.b16 %v4054
      %v4062 = vunpack.c.l.b16 %v4057
      %v4063 = vpack.c.b16 %v4062, %v4061
      %v4066 = vunpack.c.l.b16 %v4059
      %v4067 = vunpack.c.l.b16 %v4060
      %v4068 = vpack.c.b16 %v4067, %v4066
      %v4071 = vsel %vm1553, %v4063, 0
      %4073 = vmatprep.subr.bf16.mxu0 0
      %4074 = vmatpush1.bf16.msra.mxu0 0
      %4075 = vmatprep.subr.bf16.mxu0 0
      %4076 = vmatpush1.bf16.msra.mxu0 0
      %4077 = vmatprep.subr.bf16.mxu0 0
      %4078 = vmatpush1.bf16.msra.mxu0 0
      %4079 = vmatprep.subr.bf16.mxu0 0
      %4080 = vmatpush1.bf16.msra.mxu0 0
      %4081 = vmatprep.subr.bf16.mxu0 0
      %4082 = vmatpush1.bf16.msra.mxu0 0
      %4083 = vmatprep.subr.bf16.mxu0 0
      %4084 = vmatpush1.bf16.msra.mxu0 0
      %4085 = vmatprep.subr.bf16.mxu0 0
      %4086 = vmatpush1.bf16.msra.mxu0 0
      %4087 = vmatprep.subr.bf16.mxu0 0
      %4088 = vmatpush1.bf16.msra.mxu0 %v4068
      %4089 = vmatprep.subr.bf16.mxu0 0
      %4090 = vmatpush2.bf16.msra.mxu0 0
      %4091 = vmatprep.subr.bf16.mxu0 0
      %4092 = vmatpush2.bf16.msra.mxu0 0
      %4093 = vmatprep.subr.bf16.mxu0 0
      %4094 = vmatpush2.bf16.msra.mxu0 0
      %4095 = vmatprep.subr.bf16.mxu0 0
      %4096 = vmatpush2.bf16.msra.mxu0 0
      %4097 = vmatprep.subr.bf16.mxu0 0
      %4098 = vmatpush2.bf16.msra.mxu0 0
      %4099 = vmatprep.subr.bf16.mxu0 0
      %4100 = vmatpush2.bf16.msra.mxu0 0
      %4101 = vmatprep.subr.bf16.mxu0 0
      %4102 = vmatpush2.bf16.msra.mxu0 0
      %4103 = vmatprep.subr.bf16.mxu0 0
      %4104 = vmatpush2.bf16.msra.mxu0 0
      %4105 = vmatprep.mubr.bf16.mxu0 0
      %4106 = vmatmul.mubr.bf16.gmra.mxu0 %v3596
      %v4107 = vpop.f32.mrf.mxu0
      %v4108 = vadd.f32 0.0, %v4107
      %v4109 = vpop.f32.mrf.mxu0
      %v4110 = vpop.f32.mrf.mxu0
      %v4111 = vadd.f32 0.0, %v4110
      %v4112 = vpop.f32.mrf.mxu0
      %4113 = vmatprep.mubr.bf16.mxu0 0
      %4114 = vmatmul.mubr.bf16.gmra.mxu0 %v3599
      %v4115 = vpop.f32.mrf.mxu0
      %v4116 = vadd.f32 0.0, %v4115
      %v4117 = vpop.f32.mrf.mxu0
      %v4118 = vpop.f32.mrf.mxu0
      %v4119 = vadd.f32 0.0, %v4118
      %v4120 = vpop.f32.mrf.mxu0
      %4121 = vmatprep.mubr.bf16.mxu0 0
      %4122 = vmatmul.mubr.bf16.gmra.mxu0 %v3602
      %v4123 = vpop.f32.mrf.mxu0
      %v4124 = vadd.f32 0.0, %v4123
      %v4125 = vpop.f32.mrf.mxu0
      %v4126 = vpop.f32.mrf.mxu0
      %v4127 = vadd.f32 0.0, %v4126
      %v4128 = vpop.f32.mrf.mxu0
      %4129 = vmatprep.mubr.bf16.mxu0 0
      %4130 = vmatmul.mubr.bf16.gmra.mxu0 %v3605
      %v4131 = vpop.f32.mrf.mxu0
      %v4132 = vadd.f32 0.0, %v4131
      %v4133 = vpop.f32.mrf.mxu0
      %v4134 = vpop.f32.mrf.mxu0
      %v4135 = vadd.f32 0.0, %v4134
      %v4136 = vpop.f32.mrf.mxu0
      %4137 = vmatprep.mubr.bf16.mxu0 0
      %4138 = vmatmul.mubr.bf16.gmra.mxu0 %v3608
      %v4139 = vpop.f32.mrf.mxu0
      %v4140 = vadd.f32 0.0, %v4139
      %v4141 = vpop.f32.mrf.mxu0
      %v4142 = vpop.f32.mrf.mxu0
      %v4143 = vadd.f32 0.0, %v4142
      %v4144 = vpop.f32.mrf.mxu0
      %4145 = vmatprep.mubr.bf16.mxu0 0
      %4146 = vmatmul.mubr.bf16.gmra.mxu0 %v3611
      %v4147 = vpop.f32.mrf.mxu0
      %v4148 = vadd.f32 0.0, %v4147
      %v4149 = vpop.f32.mrf.mxu0
      %v4150 = vpop.f32.mrf.mxu0
      %v4151 = vadd.f32 0.0, %v4150
      %v4152 = vpop.f32.mrf.mxu0
      %4153 = vmatprep.mubr.bf16.mxu0 0
      %4154 = vmatmul.mubr.bf16.gmra.mxu0 %v3614
      %v4155 = vpop.f32.mrf.mxu0
      %v4156 = vadd.f32 0.0, %v4155
      %v4157 = vpop.f32.mrf.mxu0
      %v4158 = vpop.f32.mrf.mxu0
      %v4159 = vadd.f32 0.0, %v4158
      %v4160 = vpop.f32.mrf.mxu0
      %4161 = vmatprep.mubr.bf16.mxu0 0
      %4162 = vmatmul.mubr.bf16.gmra.mxu0 %v3617
      %v4163 = vpop.f32.mrf.mxu0
      %v4164 = vadd.f32 0.0, %v4163
      %v4165 = vpop.f32.mrf.mxu0
      %v4166 = vpop.f32.mrf.mxu0
      %v4167 = vadd.f32 0.0, %v4166
      %v4168 = vpop.f32.mrf.mxu0
      %4169 = vmatprep.mubr.bf16.mxu0 0
      %4170 = vmatmul.mubr.bf16.gmra.mxu0 %v3620
      %v4171 = vpop.f32.mrf.mxu0
      %v4172 = vadd.f32 0.0, %v4171
      %v4173 = vpop.f32.mrf.mxu0
      %v4174 = vpop.f32.mrf.mxu0
      %v4175 = vadd.f32 0.0, %v4174
      %v4176 = vpop.f32.mrf.mxu0
      %4177 = vmatprep.mubr.bf16.mxu0 0
      %4178 = vmatmul.mubr.bf16.gmra.mxu0 %v3623
      %v4179 = vpop.f32.mrf.mxu0
      %v4180 = vadd.f32 0.0, %v4179
      %v4181 = vpop.f32.mrf.mxu0
      %v4182 = vpop.f32.mrf.mxu0
      %v4183 = vadd.f32 0.0, %v4182
      %v4184 = vpop.f32.mrf.mxu0
      %4185 = vmatprep.mubr.bf16.mxu0 0
      %4186 = vmatmul.mubr.bf16.gmra.mxu0 %v3626
      %v4187 = vpop.f32.mrf.mxu0
      %v4188 = vadd.f32 0.0, %v4187
      %v4189 = vpop.f32.mrf.mxu0
      %v4190 = vpop.f32.mrf.mxu0
      %v4191 = vadd.f32 0.0, %v4190
      %v4192 = vpop.f32.mrf.mxu0
      %4193 = vmatprep.mubr.bf16.mxu0 0
      %4194 = vmatmul.mubr.bf16.gmra.mxu0 %v3629
      %v4195 = vpop.f32.mrf.mxu0
      %v4196 = vadd.f32 0.0, %v4195
      %v4197 = vpop.f32.mrf.mxu0
      %v4198 = vpop.f32.mrf.mxu0
      %v4199 = vadd.f32 0.0, %v4198
      %v4200 = vpop.f32.mrf.mxu0
      %4201 = vmatprep.mubr.bf16.mxu0 0
      %4202 = vmatmul.mubr.bf16.gmra.mxu0 %v3632
      %v4203 = vpop.f32.mrf.mxu0
      %v4204 = vadd.f32 0.0, %v4203
      %v4205 = vpop.f32.mrf.mxu0
      %v4206 = vpop.f32.mrf.mxu0
      %v4207 = vadd.f32 0.0, %v4206
      %v4208 = vpop.f32.mrf.mxu0
      %4209 = vmatprep.mubr.bf16.mxu0 0
      %4210 = vmatmul.mubr.bf16.gmra.mxu0 %v3635
      %v4211 = vpop.f32.mrf.mxu0
      %v4212 = vadd.f32 0.0, %v4211
      %v4213 = vpop.f32.mrf.mxu0
      %v4214 = vpop.f32.mrf.mxu0
      %v4215 = vadd.f32 0.0, %v4214
      %v4216 = vpop.f32.mrf.mxu0
      %4217 = vmatprep.mubr.bf16.mxu0 0
      %4218 = vmatmul.mubr.bf16.gmra.mxu0 %v3853
      %v4219 = vpop.f32.mrf.mxu0
      %v4220 = vadd.f32 0.0, %v4219
      %v4221 = vpop.f32.mrf.mxu0
      %v4222 = vpop.f32.mrf.mxu0
      %v4223 = vadd.f32 0.0, %v4222
      %v4224 = vpop.f32.mrf.mxu0
      %4225 = vmatprep.mubr.bf16.mxu0 0
      %4226 = vmatmul.mubr.bf16.gmra.mxu0 %v4071
      %v4227 = vpop.f32.mrf.mxu0
      %v4228 = vadd.f32 0.0, %v4227
      %v4229 = vpop.f32.mrf.mxu0
      %v4230 = vpop.f32.mrf.mxu0
      %v4231 = vadd.f32 0.0, %v4230
      %v4232 = vpop.f32.mrf.mxu0
      %4233 = vdwg.mxu0
      %v4234 = vadd.f32 %v4016, %v4108
      %v4235 = vadd.f32 %v4017, %v4111
      %v4236 = vadd.f32 %v4018, %v4116
      %v4237 = vadd.f32 %v4019, %v4119
      %v4238 = vadd.f32 %v4020, %v4124
      %v4239 = vadd.f32 %v4021, %v4127
      %v4240 = vadd.f32 %v4022, %v4132
      %v4241 = vadd.f32 %v4023, %v4135
      %v4242 = vadd.f32 %v4024, %v4140
      %v4243 = vadd.f32 %v4025, %v4143
      %v4244 = vadd.f32 %v4026, %v4148
      %v4245 = vadd.f32 %v4027, %v4151
      %v4246 = vadd.f32 %v4028, %v4156
      %v4247 = vadd.f32 %v4029, %v4159
      %v4248 = vadd.f32 %v4030, %v4164
      %v4249 = vadd.f32 %v4031, %v4167
      %v4250 = vadd.f32 %v4032, %v4172
      %v4251 = vadd.f32 %v4033, %v4175
      %v4252 = vadd.f32 %v4034, %v4180
      %v4253 = vadd.f32 %v4035, %v4183
      %v4254 = vadd.f32 %v4036, %v4188
      %v4255 = vadd.f32 %v4037, %v4191
      %v4256 = vadd.f32 %v4038, %v4196
      %v4257 = vadd.f32 %v4039, %v4199
      %v4258 = vadd.f32 %v4040, %v4204
      %v4259 = vadd.f32 %v4041, %v4207
      %v4260 = vadd.f32 %v4042, %v4212
      %v4261 = vadd.f32 %v4043, %v4215
      %v4262 = vadd.f32 %v4044, %v4220
      %v4263 = vadd.f32 %v4045, %v4223
      %v4264 = vadd.f32 %v4046, %v4228
      %v4265 = vadd.f32 %v4047, %v4231
      %4298 = vrot.lane.b32.xlu0 %v4234, 2
      %v4299 = vpop.permute.xlu0 %4298
      %4300 = vrot.lane.b32.xlu0 %v4235, 2
      %v4301 = vpop.permute.xlu0 %4300
      %4302 = vrot.lane.b32.xlu0 %v4236, 2
      %v4303 = vpop.permute.xlu0 %4302
      %4304 = vrot.lane.b32.xlu0 %v4237, 2
      %v4305 = vpop.permute.xlu0 %4304
      %4306 = vrot.lane.b32.xlu0 %v4238, 2
      %v4307 = vpop.permute.xlu0 %4306
      %4308 = vrot.lane.b32.xlu0 %v4239, 2
      %v4309 = vpop.permute.xlu0 %4308
      %4310 = vrot.lane.b32.xlu0 %v4240, 2
      %v4311 = vpop.permute.xlu0 %4310
      %4312 = vrot.lane.b32.xlu0 %v4241, 2
      %v4313 = vpop.permute.xlu0 %4312
      %4314 = vrot.lane.b32.xlu0 %v4242, 2
      %v4315 = vpop.permute.xlu0 %4314
      %4316 = vrot.lane.b32.xlu0 %v4243, 2
      %v4317 = vpop.permute.xlu0 %4316
      %4318 = vrot.lane.b32.xlu0 %v4244, 2
      %v4319 = vpop.permute.xlu0 %4318
      %4320 = vrot.lane.b32.xlu0 %v4245, 2
      %v4321 = vpop.permute.xlu0 %4320
      %4322 = vrot.lane.b32.xlu0 %v4246, 2
      %v4323 = vpop.permute.xlu0 %4322
      %4324 = vrot.lane.b32.xlu0 %v4247, 2
      %v4325 = vpop.permute.xlu0 %4324
      %4326 = vrot.lane.b32.xlu0 %v4248, 2
      %v4327 = vpop.permute.xlu0 %4326
      %4328 = vrot.lane.b32.xlu0 %v4249, 2
      %v4329 = vpop.permute.xlu0 %4328
      %4330 = vrot.lane.b32.xlu0 %v4250, 2
      %v4331 = vpop.permute.xlu0 %4330
      %4332 = vrot.lane.b32.xlu0 %v4251, 2
      %v4333 = vpop.permute.xlu0 %4332
      %4334 = vrot.lane.b32.xlu0 %v4252, 2
      %v4335 = vpop.permute.xlu0 %4334
      %4336 = vrot.lane.b32.xlu0 %v4253, 2
      %v4337 = vpop.permute.xlu0 %4336
      %4338 = vrot.lane.b32.xlu0 %v4254, 2
      %v4339 = vpop.permute.xlu0 %4338
      %4340 = vrot.lane.b32.xlu0 %v4255, 2
      %v4341 = vpop.permute.xlu0 %4340
      %4342 = vrot.lane.b32.xlu0 %v4256, 2
      %v4343 = vpop.permute.xlu0 %4342
      %4344 = vrot.lane.b32.xlu0 %v4257, 2
      %v4345 = vpop.permute.xlu0 %4344
      %4346 = vrot.lane.b32.xlu0 %v4258, 2
      %v4347 = vpop.permute.xlu0 %4346
      %4348 = vrot.lane.b32.xlu0 %v4259, 2
      %v4349 = vpop.permute.xlu0 %4348
      %4350 = vrot.lane.b32.xlu0 %v4260, 2
      %v4351 = vpop.permute.xlu0 %4350
      %4352 = vrot.lane.b32.xlu0 %v4261, 2
      %v4353 = vpop.permute.xlu0 %4352
      %4354 = vrot.lane.b32.xlu0 %v4262, 2
      %v4355 = vpop.permute.xlu0 %4354
      %4356 = vrot.lane.b32.xlu0 %v4263, 2
      %v4357 = vpop.permute.xlu0 %4356
      %4358 = vrot.lane.b32.xlu0 %v4264, 2
      %v4359 = vpop.permute.xlu0 %4358
      %4360 = vrot.lane.b32.xlu0 %v4265, 2
      %v4361 = vpop.permute.xlu0 %4360
      %vm4394 = vcmask 48144
      %4395 = vst.msk [vmem:[%s332] sm:$0xff] %vm4394, %v4299
      %4396 = vst.msk [vmem:[%s332 + $0x8] sm:$0xff] %vm4394, %v4301
      %4397 = vst.msk [vmem:[%s332 + $0x10] sm:$0xff] %vm4394, %v4303
      %4398 = vst.msk [vmem:[%s332 + $0x18] sm:$0xff] %vm4394, %v4305
      %4399 = vst.msk [vmem:[%s332 + $0x20] sm:$0xff] %vm4394, %v4307
      %4400 = vst.msk [vmem:[%s332 + $0x28] sm:$0xff] %vm4394, %v4309
      %4401 = vst.msk [vmem:[%s332 + $0x30] sm:$0xff] %vm4394, %v4311
      %4402 = vst.msk [vmem:[%s332 + $0x38] sm:$0xff] %vm4394, %v4313
      %4403 = vst.msk [vmem:[%s332 + $0x40] sm:$0xff] %vm4394, %v4315
      %4404 = vst.msk [vmem:[%s332 + $0x48] sm:$0xff] %vm4394, %v4317
      %4405 = vst.msk [vmem:[%s332 + $0x50] sm:$0xff] %vm4394, %v4319
      %4406 = vst.msk [vmem:[%s332 + $0x58] sm:$0xff] %vm4394, %v4321
      %4407 = vst.msk [vmem:[%s332 + $0x60] sm:$0xff] %vm4394, %v4323
      %4408 = vst.msk [vmem:[%s332 + $0x68] sm:$0xff] %vm4394, %v4325
      %4409 = vst.msk [vmem:[%s332 + $0x70] sm:$0xff] %vm4394, %v4327
      %4410 = vst.msk [vmem:[%s332 + $0x78] sm:$0xff] %vm4394, %v4329
      %4411 = vst.msk [vmem:[%s332 + $0x80] sm:$0xff] %vm4394, %v4331
      %4412 = vst.msk [vmem:[%s332 + $0x88] sm:$0xff] %vm4394, %v4333
      %4413 = vst.msk [vmem:[%s332 + $0x90] sm:$0xff] %vm4394, %v4335
      %4414 = vst.msk [vmem:[%s332 + $0x98] sm:$0xff] %vm4394, %v4337
      %4415 = vst.msk [vmem:[%s332 + $0xa0] sm:$0xff] %vm4394, %v4339
      %4416 = vst.msk [vmem:[%s332 + $0xa8] sm:$0xff] %vm4394, %v4341
      %4417 = vst.msk [vmem:[%s332 + $0xb0] sm:$0xff] %vm4394, %v4343
      %4418 = vst.msk [vmem:[%s332 + $0xb8] sm:$0xff] %vm4394, %v4345
      %4419 = vst.msk [vmem:[%s332 + $0xc0] sm:$0xff] %vm4394, %v4347
      %4420 = vst.msk [vmem:[%s332 + $0xc8] sm:$0xff] %vm4394, %v4349
      %4421 = vst.msk [vmem:[%s332 + $0xd0] sm:$0xff] %vm4394, %v4351
      %4422 = vst.msk [vmem:[%s332 + $0xd8] sm:$0xff] %vm4394, %v4353
      %4423 = vst.msk [vmem:[%s332 + $0xe0] sm:$0xff] %vm4394, %v4355
      %4424 = vst.msk [vmem:[%s332 + $0xe8] sm:$0xff] %vm4394, %v4357
      %4425 = vst.msk [vmem:[%s332 + $0xf0] sm:$0xff] %vm4394, %v4359
      %4426 = vst.msk [vmem:[%s332 + $0xf8] sm:$0xff] %vm4394, %v4361
      %v4427 = vld [vmem:[%s332] sm:$0xff]
      %v4428 = vld [vmem:[%s332 + $0x8] sm:$0xff]
      %v4429 = vld [vmem:[%s332 + $0x10] sm:$0xff]
      %v4430 = vld [vmem:[%s332 + $0x18] sm:$0xff]
      %v4431 = vld [vmem:[%s332 + $0x20] sm:$0xff]
      %v4432 = vld [vmem:[%s332 + $0x28] sm:$0xff]
      %v4433 = vld [vmem:[%s332 + $0x30] sm:$0xff]
      %v4434 = vld [vmem:[%s332 + $0x38] sm:$0xff]
      %v4435 = vld [vmem:[%s332 + $0x40] sm:$0xff]
      %v4436 = vld [vmem:[%s332 + $0x48] sm:$0xff]
      %v4437 = vld [vmem:[%s332 + $0x50] sm:$0xff]
      %v4438 = vld [vmem:[%s332 + $0x58] sm:$0xff]
      %v4439 = vld [vmem:[%s332 + $0x60] sm:$0xff]
      %v4440 = vld [vmem:[%s332 + $0x68] sm:$0xff]
      %v4441 = vld [vmem:[%s332 + $0x70] sm:$0xff]
      %v4442 = vld [vmem:[%s332 + $0x78] sm:$0xff]
      %v4443 = vld [vmem:[%s332 + $0x80] sm:$0xff]
      %v4444 = vld [vmem:[%s332 + $0x88] sm:$0xff]
      %v4445 = vld [vmem:[%s332 + $0x90] sm:$0xff]
      %v4446 = vld [vmem:[%s332 + $0x98] sm:$0xff]
      %v4447 = vld [vmem:[%s332 + $0xa0] sm:$0xff]
      %v4448 = vld [vmem:[%s332 + $0xa8] sm:$0xff]
      %v4449 = vld [vmem:[%s332 + $0xb0] sm:$0xff]
      %v4450 = vld [vmem:[%s332 + $0xb8] sm:$0xff]
      %v4451 = vld [vmem:[%s332 + $0xc0] sm:$0xff]
      %v4452 = vld [vmem:[%s332 + $0xc8] sm:$0xff]
      %v4453 = vld [vmem:[%s332 + $0xd0] sm:$0xff]
      %v4454 = vld [vmem:[%s332 + $0xd8] sm:$0xff]
      %v4455 = vld [vmem:[%s332 + $0xe0] sm:$0xff]
      %v4456 = vld [vmem:[%s332 + $0xe8] sm:$0xff]
      %v4457 = vld [vmem:[%s332 + $0xf0] sm:$0xff]
      %v4458 = vld [vmem:[%s332 + $0xf8] sm:$0xff]
      %v4459 = vld [vmem:[%s5] sm:$0x1]
      %v4461 = vlaneseq
      %v4462 = vshrl.u32 %v4461, 7
      %v4463 = vsub.s32 0, %v4462
      %v4464 = vrot.slane %v4459, %v4463
      %v4466 = vadd.f32 %v4427, %v4464
      %v4467 = vadd.f32 %v4428, %v4464
      %v4468 = vadd.f32 %v4429, %v4464
      %v4469 = vadd.f32 %v4430, %v4464
      %v4470 = vadd.f32 %v4431, %v4464
      %v4471 = vadd.f32 %v4432, %v4464
      %v4472 = vadd.f32 %v4433, %v4464
      %v4473 = vadd.f32 %v4434, %v4464
      %v4474 = vadd.f32 %v4435, %v4464
      %v4475 = vadd.f32 %v4436, %v4464
      %v4476 = vadd.f32 %v4437, %v4464
      %v4477 = vadd.f32 %v4438, %v4464
      %v4478 = vadd.f32 %v4439, %v4464
      %v4479 = vadd.f32 %v4440, %v4464
      %v4480 = vadd.f32 %v4441, %v4464
      %v4481 = vadd.f32 %v4442, %v4464
      %v4482 = vadd.f32 %v4443, %v4464
      %v4483 = vadd.f32 %v4444, %v4464
      %v4484 = vadd.f32 %v4445, %v4464
      %v4485 = vadd.f32 %v4446, %v4464
      %v4486 = vadd.f32 %v4447, %v4464
      %v4487 = vadd.f32 %v4448, %v4464
      %v4488 = vadd.f32 %v4449, %v4464
      %v4489 = vadd.f32 %v4450, %v4464
      %v4490 = vadd.f32 %v4451, %v4464
      %v4491 = vadd.f32 %v4452, %v4464
      %v4492 = vadd.f32 %v4453, %v4464
      %v4493 = vadd.f32 %v4454, %v4464
      %v4494 = vadd.f32 %v4455, %v4464
      %v4495 = vadd.f32 %v4456, %v4464
      %v4496 = vadd.f32 %v4457, %v4464
      %v4497 = vadd.f32 %v4458, %v4464
      %v4498 = vmax.f32 %v4466, 0.0
      %v4499 = vmax.f32 %v4467, 0.0
      %v4500 = vmax.f32 %v4468, 0.0
      %v4501 = vmax.f32 %v4469, 0.0
      %v4502 = vmax.f32 %v4470, 0.0
      %v4503 = vmax.f32 %v4471, 0.0
      %v4504 = vmax.f32 %v4472, 0.0
      %v4505 = vmax.f32 %v4473, 0.0
      %v4506 = vmax.f32 %v4474, 0.0
      %v4507 = vmax.f32 %v4475, 0.0
      %v4508 = vmax.f32 %v4476, 0.0
      %v4509 = vmax.f32 %v4477, 0.0
      %v4510 = vmax.f32 %v4478, 0.0
      %v4511 = vmax.f32 %v4479, 0.0
      %v4512 = vmax.f32 %v4480, 0.0
      %v4513 = vmax.f32 %v4481, 0.0
      %v4514 = vmax.f32 %v4482, 0.0
      %v4515 = vmax.f32 %v4483, 0.0
      %v4516 = vmax.f32 %v4484, 0.0
      %v4517 = vmax.f32 %v4485, 0.0
      %v4518 = vmax.f32 %v4486, 0.0
      %v4519 = vmax.f32 %v4487, 0.0
      %v4520 = vmax.f32 %v4488, 0.0
      %v4521 = vmax.f32 %v4489, 0.0
      %v4522 = vmax.f32 %v4490, 0.0
      %v4523 = vmax.f32 %v4491, 0.0
      %v4524 = vmax.f32 %v4492, 0.0
      %v4525 = vmax.f32 %v4493, 0.0
      %v4526 = vmax.f32 %v4494, 0.0
      %v4527 = vmax.f32 %v4495, 0.0
      %v4528 = vmax.f32 %v4496, 0.0
      %v4529 = vmax.f32 %v4497, 0.0
      %v4530 = vpack.c.bf16 %v4499, %v4498
      %v4531 = vpack.c.bf16 %v4501, %v4500
      %v4532 = vpack.c.bf16 %v4503, %v4502
      %v4533 = vpack.c.bf16 %v4505, %v4504
      %v4534 = vpack.c.bf16 %v4507, %v4506
      %v4535 = vpack.c.bf16 %v4509, %v4508
      %v4536 = vpack.c.bf16 %v4511, %v4510
      %v4537 = vpack.c.bf16 %v4513, %v4512
      %v4538 = vpack.c.bf16 %v4515, %v4514
      %v4539 = vpack.c.bf16 %v4517, %v4516
      %v4540 = vpack.c.bf16 %v4519, %v4518
      %v4541 = vpack.c.bf16 %v4521, %v4520
      %v4542 = vpack.c.bf16 %v4523, %v4522
      %v4543 = vpack.c.bf16 %v4525, %v4524
      %v4544 = vpack.c.bf16 %v4527, %v4526
      %v4545 = vpack.c.bf16 %v4529, %v4528
      %v4546 = vld [vmem:[%s6] sm:$0x7]
      %v4547 = vld [vmem:[%s7] sm:$0x1]
      %v4549 = vlaneseq
      %v4550 = vshrl.u32 %v4549, 7
      %v4551 = vsub.s32 0, %v4550
      %v4552 = vrot.slane %v4547, %v4551
      %vm4554 = vcmask 48128
      %v4556 = vsel %vm4554, %v4530, 0
      %v4559 = vsel %vm4554, %v4531, 0
      %v4562 = vsel %vm4554, %v4532, 0
      %v4565 = vsel %vm4554, %v4533, 0
      %v4568 = vsel %vm4554, %v4534, 0
      %v4571 = vsel %vm4554, %v4535, 0
      %v4574 = vsel %vm4554, %v4536, 0
      %v4577 = vsel %vm4554, %v4537, 0
      %v4580 = vsel %vm4554, %v4538, 0
      %v4583 = vsel %vm4554, %v4539, 0
      %v4586 = vsel %vm4554, %v4540, 0
      %v4589 = vsel %vm4554, %v4541, 0
      %v4592 = vsel %vm4554, %v4542, 0
      %v4595 = vsel %vm4554, %v4543, 0
      %v4598 = vsel %vm4554, %v4544, 0
      %v4601 = vsel %vm4554, %v4545, 0
      %vm4603 = vcmask 1042432
      %v4605 = vsel %vm4603, %v4546, 0
      %4607 = vmatprep.subr.bf16.mxu0 0
      %4608 = vmatpush1.bf16.msra.mxu0 0
      %4609 = vmatprep.subr.bf16.mxu0 0
      %4610 = vmatpush1.bf16.msra.mxu0 0
      %4611 = vmatprep.subr.bf16.mxu0 0
      %4612 = vmatpush1.bf16.msra.mxu0 0
      %4613 = vmatprep.subr.bf16.mxu0 0
      %4614 = vmatpush1.bf16.msra.mxu0 0
      %4615 = vmatprep.subr.bf16.mxu0 0
      %4616 = vmatpush1.bf16.msra.mxu0 0
      %4617 = vmatprep.subr.bf16.mxu0 0
      %4618 = vmatpush1.bf16.msra.mxu0 0
      %4619 = vmatprep.subr.bf16.mxu0 0
      %4620 = vmatpush1.bf16.msra.mxu0 0
      %4621 = vmatprep.subr.bf16.mxu0 0
      %4622 = vmatpush1.bf16.msra.mxu0 %v4605
      %4623 = vmatprep.subr.bf16.mxu0 0
      %4624 = vmatpush2.bf16.msra.mxu0 0
      %4625 = vmatprep.subr.bf16.mxu0 0
      %4626 = vmatpush2.bf16.msra.mxu0 0
      %4627 = vmatprep.subr.bf16.mxu0 0
      %4628 = vmatpush2.bf16.msra.mxu0 0
      %4629 = vmatprep.subr.bf16.mxu0 0
      %4630 = vmatpush2.bf16.msra.mxu0 0
      %4631 = vmatprep.subr.bf16.mxu0 0
      %4632 = vmatpush2.bf16.msra.mxu0 0
      %4633 = vmatprep.subr.bf16.mxu0 0
      %4634 = vmatpush2.bf16.msra.mxu0 0
      %4635 = vmatprep.subr.bf16.mxu0 0
      %4636 = vmatpush2.bf16.msra.mxu0 0
      %4637 = vmatprep.subr.bf16.mxu0 0
      %4638 = vmatpush2.bf16.msra.mxu0 0
      %4639 = vmatprep.mubr.bf16.mxu0 0
      %4640 = vmatmul.mubr.bf16.gmra.mxu0 %v4556
      %v4641 = vpop.f32.mrf.mxu0
      %v4642 = vadd.f32 %v4552, %v4641
      %v4643 = vpop.f32.mrf.mxu0
      %v4644 = vpop.f32.mrf.mxu0
      %v4645 = vadd.f32 %v4552, %v4644
      %v4646 = vpop.f32.mrf.mxu0
      %4647 = vmatprep.mubr.bf16.mxu0 0
      %4648 = vmatmul.mubr.bf16.gmra.mxu0 %v4559
      %v4649 = vpop.f32.mrf.mxu0
      %v4650 = vadd.f32 %v4552, %v4649
      %v4651 = vpop.f32.mrf.mxu0
      %v4652 = vpop.f32.mrf.mxu0
      %v4653 = vadd.f32 %v4552, %v4652
      %v4654 = vpop.f32.mrf.mxu0
      %4655 = vmatprep.mubr.bf16.mxu0 0
      %4656 = vmatmul.mubr.bf16.gmra.mxu0 %v4562
      %v4657 = vpop.f32.mrf.mxu0
      %v4658 = vadd.f32 %v4552, %v4657
      %v4659 = vpop.f32.mrf.mxu0
      %v4660 = vpop.f32.mrf.mxu0
      %v4661 = vadd.f32 %v4552, %v4660
      %v4662 = vpop.f32.mrf.mxu0
      %4663 = vmatprep.mubr.bf16.mxu0 0
      %4664 = vmatmul.mubr.bf16.gmra.mxu0 %v4565
      %v4665 = vpop.f32.mrf.mxu0
      %v4666 = vadd.f32 %v4552, %v4665
      %v4667 = vpop.f32.mrf.mxu0
      %v4668 = vpop.f32.mrf.mxu0
      %v4669 = vadd.f32 %v4552, %v4668
      %v4670 = vpop.f32.mrf.mxu0
      %4671 = vmatprep.mubr.bf16.mxu0 0
      %4672 = vmatmul.mubr.bf16.gmra.mxu0 %v4568
      %v4673 = vpop.f32.mrf.mxu0
      %v4674 = vadd.f32 %v4552, %v4673
      %v4675 = vpop.f32.mrf.mxu0
      %v4676 = vpop.f32.mrf.mxu0
      %v4677 = vadd.f32 %v4552, %v4676
      %v4678 = vpop.f32.mrf.mxu0
      %4679 = vmatprep.mubr.bf16.mxu0 0
      %4680 = vmatmul.mubr.bf16.gmra.mxu0 %v4571
      %v4681 = vpop.f32.mrf.mxu0
      %v4682 = vadd.f32 %v4552, %v4681
      %v4683 = vpop.f32.mrf.mxu0
      %v4684 = vpop.f32.mrf.mxu0
      %v4685 = vadd.f32 %v4552, %v4684
      %v4686 = vpop.f32.mrf.mxu0
      %4687 = vmatprep.mubr.bf16.mxu0 0
      %4688 = vmatmul.mubr.bf16.gmra.mxu0 %v4574
      %v4689 = vpop.f32.mrf.mxu0
      %v4690 = vadd.f32 %v4552, %v4689
      %v4691 = vpop.f32.mrf.mxu0
      %v4692 = vpop.f32.mrf.mxu0
      %v4693 = vadd.f32 %v4552, %v4692
      %v4694 = vpop.f32.mrf.mxu0
      %4695 = vmatprep.mubr.bf16.mxu0 0
      %4696 = vmatmul.mubr.bf16.gmra.mxu0 %v4577
      %v4697 = vpop.f32.mrf.mxu0
      %v4698 = vadd.f32 %v4552, %v4697
      %v4699 = vpop.f32.mrf.mxu0
      %v4700 = vpop.f32.mrf.mxu0
      %v4701 = vadd.f32 %v4552, %v4700
      %v4702 = vpop.f32.mrf.mxu0
      %4703 = vmatprep.mubr.bf16.mxu0 0
      %4704 = vmatmul.mubr.bf16.gmra.mxu0 %v4580
      %v4705 = vpop.f32.mrf.mxu0
      %v4706 = vadd.f32 %v4552, %v4705
      %v4707 = vpop.f32.mrf.mxu0
      %v4708 = vpop.f32.mrf.mxu0
      %v4709 = vadd.f32 %v4552, %v4708
      %v4710 = vpop.f32.mrf.mxu0
      %4711 = vmatprep.mubr.bf16.mxu0 0
      %4712 = vmatmul.mubr.bf16.gmra.mxu0 %v4583
      %v4713 = vpop.f32.mrf.mxu0
      %v4714 = vadd.f32 %v4552, %v4713
      %v4715 = vpop.f32.mrf.mxu0
      %v4716 = vpop.f32.mrf.mxu0
      %v4717 = vadd.f32 %v4552, %v4716
      %v4718 = vpop.f32.mrf.mxu0
      %4719 = vmatprep.mubr.bf16.mxu0 0
      %4720 = vmatmul.mubr.bf16.gmra.mxu0 %v4586
      %v4721 = vpop.f32.mrf.mxu0
      %v4722 = vadd.f32 %v4552, %v4721
      %v4723 = vpop.f32.mrf.mxu0
      %v4724 = vpop.f32.mrf.mxu0
      %v4725 = vadd.f32 %v4552, %v4724
      %v4726 = vpop.f32.mrf.mxu0
      %4727 = vmatprep.mubr.bf16.mxu0 0
      %4728 = vmatmul.mubr.bf16.gmra.mxu0 %v4589
      %v4729 = vpop.f32.mrf.mxu0
      %v4730 = vadd.f32 %v4552, %v4729
      %v4731 = vpop.f32.mrf.mxu0
      %v4732 = vpop.f32.mrf.mxu0
      %v4733 = vadd.f32 %v4552, %v4732
      %v4734 = vpop.f32.mrf.mxu0
      %4735 = vmatprep.mubr.bf16.mxu0 0
      %4736 = vmatmul.mubr.bf16.gmra.mxu0 %v4592
      %v4737 = vpop.f32.mrf.mxu0
      %v4738 = vadd.f32 %v4552, %v4737
      %v4739 = vpop.f32.mrf.mxu0
      %v4740 = vpop.f32.mrf.mxu0
      %v4741 = vadd.f32 %v4552, %v4740
      %v4742 = vpop.f32.mrf.mxu0
      %4743 = vmatprep.mubr.bf16.mxu0 0
      %4744 = vmatmul.mubr.bf16.gmra.mxu0 %v4595
      %v4745 = vpop.f32.mrf.mxu0
      %v4746 = vadd.f32 %v4552, %v4745
      %v4747 = vpop.f32.mrf.mxu0
      %v4748 = vpop.f32.mrf.mxu0
      %v4749 = vadd.f32 %v4552, %v4748
      %v4750 = vpop.f32.mrf.mxu0
      %4751 = vmatprep.mubr.bf16.mxu0 0
      %4752 = vmatmul.mubr.bf16.gmra.mxu0 %v4598
      %v4753 = vpop.f32.mrf.mxu0
      %v4754 = vadd.f32 %v4552, %v4753
      %v4755 = vpop.f32.mrf.mxu0
      %v4756 = vpop.f32.mrf.mxu0
      %v4757 = vadd.f32 %v4552, %v4756
      %v4758 = vpop.f32.mrf.mxu0
      %4759 = vmatprep.mubr.bf16.mxu0 0
      %4760 = vmatmul.mubr.bf16.gmra.mxu0 %v4601
      %v4761 = vpop.f32.mrf.mxu0
      %v4762 = vadd.f32 %v4552, %v4761
      %v4763 = vpop.f32.mrf.mxu0
      %v4764 = vpop.f32.mrf.mxu0
      %v4765 = vadd.f32 %v4552, %v4764
      %v4766 = vpop.f32.mrf.mxu0
      %4767 = vdwg.mxu0
      %v4768 = vmax.f32 %v4642, 0.0
      %v4769 = vmax.f32 %v4645, 0.0
      %v4770 = vmax.f32 %v4650, 0.0
      %v4771 = vmax.f32 %v4653, 0.0
      %v4772 = vmax.f32 %v4658, 0.0
      %v4773 = vmax.f32 %v4661, 0.0
      %v4774 = vmax.f32 %v4666, 0.0
      %v4775 = vmax.f32 %v4669, 0.0
      %v4776 = vmax.f32 %v4674, 0.0
      %v4777 = vmax.f32 %v4677, 0.0
      %v4778 = vmax.f32 %v4682, 0.0
      %v4779 = vmax.f32 %v4685, 0.0
      %v4780 = vmax.f32 %v4690, 0.0
      %v4781 = vmax.f32 %v4693, 0.0
      %v4782 = vmax.f32 %v4698, 0.0
      %v4783 = vmax.f32 %v4701, 0.0
      %v4784 = vmax.f32 %v4706, 0.0
      %v4785 = vmax.f32 %v4709, 0.0
      %v4786 = vmax.f32 %v4714, 0.0
      %v4787 = vmax.f32 %v4717, 0.0
      %v4788 = vmax.f32 %v4722, 0.0
      %v4789 = vmax.f32 %v4725, 0.0
      %v4790 = vmax.f32 %v4730, 0.0
      %v4791 = vmax.f32 %v4733, 0.0
      %v4792 = vmax.f32 %v4738, 0.0
      %v4793 = vmax.f32 %v4741, 0.0
      %v4794 = vmax.f32 %v4746, 0.0
      %v4795 = vmax.f32 %v4749, 0.0
      %v4796 = vmax.f32 %v4754, 0.0
      %v4797 = vmax.f32 %v4757, 0.0
      %v4798 = vmax.f32 %v4762, 0.0
      %v4799 = vmax.f32 %v4765, 0.0
      %v4800 = vpack.c.bf16 %v4769, %v4768
      %v4801 = vpack.c.bf16 %v4771, %v4770
      %v4802 = vpack.c.bf16 %v4773, %v4772
      %v4803 = vpack.c.bf16 %v4775, %v4774
      %v4804 = vpack.c.bf16 %v4777, %v4776
      %v4805 = vpack.c.bf16 %v4779, %v4778
      %v4806 = vpack.c.bf16 %v4781, %v4780
      %v4807 = vpack.c.bf16 %v4783, %v4782
      %v4808 = vpack.c.bf16 %v4785, %v4784
      %v4809 = vpack.c.bf16 %v4787, %v4786
      %v4810 = vpack.c.bf16 %v4789, %v4788
      %v4811 = vpack.c.bf16 %v4791, %v4790
      %v4812 = vpack.c.bf16 %v4793, %v4792
      %v4813 = vpack.c.bf16 %v4795, %v4794
      %v4814 = vpack.c.bf16 %v4797, %v4796
      %v4815 = vpack.c.bf16 %v4799, %v4798
      %v4832 = vunpack.c.l.b16 %v4800
      %v4833 = vunpack.c.h.b16 %v4800
      %v4834 = vunpack.c.l.b16 %v4801
      %v4835 = vunpack.c.h.b16 %v4801
      %v4836 = vunpack.c.l.b16 %v4802
      %v4837 = vunpack.c.h.b16 %v4802
      %v4838 = vunpack.c.l.b16 %v4803
      %v4839 = vunpack.c.h.b16 %v4803
      %v4840 = vunpack.c.l.b16 %v4804
      %v4841 = vunpack.c.h.b16 %v4804
      %v4842 = vunpack.c.l.b16 %v4805
      %v4843 = vunpack.c.h.b16 %v4805
      %v4844 = vunpack.c.l.b16 %v4806
      %v4845 = vunpack.c.h.b16 %v4806
      %v4846 = vunpack.c.l.b16 %v4807
      %v4847 = vunpack.c.h.b16 %v4807
      %v4848 = vunpack.c.l.b16 %v4808
      %v4849 = vunpack.c.h.b16 %v4808
      %v4850 = vunpack.c.l.b16 %v4809
      %v4851 = vunpack.c.h.b16 %v4809
      %v4852 = vunpack.c.l.b16 %v4810
      %v4853 = vunpack.c.h.b16 %v4810
      %v4854 = vunpack.c.l.b16 %v4811
      %v4855 = vunpack.c.h.b16 %v4811
      %v4856 = vunpack.c.l.b16 %v4812
      %v4857 = vunpack.c.h.b16 %v4812
      %v4858 = vunpack.c.l.b16 %v4813
      %v4859 = vunpack.c.h.b16 %v4813
      %v4860 = vunpack.c.l.b16 %v4814
      %v4861 = vunpack.c.h.b16 %v4814
      %v4862 = vunpack.c.l.b16 %v4815
      %v4863 = vunpack.c.h.b16 %v4815
      %v4864 = vpack.c.b16 %v4832, %v4832
      %v4865 = vpack.c.b16 %v4833, %v4833
      %v4866 = vpack.c.b16 %v4834, %v4834
      %v4867 = vpack.c.b16 %v4835, %v4835
      %v4868 = vpack.c.b16 %v4836, %v4836
      %v4869 = vpack.c.b16 %v4837, %v4837
      %v4870 = vpack.c.b16 %v4838, %v4838
      %v4871 = vpack.c.b16 %v4839, %v4839
      %v4872 = vpack.c.b16 %v4840, %v4840
      %v4873 = vpack.c.b16 %v4841, %v4841
      %v4874 = vpack.c.b16 %v4842, %v4842
      %v4875 = vpack.c.b16 %v4843, %v4843
      %v4876 = vpack.c.b16 %v4844, %v4844
      %v4877 = vpack.c.b16 %v4845, %v4845
      %v4878 = vpack.c.b16 %v4846, %v4846
      %v4879 = vpack.c.b16 %v4847, %v4847
      %v4880 = vpack.c.b16 %v4848, %v4848
      %v4881 = vpack.c.b16 %v4849, %v4849
      %v4882 = vpack.c.b16 %v4850, %v4850
      %v4883 = vpack.c.b16 %v4851, %v4851
      %v4884 = vpack.c.b16 %v4852, %v4852
      %v4885 = vpack.c.b16 %v4853, %v4853
      %v4886 = vpack.c.b16 %v4854, %v4854
      %v4887 = vpack.c.b16 %v4855, %v4855
      %v4888 = vpack.c.b16 %v4856, %v4856
      %v4889 = vpack.c.b16 %v4857, %v4857
      %v4890 = vpack.c.b16 %v4858, %v4858
      %v4891 = vpack.c.b16 %v4859, %v4859
      %v4892 = vpack.c.b16 %v4860, %v4860
      %v4893 = vpack.c.b16 %v4861, %v4861
      %v4894 = vpack.c.b16 %v4862, %v4862
      %v4895 = vpack.c.b16 %v4863, %v4863
      %v4897 = vshrl.u32 %v4864, 16
      %v4899 = vrot.slane %v4897, 7
      %v4900 = vshll.u32 %v4864, 16
      %v4902 = vor.u32 %v4899, %v4900
      %v4903 = vrot.slane %v4899, 4
      %v4905 = vshrl.u32 %v4865, 16
      %v4907 = vrot.slane %v4905, 7
      %v4908 = vshll.u32 %v4865, 16
      %v4910 = vor.u32 %v4907, %v4908
      %v4911 = vsel %vm990, %v4903, %v4910
      %v4912 = vrot.slane %v4907, 4
      %v4914 = vshrl.u32 %v4866, 16
      %v4916 = vrot.slane %v4914, 7
      %v4917 = vshll.u32 %v4866, 16
      %v4919 = vor.u32 %v4916, %v4917
      %v4920 = vrot.slane %v4916, 4
      %v4922 = vshrl.u32 %v4867, 16
      %v4924 = vrot.slane %v4922, 7
      %v4925 = vshll.u32 %v4867, 16
      %v4927 = vor.u32 %v4924, %v4925
      %v4928 = vsel %vm990, %v4920, %v4927
      %v4929 = vrot.slane %v4924, 4
      %v4931 = vshrl.u32 %v4868, 16
      %v4933 = vrot.slane %v4931, 7
      %v4934 = vshll.u32 %v4868, 16
      %v4936 = vor.u32 %v4933, %v4934
      %v4937 = vrot.slane %v4933, 4
      %v4939 = vshrl.u32 %v4869, 16
      %v4941 = vrot.slane %v4939, 7
      %v4942 = vshll.u32 %v4869, 16
      %v4944 = vor.u32 %v4941, %v4942
      %v4945 = vsel %vm990, %v4937, %v4944
      %v4946 = vrot.slane %v4941, 4
      %v4948 = vshrl.u32 %v4870, 16
      %v4950 = vrot.slane %v4948, 7
      %v4951 = vshll.u32 %v4870, 16
      %v4953 = vor.u32 %v4950, %v4951
      %v4954 = vrot.slane %v4950, 4
      %v4956 = vshrl.u32 %v4871, 16
      %v4958 = vrot.slane %v4956, 7
      %v4959 = vshll.u32 %v4871, 16
      %v4961 = vor.u32 %v4958, %v4959
      %v4962 = vsel %vm990, %v4954, %v4961
      %v4963 = vrot.slane %v4958, 4
      %v4965 = vshrl.u32 %v4872, 16
      %v4967 = vrot.slane %v4965, 7
      %v4968 = vshll.u32 %v4872, 16
      %v4970 = vor.u32 %v4967, %v4968
      %v4971 = vrot.slane %v4967, 4
      %v4973 = vshrl.u32 %v4873, 16
      %v4975 = vrot.slane %v4973, 7
      %v4976 = vshll.u32 %v4873, 16
      %v4978 = vor.u32 %v4975, %v4976
      %v4979 = vsel %vm990, %v4971, %v4978
      %v4980 = vrot.slane %v4975, 4
      %v4982 = vshrl.u32 %v4874, 16
      %v4984 = vrot.slane %v4982, 7
      %v4985 = vshll.u32 %v4874, 16
      %v4987 = vor.u32 %v4984, %v4985
      %v4988 = vrot.slane %v4984, 4
      %v4990 = vshrl.u32 %v4875, 16
      %v4992 = vrot.slane %v4990, 7
      %v4993 = vshll.u32 %v4875, 16
      %v4995 = vor.u32 %v4992, %v4993
      %v4996 = vsel %vm990, %v4988, %v4995
      %v4997 = vrot.slane %v4992, 4
      %v4999 = vshrl.u32 %v4876, 16
      %v5001 = vrot.slane %v4999, 7
      %v5002 = vshll.u32 %v4876, 16
      %v5004 = vor.u32 %v5001, %v5002
      %v5005 = vrot.slane %v5001, 4
      %v5007 = vshrl.u32 %v4877, 16
      %v5009 = vrot.slane %v5007, 7
      %v5010 = vshll.u32 %v4877, 16
      %v5012 = vor.u32 %v5009, %v5010
      %v5013 = vsel %vm990, %v5005, %v5012
      %v5014 = vrot.slane %v5009, 4
      %v5016 = vshrl.u32 %v4878, 16
      %v5018 = vrot.slane %v5016, 7
      %v5019 = vshll.u32 %v4878, 16
      %v5021 = vor.u32 %v5018, %v5019
      %v5022 = vrot.slane %v5018, 4
      %v5024 = vshrl.u32 %v4879, 16
      %v5026 = vrot.slane %v5024, 7
      %v5027 = vshll.u32 %v4879, 16
      %v5029 = vor.u32 %v5026, %v5027
      %v5030 = vsel %vm990, %v5022, %v5029
      %v5031 = vrot.slane %v5026, 4
      %v5033 = vshrl.u32 %v4880, 16
      %v5035 = vrot.slane %v5033, 7
      %v5036 = vshll.u32 %v4880, 16
      %v5038 = vor.u32 %v5035, %v5036
      %v5039 = vrot.slane %v5035, 4
      %v5041 = vshrl.u32 %v4881, 16
      %v5043 = vrot.slane %v5041, 7
      %v5044 = vshll.u32 %v4881, 16
      %v5046 = vor.u32 %v5043, %v5044
      %v5047 = vsel %vm990, %v5039, %v5046
      %v5048 = vrot.slane %v5043, 4
      %v5050 = vshrl.u32 %v4882, 16
      %v5052 = vrot.slane %v5050, 7
      %v5053 = vshll.u32 %v4882, 16
      %v5055 = vor.u32 %v5052, %v5053
      %v5056 = vrot.slane %v5052, 4
      %v5058 = vshrl.u32 %v4883, 16
      %v5060 = vrot.slane %v5058, 7
      %v5061 = vshll.u32 %v4883, 16
      %v5063 = vor.u32 %v5060, %v5061
      %v5064 = vsel %vm990, %v5056, %v5063
      %v5065 = vrot.slane %v5060, 4
      %v5067 = vshrl.u32 %v4884, 16
      %v5069 = vrot.slane %v5067, 7
      %v5070 = vshll.u32 %v4884, 16
      %v5072 = vor.u32 %v5069, %v5070
      %v5073 = vrot.slane %v5069, 4
      %v5075 = vshrl.u32 %v4885, 16
      %v5077 = vrot.slane %v5075, 7
      %v5078 = vshll.u32 %v4885, 16
      %v5080 = vor.u32 %v5077, %v5078
      %v5081 = vsel %vm990, %v5073, %v5080
      %v5082 = vrot.slane %v5077, 4
      %v5084 = vshrl.u32 %v4886, 16
      %v5086 = vrot.slane %v5084, 7
      %v5087 = vshll.u32 %v4886, 16
      %v5089 = vor.u32 %v5086, %v5087
      %v5090 = vrot.slane %v5086, 4
      %v5092 = vshrl.u32 %v4887, 16
      %v5094 = vrot.slane %v5092, 7
      %v5095 = vshll.u32 %v4887, 16
      %v5097 = vor.u32 %v5094, %v5095
      %v5098 = vsel %vm990, %v5090, %v5097
      %v5099 = vrot.slane %v5094, 4
      %v5101 = vshrl.u32 %v4888, 16
      %v5103 = vrot.slane %v5101, 7
      %v5104 = vshll.u32 %v4888, 16
      %v5106 = vor.u32 %v5103, %v5104
      %v5107 = vrot.slane %v5103, 4
      %v5109 = vshrl.u32 %v4889, 16
      %v5111 = vrot.slane %v5109, 7
      %v5112 = vshll.u32 %v4889, 16
      %v5114 = vor.u32 %v5111, %v5112
      %v5115 = vsel %vm990, %v5107, %v5114
      %v5116 = vrot.slane %v5111, 4
      %v5118 = vshrl.u32 %v4890, 16
      %v5120 = vrot.slane %v5118, 7
      %v5121 = vshll.u32 %v4890, 16
      %v5123 = vor.u32 %v5120, %v5121
      %v5124 = vrot.slane %v5120, 4
      %v5126 = vshrl.u32 %v4891, 16
      %v5128 = vrot.slane %v5126, 7
      %v5129 = vshll.u32 %v4891, 16
      %v5131 = vor.u32 %v5128, %v5129
      %v5132 = vsel %vm990, %v5124, %v5131
      %v5133 = vrot.slane %v5128, 4
      %v5135 = vshrl.u32 %v4892, 16
      %v5137 = vrot.slane %v5135, 7
      %v5138 = vshll.u32 %v4892, 16
      %v5140 = vor.u32 %v5137, %v5138
      %v5141 = vrot.slane %v5137, 4
      %v5143 = vshrl.u32 %v4893, 16
      %v5145 = vrot.slane %v5143, 7
      %v5146 = vshll.u32 %v4893, 16
      %v5148 = vor.u32 %v5145, %v5146
      %v5149 = vsel %vm990, %v5141, %v5148
      %v5150 = vrot.slane %v5145, 4
      %v5152 = vshrl.u32 %v4894, 16
      %v5154 = vrot.slane %v5152, 7
      %v5155 = vshll.u32 %v4894, 16
      %v5157 = vor.u32 %v5154, %v5155
      %v5158 = vrot.slane %v5154, 4
      %v5160 = vshrl.u32 %v4895, 16
      %v5162 = vrot.slane %v5160, 7
      %v5163 = vshll.u32 %v4895, 16
      %v5165 = vor.u32 %v5162, %v5163
      %v5166 = vsel %vm990, %v5158, %v5165
      %v5167 = vrot.slane %v5162, 4
      %v5216 = vld [vmem:[%s1311] sm:$0xf]
      %v5217 = vsel %vm1313, %v4902, %v5216
      %5218 = vst [vmem:[%s1311] sm:$0xf] %v5217
      %5219 = vst.msk [vmem:[%s1311 + $0x4] sm:$0xf] %vm399, %v4911
      %v5220 = vld [vmem:[%s1311 + $0x8] sm:$0x1]
      %v5221 = vsel %vm410, %v4912, %v5220
      %5222 = vst [vmem:[%s1311 + $0x8] sm:$0x1] %v5221
      %v5223 = vld [vmem:[%s1311 + $0xc] sm:$0xf]
      %v5224 = vsel %vm1313, %v4919, %v5223
      %5225 = vst [vmem:[%s1311 + $0xc] sm:$0xf] %v5224
      %5226 = vst.msk [vmem:[%s1311 + $0x10] sm:$0xf] %vm399, %v4928
      %v5227 = vld [vmem:[%s1311 + $0x14] sm:$0x1]
      %v5228 = vsel %vm410, %v4929, %v5227
      %5229 = vst [vmem:[%s1311 + $0x14] sm:$0x1] %v5228
      %v5230 = vld [vmem:[%s1311 + $0x18] sm:$0xf]
      %v5231 = vsel %vm1313, %v4936, %v5230
      %5232 = vst [vmem:[%s1311 + $0x18] sm:$0xf] %v5231
      %5233 = vst.msk [vmem:[%s1311 + $0x1c] sm:$0xf] %vm399, %v4945
      %v5234 = vld [vmem:[%s1311 + $0x20] sm:$0x1]
      %v5235 = vsel %vm410, %v4946, %v5234
      %5236 = vst [vmem:[%s1311 + $0x20] sm:$0x1] %v5235
      %v5237 = vld [vmem:[%s1311 + $0x24] sm:$0xf]
      %v5238 = vsel %vm1313, %v4953, %v5237
      %5239 = vst [vmem:[%s1311 + $0x24] sm:$0xf] %v5238
      %5240 = vst.msk [vmem:[%s1311 + $0x28] sm:$0xf] %vm399, %v4962
      %v5241 = vld [vmem:[%s1311 + $0x2c] sm:$0x1]
      %v5242 = vsel %vm410, %v4963, %v5241
      %5243 = vst [vmem:[%s1311 + $0x2c] sm:$0x1] %v5242
      %v5244 = vld [vmem:[%s1311 + $0x30] sm:$0xf]
      %v5245 = vsel %vm1313, %v4970, %v5244
      %5246 = vst [vmem:[%s1311 + $0x30] sm:$0xf] %v5245
      %5247 = vst.msk [vmem:[%s1311 + $0x34] sm:$0xf] %vm399, %v4979
      %v5248 = vld [vmem:[%s1311 + $0x38] sm:$0x1]
      %v5249 = vsel %vm410, %v4980, %v5248
      %5250 = vst [vmem:[%s1311 + $0x38] sm:$0x1] %v5249
      %v5251 = vld [vmem:[%s1311 + $0x3c] sm:$0xf]
      %v5252 = vsel %vm1313, %v4987, %v5251
      %5253 = vst [vmem:[%s1311 + $0x3c] sm:$0xf] %v5252
      %5254 = vst.msk [vmem:[%s1311 + $0x40] sm:$0xf] %vm399, %v4996
      %v5255 = vld [vmem:[%s1311 + $0x44] sm:$0x1]
      %v5256 = vsel %vm410, %v4997, %v5255
      %5257 = vst [vmem:[%s1311 + $0x44] sm:$0x1] %v5256
      %v5258 = vld [vmem:[%s1311 + $0x48] sm:$0xf]
      %v5259 = vsel %vm1313, %v5004, %v5258
      %5260 = vst [vmem:[%s1311 + $0x48] sm:$0xf] %v5259
      %5261 = vst.msk [vmem:[%s1311 + $0x4c] sm:$0xf] %vm399, %v5013
      %v5262 = vld [vmem:[%s1311 + $0x50] sm:$0x1]
      %v5263 = vsel %vm410, %v5014, %v5262
      %5264 = vst [vmem:[%s1311 + $0x50] sm:$0x1] %v5263
      %v5265 = vld [vmem:[%s1311 + $0x54] sm:$0xf]
      %v5266 = vsel %vm1313, %v5021, %v5265
      %5267 = vst [vmem:[%s1311 + $0x54] sm:$0xf] %v5266
      %5268 = vst.msk [vmem:[%s1311 + $0x58] sm:$0xf] %vm399, %v5030
      %v5269 = vld [vmem:[%s1311 + $0x5c] sm:$0x1]
      %v5270 = vsel %vm410, %v5031, %v5269
      %5271 = vst [vmem:[%s1311 + $0x5c] sm:$0x1] %v5270
      %v5272 = vld [vmem:[%s1311 + $0x60] sm:$0xf]
      %v5273 = vsel %vm1313, %v5038, %v5272
      %5274 = vst [vmem:[%s1311 + $0x60] sm:$0xf] %v5273
      %5275 = vst.msk [vmem:[%s1311 + $0x64] sm:$0xf] %vm399, %v5047
      %v5276 = vld [vmem:[%s1311 + $0x68] sm:$0x1]
      %v5277 = vsel %vm410, %v5048, %v5276
      %5278 = vst [vmem:[%s1311 + $0x68] sm:$0x1] %v5277
      %v5279 = vld [vmem:[%s1311 + $0x6c] sm:$0xf]
      %v5280 = vsel %vm1313, %v5055, %v5279
      %5281 = vst [vmem:[%s1311 + $0x6c] sm:$0xf] %v5280
      %5282 = vst.msk [vmem:[%s1311 + $0x70] sm:$0xf] %vm399, %v5064
      %v5283 = vld [vmem:[%s1311 + $0x74] sm:$0x1]
      %v5284 = vsel %vm410, %v5065, %v5283
      %5285 = vst [vmem:[%s1311 + $0x74] sm:$0x1] %v5284
      %v5286 = vld [vmem:[%s1311 + $0x78] sm:$0xf]
      %v5287 = vsel %vm1313, %v5072, %v5286
      %5288 = vst [vmem:[%s1311 + $0x78] sm:$0xf] %v5287
      %5289 = vst.msk [vmem:[%s1311 + $0x7c] sm:$0xf] %vm399, %v5081
      %v5290 = vld [vmem:[%s1311 + $0x80] sm:$0x1]
      %v5291 = vsel %vm410, %v5082, %v5290
      %5292 = vst [vmem:[%s1311 + $0x80] sm:$0x1] %v5291
      %v5293 = vld [vmem:[%s1311 + $0x84] sm:$0xf]
      %v5294 = vsel %vm1313, %v5089, %v5293
      %5295 = vst [vmem:[%s1311 + $0x84] sm:$0xf] %v5294
      %5296 = vst.msk [vmem:[%s1311 + $0x88] sm:$0xf] %vm399, %v5098
      %v5297 = vld [vmem:[%s1311 + $0x8c] sm:$0x1]
      %v5298 = vsel %vm410, %v5099, %v5297
      %5299 = vst [vmem:[%s1311 + $0x8c] sm:$0x1] %v5298
      %v5300 = vld [vmem:[%s1311 + $0x90] sm:$0xf]
      %v5301 = vsel %vm1313, %v5106, %v5300
      %5302 = vst [vmem:[%s1311 + $0x90] sm:$0xf] %v5301
      %5303 = vst.msk [vmem:[%s1311 + $0x94] sm:$0xf] %vm399, %v5115
      %v5304 = vld [vmem:[%s1311 + $0x98] sm:$0x1]
      %v5305 = vsel %vm410, %v5116, %v5304
      %5306 = vst [vmem:[%s1311 + $0x98] sm:$0x1] %v5305
      %v5307 = vld [vmem:[%s1311 + $0x9c] sm:$0xf]
      %v5308 = vsel %vm1313, %v5123, %v5307
      %5309 = vst [vmem:[%s1311 + $0x9c] sm:$0xf] %v5308
      %5310 = vst.msk [vmem:[%s1311 + $0xa0] sm:$0xf] %vm399, %v5132
      %v5311 = vld [vmem:[%s1311 + $0xa4] sm:$0x1]
      %v5312 = vsel %vm410, %v5133, %v5311
      %5313 = vst [vmem:[%s1311 + $0xa4] sm:$0x1] %v5312
      %v5314 = vld [vmem:[%s1311 + $0xa8] sm:$0xf]
      %v5315 = vsel %vm1313, %v5140, %v5314
      %5316 = vst [vmem:[%s1311 + $0xa8] sm:$0xf] %v5315
      %5317 = vst.msk [vmem:[%s1311 + $0xac] sm:$0xf] %vm399, %v5149
      %v5318 = vld [vmem:[%s1311 + $0xb0] sm:$0x1]
      %v5319 = vsel %vm410, %v5150, %v5318
      %5320 = vst [vmem:[%s1311 + $0xb0] sm:$0x1] %v5319
      %v5321 = vld [vmem:[%s1311 + $0xb4] sm:$0xf]
      %v5322 = vsel %vm1313, %v5157, %v5321
      %5323 = vst [vmem:[%s1311 + $0xb4] sm:$0xf] %v5322
      %5324 = vst.msk [vmem:[%s1311 + $0xb8] sm:$0xf] %vm399, %v5166
      %v5325 = vld [vmem:[%s1311 + $0xbc] sm:$0x1]
      %v5326 = vsel %vm410, %v5167, %v5325
      %5327 = vst [vmem:[%s1311 + $0xbc] sm:$0x1] %v5326
      %v5328 = vld [vmem:[#allocation2] sm:$0xf]
      %v5329 = vld [vmem:[#allocation2 + $0x4] sm:$0xf]
      %v5330 = vld [vmem:[#allocation2 + $0xc] sm:$0xf]
      %v5331 = vld [vmem:[#allocation2 + $0x10] sm:$0xf]
      %v5332 = vld [vmem:[#allocation2 + $0x18] sm:$0xf]
      %v5333 = vld [vmem:[#allocation2 + $0x1c] sm:$0xf]
      %v5334 = vld [vmem:[#allocation2 + $0x24] sm:$0xf]
      %v5335 = vld [vmem:[#allocation2 + $0x28] sm:$0xf]
      %v5336 = vld [vmem:[#allocation2 + $0x30] sm:$0xf]
      %v5337 = vld [vmem:[#allocation2 + $0x34] sm:$0xf]
      %v5338 = vld [vmem:[#allocation2 + $0x3c] sm:$0xf]
      %v5339 = vld [vmem:[#allocation2 + $0x40] sm:$0xf]
      %v5340 = vld [vmem:[#allocation2 + $0x48] sm:$0xf]
      %v5341 = vld [vmem:[#allocation2 + $0x4c] sm:$0xf]
      %v5342 = vld [vmem:[#allocation2 + $0x54] sm:$0xf]
      %v5343 = vld [vmem:[#allocation2 + $0x58] sm:$0xf]
      %v5344 = vld [vmem:[#allocation2 + $0x60] sm:$0xf]
      %v5345 = vld [vmem:[#allocation2 + $0x64] sm:$0xf]
      %v5346 = vld [vmem:[#allocation2 + $0x6c] sm:$0xf]
      %v5347 = vld [vmem:[#allocation2 + $0x70] sm:$0xf]
      %v5348 = vld [vmem:[#allocation2 + $0x78] sm:$0xf]
      %v5349 = vld [vmem:[#allocation2 + $0x7c] sm:$0xf]
      %v5350 = vld [vmem:[#allocation2 + $0x84] sm:$0xf]
      %v5351 = vld [vmem:[#allocation2 + $0x88] sm:$0xf]
      %v5352 = vld [vmem:[#allocation2 + $0x90] sm:$0xf]
      %v5353 = vld [vmem:[#allocation2 + $0x94] sm:$0xf]
      %v5354 = vld [vmem:[#allocation2 + $0x9c] sm:$0xf]
      %v5355 = vld [vmem:[#allocation2 + $0xa0] sm:$0xf]
      %v5356 = vld [vmem:[#allocation2 + $0xa8] sm:$0xf]
      %v5357 = vld [vmem:[#allocation2 + $0xac] sm:$0xf]
      %v5358 = vld [vmem:[#allocation2 + $0xb4] sm:$0xf]
      %v5359 = vld [vmem:[#allocation2 + $0xb8] sm:$0xf]
      %v5360 = vld [vmem:[#allocation2 + $0xc0] sm:$0xf]
      %v5361 = vld [vmem:[#allocation2 + $0xc4] sm:$0xf]
      %v5362 = vld [vmem:[#allocation2 + $0xcc] sm:$0xf]
      %v5363 = vld [vmem:[#allocation2 + $0xd0] sm:$0xf]
      %v5364 = vld [vmem:[%s8] sm:$0xf]
      %v5365 = vld [vmem:[%s8 + $0x4] sm:$0xf]
      %s5366 = scalar_lea.vmem %s8, 24
      %v5367 = vld [vmem:[%s5366] sm:$0xf]
      %v5368 = vld [vmem:[%s5366 + $0x4] sm:$0xf]
      %v5401 = vunpack.c.l.b16 %v5330
      %v5402 = vunpack.c.l.b16 %v5331
      %v5403 = vunpack.c.l.b16 %v5332
      %v5404 = vunpack.c.l.b16 %v5333
      %v5405 = vunpack.c.l.b16 %v5334
      %v5406 = vunpack.c.l.b16 %v5335
      %v5407 = vunpack.c.l.b16 %v5336
      %v5408 = vunpack.c.l.b16 %v5337
      %v5409 = vunpack.c.l.b16 %v5338
      %v5410 = vunpack.c.l.b16 %v5339
      %v5411 = vunpack.c.l.b16 %v5340
      %v5412 = vunpack.c.l.b16 %v5341
      %v5413 = vunpack.c.l.b16 %v5342
      %v5414 = vunpack.c.l.b16 %v5343
      %v5415 = vunpack.c.l.b16 %v5344
      %v5416 = vunpack.c.l.b16 %v5345
      %v5417 = vunpack.c.l.b16 %v5346
      %v5418 = vunpack.c.l.b16 %v5347
      %v5419 = vunpack.c.l.b16 %v5348
      %v5420 = vunpack.c.l.b16 %v5349
      %v5421 = vunpack.c.l.b16 %v5350
      %v5422 = vunpack.c.l.b16 %v5351
      %v5423 = vunpack.c.l.b16 %v5352
      %v5424 = vunpack.c.l.b16 %v5353
      %v5425 = vunpack.c.l.b16 %v5354
      %v5426 = vunpack.c.l.b16 %v5355
      %v5427 = vunpack.c.l.b16 %v5356
      %v5428 = vunpack.c.l.b16 %v5357
      %v5429 = vunpack.c.l.b16 %v5358
      %v5430 = vunpack.c.l.b16 %v5359
      %v5431 = vunpack.c.l.b16 %v5360
      %v5432 = vunpack.c.l.b16 %v5361
      %v5433 = vpack.c.b16 %v5402, %v5401
      %v5434 = vpack.c.b16 %v5404, %v5403
      %v5435 = vpack.c.b16 %v5406, %v5405
      %v5436 = vpack.c.b16 %v5408, %v5407
      %v5437 = vpack.c.b16 %v5410, %v5409
      %v5438 = vpack.c.b16 %v5412, %v5411
      %v5439 = vpack.c.b16 %v5414, %v5413
      %v5440 = vpack.c.b16 %v5416, %v5415
      %v5441 = vpack.c.b16 %v5418, %v5417
      %v5442 = vpack.c.b16 %v5420, %v5419
      %v5443 = vpack.c.b16 %v5422, %v5421
      %v5444 = vpack.c.b16 %v5424, %v5423
      %v5445 = vpack.c.b16 %v5426, %v5425
      %v5446 = vpack.c.b16 %v5428, %v5427
      %v5447 = vpack.c.b16 %v5430, %v5429
      %v5448 = vpack.c.b16 %v5432, %v5431
      %v5451 = vunpack.c.l.b16 %v5367
      %v5452 = vunpack.c.l.b16 %v5368
      %v5453 = vpack.c.b16 %v5452, %v5451
      %v5456 = vsel %vm1553, %v5433, 0
      %v5459 = vsel %vm1553, %v5434, 0
      %v5462 = vsel %vm1553, %v5435, 0
      %v5465 = vsel %vm1553, %v5436, 0
      %v5468 = vsel %vm1553, %v5437, 0
      %v5471 = vsel %vm1553, %v5438, 0
      %v5474 = vsel %vm1553, %v5439, 0
      %v5477 = vsel %vm1553, %v5440, 0
      %v5480 = vsel %vm1553, %v5441, 0
      %v5483 = vsel %vm1553, %v5442, 0
      %v5486 = vsel %vm1553, %v5443, 0
      %v5489 = vsel %vm1553, %v5444, 0
      %v5492 = vsel %vm1553, %v5445, 0
      %v5495 = vsel %vm1553, %v5446, 0
      %v5498 = vsel %vm1553, %v5447, 0
      %v5501 = vsel %vm1553, %v5448, 0
      %5503 = vmatprep.subr.bf16.mxu0 0
      %5504 = vmatpush1.bf16.msra.mxu0 0
      %5505 = vmatprep.subr.bf16.mxu0 0
      %5506 = vmatpush1.bf16.msra.mxu0 0
      %5507 = vmatprep.subr.bf16.mxu0 0
      %5508 = vmatpush1.bf16.msra.mxu0 0
      %5509 = vmatprep.subr.bf16.mxu0 0
      %5510 = vmatpush1.bf16.msra.mxu0 0
      %5511 = vmatprep.subr.bf16.mxu0 0
      %5512 = vmatpush1.bf16.msra.mxu0 0
      %5513 = vmatprep.subr.bf16.mxu0 0
      %5514 = vmatpush1.bf16.msra.mxu0 0
      %5515 = vmatprep.subr.bf16.mxu0 0
      %5516 = vmatpush1.bf16.msra.mxu0 0
      %5517 = vmatprep.subr.bf16.mxu0 0
      %5518 = vmatpush1.bf16.msra.mxu0 %v5453
      %5519 = vmatprep.subr.bf16.mxu0 0
      %5520 = vmatpush2.bf16.msra.mxu0 0
      %5521 = vmatprep.subr.bf16.mxu0 0
      %5522 = vmatpush2.bf16.msra.mxu0 0
      %5523 = vmatprep.subr.bf16.mxu0 0
      %5524 = vmatpush2.bf16.msra.mxu0 0
      %5525 = vmatprep.subr.bf16.mxu0 0
      %5526 = vmatpush2.bf16.msra.mxu0 0
      %5527 = vmatprep.subr.bf16.mxu0 0
      %5528 = vmatpush2.bf16.msra.mxu0 0
      %5529 = vmatprep.subr.bf16.mxu0 0
      %5530 = vmatpush2.bf16.msra.mxu0 0
      %5531 = vmatprep.subr.bf16.mxu0 0
      %5532 = vmatpush2.bf16.msra.mxu0 0
      %5533 = vmatprep.subr.bf16.mxu0 0
      %5534 = vmatpush2.bf16.msra.mxu0 0
      %5535 = vmatprep.mubr.bf16.mxu0 0
      %5536 = vmatmul.mubr.bf16.gmra.mxu0 %v5456
      %v5537 = vpop.f32.mrf.mxu0
      %v5538 = vadd.f32 0.0, %v5537
      %v5539 = vpop.f32.mrf.mxu0
      %v5540 = vpop.f32.mrf.mxu0
      %v5541 = vadd.f32 0.0, %v5540
      %v5542 = vpop.f32.mrf.mxu0
      %5543 = vmatprep.mubr.bf16.mxu0 0
      %5544 = vmatmul.mubr.bf16.gmra.mxu0 %v5459
      %v5545 = vpop.f32.mrf.mxu0
      %v5546 = vadd.f32 0.0, %v5545
      %v5547 = vpop.f32.mrf.mxu0
      %v5548 = vpop.f32.mrf.mxu0
      %v5549 = vadd.f32 0.0, %v5548
      %v5550 = vpop.f32.mrf.mxu0
      %5551 = vmatprep.mubr.bf16.mxu0 0
      %5552 = vmatmul.mubr.bf16.gmra.mxu0 %v5462
      %v5553 = vpop.f32.mrf.mxu0
      %v5554 = vadd.f32 0.0, %v5553
      %v5555 = vpop.f32.mrf.mxu0
      %v5556 = vpop.f32.mrf.mxu0
      %v5557 = vadd.f32 0.0, %v5556
      %v5558 = vpop.f32.mrf.mxu0
      %5559 = vmatprep.mubr.bf16.mxu0 0
      %5560 = vmatmul.mubr.bf16.gmra.mxu0 %v5465
      %v5561 = vpop.f32.mrf.mxu0
      %v5562 = vadd.f32 0.0, %v5561
      %v5563 = vpop.f32.mrf.mxu0
      %v5564 = vpop.f32.mrf.mxu0
      %v5565 = vadd.f32 0.0, %v5564
      %v5566 = vpop.f32.mrf.mxu0
      %5567 = vmatprep.mubr.bf16.mxu0 0
      %5568 = vmatmul.mubr.bf16.gmra.mxu0 %v5468
      %v5569 = vpop.f32.mrf.mxu0
      %v5570 = vadd.f32 0.0, %v5569
      %v5571 = vpop.f32.mrf.mxu0
      %v5572 = vpop.f32.mrf.mxu0
      %v5573 = vadd.f32 0.0, %v5572
      %v5574 = vpop.f32.mrf.mxu0
      %5575 = vmatprep.mubr.bf16.mxu0 0
      %5576 = vmatmul.mubr.bf16.gmra.mxu0 %v5471
      %v5577 = vpop.f32.mrf.mxu0
      %v5578 = vadd.f32 0.0, %v5577
      %v5579 = vpop.f32.mrf.mxu0
      %v5580 = vpop.f32.mrf.mxu0
      %v5581 = vadd.f32 0.0, %v5580
      %v5582 = vpop.f32.mrf.mxu0
      %5583 = vmatprep.mubr.bf16.mxu0 0
      %5584 = vmatmul.mubr.bf16.gmra.mxu0 %v5474
      %v5585 = vpop.f32.mrf.mxu0
      %v5586 = vadd.f32 0.0, %v5585
      %v5587 = vpop.f32.mrf.mxu0
      %v5588 = vpop.f32.mrf.mxu0
      %v5589 = vadd.f32 0.0, %v5588
      %v5590 = vpop.f32.mrf.mxu0
      %5591 = vmatprep.mubr.bf16.mxu0 0
      %5592 = vmatmul.mubr.bf16.gmra.mxu0 %v5477
      %v5593 = vpop.f32.mrf.mxu0
      %v5594 = vadd.f32 0.0, %v5593
      %v5595 = vpop.f32.mrf.mxu0
      %v5596 = vpop.f32.mrf.mxu0
      %v5597 = vadd.f32 0.0, %v5596
      %v5598 = vpop.f32.mrf.mxu0
      %5599 = vmatprep.mubr.bf16.mxu0 0
      %5600 = vmatmul.mubr.bf16.gmra.mxu0 %v5480
      %v5601 = vpop.f32.mrf.mxu0
      %v5602 = vadd.f32 0.0, %v5601
      %v5603 = vpop.f32.mrf.mxu0
      %v5604 = vpop.f32.mrf.mxu0
      %v5605 = vadd.f32 0.0, %v5604
      %v5606 = vpop.f32.mrf.mxu0
      %5607 = vmatprep.mubr.bf16.mxu0 0
      %5608 = vmatmul.mubr.bf16.gmra.mxu0 %v5483
      %v5609 = vpop.f32.mrf.mxu0
      %v5610 = vadd.f32 0.0, %v5609
      %v5611 = vpop.f32.mrf.mxu0
      %v5612 = vpop.f32.mrf.mxu0
      %v5613 = vadd.f32 0.0, %v5612
      %v5614 = vpop.f32.mrf.mxu0
      %5615 = vmatprep.mubr.bf16.mxu0 0
      %5616 = vmatmul.mubr.bf16.gmra.mxu0 %v5486
      %v5617 = vpop.f32.mrf.mxu0
      %v5618 = vadd.f32 0.0, %v5617
      %v5619 = vpop.f32.mrf.mxu0
      %v5620 = vpop.f32.mrf.mxu0
      %v5621 = vadd.f32 0.0, %v5620
      %v5622 = vpop.f32.mrf.mxu0
      %5623 = vmatprep.mubr.bf16.mxu0 0
      %5624 = vmatmul.mubr.bf16.gmra.mxu0 %v5489
      %v5625 = vpop.f32.mrf.mxu0
      %v5626 = vadd.f32 0.0, %v5625
      %v5627 = vpop.f32.mrf.mxu0
      %v5628 = vpop.f32.mrf.mxu0
      %v5629 = vadd.f32 0.0, %v5628
      %v5630 = vpop.f32.mrf.mxu0
      %5631 = vmatprep.mubr.bf16.mxu0 0
      %5632 = vmatmul.mubr.bf16.gmra.mxu0 %v5492
      %v5633 = vpop.f32.mrf.mxu0
      %v5634 = vadd.f32 0.0, %v5633
      %v5635 = vpop.f32.mrf.mxu0
      %v5636 = vpop.f32.mrf.mxu0
      %v5637 = vadd.f32 0.0, %v5636
      %v5638 = vpop.f32.mrf.mxu0
      %5639 = vmatprep.mubr.bf16.mxu0 0
      %5640 = vmatmul.mubr.bf16.gmra.mxu0 %v5495
      %v5641 = vpop.f32.mrf.mxu0
      %v5642 = vadd.f32 0.0, %v5641
      %v5643 = vpop.f32.mrf.mxu0
      %v5644 = vpop.f32.mrf.mxu0
      %v5645 = vadd.f32 0.0, %v5644
      %v5646 = vpop.f32.mrf.mxu0
      %5647 = vmatprep.mubr.bf16.mxu0 0
      %5648 = vmatmul.mubr.bf16.gmra.mxu0 %v5498
      %v5649 = vpop.f32.mrf.mxu0
      %v5650 = vadd.f32 0.0, %v5649
      %v5651 = vpop.f32.mrf.mxu0
      %v5652 = vpop.f32.mrf.mxu0
      %v5653 = vadd.f32 0.0, %v5652
      %v5654 = vpop.f32.mrf.mxu0
      %5655 = vmatprep.mubr.bf16.mxu0 0
      %5656 = vmatmul.mubr.bf16.gmra.mxu0 %v5501
      %v5657 = vpop.f32.mrf.mxu0
      %v5658 = vadd.f32 0.0, %v5657
      %v5659 = vpop.f32.mrf.mxu0
      %v5660 = vpop.f32.mrf.mxu0
      %v5661 = vadd.f32 0.0, %v5660
      %v5662 = vpop.f32.mrf.mxu0
      %5663 = vdwg.mxu0
      %v5666 = vunpack.c.l.b16 %v5328
      %v5667 = vunpack.c.l.b16 %v5329
      %v5668 = vpack.c.b16 %v5667, %v5666
      %v5671 = vunpack.c.l.b16 %v5364
      %v5672 = vunpack.c.l.b16 %v5365
      %v5673 = vpack.c.b16 %v5672, %v5671
      %v5676 = vsel %vm1553, %v5668, 0
      %5678 = vmatprep.subr.bf16.mxu0 0
      %5679 = vmatpush1.bf16.msra.mxu0 0
      %5680 = vmatprep.subr.bf16.mxu0 0
      %5681 = vmatpush1.bf16.msra.mxu0 0
      %5682 = vmatprep.subr.bf16.mxu0 0
      %5683 = vmatpush1.bf16.msra.mxu0 0
      %5684 = vmatprep.subr.bf16.mxu0 0
      %5685 = vmatpush1.bf16.msra.mxu0 0
      %5686 = vmatprep.subr.bf16.mxu0 0
      %5687 = vmatpush1.bf16.msra.mxu0 0
      %5688 = vmatprep.subr.bf16.mxu0 0
      %5689 = vmatpush1.bf16.msra.mxu0 0
      %5690 = vmatprep.subr.bf16.mxu0 0
      %5691 = vmatpush1.bf16.msra.mxu0 0
      %5692 = vmatprep.subr.bf16.mxu0 0
      %5693 = vmatpush1.bf16.msra.mxu0 %v5673
      %5694 = vmatprep.subr.bf16.mxu0 0
      %5695 = vmatpush2.bf16.msra.mxu0 0
      %5696 = vmatprep.subr.bf16.mxu0 0
      %5697 = vmatpush2.bf16.msra.mxu0 0
      %5698 = vmatprep.subr.bf16.mxu0 0
      %5699 = vmatpush2.bf16.msra.mxu0 0
      %5700 = vmatprep.subr.bf16.mxu0 0
      %5701 = vmatpush2.bf16.msra.mxu0 0
      %5702 = vmatprep.subr.bf16.mxu0 0
      %5703 = vmatpush2.bf16.msra.mxu0 0
      %5704 = vmatprep.subr.bf16.mxu0 0
      %5705 = vmatpush2.bf16.msra.mxu0 0
      %5706 = vmatprep.subr.bf16.mxu0 0
      %5707 = vmatpush2.bf16.msra.mxu0 0
      %5708 = vmatprep.subr.bf16.mxu0 0
      %5709 = vmatpush2.bf16.msra.mxu0 0
      %5710 = vmatprep.mubr.bf16.mxu0 0
      %5711 = vmatmul.mubr.bf16.gmra.mxu0 %v5676
      %v5712 = vpop.f32.mrf.mxu0
      %v5713 = vadd.f32 %v5538, %v5712
      %v5714 = vpop.f32.mrf.mxu0
      %v5715 = vpop.f32.mrf.mxu0
      %v5716 = vadd.f32 %v5541, %v5715
      %v5717 = vpop.f32.mrf.mxu0
      %5718 = vmatprep.mubr.bf16.mxu0 0
      %5719 = vmatmul.mubr.bf16.gmra.mxu0 %v5456
      %v5720 = vpop.f32.mrf.mxu0
      %v5721 = vadd.f32 %v5546, %v5720
      %v5722 = vpop.f32.mrf.mxu0
      %v5723 = vpop.f32.mrf.mxu0
      %v5724 = vadd.f32 %v5549, %v5723
      %v5725 = vpop.f32.mrf.mxu0
      %5726 = vmatprep.mubr.bf16.mxu0 0
      %5727 = vmatmul.mubr.bf16.gmra.mxu0 %v5459
      %v5728 = vpop.f32.mrf.mxu0
      %v5729 = vadd.f32 %v5554, %v5728
      %v5730 = vpop.f32.mrf.mxu0
      %v5731 = vpop.f32.mrf.mxu0
      %v5732 = vadd.f32 %v5557, %v5731
      %v5733 = vpop.f32.mrf.mxu0
      %5734 = vmatprep.mubr.bf16.mxu0 0
      %5735 = vmatmul.mubr.bf16.gmra.mxu0 %v5462
      %v5736 = vpop.f32.mrf.mxu0
      %v5737 = vadd.f32 %v5562, %v5736
      %v5738 = vpop.f32.mrf.mxu0
      %v5739 = vpop.f32.mrf.mxu0
      %v5740 = vadd.f32 %v5565, %v5739
      %v5741 = vpop.f32.mrf.mxu0
      %5742 = vmatprep.mubr.bf16.mxu0 0
      %5743 = vmatmul.mubr.bf16.gmra.mxu0 %v5465
      %v5744 = vpop.f32.mrf.mxu0
      %v5745 = vadd.f32 %v5570, %v5744
      %v5746 = vpop.f32.mrf.mxu0
      %v5747 = vpop.f32.mrf.mxu0
      %v5748 = vadd.f32 %v5573, %v5747
      %v5749 = vpop.f32.mrf.mxu0
      %5750 = vmatprep.mubr.bf16.mxu0 0
      %5751 = vmatmul.mubr.bf16.gmra.mxu0 %v5468
      %v5752 = vpop.f32.mrf.mxu0
      %v5753 = vadd.f32 %v5578, %v5752
      %v5754 = vpop.f32.mrf.mxu0
      %v5755 = vpop.f32.mrf.mxu0
      %v5756 = vadd.f32 %v5581, %v5755
      %v5757 = vpop.f32.mrf.mxu0
      %5758 = vmatprep.mubr.bf16.mxu0 0
      %5759 = vmatmul.mubr.bf16.gmra.mxu0 %v5471
      %v5760 = vpop.f32.mrf.mxu0
      %v5761 = vadd.f32 %v5586, %v5760
      %v5762 = vpop.f32.mrf.mxu0
      %v5763 = vpop.f32.mrf.mxu0
      %v5764 = vadd.f32 %v5589, %v5763
      %v5765 = vpop.f32.mrf.mxu0
      %5766 = vmatprep.mubr.bf16.mxu0 0
      %5767 = vmatmul.mubr.bf16.gmra.mxu0 %v5474
      %v5768 = vpop.f32.mrf.mxu0
      %v5769 = vadd.f32 %v5594, %v5768
      %v5770 = vpop.f32.mrf.mxu0
      %v5771 = vpop.f32.mrf.mxu0
      %v5772 = vadd.f32 %v5597, %v5771
      %v5773 = vpop.f32.mrf.mxu0
      %5774 = vmatprep.mubr.bf16.mxu0 0
      %5775 = vmatmul.mubr.bf16.gmra.mxu0 %v5477
      %v5776 = vpop.f32.mrf.mxu0
      %v5777 = vadd.f32 %v5602, %v5776
      %v5778 = vpop.f32.mrf.mxu0
      %v5779 = vpop.f32.mrf.mxu0
      %v5780 = vadd.f32 %v5605, %v5779
      %v5781 = vpop.f32.mrf.mxu0
      %5782 = vmatprep.mubr.bf16.mxu0 0
      %5783 = vmatmul.mubr.bf16.gmra.mxu0 %v5480
      %v5784 = vpop.f32.mrf.mxu0
      %v5785 = vadd.f32 %v5610, %v5784
      %v5786 = vpop.f32.mrf.mxu0
      %v5787 = vpop.f32.mrf.mxu0
      %v5788 = vadd.f32 %v5613, %v5787
      %v5789 = vpop.f32.mrf.mxu0
      %5790 = vmatprep.mubr.bf16.mxu0 0
      %5791 = vmatmul.mubr.bf16.gmra.mxu0 %v5483
      %v5792 = vpop.f32.mrf.mxu0
      %v5793 = vadd.f32 %v5618, %v5792
      %v5794 = vpop.f32.mrf.mxu0
      %v5795 = vpop.f32.mrf.mxu0
      %v5796 = vadd.f32 %v5621, %v5795
      %v5797 = vpop.f32.mrf.mxu0
      %5798 = vmatprep.mubr.bf16.mxu0 0
      %5799 = vmatmul.mubr.bf16.gmra.mxu0 %v5486
      %v5800 = vpop.f32.mrf.mxu0
      %v5801 = vadd.f32 %v5626, %v5800
      %v5802 = vpop.f32.mrf.mxu0
      %v5803 = vpop.f32.mrf.mxu0
      %v5804 = vadd.f32 %v5629, %v5803
      %v5805 = vpop.f32.mrf.mxu0
      %5806 = vmatprep.mubr.bf16.mxu0 0
      %5807 = vmatmul.mubr.bf16.gmra.mxu0 %v5489
      %v5808 = vpop.f32.mrf.mxu0
      %v5809 = vadd.f32 %v5634, %v5808
      %v5810 = vpop.f32.mrf.mxu0
      %v5811 = vpop.f32.mrf.mxu0
      %v5812 = vadd.f32 %v5637, %v5811
      %v5813 = vpop.f32.mrf.mxu0
      %5814 = vmatprep.mubr.bf16.mxu0 0
      %5815 = vmatmul.mubr.bf16.gmra.mxu0 %v5492
      %v5816 = vpop.f32.mrf.mxu0
      %v5817 = vadd.f32 %v5642, %v5816
      %v5818 = vpop.f32.mrf.mxu0
      %v5819 = vpop.f32.mrf.mxu0
      %v5820 = vadd.f32 %v5645, %v5819
      %v5821 = vpop.f32.mrf.mxu0
      %5822 = vmatprep.mubr.bf16.mxu0 0
      %5823 = vmatmul.mubr.bf16.gmra.mxu0 %v5495
      %v5824 = vpop.f32.mrf.mxu0
      %v5825 = vadd.f32 %v5650, %v5824
      %v5826 = vpop.f32.mrf.mxu0
      %v5827 = vpop.f32.mrf.mxu0
      %v5828 = vadd.f32 %v5653, %v5827
      %v5829 = vpop.f32.mrf.mxu0
      %5830 = vmatprep.mubr.bf16.mxu0 0
      %5831 = vmatmul.mubr.bf16.gmra.mxu0 %v5498
      %v5832 = vpop.f32.mrf.mxu0
      %v5833 = vadd.f32 %v5658, %v5832
      %v5834 = vpop.f32.mrf.mxu0
      %v5835 = vpop.f32.mrf.mxu0
      %v5836 = vadd.f32 %v5661, %v5835
      %v5837 = vpop.f32.mrf.mxu0
      %5838 = vdwg.mxu0
      %s5839 = scalar_lea.vmem %s8, 48
      %v5840 = vld [vmem:[%s5839] sm:$0xf]
      %v5841 = vld [vmem:[%s5839 + $0x4] sm:$0xf]
      %v5844 = vunpack.c.l.b16 %v5362
      %v5845 = vunpack.c.l.b16 %v5363
      %v5846 = vpack.c.b16 %v5845, %v5844
      %v5849 = vunpack.c.l.b16 %v5840
      %v5850 = vunpack.c.l.b16 %v5841
      %v5851 = vpack.c.b16 %v5850, %v5849
      %v5854 = vsel %vm1553, %v5846, 0
      %5856 = vmatprep.subr.bf16.mxu0 0
      %5857 = vmatpush1.bf16.msra.mxu0 0
      %5858 = vmatprep.subr.bf16.mxu0 0
      %5859 = vmatpush1.bf16.msra.mxu0 0
      %5860 = vmatprep.subr.bf16.mxu0 0
      %5861 = vmatpush1.bf16.msra.mxu0 0
      %5862 = vmatprep.subr.bf16.mxu0 0
      %5863 = vmatpush1.bf16.msra.mxu0 0
      %5864 = vmatprep.subr.bf16.mxu0 0
      %5865 = vmatpush1.bf16.msra.mxu0 0
      %5866 = vmatprep.subr.bf16.mxu0 0
      %5867 = vmatpush1.bf16.msra.mxu0 0
      %5868 = vmatprep.subr.bf16.mxu0 0
      %5869 = vmatpush1.bf16.msra.mxu0 0
      %5870 = vmatprep.subr.bf16.mxu0 0
      %5871 = vmatpush1.bf16.msra.mxu0 %v5851
      %5872 = vmatprep.subr.bf16.mxu0 0
      %5873 = vmatpush2.bf16.msra.mxu0 0
      %5874 = vmatprep.subr.bf16.mxu0 0
      %5875 = vmatpush2.bf16.msra.mxu0 0
      %5876 = vmatprep.subr.bf16.mxu0 0
      %5877 = vmatpush2.bf16.msra.mxu0 0
      %5878 = vmatprep.subr.bf16.mxu0 0
      %5879 = vmatpush2.bf16.msra.mxu0 0
      %5880 = vmatprep.subr.bf16.mxu0 0
      %5881 = vmatpush2.bf16.msra.mxu0 0
      %5882 = vmatprep.subr.bf16.mxu0 0
      %5883 = vmatpush2.bf16.msra.mxu0 0
      %5884 = vmatprep.subr.bf16.mxu0 0
      %5885 = vmatpush2.bf16.msra.mxu0 0
      %5886 = vmatprep.subr.bf16.mxu0 0
      %5887 = vmatpush2.bf16.msra.mxu0 0
      %5888 = vmatprep.mubr.bf16.mxu0 0
      %5889 = vmatmul.mubr.bf16.gmra.mxu0 %v5459
      %v5890 = vpop.f32.mrf.mxu0
      %v5891 = vadd.f32 0.0, %v5890
      %v5892 = vpop.f32.mrf.mxu0
      %v5893 = vpop.f32.mrf.mxu0
      %v5894 = vadd.f32 0.0, %v5893
      %v5895 = vpop.f32.mrf.mxu0
      %5896 = vmatprep.mubr.bf16.mxu0 0
      %5897 = vmatmul.mubr.bf16.gmra.mxu0 %v5462
      %v5898 = vpop.f32.mrf.mxu0
      %v5899 = vadd.f32 0.0, %v5898
      %v5900 = vpop.f32.mrf.mxu0
      %v5901 = vpop.f32.mrf.mxu0
      %v5902 = vadd.f32 0.0, %v5901
      %v5903 = vpop.f32.mrf.mxu0
      %5904 = vmatprep.mubr.bf16.mxu0 0
      %5905 = vmatmul.mubr.bf16.gmra.mxu0 %v5465
      %v5906 = vpop.f32.mrf.mxu0
      %v5907 = vadd.f32 0.0, %v5906
      %v5908 = vpop.f32.mrf.mxu0
      %v5909 = vpop.f32.mrf.mxu0
      %v5910 = vadd.f32 0.0, %v5909
      %v5911 = vpop.f32.mrf.mxu0
      %5912 = vmatprep.mubr.bf16.mxu0 0
      %5913 = vmatmul.mubr.bf16.gmra.mxu0 %v5468
      %v5914 = vpop.f32.mrf.mxu0
      %v5915 = vadd.f32 0.0, %v5914
      %v5916 = vpop.f32.mrf.mxu0
      %v5917 = vpop.f32.mrf.mxu0
      %v5918 = vadd.f32 0.0, %v5917
      %v5919 = vpop.f32.mrf.mxu0
      %5920 = vmatprep.mubr.bf16.mxu0 0
      %5921 = vmatmul.mubr.bf16.gmra.mxu0 %v5471
      %v5922 = vpop.f32.mrf.mxu0
      %v5923 = vadd.f32 0.0, %v5922
      %v5924 = vpop.f32.mrf.mxu0
      %v5925 = vpop.f32.mrf.mxu0
      %v5926 = vadd.f32 0.0, %v5925
      %v5927 = vpop.f32.mrf.mxu0
      %5928 = vmatprep.mubr.bf16.mxu0 0
      %5929 = vmatmul.mubr.bf16.gmra.mxu0 %v5474
      %v5930 = vpop.f32.mrf.mxu0
      %v5931 = vadd.f32 0.0, %v5930
      %v5932 = vpop.f32.mrf.mxu0
      %v5933 = vpop.f32.mrf.mxu0
      %v5934 = vadd.f32 0.0, %v5933
      %v5935 = vpop.f32.mrf.mxu0
      %5936 = vmatprep.mubr.bf16.mxu0 0
      %5937 = vmatmul.mubr.bf16.gmra.mxu0 %v5477
      %v5938 = vpop.f32.mrf.mxu0
      %v5939 = vadd.f32 0.0, %v5938
      %v5940 = vpop.f32.mrf.mxu0
      %v5941 = vpop.f32.mrf.mxu0
      %v5942 = vadd.f32 0.0, %v5941
      %v5943 = vpop.f32.mrf.mxu0
      %5944 = vmatprep.mubr.bf16.mxu0 0
      %5945 = vmatmul.mubr.bf16.gmra.mxu0 %v5480
      %v5946 = vpop.f32.mrf.mxu0
      %v5947 = vadd.f32 0.0, %v5946
      %v5948 = vpop.f32.mrf.mxu0
      %v5949 = vpop.f32.mrf.mxu0
      %v5950 = vadd.f32 0.0, %v5949
      %v5951 = vpop.f32.mrf.mxu0
      %5952 = vmatprep.mubr.bf16.mxu0 0
      %5953 = vmatmul.mubr.bf16.gmra.mxu0 %v5483
      %v5954 = vpop.f32.mrf.mxu0
      %v5955 = vadd.f32 0.0, %v5954
      %v5956 = vpop.f32.mrf.mxu0
      %v5957 = vpop.f32.mrf.mxu0
      %v5958 = vadd.f32 0.0, %v5957
      %v5959 = vpop.f32.mrf.mxu0
      %5960 = vmatprep.mubr.bf16.mxu0 0
      %5961 = vmatmul.mubr.bf16.gmra.mxu0 %v5486
      %v5962 = vpop.f32.mrf.mxu0
      %v5963 = vadd.f32 0.0, %v5962
      %v5964 = vpop.f32.mrf.mxu0
      %v5965 = vpop.f32.mrf.mxu0
      %v5966 = vadd.f32 0.0, %v5965
      %v5967 = vpop.f32.mrf.mxu0
      %5968 = vmatprep.mubr.bf16.mxu0 0
      %5969 = vmatmul.mubr.bf16.gmra.mxu0 %v5489
      %v5970 = vpop.f32.mrf.mxu0
      %v5971 = vadd.f32 0.0, %v5970
      %v5972 = vpop.f32.mrf.mxu0
      %v5973 = vpop.f32.mrf.mxu0
      %v5974 = vadd.f32 0.0, %v5973
      %v5975 = vpop.f32.mrf.mxu0
      %5976 = vmatprep.mubr.bf16.mxu0 0
      %5977 = vmatmul.mubr.bf16.gmra.mxu0 %v5492
      %v5978 = vpop.f32.mrf.mxu0
      %v5979 = vadd.f32 0.0, %v5978
      %v5980 = vpop.f32.mrf.mxu0
      %v5981 = vpop.f32.mrf.mxu0
      %v5982 = vadd.f32 0.0, %v5981
      %v5983 = vpop.f32.mrf.mxu0
      %5984 = vmatprep.mubr.bf16.mxu0 0
      %5985 = vmatmul.mubr.bf16.gmra.mxu0 %v5495
      %v5986 = vpop.f32.mrf.mxu0
      %v5987 = vadd.f32 0.0, %v5986
      %v5988 = vpop.f32.mrf.mxu0
      %v5989 = vpop.f32.mrf.mxu0
      %v5990 = vadd.f32 0.0, %v5989
      %v5991 = vpop.f32.mrf.mxu0
      %5992 = vmatprep.mubr.bf16.mxu0 0
      %5993 = vmatmul.mubr.bf16.gmra.mxu0 %v5498
      %v5994 = vpop.f32.mrf.mxu0
      %v5995 = vadd.f32 0.0, %v5994
      %v5996 = vpop.f32.mrf.mxu0
      %v5997 = vpop.f32.mrf.mxu0
      %v5998 = vadd.f32 0.0, %v5997
      %v5999 = vpop.f32.mrf.mxu0
      %6000 = vmatprep.mubr.bf16.mxu0 0
      %6001 = vmatmul.mubr.bf16.gmra.mxu0 %v5501
      %v6002 = vpop.f32.mrf.mxu0
      %v6003 = vadd.f32 0.0, %v6002
      %v6004 = vpop.f32.mrf.mxu0
      %v6005 = vpop.f32.mrf.mxu0
      %v6006 = vadd.f32 0.0, %v6005
      %v6007 = vpop.f32.mrf.mxu0
      %6008 = vmatprep.mubr.bf16.mxu0 0
      %6009 = vmatmul.mubr.bf16.gmra.mxu0 %v5854
      %v6010 = vpop.f32.mrf.mxu0
      %v6011 = vadd.f32 0.0, %v6010
      %v6012 = vpop.f32.mrf.mxu0
      %v6013 = vpop.f32.mrf.mxu0
      %v6014 = vadd.f32 0.0, %v6013
      %v6015 = vpop.f32.mrf.mxu0
      %6016 = vdwg.mxu0
      %v6017 = vadd.f32 %v5713, %v5891
      %v6018 = vadd.f32 %v5716, %v5894
      %v6019 = vadd.f32 %v5721, %v5899
      %v6020 = vadd.f32 %v5724, %v5902
      %v6021 = vadd.f32 %v5729, %v5907
      %v6022 = vadd.f32 %v5732, %v5910
      %v6023 = vadd.f32 %v5737, %v5915
      %v6024 = vadd.f32 %v5740, %v5918
      %v6025 = vadd.f32 %v5745, %v5923
      %v6026 = vadd.f32 %v5748, %v5926
      %v6027 = vadd.f32 %v5753, %v5931
      %v6028 = vadd.f32 %v5756, %v5934
      %v6029 = vadd.f32 %v5761, %v5939
      %v6030 = vadd.f32 %v5764, %v5942
      %v6031 = vadd.f32 %v5769, %v5947
      %v6032 = vadd.f32 %v5772, %v5950
      %v6033 = vadd.f32 %v5777, %v5955
      %v6034 = vadd.f32 %v5780, %v5958
      %v6035 = vadd.f32 %v5785, %v5963
      %v6036 = vadd.f32 %v5788, %v5966
      %v6037 = vadd.f32 %v5793, %v5971
      %v6038 = vadd.f32 %v5796, %v5974
      %v6039 = vadd.f32 %v5801, %v5979
      %v6040 = vadd.f32 %v5804, %v5982
      %v6041 = vadd.f32 %v5809, %v5987
      %v6042 = vadd.f32 %v5812, %v5990
      %v6043 = vadd.f32 %v5817, %v5995
      %v6044 = vadd.f32 %v5820, %v5998
      %v6045 = vadd.f32 %v5825, %v6003
      %v6046 = vadd.f32 %v5828, %v6006
      %v6047 = vadd.f32 %v5833, %v6011
      %v6048 = vadd.f32 %v5836, %v6014
      %v6049 = vld [vmem:[#allocation2] sm:$0xf]
      %v6050 = vld [vmem:[#allocation2 + $0x4] sm:$0xf]
      %v6051 = vld [vmem:[#allocation2 + $0x8] sm:$0x1]
      %v6052 = vld [vmem:[#allocation2 + $0xc] sm:$0xf]
      %v6053 = vld [vmem:[#allocation2 + $0x10] sm:$0xf]
      %v6054 = vld [vmem:[#allocation2 + $0x14] sm:$0x1]
      %v6055 = vld [vmem:[#allocation2 + $0x18] sm:$0xf]
      %v6056 = vld [vmem:[#allocation2 + $0x1c] sm:$0xf]
      %v6057 = vld [vmem:[#allocation2 + $0x20] sm:$0x1]
      %v6058 = vld [vmem:[#allocation2 + $0x24] sm:$0xf]
      %v6059 = vld [vmem:[#allocation2 + $0x28] sm:$0xf]
      %v6060 = vld [vmem:[#allocation2 + $0x2c] sm:$0x1]
      %v6061 = vld [vmem:[#allocation2 + $0x30] sm:$0xf]
      %v6062 = vld [vmem:[#allocation2 + $0x34] sm:$0xf]
      %v6063 = vld [vmem:[#allocation2 + $0x38] sm:$0x1]
      %v6064 = vld [vmem:[#allocation2 + $0x3c] sm:$0xf]
      %v6065 = vld [vmem:[#allocation2 + $0x40] sm:$0xf]
      %v6066 = vld [vmem:[#allocation2 + $0x44] sm:$0x1]
      %v6067 = vld [vmem:[#allocation2 + $0x48] sm:$0xf]
      %v6068 = vld [vmem:[#allocation2 + $0x4c] sm:$0xf]
      %v6069 = vld [vmem:[#allocation2 + $0x50] sm:$0x1]
      %v6070 = vld [vmem:[#allocation2 + $0x54] sm:$0xf]
      %v6071 = vld [vmem:[#allocation2 + $0x58] sm:$0xf]
      %v6072 = vld [vmem:[#allocation2 + $0x5c] sm:$0x1]
      %v6073 = vld [vmem:[#allocation2 + $0x60] sm:$0xf]
      %v6074 = vld [vmem:[#allocation2 + $0x64] sm:$0xf]
      %v6075 = vld [vmem:[#allocation2 + $0x68] sm:$0x1]
      %v6076 = vld [vmem:[#allocation2 + $0x6c] sm:$0xf]
      %v6077 = vld [vmem:[#allocation2 + $0x70] sm:$0xf]
      %v6078 = vld [vmem:[#allocation2 + $0x74] sm:$0x1]
      %v6079 = vld [vmem:[#allocation2 + $0x78] sm:$0xf]
      %v6080 = vld [vmem:[#allocation2 + $0x7c] sm:$0xf]
      %v6081 = vld [vmem:[#allocation2 + $0x80] sm:$0x1]
      %v6082 = vld [vmem:[#allocation2 + $0x84] sm:$0xf]
      %v6083 = vld [vmem:[#allocation2 + $0x88] sm:$0xf]
      %v6084 = vld [vmem:[#allocation2 + $0x8c] sm:$0x1]
      %v6085 = vld [vmem:[#allocation2 + $0x90] sm:$0xf]
      %v6086 = vld [vmem:[#allocation2 + $0x94] sm:$0xf]
      %v6087 = vld [vmem:[#allocation2 + $0x98] sm:$0x1]
      %v6088 = vld [vmem:[#allocation2 + $0x9c] sm:$0xf]
      %v6089 = vld [vmem:[#allocation2 + $0xa0] sm:$0xf]
      %v6090 = vld [vmem:[#allocation2 + $0xa4] sm:$0x1]
      %v6091 = vld [vmem:[#allocation2 + $0xa8] sm:$0xf]
      %v6092 = vld [vmem:[#allocation2 + $0xac] sm:$0xf]
      %v6093 = vld [vmem:[#allocation2 + $0xb0] sm:$0x1]
      %v6094 = vld [vmem:[#allocation2 + $0xb4] sm:$0xf]
      %v6095 = vld [vmem:[#allocation2 + $0xb8] sm:$0xf]
      %v6096 = vld [vmem:[#allocation2 + $0xbc] sm:$0x1]
      %v6097 = vld [vmem:[#allocation2 + $0xc0] sm:$0xf]
      %v6098 = vld [vmem:[#allocation2 + $0xc4] sm:$0xf]
      %v6099 = vld [vmem:[#allocation2 + $0xc8] sm:$0x1]
      %v6100 = vld [vmem:[#allocation2 + $0xcc] sm:$0xf]
      %v6101 = vld [vmem:[#allocation2 + $0xd0] sm:$0xf]
      %v6102 = vld [vmem:[#allocation2 + $0xd4] sm:$0x1]
      %v6104 = vshrl.u32 %v6049, 16
      %v6106 = vrot.slane %v6104, 4
      %v6107 = vshll.u32 %v6049, 16
      %v6109 = vrot.slane %v6107, 5
      %v6110 = vor.u32 %v6106, %v6109
      %v6111 = vrot.slane %v6110, 4
      %v6113 = vshll.u32 %v6050, 16
      %v6115 = vrot.slane %v6113, 5
      %v6116 = vsel %vm2204, %v6111, %v6115
      %v6117 = vshrl.u32 %v6050, 16
      %v6119 = vrot.slane %v6117, 4
      %v6120 = vor.u32 %v6119, %v6115
      %v6121 = vrot.slane %v6120, 4
      %v6123 = vshll.u32 %v6051, 16
      %v6125 = vrot.slane %v6123, 5
      %v6126 = vsel %vm2204, %v6121, %v6125
      %v6128 = vshrl.u32 %v6052, 16
      %v6130 = vrot.slane %v6128, 4
      %v6131 = vshll.u32 %v6052, 16
      %v6133 = vrot.slane %v6131, 5
      %v6134 = vor.u32 %v6130, %v6133
      %v6135 = vrot.slane %v6134, 4
      %v6137 = vshll.u32 %v6053, 16
      %v6139 = vrot.slane %v6137, 5
      %v6140 = vsel %vm2204, %v6135, %v6139
      %v6141 = vshrl.u32 %v6053, 16
      %v6143 = vrot.slane %v6141, 4
      %v6144 = vor.u32 %v6143, %v6139
      %v6145 = vrot.slane %v6144, 4
      %v6147 = vshll.u32 %v6054, 16
      %v6149 = vrot.slane %v6147, 5
      %v6150 = vsel %vm2204, %v6145, %v6149
      %v6152 = vshrl.u32 %v6055, 16
      %v6154 = vrot.slane %v6152, 4
      %v6155 = vshll.u32 %v6055, 16
      %v6157 = vrot.slane %v6155, 5
      %v6158 = vor.u32 %v6154, %v6157
      %v6159 = vrot.slane %v6158, 4
      %v6161 = vshll.u32 %v6056, 16
      %v6163 = vrot.slane %v6161, 5
      %v6164 = vsel %vm2204, %v6159, %v6163
      %v6165 = vshrl.u32 %v6056, 16
      %v6167 = vrot.slane %v6165, 4
      %v6168 = vor.u32 %v6167, %v6163
      %v6169 = vrot.slane %v6168, 4
      %v6171 = vshll.u32 %v6057, 16
      %v6173 = vrot.slane %v6171, 5
      %v6174 = vsel %vm2204, %v6169, %v6173
      %v6176 = vshrl.u32 %v6058, 16
      %v6178 = vrot.slane %v6176, 4
      %v6179 = vshll.u32 %v6058, 16
      %v6181 = vrot.slane %v6179, 5
      %v6182 = vor.u32 %v6178, %v6181
      %v6183 = vrot.slane %v6182, 4
      %v6185 = vshll.u32 %v6059, 16
      %v6187 = vrot.slane %v6185, 5
      %v6188 = vsel %vm2204, %v6183, %v6187
      %v6189 = vshrl.u32 %v6059, 16
      %v6191 = vrot.slane %v6189, 4
      %v6192 = vor.u32 %v6191, %v6187
      %v6193 = vrot.slane %v6192, 4
      %v6195 = vshll.u32 %v6060, 16
      %v6197 = vrot.slane %v6195, 5
      %v6198 = vsel %vm2204, %v6193, %v6197
      %v6200 = vshrl.u32 %v6061, 16
      %v6202 = vrot.slane %v6200, 4
      %v6203 = vshll.u32 %v6061, 16
      %v6205 = vrot.slane %v6203, 5
      %v6206 = vor.u32 %v6202, %v6205
      %v6207 = vrot.slane %v6206, 4
      %v6209 = vshll.u32 %v6062, 16
      %v6211 = vrot.slane %v6209, 5
      %v6212 = vsel %vm2204, %v6207, %v6211
      %v6213 = vshrl.u32 %v6062, 16
      %v6215 = vrot.slane %v6213, 4
      %v6216 = vor.u32 %v6215, %v6211
      %v6217 = vrot.slane %v6216, 4
      %v6219 = vshll.u32 %v6063, 16
      %v6221 = vrot.slane %v6219, 5
      %v6222 = vsel %vm2204, %v6217, %v6221
      %v6224 = vshrl.u32 %v6064, 16
      %v6226 = vrot.slane %v6224, 4
      %v6227 = vshll.u32 %v6064, 16
      %v6229 = vrot.slane %v6227, 5
      %v6230 = vor.u32 %v6226, %v6229
      %v6231 = vrot.slane %v6230, 4
      %v6233 = vshll.u32 %v6065, 16
      %v6235 = vrot.slane %v6233, 5
      %v6236 = vsel %vm2204, %v6231, %v6235
      %v6237 = vshrl.u32 %v6065, 16
      %v6239 = vrot.slane %v6237, 4
      %v6240 = vor.u32 %v6239, %v6235
      %v6241 = vrot.slane %v6240, 4
      %v6243 = vshll.u32 %v6066, 16
      %v6245 = vrot.slane %v6243, 5
      %v6246 = vsel %vm2204, %v6241, %v6245
      %v6248 = vshrl.u32 %v6067, 16
      %v6250 = vrot.slane %v6248, 4
      %v6251 = vshll.u32 %v6067, 16
      %v6253 = vrot.slane %v6251, 5
      %v6254 = vor.u32 %v6250, %v6253
      %v6255 = vrot.slane %v6254, 4
      %v6257 = vshll.u32 %v6068, 16
      %v6259 = vrot.slane %v6257, 5
      %v6260 = vsel %vm2204, %v6255, %v6259
      %v6261 = vshrl.u32 %v6068, 16
      %v6263 = vrot.slane %v6261, 4
      %v6264 = vor.u32 %v6263, %v6259
      %v6265 = vrot.slane %v6264, 4
      %v6267 = vshll.u32 %v6069, 16
      %v6269 = vrot.slane %v6267, 5
      %v6270 = vsel %vm2204, %v6265, %v6269
      %v6272 = vshrl.u32 %v6070, 16
      %v6274 = vrot.slane %v6272, 4
      %v6275 = vshll.u32 %v6070, 16
      %v6277 = vrot.slane %v6275, 5
      %v6278 = vor.u32 %v6274, %v6277
      %v6279 = vrot.slane %v6278, 4
      %v6281 = vshll.u32 %v6071, 16
      %v6283 = vrot.slane %v6281, 5
      %v6284 = vsel %vm2204, %v6279, %v6283
      %v6285 = vshrl.u32 %v6071, 16
      %v6287 = vrot.slane %v6285, 4
      %v6288 = vor.u32 %v6287, %v6283
      %v6289 = vrot.slane %v6288, 4
      %v6291 = vshll.u32 %v6072, 16
      %v6293 = vrot.slane %v6291, 5
      %v6294 = vsel %vm2204, %v6289, %v6293
      %v6296 = vshrl.u32 %v6073, 16
      %v6298 = vrot.slane %v6296, 4
      %v6299 = vshll.u32 %v6073, 16
      %v6301 = vrot.slane %v6299, 5
      %v6302 = vor.u32 %v6298, %v6301
      %v6303 = vrot.slane %v6302, 4
      %v6305 = vshll.u32 %v6074, 16
      %v6307 = vrot.slane %v6305, 5
      %v6308 = vsel %vm2204, %v6303, %v6307
      %v6309 = vshrl.u32 %v6074, 16
      %v6311 = vrot.slane %v6309, 4
      %v6312 = vor.u32 %v6311, %v6307
      %v6313 = vrot.slane %v6312, 4
      %v6315 = vshll.u32 %v6075, 16
      %v6317 = vrot.slane %v6315, 5
      %v6318 = vsel %vm2204, %v6313, %v6317
      %v6320 = vshrl.u32 %v6076, 16
      %v6322 = vrot.slane %v6320, 4
      %v6323 = vshll.u32 %v6076, 16
      %v6325 = vrot.slane %v6323, 5
      %v6326 = vor.u32 %v6322, %v6325
      %v6327 = vrot.slane %v6326, 4
      %v6329 = vshll.u32 %v6077, 16
      %v6331 = vrot.slane %v6329, 5
      %v6332 = vsel %vm2204, %v6327, %v6331
      %v6333 = vshrl.u32 %v6077, 16
      %v6335 = vrot.slane %v6333, 4
      %v6336 = vor.u32 %v6335, %v6331
      %v6337 = vrot.slane %v6336, 4
      %v6339 = vshll.u32 %v6078, 16
      %v6341 = vrot.slane %v6339, 5
      %v6342 = vsel %vm2204, %v6337, %v6341
      %v6344 = vshrl.u32 %v6079, 16
      %v6346 = vrot.slane %v6344, 4
      %v6347 = vshll.u32 %v6079, 16
      %v6349 = vrot.slane %v6347, 5
      %v6350 = vor.u32 %v6346, %v6349
      %v6351 = vrot.slane %v6350, 4
      %v6353 = vshll.u32 %v6080, 16
      %v6355 = vrot.slane %v6353, 5
      %v6356 = vsel %vm2204, %v6351, %v6355
      %v6357 = vshrl.u32 %v6080, 16
      %v6359 = vrot.slane %v6357, 4
      %v6360 = vor.u32 %v6359, %v6355
      %v6361 = vrot.slane %v6360, 4
      %v6363 = vshll.u32 %v6081, 16
      %v6365 = vrot.slane %v6363, 5
      %v6366 = vsel %vm2204, %v6361, %v6365
      %v6368 = vshrl.u32 %v6082, 16
      %v6370 = vrot.slane %v6368, 4
      %v6371 = vshll.u32 %v6082, 16
      %v6373 = vrot.slane %v6371, 5
      %v6374 = vor.u32 %v6370, %v6373
      %v6375 = vrot.slane %v6374, 4
      %v6377 = vshll.u32 %v6083, 16
      %v6379 = vrot.slane %v6377, 5
      %v6380 = vsel %vm2204, %v6375, %v6379
      %v6381 = vshrl.u32 %v6083, 16
      %v6383 = vrot.slane %v6381, 4
      %v6384 = vor.u32 %v6383, %v6379
      %v6385 = vrot.slane %v6384, 4
      %v6387 = vshll.u32 %v6084, 16
      %v6389 = vrot.slane %v6387, 5
      %v6390 = vsel %vm2204, %v6385, %v6389
      %v6392 = vshrl.u32 %v6085, 16
      %v6394 = vrot.slane %v6392, 4
      %v6395 = vshll.u32 %v6085, 16
      %v6397 = vrot.slane %v6395, 5
      %v6398 = vor.u32 %v6394, %v6397
      %v6399 = vrot.slane %v6398, 4
      %v6401 = vshll.u32 %v6086, 16
      %v6403 = vrot.slane %v6401, 5
      %v6404 = vsel %vm2204, %v6399, %v6403
      %v6405 = vshrl.u32 %v6086, 16
      %v6407 = vrot.slane %v6405, 4
      %v6408 = vor.u32 %v6407, %v6403
      %v6409 = vrot.slane %v6408, 4
      %v6411 = vshll.u32 %v6087, 16
      %v6413 = vrot.slane %v6411, 5
      %v6414 = vsel %vm2204, %v6409, %v6413
      %v6416 = vshrl.u32 %v6088, 16
      %v6418 = vrot.slane %v6416, 4
      %v6419 = vshll.u32 %v6088, 16
      %v6421 = vrot.slane %v6419, 5
      %v6422 = vor.u32 %v6418, %v6421
      %v6423 = vrot.slane %v6422, 4
      %v6425 = vshll.u32 %v6089, 16
      %v6427 = vrot.slane %v6425, 5
      %v6428 = vsel %vm2204, %v6423, %v6427
      %v6429 = vshrl.u32 %v6089, 16
      %v6431 = vrot.slane %v6429, 4
      %v6432 = vor.u32 %v6431, %v6427
      %v6433 = vrot.slane %v6432, 4
      %v6435 = vshll.u32 %v6090, 16
      %v6437 = vrot.slane %v6435, 5
      %v6438 = vsel %vm2204, %v6433, %v6437
      %v6440 = vshrl.u32 %v6091, 16
      %v6442 = vrot.slane %v6440, 4
      %v6443 = vshll.u32 %v6091, 16
      %v6445 = vrot.slane %v6443, 5
      %v6446 = vor.u32 %v6442, %v6445
      %v6447 = vrot.slane %v6446, 4
      %v6449 = vshll.u32 %v6092, 16
      %v6451 = vrot.slane %v6449, 5
      %v6452 = vsel %vm2204, %v6447, %v6451
      %v6453 = vshrl.u32 %v6092, 16
      %v6455 = vrot.slane %v6453, 4
      %v6456 = vor.u32 %v6455, %v6451
      %v6457 = vrot.slane %v6456, 4
      %v6459 = vshll.u32 %v6093, 16
      %v6461 = vrot.slane %v6459, 5
      %v6462 = vsel %vm2204, %v6457, %v6461
      %v6464 = vshrl.u32 %v6094, 16
      %v6466 = vrot.slane %v6464, 4
      %v6467 = vshll.u32 %v6094, 16
      %v6469 = vrot.slane %v6467, 5
      %v6470 = vor.u32 %v6466, %v6469
      %v6471 = vrot.slane %v6470, 4
      %v6473 = vshll.u32 %v6095, 16
      %v6475 = vrot.slane %v6473, 5
      %v6476 = vsel %vm2204, %v6471, %v6475
      %v6477 = vshrl.u32 %v6095, 16
      %v6479 = vrot.slane %v6477, 4
      %v6480 = vor.u32 %v6479, %v6475
      %v6481 = vrot.slane %v6480, 4
      %v6483 = vshll.u32 %v6096, 16
      %v6485 = vrot.slane %v6483, 5
      %v6486 = vsel %vm2204, %v6481, %v6485
      %s6487 = scalar_lea.vmem %s8, 8
      %v6488 = vld [vmem:[%s6487] sm:$0xf]
      %v6489 = vld [vmem:[%s6487 + $0x4] sm:$0xf]
      %v6490 = vunpack.c.l.b16 %v6116
      %v6491 = vunpack.c.l.b16 %v6126
      %v6492 = vunpack.c.l.b16 %v6140
      %v6493 = vunpack.c.l.b16 %v6150
      %v6494 = vunpack.c.l.b16 %v6164
      %v6495 = vunpack.c.l.b16 %v6174
      %v6496 = vunpack.c.l.b16 %v6188
      %v6497 = vunpack.c.l.b16 %v6198
      %v6498 = vunpack.c.l.b16 %v6212
      %v6499 = vunpack.c.l.b16 %v6222
      %v6500 = vunpack.c.l.b16 %v6236
      %v6501 = vunpack.c.l.b16 %v6246
      %v6502 = vunpack.c.l.b16 %v6260
      %v6503 = vunpack.c.l.b16 %v6270
      %v6504 = vunpack.c.l.b16 %v6284
      %v6505 = vunpack.c.l.b16 %v6294
      %v6506 = vunpack.c.l.b16 %v6308
      %v6507 = vunpack.c.l.b16 %v6318
      %v6508 = vunpack.c.l.b16 %v6332
      %v6509 = vunpack.c.l.b16 %v6342
      %v6510 = vunpack.c.l.b16 %v6356
      %v6511 = vunpack.c.l.b16 %v6366
      %v6512 = vunpack.c.l.b16 %v6380
      %v6513 = vunpack.c.l.b16 %v6390
      %v6514 = vunpack.c.l.b16 %v6404
      %v6515 = vunpack.c.l.b16 %v6414
      %v6516 = vunpack.c.l.b16 %v6428
      %v6517 = vunpack.c.l.b16 %v6438
      %v6518 = vunpack.c.l.b16 %v6452
      %v6519 = vunpack.c.l.b16 %v6462
      %v6520 = vunpack.c.l.b16 %v6476
      %v6521 = vunpack.c.l.b16 %v6486
      %v6522 = vpack.c.b16 %v6491, %v6490
      %v6523 = vpack.c.b16 %v6493, %v6492
      %v6524 = vpack.c.b16 %v6495, %v6494
      %v6525 = vpack.c.b16 %v6497, %v6496
      %v6526 = vpack.c.b16 %v6499, %v6498
      %v6527 = vpack.c.b16 %v6501, %v6500
      %v6528 = vpack.c.b16 %v6503, %v6502
      %v6529 = vpack.c.b16 %v6505, %v6504
      %v6530 = vpack.c.b16 %v6507, %v6506
      %v6531 = vpack.c.b16 %v6509, %v6508
      %v6532 = vpack.c.b16 %v6511, %v6510
      %v6533 = vpack.c.b16 %v6513, %v6512
      %v6534 = vpack.c.b16 %v6515, %v6514
      %v6535 = vpack.c.b16 %v6517, %v6516
      %v6536 = vpack.c.b16 %v6519, %v6518
      %v6537 = vpack.c.b16 %v6521, %v6520
      %v6540 = vunpack.c.l.b16 %v6488
      %v6541 = vunpack.c.l.b16 %v6489
      %v6542 = vpack.c.b16 %v6541, %v6540
      %v6545 = vsel %vm1553, %v6522, 0
      %v6548 = vsel %vm1553, %v6523, 0
      %v6551 = vsel %vm1553, %v6524, 0
      %v6554 = vsel %vm1553, %v6525, 0
      %v6557 = vsel %vm1553, %v6526, 0
      %v6560 = vsel %vm1553, %v6527, 0
      %v6563 = vsel %vm1553, %v6528, 0
      %v6566 = vsel %vm1553, %v6529, 0
      %v6569 = vsel %vm1553, %v6530, 0
      %v6572 = vsel %vm1553, %v6531, 0
      %v6575 = vsel %vm1553, %v6532, 0
      %v6578 = vsel %vm1553, %v6533, 0
      %v6581 = vsel %vm1553, %v6534, 0
      %v6584 = vsel %vm1553, %v6535, 0
      %v6587 = vsel %vm1553, %v6536, 0
      %v6590 = vsel %vm1553, %v6537, 0
      %6592 = vmatprep.subr.bf16.mxu0 0
      %6593 = vmatpush1.bf16.msra.mxu0 0
      %6594 = vmatprep.subr.bf16.mxu0 0
      %6595 = vmatpush1.bf16.msra.mxu0 0
      %6596 = vmatprep.subr.bf16.mxu0 0
      %6597 = vmatpush1.bf16.msra.mxu0 0
      %6598 = vmatprep.subr.bf16.mxu0 0
      %6599 = vmatpush1.bf16.msra.mxu0 0
      %6600 = vmatprep.subr.bf16.mxu0 0
      %6601 = vmatpush1.bf16.msra.mxu0 0
      %6602 = vmatprep.subr.bf16.mxu0 0
      %6603 = vmatpush1.bf16.msra.mxu0 0
      %6604 = vmatprep.subr.bf16.mxu0 0
      %6605 = vmatpush1.bf16.msra.mxu0 0
      %6606 = vmatprep.subr.bf16.mxu0 0
      %6607 = vmatpush1.bf16.msra.mxu0 %v6542
      %6608 = vmatprep.subr.bf16.mxu0 0
      %6609 = vmatpush2.bf16.msra.mxu0 0
      %6610 = vmatprep.subr.bf16.mxu0 0
      %6611 = vmatpush2.bf16.msra.mxu0 0
      %6612 = vmatprep.subr.bf16.mxu0 0
      %6613 = vmatpush2.bf16.msra.mxu0 0
      %6614 = vmatprep.subr.bf16.mxu0 0
      %6615 = vmatpush2.bf16.msra.mxu0 0
      %6616 = vmatprep.subr.bf16.mxu0 0
      %6617 = vmatpush2.bf16.msra.mxu0 0
      %6618 = vmatprep.subr.bf16.mxu0 0
      %6619 = vmatpush2.bf16.msra.mxu0 0
      %6620 = vmatprep.subr.bf16.mxu0 0
      %6621 = vmatpush2.bf16.msra.mxu0 0
      %6622 = vmatprep.subr.bf16.mxu0 0
      %6623 = vmatpush2.bf16.msra.mxu0 0
      %6624 = vmatprep.mubr.bf16.mxu0 0
      %6625 = vmatmul.mubr.bf16.gmra.mxu0 %v6545
      %v6626 = vpop.f32.mrf.mxu0
      %v6627 = vadd.f32 0.0, %v6626
      %v6628 = vpop.f32.mrf.mxu0
      %v6629 = vpop.f32.mrf.mxu0
      %v6630 = vadd.f32 0.0, %v6629
      %v6631 = vpop.f32.mrf.mxu0
      %6632 = vmatprep.mubr.bf16.mxu0 0
      %6633 = vmatmul.mubr.bf16.gmra.mxu0 %v6548
      %v6634 = vpop.f32.mrf.mxu0
      %v6635 = vadd.f32 0.0, %v6634
      %v6636 = vpop.f32.mrf.mxu0
      %v6637 = vpop.f32.mrf.mxu0
      %v6638 = vadd.f32 0.0, %v6637
      %v6639 = vpop.f32.mrf.mxu0
      %6640 = vmatprep.mubr.bf16.mxu0 0
      %6641 = vmatmul.mubr.bf16.gmra.mxu0 %v6551
      %v6642 = vpop.f32.mrf.mxu0
      %v6643 = vadd.f32 0.0, %v6642
      %v6644 = vpop.f32.mrf.mxu0
      %v6645 = vpop.f32.mrf.mxu0
      %v6646 = vadd.f32 0.0, %v6645
      %v6647 = vpop.f32.mrf.mxu0
      %6648 = vmatprep.mubr.bf16.mxu0 0
      %6649 = vmatmul.mubr.bf16.gmra.mxu0 %v6554
      %v6650 = vpop.f32.mrf.mxu0
      %v6651 = vadd.f32 0.0, %v6650
      %v6652 = vpop.f32.mrf.mxu0
      %v6653 = vpop.f32.mrf.mxu0
      %v6654 = vadd.f32 0.0, %v6653
      %v6655 = vpop.f32.mrf.mxu0
      %6656 = vmatprep.mubr.bf16.mxu0 0
      %6657 = vmatmul.mubr.bf16.gmra.mxu0 %v6557
      %v6658 = vpop.f32.mrf.mxu0
      %v6659 = vadd.f32 0.0, %v6658
      %v6660 = vpop.f32.mrf.mxu0
      %v6661 = vpop.f32.mrf.mxu0
      %v6662 = vadd.f32 0.0, %v6661
      %v6663 = vpop.f32.mrf.mxu0
      %6664 = vmatprep.mubr.bf16.mxu0 0
      %6665 = vmatmul.mubr.bf16.gmra.mxu0 %v6560
      %v6666 = vpop.f32.mrf.mxu0
      %v6667 = vadd.f32 0.0, %v6666
      %v6668 = vpop.f32.mrf.mxu0
      %v6669 = vpop.f32.mrf.mxu0
      %v6670 = vadd.f32 0.0, %v6669
      %v6671 = vpop.f32.mrf.mxu0
      %6672 = vmatprep.mubr.bf16.mxu0 0
      %6673 = vmatmul.mubr.bf16.gmra.mxu0 %v6563
      %v6674 = vpop.f32.mrf.mxu0
      %v6675 = vadd.f32 0.0, %v6674
      %v6676 = vpop.f32.mrf.mxu0
      %v6677 = vpop.f32.mrf.mxu0
      %v6678 = vadd.f32 0.0, %v6677
      %v6679 = vpop.f32.mrf.mxu0
      %6680 = vmatprep.mubr.bf16.mxu0 0
      %6681 = vmatmul.mubr.bf16.gmra.mxu0 %v6566
      %v6682 = vpop.f32.mrf.mxu0
      %v6683 = vadd.f32 0.0, %v6682
      %v6684 = vpop.f32.mrf.mxu0
      %v6685 = vpop.f32.mrf.mxu0
      %v6686 = vadd.f32 0.0, %v6685
      %v6687 = vpop.f32.mrf.mxu0
      %6688 = vmatprep.mubr.bf16.mxu0 0
      %6689 = vmatmul.mubr.bf16.gmra.mxu0 %v6569
      %v6690 = vpop.f32.mrf.mxu0
      %v6691 = vadd.f32 0.0, %v6690
      %v6692 = vpop.f32.mrf.mxu0
      %v6693 = vpop.f32.mrf.mxu0
      %v6694 = vadd.f32 0.0, %v6693
      %v6695 = vpop.f32.mrf.mxu0
      %6696 = vmatprep.mubr.bf16.mxu0 0
      %6697 = vmatmul.mubr.bf16.gmra.mxu0 %v6572
      %v6698 = vpop.f32.mrf.mxu0
      %v6699 = vadd.f32 0.0, %v6698
      %v6700 = vpop.f32.mrf.mxu0
      %v6701 = vpop.f32.mrf.mxu0
      %v6702 = vadd.f32 0.0, %v6701
      %v6703 = vpop.f32.mrf.mxu0
      %6704 = vmatprep.mubr.bf16.mxu0 0
      %6705 = vmatmul.mubr.bf16.gmra.mxu0 %v6575
      %v6706 = vpop.f32.mrf.mxu0
      %v6707 = vadd.f32 0.0, %v6706
      %v6708 = vpop.f32.mrf.mxu0
      %v6709 = vpop.f32.mrf.mxu0
      %v6710 = vadd.f32 0.0, %v6709
      %v6711 = vpop.f32.mrf.mxu0
      %6712 = vmatprep.mubr.bf16.mxu0 0
      %6713 = vmatmul.mubr.bf16.gmra.mxu0 %v6578
      %v6714 = vpop.f32.mrf.mxu0
      %v6715 = vadd.f32 0.0, %v6714
      %v6716 = vpop.f32.mrf.mxu0
      %v6717 = vpop.f32.mrf.mxu0
      %v6718 = vadd.f32 0.0, %v6717
      %v6719 = vpop.f32.mrf.mxu0
      %6720 = vmatprep.mubr.bf16.mxu0 0
      %6721 = vmatmul.mubr.bf16.gmra.mxu0 %v6581
      %v6722 = vpop.f32.mrf.mxu0
      %v6723 = vadd.f32 0.0, %v6722
      %v6724 = vpop.f32.mrf.mxu0
      %v6725 = vpop.f32.mrf.mxu0
      %v6726 = vadd.f32 0.0, %v6725
      %v6727 = vpop.f32.mrf.mxu0
      %6728 = vmatprep.mubr.bf16.mxu0 0
      %6729 = vmatmul.mubr.bf16.gmra.mxu0 %v6584
      %v6730 = vpop.f32.mrf.mxu0
      %v6731 = vadd.f32 0.0, %v6730
      %v6732 = vpop.f32.mrf.mxu0
      %v6733 = vpop.f32.mrf.mxu0
      %v6734 = vadd.f32 0.0, %v6733
      %v6735 = vpop.f32.mrf.mxu0
      %6736 = vmatprep.mubr.bf16.mxu0 0
      %6737 = vmatmul.mubr.bf16.gmra.mxu0 %v6587
      %v6738 = vpop.f32.mrf.mxu0
      %v6739 = vadd.f32 0.0, %v6738
      %v6740 = vpop.f32.mrf.mxu0
      %v6741 = vpop.f32.mrf.mxu0
      %v6742 = vadd.f32 0.0, %v6741
      %v6743 = vpop.f32.mrf.mxu0
      %6744 = vmatprep.mubr.bf16.mxu0 0
      %6745 = vmatmul.mubr.bf16.gmra.mxu0 %v6590
      %v6746 = vpop.f32.mrf.mxu0
      %v6747 = vadd.f32 0.0, %v6746
      %v6748 = vpop.f32.mrf.mxu0
      %v6749 = vpop.f32.mrf.mxu0
      %v6750 = vadd.f32 0.0, %v6749
      %v6751 = vpop.f32.mrf.mxu0
      %6752 = vdwg.mxu0
      %v6753 = vadd.f32 %v6017, %v6627
      %v6754 = vadd.f32 %v6018, %v6630
      %v6755 = vadd.f32 %v6019, %v6635
      %v6756 = vadd.f32 %v6020, %v6638
      %v6757 = vadd.f32 %v6021, %v6643
      %v6758 = vadd.f32 %v6022, %v6646
      %v6759 = vadd.f32 %v6023, %v6651
      %v6760 = vadd.f32 %v6024, %v6654
      %v6761 = vadd.f32 %v6025, %v6659
      %v6762 = vadd.f32 %v6026, %v6662
      %v6763 = vadd.f32 %v6027, %v6667
      %v6764 = vadd.f32 %v6028, %v6670
      %v6765 = vadd.f32 %v6029, %v6675
      %v6766 = vadd.f32 %v6030, %v6678
      %v6767 = vadd.f32 %v6031, %v6683
      %v6768 = vadd.f32 %v6032, %v6686
      %v6769 = vadd.f32 %v6033, %v6691
      %v6770 = vadd.f32 %v6034, %v6694
      %v6771 = vadd.f32 %v6035, %v6699
      %v6772 = vadd.f32 %v6036, %v6702
      %v6773 = vadd.f32 %v6037, %v6707
      %v6774 = vadd.f32 %v6038, %v6710
      %v6775 = vadd.f32 %v6039, %v6715
      %v6776 = vadd.f32 %v6040, %v6718
      %v6777 = vadd.f32 %v6041, %v6723
      %v6778 = vadd.f32 %v6042, %v6726
      %v6779 = vadd.f32 %v6043, %v6731
      %v6780 = vadd.f32 %v6044, %v6734
      %v6781 = vadd.f32 %v6045, %v6739
      %v6782 = vadd.f32 %v6046, %v6742
      %v6783 = vadd.f32 %v6047, %v6747
      %v6784 = vadd.f32 %v6048, %v6750
      %v6786 = vshrl.u32 %v6097, 16
      %v6788 = vrot.slane %v6786, 4
      %v6789 = vshll.u32 %v6097, 16
      %v6791 = vrot.slane %v6789, 5
      %v6792 = vor.u32 %v6788, %v6791
      %v6793 = vrot.slane %v6792, 4
      %v6795 = vshll.u32 %v6098, 16
      %v6797 = vrot.slane %v6795, 5
      %v6798 = vsel %vm2204, %v6793, %v6797
      %v6799 = vshrl.u32 %v6098, 16
      %v6801 = vrot.slane %v6799, 4
      %v6802 = vor.u32 %v6801, %v6797
      %v6803 = vrot.slane %v6802, 4
      %v6805 = vshll.u32 %v6099, 16
      %v6807 = vrot.slane %v6805, 5
      %v6808 = vsel %vm2204, %v6803, %v6807
      %s6809 = scalar_lea.vmem %s8, 32
      %v6810 = vld [vmem:[%s6809] sm:$0xf]
      %v6811 = vld [vmem:[%s6809 + $0x4] sm:$0xf]
      %v6812 = vunpack.c.l.b16 %v6798
      %v6813 = vunpack.c.l.b16 %v6808
      %v6814 = vpack.c.b16 %v6813, %v6812
      %v6817 = vunpack.c.l.b16 %v6810
      %v6818 = vunpack.c.l.b16 %v6811
      %v6819 = vpack.c.b16 %v6818, %v6817
      %v6822 = vsel %vm1553, %v6814, 0
      %6824 = vmatprep.subr.bf16.mxu0 0
      %6825 = vmatpush1.bf16.msra.mxu0 0
      %6826 = vmatprep.subr.bf16.mxu0 0
      %6827 = vmatpush1.bf16.msra.mxu0 0
      %6828 = vmatprep.subr.bf16.mxu0 0
      %6829 = vmatpush1.bf16.msra.mxu0 0
      %6830 = vmatprep.subr.bf16.mxu0 0
      %6831 = vmatpush1.bf16.msra.mxu0 0
      %6832 = vmatprep.subr.bf16.mxu0 0
      %6833 = vmatpush1.bf16.msra.mxu0 0
      %6834 = vmatprep.subr.bf16.mxu0 0
      %6835 = vmatpush1.bf16.msra.mxu0 0
      %6836 = vmatprep.subr.bf16.mxu0 0
      %6837 = vmatpush1.bf16.msra.mxu0 0
      %6838 = vmatprep.subr.bf16.mxu0 0
      %6839 = vmatpush1.bf16.msra.mxu0 %v6819
      %6840 = vmatprep.subr.bf16.mxu0 0
      %6841 = vmatpush2.bf16.msra.mxu0 0
      %6842 = vmatprep.subr.bf16.mxu0 0
      %6843 = vmatpush2.bf16.msra.mxu0 0
      %6844 = vmatprep.subr.bf16.mxu0 0
      %6845 = vmatpush2.bf16.msra.mxu0 0
      %6846 = vmatprep.subr.bf16.mxu0 0
      %6847 = vmatpush2.bf16.msra.mxu0 0
      %6848 = vmatprep.subr.bf16.mxu0 0
      %6849 = vmatpush2.bf16.msra.mxu0 0
      %6850 = vmatprep.subr.bf16.mxu0 0
      %6851 = vmatpush2.bf16.msra.mxu0 0
      %6852 = vmatprep.subr.bf16.mxu0 0
      %6853 = vmatpush2.bf16.msra.mxu0 0
      %6854 = vmatprep.subr.bf16.mxu0 0
      %6855 = vmatpush2.bf16.msra.mxu0 0
      %6856 = vmatprep.mubr.bf16.mxu0 0
      %6857 = vmatmul.mubr.bf16.gmra.mxu0 %v6548
      %v6858 = vpop.f32.mrf.mxu0
      %v6859 = vadd.f32 0.0, %v6858
      %v6860 = vpop.f32.mrf.mxu0
      %v6861 = vpop.f32.mrf.mxu0
      %v6862 = vadd.f32 0.0, %v6861
      %v6863 = vpop.f32.mrf.mxu0
      %6864 = vmatprep.mubr.bf16.mxu0 0
      %6865 = vmatmul.mubr.bf16.gmra.mxu0 %v6551
      %v6866 = vpop.f32.mrf.mxu0
      %v6867 = vadd.f32 0.0, %v6866
      %v6868 = vpop.f32.mrf.mxu0
      %v6869 = vpop.f32.mrf.mxu0
      %v6870 = vadd.f32 0.0, %v6869
      %v6871 = vpop.f32.mrf.mxu0
      %6872 = vmatprep.mubr.bf16.mxu0 0
      %6873 = vmatmul.mubr.bf16.gmra.mxu0 %v6554
      %v6874 = vpop.f32.mrf.mxu0
      %v6875 = vadd.f32 0.0, %v6874
      %v6876 = vpop.f32.mrf.mxu0
      %v6877 = vpop.f32.mrf.mxu0
      %v6878 = vadd.f32 0.0, %v6877
      %v6879 = vpop.f32.mrf.mxu0
      %6880 = vmatprep.mubr.bf16.mxu0 0
      %6881 = vmatmul.mubr.bf16.gmra.mxu0 %v6557
      %v6882 = vpop.f32.mrf.mxu0
      %v6883 = vadd.f32 0.0, %v6882
      %v6884 = vpop.f32.mrf.mxu0
      %v6885 = vpop.f32.mrf.mxu0
      %v6886 = vadd.f32 0.0, %v6885
      %v6887 = vpop.f32.mrf.mxu0
      %6888 = vmatprep.mubr.bf16.mxu0 0
      %6889 = vmatmul.mubr.bf16.gmra.mxu0 %v6560
      %v6890 = vpop.f32.mrf.mxu0
      %v6891 = vadd.f32 0.0, %v6890
      %v6892 = vpop.f32.mrf.mxu0
      %v6893 = vpop.f32.mrf.mxu0
      %v6894 = vadd.f32 0.0, %v6893
      %v6895 = vpop.f32.mrf.mxu0
      %6896 = vmatprep.mubr.bf16.mxu0 0
      %6897 = vmatmul.mubr.bf16.gmra.mxu0 %v6563
      %v6898 = vpop.f32.mrf.mxu0
      %v6899 = vadd.f32 0.0, %v6898
      %v6900 = vpop.f32.mrf.mxu0
      %v6901 = vpop.f32.mrf.mxu0
      %v6902 = vadd.f32 0.0, %v6901
      %v6903 = vpop.f32.mrf.mxu0
      %6904 = vmatprep.mubr.bf16.mxu0 0
      %6905 = vmatmul.mubr.bf16.gmra.mxu0 %v6566
      %v6906 = vpop.f32.mrf.mxu0
      %v6907 = vadd.f32 0.0, %v6906
      %v6908 = vpop.f32.mrf.mxu0
      %v6909 = vpop.f32.mrf.mxu0
      %v6910 = vadd.f32 0.0, %v6909
      %v6911 = vpop.f32.mrf.mxu0
      %6912 = vmatprep.mubr.bf16.mxu0 0
      %6913 = vmatmul.mubr.bf16.gmra.mxu0 %v6569
      %v6914 = vpop.f32.mrf.mxu0
      %v6915 = vadd.f32 0.0, %v6914
      %v6916 = vpop.f32.mrf.mxu0
      %v6917 = vpop.f32.mrf.mxu0
      %v6918 = vadd.f32 0.0, %v6917
      %v6919 = vpop.f32.mrf.mxu0
      %6920 = vmatprep.mubr.bf16.mxu0 0
      %6921 = vmatmul.mubr.bf16.gmra.mxu0 %v6572
      %v6922 = vpop.f32.mrf.mxu0
      %v6923 = vadd.f32 0.0, %v6922
      %v6924 = vpop.f32.mrf.mxu0
      %v6925 = vpop.f32.mrf.mxu0
      %v6926 = vadd.f32 0.0, %v6925
      %v6927 = vpop.f32.mrf.mxu0
      %6928 = vmatprep.mubr.bf16.mxu0 0
      %6929 = vmatmul.mubr.bf16.gmra.mxu0 %v6575
      %v6930 = vpop.f32.mrf.mxu0
      %v6931 = vadd.f32 0.0, %v6930
      %v6932 = vpop.f32.mrf.mxu0
      %v6933 = vpop.f32.mrf.mxu0
      %v6934 = vadd.f32 0.0, %v6933
      %v6935 = vpop.f32.mrf.mxu0
      %6936 = vmatprep.mubr.bf16.mxu0 0
      %6937 = vmatmul.mubr.bf16.gmra.mxu0 %v6578
      %v6938 = vpop.f32.mrf.mxu0
      %v6939 = vadd.f32 0.0, %v6938
      %v6940 = vpop.f32.mrf.mxu0
      %v6941 = vpop.f32.mrf.mxu0
      %v6942 = vadd.f32 0.0, %v6941
      %v6943 = vpop.f32.mrf.mxu0
      %6944 = vmatprep.mubr.bf16.mxu0 0
      %6945 = vmatmul.mubr.bf16.gmra.mxu0 %v6581
      %v6946 = vpop.f32.mrf.mxu0
      %v6947 = vadd.f32 0.0, %v6946
      %v6948 = vpop.f32.mrf.mxu0
      %v6949 = vpop.f32.mrf.mxu0
      %v6950 = vadd.f32 0.0, %v6949
      %v6951 = vpop.f32.mrf.mxu0
      %6952 = vmatprep.mubr.bf16.mxu0 0
      %6953 = vmatmul.mubr.bf16.gmra.mxu0 %v6584
      %v6954 = vpop.f32.mrf.mxu0
      %v6955 = vadd.f32 0.0, %v6954
      %v6956 = vpop.f32.mrf.mxu0
      %v6957 = vpop.f32.mrf.mxu0
      %v6958 = vadd.f32 0.0, %v6957
      %v6959 = vpop.f32.mrf.mxu0
      %6960 = vmatprep.mubr.bf16.mxu0 0
      %6961 = vmatmul.mubr.bf16.gmra.mxu0 %v6587
      %v6962 = vpop.f32.mrf.mxu0
      %v6963 = vadd.f32 0.0, %v6962
      %v6964 = vpop.f32.mrf.mxu0
      %v6965 = vpop.f32.mrf.mxu0
      %v6966 = vadd.f32 0.0, %v6965
      %v6967 = vpop.f32.mrf.mxu0
      %6968 = vmatprep.mubr.bf16.mxu0 0
      %6969 = vmatmul.mubr.bf16.gmra.mxu0 %v6590
      %v6970 = vpop.f32.mrf.mxu0
      %v6971 = vadd.f32 0.0, %v6970
      %v6972 = vpop.f32.mrf.mxu0
      %v6973 = vpop.f32.mrf.mxu0
      %v6974 = vadd.f32 0.0, %v6973
      %v6975 = vpop.f32.mrf.mxu0
      %6976 = vmatprep.mubr.bf16.mxu0 0
      %6977 = vmatmul.mubr.bf16.gmra.mxu0 %v6822
      %v6978 = vpop.f32.mrf.mxu0
      %v6979 = vadd.f32 0.0, %v6978
      %v6980 = vpop.f32.mrf.mxu0
      %v6981 = vpop.f32.mrf.mxu0
      %v6982 = vadd.f32 0.0, %v6981
      %v6983 = vpop.f32.mrf.mxu0
      %6984 = vdwg.mxu0
      %v6985 = vadd.f32 %v6753, %v6859
      %v6986 = vadd.f32 %v6754, %v6862
      %v6987 = vadd.f32 %v6755, %v6867
      %v6988 = vadd.f32 %v6756, %v6870
      %v6989 = vadd.f32 %v6757, %v6875
      %v6990 = vadd.f32 %v6758, %v6878
      %v6991 = vadd.f32 %v6759, %v6883
      %v6992 = vadd.f32 %v6760, %v6886
      %v6993 = vadd.f32 %v6761, %v6891
      %v6994 = vadd.f32 %v6762, %v6894
      %v6995 = vadd.f32 %v6763, %v6899
      %v6996 = vadd.f32 %v6764, %v6902
      %v6997 = vadd.f32 %v6765, %v6907
      %v6998 = vadd.f32 %v6766, %v6910
      %v6999 = vadd.f32 %v6767, %v6915
      %v7000 = vadd.f32 %v6768, %v6918
      %v7001 = vadd.f32 %v6769, %v6923
      %v7002 = vadd.f32 %v6770, %v6926
      %v7003 = vadd.f32 %v6771, %v6931
      %v7004 = vadd.f32 %v6772, %v6934
      %v7005 = vadd.f32 %v6773, %v6939
      %v7006 = vadd.f32 %v6774, %v6942
      %v7007 = vadd.f32 %v6775, %v6947
      %v7008 = vadd.f32 %v6776, %v6950
      %v7009 = vadd.f32 %v6777, %v6955
      %v7010 = vadd.f32 %v6778, %v6958
      %v7011 = vadd.f32 %v6779, %v6963
      %v7012 = vadd.f32 %v6780, %v6966
      %v7013 = vadd.f32 %v6781, %v6971
      %v7014 = vadd.f32 %v6782, %v6974
      %v7015 = vadd.f32 %v6783, %v6979
      %v7016 = vadd.f32 %v6784, %v6982
      %v7018 = vshrl.u32 %v6100, 16
      %v7020 = vrot.slane %v7018, 4
      %v7021 = vshll.u32 %v6100, 16
      %v7023 = vrot.slane %v7021, 5
      %v7024 = vor.u32 %v7020, %v7023
      %v7025 = vrot.slane %v7024, 4
      %v7027 = vshll.u32 %v6101, 16
      %v7029 = vrot.slane %v7027, 5
      %v7030 = vsel %vm2204, %v7025, %v7029
      %v7031 = vshrl.u32 %v6101, 16
      %v7033 = vrot.slane %v7031, 4
      %v7034 = vor.u32 %v7033, %v7029
      %v7035 = vrot.slane %v7034, 4
      %v7037 = vshll.u32 %v6102, 16
      %v7039 = vrot.slane %v7037, 5
      %v7040 = vsel %vm2204, %v7035, %v7039
      %s7041 = scalar_lea.vmem %s8, 56
      %v7042 = vld [vmem:[%s7041] sm:$0xf]
      %v7043 = vld [vmem:[%s7041 + $0x4] sm:$0xf]
      %v7044 = vunpack.c.l.b16 %v7030
      %v7045 = vunpack.c.l.b16 %v7040
      %v7046 = vpack.c.b16 %v7045, %v7044
      %v7049 = vunpack.c.l.b16 %v7042
      %v7050 = vunpack.c.l.b16 %v7043
      %v7051 = vpack.c.b16 %v7050, %v7049
      %v7054 = vsel %vm1553, %v7046, 0
      %7056 = vmatprep.subr.bf16.mxu0 0
      %7057 = vmatpush1.bf16.msra.mxu0 0
      %7058 = vmatprep.subr.bf16.mxu0 0
      %7059 = vmatpush1.bf16.msra.mxu0 0
      %7060 = vmatprep.subr.bf16.mxu0 0
      %7061 = vmatpush1.bf16.msra.mxu0 0
      %7062 = vmatprep.subr.bf16.mxu0 0
      %7063 = vmatpush1.bf16.msra.mxu0 0
      %7064 = vmatprep.subr.bf16.mxu0 0
      %7065 = vmatpush1.bf16.msra.mxu0 0
      %7066 = vmatprep.subr.bf16.mxu0 0
      %7067 = vmatpush1.bf16.msra.mxu0 0
      %7068 = vmatprep.subr.bf16.mxu0 0
      %7069 = vmatpush1.bf16.msra.mxu0 0
      %7070 = vmatprep.subr.bf16.mxu0 0
      %7071 = vmatpush1.bf16.msra.mxu0 %v7051
      %7072 = vmatprep.subr.bf16.mxu0 0
      %7073 = vmatpush2.bf16.msra.mxu0 0
      %7074 = vmatprep.subr.bf16.mxu0 0
      %7075 = vmatpush2.bf16.msra.mxu0 0
      %7076 = vmatprep.subr.bf16.mxu0 0
      %7077 = vmatpush2.bf16.msra.mxu0 0
      %7078 = vmatprep.subr.bf16.mxu0 0
      %7079 = vmatpush2.bf16.msra.mxu0 0
      %7080 = vmatprep.subr.bf16.mxu0 0
      %7081 = vmatpush2.bf16.msra.mxu0 0
      %7082 = vmatprep.subr.bf16.mxu0 0
      %7083 = vmatpush2.bf16.msra.mxu0 0
      %7084 = vmatprep.subr.bf16.mxu0 0
      %7085 = vmatpush2.bf16.msra.mxu0 0
      %7086 = vmatprep.subr.bf16.mxu0 0
      %7087 = vmatpush2.bf16.msra.mxu0 0
      %7088 = vmatprep.mubr.bf16.mxu0 0
      %7089 = vmatmul.mubr.bf16.gmra.mxu0 %v6551
      %v7090 = vpop.f32.mrf.mxu0
      %v7091 = vadd.f32 0.0, %v7090
      %v7092 = vpop.f32.mrf.mxu0
      %v7093 = vpop.f32.mrf.mxu0
      %v7094 = vadd.f32 0.0, %v7093
      %v7095 = vpop.f32.mrf.mxu0
      %7096 = vmatprep.mubr.bf16.mxu0 0
      %7097 = vmatmul.mubr.bf16.gmra.mxu0 %v6554
      %v7098 = vpop.f32.mrf.mxu0
      %v7099 = vadd.f32 0.0, %v7098
      %v7100 = vpop.f32.mrf.mxu0
      %v7101 = vpop.f32.mrf.mxu0
      %v7102 = vadd.f32 0.0, %v7101
      %v7103 = vpop.f32.mrf.mxu0
      %7104 = vmatprep.mubr.bf16.mxu0 0
      %7105 = vmatmul.mubr.bf16.gmra.mxu0 %v6557
      %v7106 = vpop.f32.mrf.mxu0
      %v7107 = vadd.f32 0.0, %v7106
      %v7108 = vpop.f32.mrf.mxu0
      %v7109 = vpop.f32.mrf.mxu0
      %v7110 = vadd.f32 0.0, %v7109
      %v7111 = vpop.f32.mrf.mxu0
      %7112 = vmatprep.mubr.bf16.mxu0 0
      %7113 = vmatmul.mubr.bf16.gmra.mxu0 %v6560
      %v7114 = vpop.f32.mrf.mxu0
      %v7115 = vadd.f32 0.0, %v7114
      %v7116 = vpop.f32.mrf.mxu0
      %v7117 = vpop.f32.mrf.mxu0
      %v7118 = vadd.f32 0.0, %v7117
      %v7119 = vpop.f32.mrf.mxu0
      %7120 = vmatprep.mubr.bf16.mxu0 0
      %7121 = vmatmul.mubr.bf16.gmra.mxu0 %v6563
      %v7122 = vpop.f32.mrf.mxu0
      %v7123 = vadd.f32 0.0, %v7122
      %v7124 = vpop.f32.mrf.mxu0
      %v7125 = vpop.f32.mrf.mxu0
      %v7126 = vadd.f32 0.0, %v7125
      %v7127 = vpop.f32.mrf.mxu0
      %7128 = vmatprep.mubr.bf16.mxu0 0
      %7129 = vmatmul.mubr.bf16.gmra.mxu0 %v6566
      %v7130 = vpop.f32.mrf.mxu0
      %v7131 = vadd.f32 0.0, %v7130
      %v7132 = vpop.f32.mrf.mxu0
      %v7133 = vpop.f32.mrf.mxu0
      %v7134 = vadd.f32 0.0, %v7133
      %v7135 = vpop.f32.mrf.mxu0
      %7136 = vmatprep.mubr.bf16.mxu0 0
      %7137 = vmatmul.mubr.bf16.gmra.mxu0 %v6569
      %v7138 = vpop.f32.mrf.mxu0
      %v7139 = vadd.f32 0.0, %v7138
      %v7140 = vpop.f32.mrf.mxu0
      %v7141 = vpop.f32.mrf.mxu0
      %v7142 = vadd.f32 0.0, %v7141
      %v7143 = vpop.f32.mrf.mxu0
      %7144 = vmatprep.mubr.bf16.mxu0 0
      %7145 = vmatmul.mubr.bf16.gmra.mxu0 %v6572
      %v7146 = vpop.f32.mrf.mxu0
      %v7147 = vadd.f32 0.0, %v7146
      %v7148 = vpop.f32.mrf.mxu0
      %v7149 = vpop.f32.mrf.mxu0
      %v7150 = vadd.f32 0.0, %v7149
      %v7151 = vpop.f32.mrf.mxu0
      %7152 = vmatprep.mubr.bf16.mxu0 0
      %7153 = vmatmul.mubr.bf16.gmra.mxu0 %v6575
      %v7154 = vpop.f32.mrf.mxu0
      %v7155 = vadd.f32 0.0, %v7154
      %v7156 = vpop.f32.mrf.mxu0
      %v7157 = vpop.f32.mrf.mxu0
      %v7158 = vadd.f32 0.0, %v7157
      %v7159 = vpop.f32.mrf.mxu0
      %7160 = vmatprep.mubr.bf16.mxu0 0
      %7161 = vmatmul.mubr.bf16.gmra.mxu0 %v6578
      %v7162 = vpop.f32.mrf.mxu0
      %v7163 = vadd.f32 0.0, %v7162
      %v7164 = vpop.f32.mrf.mxu0
      %v7165 = vpop.f32.mrf.mxu0
      %v7166 = vadd.f32 0.0, %v7165
      %v7167 = vpop.f32.mrf.mxu0
      %7168 = vmatprep.mubr.bf16.mxu0 0
      %7169 = vmatmul.mubr.bf16.gmra.mxu0 %v6581
      %v7170 = vpop.f32.mrf.mxu0
      %v7171 = vadd.f32 0.0, %v7170
      %v7172 = vpop.f32.mrf.mxu0
      %v7173 = vpop.f32.mrf.mxu0
      %v7174 = vadd.f32 0.0, %v7173
      %v7175 = vpop.f32.mrf.mxu0
      %7176 = vmatprep.mubr.bf16.mxu0 0
      %7177 = vmatmul.mubr.bf16.gmra.mxu0 %v6584
      %v7178 = vpop.f32.mrf.mxu0
      %v7179 = vadd.f32 0.0, %v7178
      %v7180 = vpop.f32.mrf.mxu0
      %v7181 = vpop.f32.mrf.mxu0
      %v7182 = vadd.f32 0.0, %v7181
      %v7183 = vpop.f32.mrf.mxu0
      %7184 = vmatprep.mubr.bf16.mxu0 0
      %7185 = vmatmul.mubr.bf16.gmra.mxu0 %v6587
      %v7186 = vpop.f32.mrf.mxu0
      %v7187 = vadd.f32 0.0, %v7186
      %v7188 = vpop.f32.mrf.mxu0
      %v7189 = vpop.f32.mrf.mxu0
      %v7190 = vadd.f32 0.0, %v7189
      %v7191 = vpop.f32.mrf.mxu0
      %7192 = vmatprep.mubr.bf16.mxu0 0
      %7193 = vmatmul.mubr.bf16.gmra.mxu0 %v6590
      %v7194 = vpop.f32.mrf.mxu0
      %v7195 = vadd.f32 0.0, %v7194
      %v7196 = vpop.f32.mrf.mxu0
      %v7197 = vpop.f32.mrf.mxu0
      %v7198 = vadd.f32 0.0, %v7197
      %v7199 = vpop.f32.mrf.mxu0
      %7200 = vmatprep.mubr.bf16.mxu0 0
      %7201 = vmatmul.mubr.bf16.gmra.mxu0 %v6822
      %v7202 = vpop.f32.mrf.mxu0
      %v7203 = vadd.f32 0.0, %v7202
      %v7204 = vpop.f32.mrf.mxu0
      %v7205 = vpop.f32.mrf.mxu0
      %v7206 = vadd.f32 0.0, %v7205
      %v7207 = vpop.f32.mrf.mxu0
      %7208 = vmatprep.mubr.bf16.mxu0 0
      %7209 = vmatmul.mubr.bf16.gmra.mxu0 %v7054
      %v7210 = vpop.f32.mrf.mxu0
      %v7211 = vadd.f32 0.0, %v7210
      %v7212 = vpop.f32.mrf.mxu0
      %v7213 = vpop.f32.mrf.mxu0
      %v7214 = vadd.f32 0.0, %v7213
      %v7215 = vpop.f32.mrf.mxu0
      %7216 = vdwg.mxu0
      %v7217 = vadd.f32 %v6985, %v7091
      %v7218 = vadd.f32 %v6986, %v7094
      %v7219 = vadd.f32 %v6987, %v7099
      %v7220 = vadd.f32 %v6988, %v7102
      %v7221 = vadd.f32 %v6989, %v7107
      %v7222 = vadd.f32 %v6990, %v7110
      %v7223 = vadd.f32 %v6991, %v7115
      %v7224 = vadd.f32 %v6992, %v7118
      %v7225 = vadd.f32 %v6993, %v7123
      %v7226 = vadd.f32 %v6994, %v7126
      %v7227 = vadd.f32 %v6995, %v7131
      %v7228 = vadd.f32 %v6996, %v7134
      %v7229 = vadd.f32 %v6997, %v7139
      %v7230 = vadd.f32 %v6998, %v7142
      %v7231 = vadd.f32 %v6999, %v7147
      %v7232 = vadd.f32 %v7000, %v7150
      %v7233 = vadd.f32 %v7001, %v7155
      %v7234 = vadd.f32 %v7002, %v7158
      %v7235 = vadd.f32 %v7003, %v7163
      %v7236 = vadd.f32 %v7004, %v7166
      %v7237 = vadd.f32 %v7005, %v7171
      %v7238 = vadd.f32 %v7006, %v7174
      %v7239 = vadd.f32 %v7007, %v7179
      %v7240 = vadd.f32 %v7008, %v7182
      %v7241 = vadd.f32 %v7009, %v7187
      %v7242 = vadd.f32 %v7010, %v7190
      %v7243 = vadd.f32 %v7011, %v7195
      %v7244 = vadd.f32 %v7012, %v7198
      %v7245 = vadd.f32 %v7013, %v7203
      %v7246 = vadd.f32 %v7014, %v7206
      %v7247 = vadd.f32 %v7015, %v7211
      %v7248 = vadd.f32 %v7016, %v7214
      %v7249 = vld [vmem:[#allocation2] sm:$0xe]
      %v7250 = vld [vmem:[#allocation2 + $0xc] sm:$0xe]
      %v7251 = vld [vmem:[#allocation2 + $0x18] sm:$0xe]
      %v7252 = vld [vmem:[#allocation2 + $0x24] sm:$0xe]
      %v7253 = vld [vmem:[#allocation2 + $0x30] sm:$0xe]
      %v7254 = vld [vmem:[#allocation2 + $0x3c] sm:$0xe]
      %v7255 = vld [vmem:[#allocation2 + $0x48] sm:$0xe]
      %v7256 = vld [vmem:[#allocation2 + $0x54] sm:$0xe]
      %v7257 = vld [vmem:[#allocation2 + $0x60] sm:$0xe]
      %v7258 = vld [vmem:[#allocation2 + $0x6c] sm:$0xe]
      %v7259 = vld [vmem:[#allocation2 + $0x78] sm:$0xe]
      %v7260 = vld [vmem:[#allocation2 + $0x84] sm:$0xe]
      %v7261 = vld [vmem:[#allocation2 + $0x90] sm:$0xe]
      %v7262 = vld [vmem:[#allocation2 + $0x9c] sm:$0xe]
      %v7263 = vld [vmem:[#allocation2 + $0xa8] sm:$0xe]
      %v7264 = vld [vmem:[#allocation2 + $0xb4] sm:$0xe]
      %v7265 = vld [vmem:[#allocation2 + $0xc0] sm:$0xe]
      %v7266 = vld [vmem:[#allocation2 + $0xcc] sm:$0xe]
      %v7315 = vrot.slane %v7249, 5
      %v7316 = vrot.slane %v7315, 4
      %v7317 = vrot.slane %v6050, 5
      %v7318 = vsel %vm3419, %v7316, %v7317
      %v7319 = vrot.slane %v7317, 4
      %v7320 = vrot.slane %v6051, 5
      %v7321 = vsel %vm3419, %v7319, %v7320
      %v7322 = vrot.slane %v7250, 5
      %v7323 = vrot.slane %v7322, 4
      %v7324 = vrot.slane %v6053, 5
      %v7325 = vsel %vm3419, %v7323, %v7324
      %v7326 = vrot.slane %v7324, 4
      %v7327 = vrot.slane %v6054, 5
      %v7328 = vsel %vm3419, %v7326, %v7327
      %v7329 = vrot.slane %v7251, 5
      %v7330 = vrot.slane %v7329, 4
      %v7331 = vrot.slane %v6056, 5
      %v7332 = vsel %vm3419, %v7330, %v7331
      %v7333 = vrot.slane %v7331, 4
      %v7334 = vrot.slane %v6057, 5
      %v7335 = vsel %vm3419, %v7333, %v7334
      %v7336 = vrot.slane %v7252, 5
      %v7337 = vrot.slane %v7336, 4
      %v7338 = vrot.slane %v6059, 5
      %v7339 = vsel %vm3419, %v7337, %v7338
      %v7340 = vrot.slane %v7338, 4
      %v7341 = vrot.slane %v6060, 5
      %v7342 = vsel %vm3419, %v7340, %v7341
      %v7343 = vrot.slane %v7253, 5
      %v7344 = vrot.slane %v7343, 4
      %v7345 = vrot.slane %v6062, 5
      %v7346 = vsel %vm3419, %v7344, %v7345
      %v7347 = vrot.slane %v7345, 4
      %v7348 = vrot.slane %v6063, 5
      %v7349 = vsel %vm3419, %v7347, %v7348
      %v7350 = vrot.slane %v7254, 5
      %v7351 = vrot.slane %v7350, 4
      %v7352 = vrot.slane %v6065, 5
      %v7353 = vsel %vm3419, %v7351, %v7352
      %v7354 = vrot.slane %v7352, 4
      %v7355 = vrot.slane %v6066, 5
      %v7356 = vsel %vm3419, %v7354, %v7355
      %v7357 = vrot.slane %v7255, 5
      %v7358 = vrot.slane %v7357, 4
      %v7359 = vrot.slane %v6068, 5
      %v7360 = vsel %vm3419, %v7358, %v7359
      %v7361 = vrot.slane %v7359, 4
      %v7362 = vrot.slane %v6069, 5
      %v7363 = vsel %vm3419, %v7361, %v7362
      %v7364 = vrot.slane %v7256, 5
      %v7365 = vrot.slane %v7364, 4
      %v7366 = vrot.slane %v6071, 5
      %v7367 = vsel %vm3419, %v7365, %v7366
      %v7368 = vrot.slane %v7366, 4
      %v7369 = vrot.slane %v6072, 5
      %v7370 = vsel %vm3419, %v7368, %v7369
      %v7371 = vrot.slane %v7257, 5
      %v7372 = vrot.slane %v7371, 4
      %v7373 = vrot.slane %v6074, 5
      %v7374 = vsel %vm3419, %v7372, %v7373
      %v7375 = vrot.slane %v7373, 4
      %v7376 = vrot.slane %v6075, 5
      %v7377 = vsel %vm3419, %v7375, %v7376
      %v7378 = vrot.slane %v7258, 5
      %v7379 = vrot.slane %v7378, 4
      %v7380 = vrot.slane %v6077, 5
      %v7381 = vsel %vm3419, %v7379, %v7380
      %v7382 = vrot.slane %v7380, 4
      %v7383 = vrot.slane %v6078, 5
      %v7384 = vsel %vm3419, %v7382, %v7383
      %v7385 = vrot.slane %v7259, 5
      %v7386 = vrot.slane %v7385, 4
      %v7387 = vrot.slane %v6080, 5
      %v7388 = vsel %vm3419, %v7386, %v7387
      %v7389 = vrot.slane %v7387, 4
      %v7390 = vrot.slane %v6081, 5
      %v7391 = vsel %vm3419, %v7389, %v7390
      %v7392 = vrot.slane %v7260, 5
      %v7393 = vrot.slane %v7392, 4
      %v7394 = vrot.slane %v6083, 5
      %v7395 = vsel %vm3419, %v7393, %v7394
      %v7396 = vrot.slane %v7394, 4
      %v7397 = vrot.slane %v6084, 5
      %v7398 = vsel %vm3419, %v7396, %v7397
      %v7399 = vrot.slane %v7261, 5
      %v7400 = vrot.slane %v7399, 4
      %v7401 = vrot.slane %v6086, 5
      %v7402 = vsel %vm3419, %v7400, %v7401
      %v7403 = vrot.slane %v7401, 4
      %v7404 = vrot.slane %v6087, 5
      %v7405 = vsel %vm3419, %v7403, %v7404
      %v7406 = vrot.slane %v7262, 5
      %v7407 = vrot.slane %v7406, 4
      %v7408 = vrot.slane %v6089, 5
      %v7409 = vsel %vm3419, %v7407, %v7408
      %v7410 = vrot.slane %v7408, 4
      %v7411 = vrot.slane %v6090, 5
      %v7412 = vsel %vm3419, %v7410, %v7411
      %v7413 = vrot.slane %v7263, 5
      %v7414 = vrot.slane %v7413, 4
      %v7415 = vrot.slane %v6092, 5
      %v7416 = vsel %vm3419, %v7414, %v7415
      %v7417 = vrot.slane %v7415, 4
      %v7418 = vrot.slane %v6093, 5
      %v7419 = vsel %vm3419, %v7417, %v7418
      %v7420 = vrot.slane %v7264, 5
      %v7421 = vrot.slane %v7420, 4
      %v7422 = vrot.slane %v6095, 5
      %v7423 = vsel %vm3419, %v7421, %v7422
      %v7424 = vrot.slane %v7422, 4
      %v7425 = vrot.slane %v6096, 5
      %v7426 = vsel %vm3419, %v7424, %v7425
      %s7427 = scalar_lea.vmem %s8, 16
      %v7428 = vld [vmem:[%s7427] sm:$0xf]
      %v7429 = vld [vmem:[%s7427 + $0x4] sm:$0xf]
      %v7430 = vunpack.c.l.b16 %v7318
      %v7431 = vunpack.c.l.b16 %v7321
      %v7432 = vunpack.c.l.b16 %v7325
      %v7433 = vunpack.c.l.b16 %v7328
      %v7434 = vunpack.c.l.b16 %v7332
      %v7435 = vunpack.c.l.b16 %v7335
      %v7436 = vunpack.c.l.b16 %v7339
      %v7437 = vunpack.c.l.b16 %v7342
      %v7438 = vunpack.c.l.b16 %v7346
      %v7439 = vunpack.c.l.b16 %v7349
      %v7440 = vunpack.c.l.b16 %v7353
      %v7441 = vunpack.c.l.b16 %v7356
      %v7442 = vunpack.c.l.b16 %v7360
      %v7443 = vunpack.c.l.b16 %v7363
      %v7444 = vunpack.c.l.b16 %v7367
      %v7445 = vunpack.c.l.b16 %v7370
      %v7446 = vunpack.c.l.b16 %v7374
      %v7447 = vunpack.c.l.b16 %v7377
      %v7448 = vunpack.c.l.b16 %v7381
      %v7449 = vunpack.c.l.b16 %v7384
      %v7450 = vunpack.c.l.b16 %v7388
      %v7451 = vunpack.c.l.b16 %v7391
      %v7452 = vunpack.c.l.b16 %v7395
      %v7453 = vunpack.c.l.b16 %v7398
      %v7454 = vunpack.c.l.b16 %v7402
      %v7455 = vunpack.c.l.b16 %v7405
      %v7456 = vunpack.c.l.b16 %v7409
      %v7457 = vunpack.c.l.b16 %v7412
      %v7458 = vunpack.c.l.b16 %v7416
      %v7459 = vunpack.c.l.b16 %v7419
      %v7460 = vunpack.c.l.b16 %v7423
      %v7461 = vunpack.c.l.b16 %v7426
      %v7462 = vpack.c.b16 %v7431, %v7430
      %v7463 = vpack.c.b16 %v7433, %v7432
      %v7464 = vpack.c.b16 %v7435, %v7434
      %v7465 = vpack.c.b16 %v7437, %v7436
      %v7466 = vpack.c.b16 %v7439, %v7438
      %v7467 = vpack.c.b16 %v7441, %v7440
      %v7468 = vpack.c.b16 %v7443, %v7442
      %v7469 = vpack.c.b16 %v7445, %v7444
      %v7470 = vpack.c.b16 %v7447, %v7446
      %v7471 = vpack.c.b16 %v7449, %v7448
      %v7472 = vpack.c.b16 %v7451, %v7450
      %v7473 = vpack.c.b16 %v7453, %v7452
      %v7474 = vpack.c.b16 %v7455, %v7454
      %v7475 = vpack.c.b16 %v7457, %v7456
      %v7476 = vpack.c.b16 %v7459, %v7458
      %v7477 = vpack.c.b16 %v7461, %v7460
      %v7480 = vunpack.c.l.b16 %v7428
      %v7481 = vunpack.c.l.b16 %v7429
      %v7482 = vpack.c.b16 %v7481, %v7480
      %v7485 = vsel %vm1553, %v7462, 0
      %v7488 = vsel %vm1553, %v7463, 0
      %v7491 = vsel %vm1553, %v7464, 0
      %v7494 = vsel %vm1553, %v7465, 0
      %v7497 = vsel %vm1553, %v7466, 0
      %v7500 = vsel %vm1553, %v7467, 0
      %v7503 = vsel %vm1553, %v7468, 0
      %v7506 = vsel %vm1553, %v7469, 0
      %v7509 = vsel %vm1553, %v7470, 0
      %v7512 = vsel %vm1553, %v7471, 0
      %v7515 = vsel %vm1553, %v7472, 0
      %v7518 = vsel %vm1553, %v7473, 0
      %v7521 = vsel %vm1553, %v7474, 0
      %v7524 = vsel %vm1553, %v7475, 0
      %v7527 = vsel %vm1553, %v7476, 0
      %v7530 = vsel %vm1553, %v7477, 0
      %7532 = vmatprep.subr.bf16.mxu0 0
      %7533 = vmatpush1.bf16.msra.mxu0 0
      %7534 = vmatprep.subr.bf16.mxu0 0
      %7535 = vmatpush1.bf16.msra.mxu0 0
      %7536 = vmatprep.subr.bf16.mxu0 0
      %7537 = vmatpush1.bf16.msra.mxu0 0
      %7538 = vmatprep.subr.bf16.mxu0 0
      %7539 = vmatpush1.bf16.msra.mxu0 0
      %7540 = vmatprep.subr.bf16.mxu0 0
      %7541 = vmatpush1.bf16.msra.mxu0 0
      %7542 = vmatprep.subr.bf16.mxu0 0
      %7543 = vmatpush1.bf16.msra.mxu0 0
      %7544 = vmatprep.subr.bf16.mxu0 0
      %7545 = vmatpush1.bf16.msra.mxu0 0
      %7546 = vmatprep.subr.bf16.mxu0 0
      %7547 = vmatpush1.bf16.msra.mxu0 %v7482
      %7548 = vmatprep.subr.bf16.mxu0 0
      %7549 = vmatpush2.bf16.msra.mxu0 0
      %7550 = vmatprep.subr.bf16.mxu0 0
      %7551 = vmatpush2.bf16.msra.mxu0 0
      %7552 = vmatprep.subr.bf16.mxu0 0
      %7553 = vmatpush2.bf16.msra.mxu0 0
      %7554 = vmatprep.subr.bf16.mxu0 0
      %7555 = vmatpush2.bf16.msra.mxu0 0
      %7556 = vmatprep.subr.bf16.mxu0 0
      %7557 = vmatpush2.bf16.msra.mxu0 0
      %7558 = vmatprep.subr.bf16.mxu0 0
      %7559 = vmatpush2.bf16.msra.mxu0 0
      %7560 = vmatprep.subr.bf16.mxu0 0
      %7561 = vmatpush2.bf16.msra.mxu0 0
      %7562 = vmatprep.subr.bf16.mxu0 0
      %7563 = vmatpush2.bf16.msra.mxu0 0
      %7564 = vmatprep.mubr.bf16.mxu0 0
      %7565 = vmatmul.mubr.bf16.gmra.mxu0 %v7485
      %v7566 = vpop.f32.mrf.mxu0
      %v7567 = vadd.f32 0.0, %v7566
      %v7568 = vpop.f32.mrf.mxu0
      %v7569 = vpop.f32.mrf.mxu0
      %v7570 = vadd.f32 0.0, %v7569
      %v7571 = vpop.f32.mrf.mxu0
      %7572 = vmatprep.mubr.bf16.mxu0 0
      %7573 = vmatmul.mubr.bf16.gmra.mxu0 %v7488
      %v7574 = vpop.f32.mrf.mxu0
      %v7575 = vadd.f32 0.0, %v7574
      %v7576 = vpop.f32.mrf.mxu0
      %v7577 = vpop.f32.mrf.mxu0
      %v7578 = vadd.f32 0.0, %v7577
      %v7579 = vpop.f32.mrf.mxu0
      %7580 = vmatprep.mubr.bf16.mxu0 0
      %7581 = vmatmul.mubr.bf16.gmra.mxu0 %v7491
      %v7582 = vpop.f32.mrf.mxu0
      %v7583 = vadd.f32 0.0, %v7582
      %v7584 = vpop.f32.mrf.mxu0
      %v7585 = vpop.f32.mrf.mxu0
      %v7586 = vadd.f32 0.0, %v7585
      %v7587 = vpop.f32.mrf.mxu0
      %7588 = vmatprep.mubr.bf16.mxu0 0
      %7589 = vmatmul.mubr.bf16.gmra.mxu0 %v7494
      %v7590 = vpop.f32.mrf.mxu0
      %v7591 = vadd.f32 0.0, %v7590
      %v7592 = vpop.f32.mrf.mxu0
      %v7593 = vpop.f32.mrf.mxu0
      %v7594 = vadd.f32 0.0, %v7593
      %v7595 = vpop.f32.mrf.mxu0
      %7596 = vmatprep.mubr.bf16.mxu0 0
      %7597 = vmatmul.mubr.bf16.gmra.mxu0 %v7497
      %v7598 = vpop.f32.mrf.mxu0
      %v7599 = vadd.f32 0.0, %v7598
      %v7600 = vpop.f32.mrf.mxu0
      %v7601 = vpop.f32.mrf.mxu0
      %v7602 = vadd.f32 0.0, %v7601
      %v7603 = vpop.f32.mrf.mxu0
      %7604 = vmatprep.mubr.bf16.mxu0 0
      %7605 = vmatmul.mubr.bf16.gmra.mxu0 %v7500
      %v7606 = vpop.f32.mrf.mxu0
      %v7607 = vadd.f32 0.0, %v7606
      %v7608 = vpop.f32.mrf.mxu0
      %v7609 = vpop.f32.mrf.mxu0
      %v7610 = vadd.f32 0.0, %v7609
      %v7611 = vpop.f32.mrf.mxu0
      %7612 = vmatprep.mubr.bf16.mxu0 0
      %7613 = vmatmul.mubr.bf16.gmra.mxu0 %v7503
      %v7614 = vpop.f32.mrf.mxu0
      %v7615 = vadd.f32 0.0, %v7614
      %v7616 = vpop.f32.mrf.mxu0
      %v7617 = vpop.f32.mrf.mxu0
      %v7618 = vadd.f32 0.0, %v7617
      %v7619 = vpop.f32.mrf.mxu0
      %7620 = vmatprep.mubr.bf16.mxu0 0
      %7621 = vmatmul.mubr.bf16.gmra.mxu0 %v7506
      %v7622 = vpop.f32.mrf.mxu0
      %v7623 = vadd.f32 0.0, %v7622
      %v7624 = vpop.f32.mrf.mxu0
      %v7625 = vpop.f32.mrf.mxu0
      %v7626 = vadd.f32 0.0, %v7625
      %v7627 = vpop.f32.mrf.mxu0
      %7628 = vmatprep.mubr.bf16.mxu0 0
      %7629 = vmatmul.mubr.bf16.gmra.mxu0 %v7509
      %v7630 = vpop.f32.mrf.mxu0
      %v7631 = vadd.f32 0.0, %v7630
      %v7632 = vpop.f32.mrf.mxu0
      %v7633 = vpop.f32.mrf.mxu0
      %v7634 = vadd.f32 0.0, %v7633
      %v7635 = vpop.f32.mrf.mxu0
      %7636 = vmatprep.mubr.bf16.mxu0 0
      %7637 = vmatmul.mubr.bf16.gmra.mxu0 %v7512
      %v7638 = vpop.f32.mrf.mxu0
      %v7639 = vadd.f32 0.0, %v7638
      %v7640 = vpop.f32.mrf.mxu0
      %v7641 = vpop.f32.mrf.mxu0
      %v7642 = vadd.f32 0.0, %v7641
      %v7643 = vpop.f32.mrf.mxu0
      %7644 = vmatprep.mubr.bf16.mxu0 0
      %7645 = vmatmul.mubr.bf16.gmra.mxu0 %v7515
      %v7646 = vpop.f32.mrf.mxu0
      %v7647 = vadd.f32 0.0, %v7646
      %v7648 = vpop.f32.mrf.mxu0
      %v7649 = vpop.f32.mrf.mxu0
      %v7650 = vadd.f32 0.0, %v7649
      %v7651 = vpop.f32.mrf.mxu0
      %7652 = vmatprep.mubr.bf16.mxu0 0
      %7653 = vmatmul.mubr.bf16.gmra.mxu0 %v7518
      %v7654 = vpop.f32.mrf.mxu0
      %v7655 = vadd.f32 0.0, %v7654
      %v7656 = vpop.f32.mrf.mxu0
      %v7657 = vpop.f32.mrf.mxu0
      %v7658 = vadd.f32 0.0, %v7657
      %v7659 = vpop.f32.mrf.mxu0
      %7660 = vmatprep.mubr.bf16.mxu0 0
      %7661 = vmatmul.mubr.bf16.gmra.mxu0 %v7521
      %v7662 = vpop.f32.mrf.mxu0
      %v7663 = vadd.f32 0.0, %v7662
      %v7664 = vpop.f32.mrf.mxu0
      %v7665 = vpop.f32.mrf.mxu0
      %v7666 = vadd.f32 0.0, %v7665
      %v7667 = vpop.f32.mrf.mxu0
      %7668 = vmatprep.mubr.bf16.mxu0 0
      %7669 = vmatmul.mubr.bf16.gmra.mxu0 %v7524
      %v7670 = vpop.f32.mrf.mxu0
      %v7671 = vadd.f32 0.0, %v7670
      %v7672 = vpop.f32.mrf.mxu0
      %v7673 = vpop.f32.mrf.mxu0
      %v7674 = vadd.f32 0.0, %v7673
      %v7675 = vpop.f32.mrf.mxu0
      %7676 = vmatprep.mubr.bf16.mxu0 0
      %7677 = vmatmul.mubr.bf16.gmra.mxu0 %v7527
      %v7678 = vpop.f32.mrf.mxu0
      %v7679 = vadd.f32 0.0, %v7678
      %v7680 = vpop.f32.mrf.mxu0
      %v7681 = vpop.f32.mrf.mxu0
      %v7682 = vadd.f32 0.0, %v7681
      %v7683 = vpop.f32.mrf.mxu0
      %7684 = vmatprep.mubr.bf16.mxu0 0
      %7685 = vmatmul.mubr.bf16.gmra.mxu0 %v7530
      %v7686 = vpop.f32.mrf.mxu0
      %v7687 = vadd.f32 0.0, %v7686
      %v7688 = vpop.f32.mrf.mxu0
      %v7689 = vpop.f32.mrf.mxu0
      %v7690 = vadd.f32 0.0, %v7689
      %v7691 = vpop.f32.mrf.mxu0
      %7692 = vdwg.mxu0
      %v7693 = vadd.f32 %v7217, %v7567
      %v7694 = vadd.f32 %v7218, %v7570
      %v7695 = vadd.f32 %v7219, %v7575
      %v7696 = vadd.f32 %v7220, %v7578
      %v7697 = vadd.f32 %v7221, %v7583
      %v7698 = vadd.f32 %v7222, %v7586
      %v7699 = vadd.f32 %v7223, %v7591
      %v7700 = vadd.f32 %v7224, %v7594
      %v7701 = vadd.f32 %v7225, %v7599
      %v7702 = vadd.f32 %v7226, %v7602
      %v7703 = vadd.f32 %v7227, %v7607
      %v7704 = vadd.f32 %v7228, %v7610
      %v7705 = vadd.f32 %v7229, %v7615
      %v7706 = vadd.f32 %v7230, %v7618
      %v7707 = vadd.f32 %v7231, %v7623
      %v7708 = vadd.f32 %v7232, %v7626
      %v7709 = vadd.f32 %v7233, %v7631
      %v7710 = vadd.f32 %v7234, %v7634
      %v7711 = vadd.f32 %v7235, %v7639
      %v7712 = vadd.f32 %v7236, %v7642
      %v7713 = vadd.f32 %v7237, %v7647
      %v7714 = vadd.f32 %v7238, %v7650
      %v7715 = vadd.f32 %v7239, %v7655
      %v7716 = vadd.f32 %v7240, %v7658
      %v7717 = vadd.f32 %v7241, %v7663
      %v7718 = vadd.f32 %v7242, %v7666
      %v7719 = vadd.f32 %v7243, %v7671
      %v7720 = vadd.f32 %v7244, %v7674
      %v7721 = vadd.f32 %v7245, %v7679
      %v7722 = vadd.f32 %v7246, %v7682
      %v7723 = vadd.f32 %v7247, %v7687
      %v7724 = vadd.f32 %v7248, %v7690
      %v7728 = vrot.slane %v7265, 5
      %v7729 = vrot.slane %v7728, 4
      %v7730 = vrot.slane %v6098, 5
      %v7731 = vsel %vm3419, %v7729, %v7730
      %v7732 = vrot.slane %v7730, 4
      %v7733 = vrot.slane %v6099, 5
      %v7734 = vsel %vm3419, %v7732, %v7733
      %s7735 = scalar_lea.vmem %s8, 40
      %v7736 = vld [vmem:[%s7735] sm:$0xf]
      %v7737 = vld [vmem:[%s7735 + $0x4] sm:$0xf]
      %v7738 = vunpack.c.l.b16 %v7731
      %v7739 = vunpack.c.l.b16 %v7734
      %v7740 = vpack.c.b16 %v7739, %v7738
      %v7743 = vunpack.c.l.b16 %v7736
      %v7744 = vunpack.c.l.b16 %v7737
      %v7745 = vpack.c.b16 %v7744, %v7743
      %v7748 = vsel %vm1553, %v7740, 0
      %7750 = vmatprep.subr.bf16.mxu0 0
      %7751 = vmatpush1.bf16.msra.mxu0 0
      %7752 = vmatprep.subr.bf16.mxu0 0
      %7753 = vmatpush1.bf16.msra.mxu0 0
      %7754 = vmatprep.subr.bf16.mxu0 0
      %7755 = vmatpush1.bf16.msra.mxu0 0
      %7756 = vmatprep.subr.bf16.mxu0 0
      %7757 = vmatpush1.bf16.msra.mxu0 0
      %7758 = vmatprep.subr.bf16.mxu0 0
      %7759 = vmatpush1.bf16.msra.mxu0 0
      %7760 = vmatprep.subr.bf16.mxu0 0
      %7761 = vmatpush1.bf16.msra.mxu0 0
      %7762 = vmatprep.subr.bf16.mxu0 0
      %7763 = vmatpush1.bf16.msra.mxu0 0
      %7764 = vmatprep.subr.bf16.mxu0 0
      %7765 = vmatpush1.bf16.msra.mxu0 %v7745
      %7766 = vmatprep.subr.bf16.mxu0 0
      %7767 = vmatpush2.bf16.msra.mxu0 0
      %7768 = vmatprep.subr.bf16.mxu0 0
      %7769 = vmatpush2.bf16.msra.mxu0 0
      %7770 = vmatprep.subr.bf16.mxu0 0
      %7771 = vmatpush2.bf16.msra.mxu0 0
      %7772 = vmatprep.subr.bf16.mxu0 0
      %7773 = vmatpush2.bf16.msra.mxu0 0
      %7774 = vmatprep.subr.bf16.mxu0 0
      %7775 = vmatpush2.bf16.msra.mxu0 0
      %7776 = vmatprep.subr.bf16.mxu0 0
      %7777 = vmatpush2.bf16.msra.mxu0 0
      %7778 = vmatprep.subr.bf16.mxu0 0
      %7779 = vmatpush2.bf16.msra.mxu0 0
      %7780 = vmatprep.subr.bf16.mxu0 0
      %7781 = vmatpush2.bf16.msra.mxu0 0
      %7782 = vmatprep.mubr.bf16.mxu0 0
      %7783 = vmatmul.mubr.bf16.gmra.mxu0 %v7488
      %v7784 = vpop.f32.mrf.mxu0
      %v7785 = vadd.f32 0.0, %v7784
      %v7786 = vpop.f32.mrf.mxu0
      %v7787 = vpop.f32.mrf.mxu0
      %v7788 = vadd.f32 0.0, %v7787
      %v7789 = vpop.f32.mrf.mxu0
      %7790 = vmatprep.mubr.bf16.mxu0 0
      %7791 = vmatmul.mubr.bf16.gmra.mxu0 %v7491
      %v7792 = vpop.f32.mrf.mxu0
      %v7793 = vadd.f32 0.0, %v7792
      %v7794 = vpop.f32.mrf.mxu0
      %v7795 = vpop.f32.mrf.mxu0
      %v7796 = vadd.f32 0.0, %v7795
      %v7797 = vpop.f32.mrf.mxu0
      %7798 = vmatprep.mubr.bf16.mxu0 0
      %7799 = vmatmul.mubr.bf16.gmra.mxu0 %v7494
      %v7800 = vpop.f32.mrf.mxu0
      %v7801 = vadd.f32 0.0, %v7800
      %v7802 = vpop.f32.mrf.mxu0
      %v7803 = vpop.f32.mrf.mxu0
      %v7804 = vadd.f32 0.0, %v7803
      %v7805 = vpop.f32.mrf.mxu0
      %7806 = vmatprep.mubr.bf16.mxu0 0
      %7807 = vmatmul.mubr.bf16.gmra.mxu0 %v7497
      %v7808 = vpop.f32.mrf.mxu0
      %v7809 = vadd.f32 0.0, %v7808
      %v7810 = vpop.f32.mrf.mxu0
      %v7811 = vpop.f32.mrf.mxu0
      %v7812 = vadd.f32 0.0, %v7811
      %v7813 = vpop.f32.mrf.mxu0
      %7814 = vmatprep.mubr.bf16.mxu0 0
      %7815 = vmatmul.mubr.bf16.gmra.mxu0 %v7500
      %v7816 = vpop.f32.mrf.mxu0
      %v7817 = vadd.f32 0.0, %v7816
      %v7818 = vpop.f32.mrf.mxu0
      %v7819 = vpop.f32.mrf.mxu0
      %v7820 = vadd.f32 0.0, %v7819
      %v7821 = vpop.f32.mrf.mxu0
      %7822 = vmatprep.mubr.bf16.mxu0 0
      %7823 = vmatmul.mubr.bf16.gmra.mxu0 %v7503
      %v7824 = vpop.f32.mrf.mxu0
      %v7825 = vadd.f32 0.0, %v7824
      %v7826 = vpop.f32.mrf.mxu0
      %v7827 = vpop.f32.mrf.mxu0
      %v7828 = vadd.f32 0.0, %v7827
      %v7829 = vpop.f32.mrf.mxu0
      %7830 = vmatprep.mubr.bf16.mxu0 0
      %7831 = vmatmul.mubr.bf16.gmra.mxu0 %v7506
      %v7832 = vpop.f32.mrf.mxu0
      %v7833 = vadd.f32 0.0, %v7832
      %v7834 = vpop.f32.mrf.mxu0
      %v7835 = vpop.f32.mrf.mxu0
      %v7836 = vadd.f32 0.0, %v7835
      %v7837 = vpop.f32.mrf.mxu0
      %7838 = vmatprep.mubr.bf16.mxu0 0
      %7839 = vmatmul.mubr.bf16.gmra.mxu0 %v7509
      %v7840 = vpop.f32.mrf.mxu0
      %v7841 = vadd.f32 0.0, %v7840
      %v7842 = vpop.f32.mrf.mxu0
      %v7843 = vpop.f32.mrf.mxu0
      %v7844 = vadd.f32 0.0, %v7843
      %v7845 = vpop.f32.mrf.mxu0
      %7846 = vmatprep.mubr.bf16.mxu0 0
      %7847 = vmatmul.mubr.bf16.gmra.mxu0 %v7512
      %v7848 = vpop.f32.mrf.mxu0
      %v7849 = vadd.f32 0.0, %v7848
      %v7850 = vpop.f32.mrf.mxu0
      %v7851 = vpop.f32.mrf.mxu0
      %v7852 = vadd.f32 0.0, %v7851
      %v7853 = vpop.f32.mrf.mxu0
      %7854 = vmatprep.mubr.bf16.mxu0 0
      %7855 = vmatmul.mubr.bf16.gmra.mxu0 %v7515
      %v7856 = vpop.f32.mrf.mxu0
      %v7857 = vadd.f32 0.0, %v7856
      %v7858 = vpop.f32.mrf.mxu0
      %v7859 = vpop.f32.mrf.mxu0
      %v7860 = vadd.f32 0.0, %v7859
      %v7861 = vpop.f32.mrf.mxu0
      %7862 = vmatprep.mubr.bf16.mxu0 0
      %7863 = vmatmul.mubr.bf16.gmra.mxu0 %v7518
      %v7864 = vpop.f32.mrf.mxu0
      %v7865 = vadd.f32 0.0, %v7864
      %v7866 = vpop.f32.mrf.mxu0
      %v7867 = vpop.f32.mrf.mxu0
      %v7868 = vadd.f32 0.0, %v7867
      %v7869 = vpop.f32.mrf.mxu0
      %7870 = vmatprep.mubr.bf16.mxu0 0
      %7871 = vmatmul.mubr.bf16.gmra.mxu0 %v7521
      %v7872 = vpop.f32.mrf.mxu0
      %v7873 = vadd.f32 0.0, %v7872
      %v7874 = vpop.f32.mrf.mxu0
      %v7875 = vpop.f32.mrf.mxu0
      %v7876 = vadd.f32 0.0, %v7875
      %v7877 = vpop.f32.mrf.mxu0
      %7878 = vmatprep.mubr.bf16.mxu0 0
      %7879 = vmatmul.mubr.bf16.gmra.mxu0 %v7524
      %v7880 = vpop.f32.mrf.mxu0
      %v7881 = vadd.f32 0.0, %v7880
      %v7882 = vpop.f32.mrf.mxu0
      %v7883 = vpop.f32.mrf.mxu0
      %v7884 = vadd.f32 0.0, %v7883
      %v7885 = vpop.f32.mrf.mxu0
      %7886 = vmatprep.mubr.bf16.mxu0 0
      %7887 = vmatmul.mubr.bf16.gmra.mxu0 %v7527
      %v7888 = vpop.f32.mrf.mxu0
      %v7889 = vadd.f32 0.0, %v7888
      %v7890 = vpop.f32.mrf.mxu0
      %v7891 = vpop.f32.mrf.mxu0
      %v7892 = vadd.f32 0.0, %v7891
      %v7893 = vpop.f32.mrf.mxu0
      %7894 = vmatprep.mubr.bf16.mxu0 0
      %7895 = vmatmul.mubr.bf16.gmra.mxu0 %v7530
      %v7896 = vpop.f32.mrf.mxu0
      %v7897 = vadd.f32 0.0, %v7896
      %v7898 = vpop.f32.mrf.mxu0
      %v7899 = vpop.f32.mrf.mxu0
      %v7900 = vadd.f32 0.0, %v7899
      %v7901 = vpop.f32.mrf.mxu0
      %7902 = vmatprep.mubr.bf16.mxu0 0
      %7903 = vmatmul.mubr.bf16.gmra.mxu0 %v7748
      %v7904 = vpop.f32.mrf.mxu0
      %v7905 = vadd.f32 0.0, %v7904
      %v7906 = vpop.f32.mrf.mxu0
      %v7907 = vpop.f32.mrf.mxu0
      %v7908 = vadd.f32 0.0, %v7907
      %v7909 = vpop.f32.mrf.mxu0
      %7910 = vdwg.mxu0
      %v7911 = vadd.f32 %v7693, %v7785
      %v7912 = vadd.f32 %v7694, %v7788
      %v7913 = vadd.f32 %v7695, %v7793
      %v7914 = vadd.f32 %v7696, %v7796
      %v7915 = vadd.f32 %v7697, %v7801
      %v7916 = vadd.f32 %v7698, %v7804
      %v7917 = vadd.f32 %v7699, %v7809
      %v7918 = vadd.f32 %v7700, %v7812
      %v7919 = vadd.f32 %v7701, %v7817
      %v7920 = vadd.f32 %v7702, %v7820
      %v7921 = vadd.f32 %v7703, %v7825
      %v7922 = vadd.f32 %v7704, %v7828
      %v7923 = vadd.f32 %v7705, %v7833
      %v7924 = vadd.f32 %v7706, %v7836
      %v7925 = vadd.f32 %v7707, %v7841
      %v7926 = vadd.f32 %v7708, %v7844
      %v7927 = vadd.f32 %v7709, %v7849
      %v7928 = vadd.f32 %v7710, %v7852
      %v7929 = vadd.f32 %v7711, %v7857
      %v7930 = vadd.f32 %v7712, %v7860
      %v7931 = vadd.f32 %v7713, %v7865
      %v7932 = vadd.f32 %v7714, %v7868
      %v7933 = vadd.f32 %v7715, %v7873
      %v7934 = vadd.f32 %v7716, %v7876
      %v7935 = vadd.f32 %v7717, %v7881
      %v7936 = vadd.f32 %v7718, %v7884
      %v7937 = vadd.f32 %v7719, %v7889
      %v7938 = vadd.f32 %v7720, %v7892
      %v7939 = vadd.f32 %v7721, %v7897
      %v7940 = vadd.f32 %v7722, %v7900
      %v7941 = vadd.f32 %v7723, %v7905
      %v7942 = vadd.f32 %v7724, %v7908
      %v7946 = vrot.slane %v7266, 5
      %v7947 = vrot.slane %v7946, 4
      %v7948 = vrot.slane %v6101, 5
      %v7949 = vsel %vm3419, %v7947, %v7948
      %v7950 = vrot.slane %v7948, 4
      %v7951 = vrot.slane %v6102, 5
      %v7952 = vsel %vm3419, %v7950, %v7951
      %s7953 = scalar_lea.vmem %s8, 64
      %v7954 = vld [vmem:[%s7953] sm:$0xf]
      %v7955 = vld [vmem:[%s7953 + $0x4] sm:$0xf]
      %v7956 = vunpack.c.l.b16 %v7949
      %v7957 = vunpack.c.l.b16 %v7952
      %v7958 = vpack.c.b16 %v7957, %v7956
      %v7961 = vunpack.c.l.b16 %v7954
      %v7962 = vunpack.c.l.b16 %v7955
      %v7963 = vpack.c.b16 %v7962, %v7961
      %v7966 = vsel %vm1553, %v7958, 0
      %7968 = vmatprep.subr.bf16.mxu0 0
      %7969 = vmatpush1.bf16.msra.mxu0 0
      %7970 = vmatprep.subr.bf16.mxu0 0
      %7971 = vmatpush1.bf16.msra.mxu0 0
      %7972 = vmatprep.subr.bf16.mxu0 0
      %7973 = vmatpush1.bf16.msra.mxu0 0
      %7974 = vmatprep.subr.bf16.mxu0 0
      %7975 = vmatpush1.bf16.msra.mxu0 0
      %7976 = vmatprep.subr.bf16.mxu0 0
      %7977 = vmatpush1.bf16.msra.mxu0 0
      %7978 = vmatprep.subr.bf16.mxu0 0
      %7979 = vmatpush1.bf16.msra.mxu0 0
      %7980 = vmatprep.subr.bf16.mxu0 0
      %7981 = vmatpush1.bf16.msra.mxu0 0
      %7982 = vmatprep.subr.bf16.mxu0 0
      %7983 = vmatpush1.bf16.msra.mxu0 %v7963
      %7984 = vmatprep.subr.bf16.mxu0 0
      %7985 = vmatpush2.bf16.msra.mxu0 0
      %7986 = vmatprep.subr.bf16.mxu0 0
      %7987 = vmatpush2.bf16.msra.mxu0 0
      %7988 = vmatprep.subr.bf16.mxu0 0
      %7989 = vmatpush2.bf16.msra.mxu0 0
      %7990 = vmatprep.subr.bf16.mxu0 0
      %7991 = vmatpush2.bf16.msra.mxu0 0
      %7992 = vmatprep.subr.bf16.mxu0 0
      %7993 = vmatpush2.bf16.msra.mxu0 0
      %7994 = vmatprep.subr.bf16.mxu0 0
      %7995 = vmatpush2.bf16.msra.mxu0 0
      %7996 = vmatprep.subr.bf16.mxu0 0
      %7997 = vmatpush2.bf16.msra.mxu0 0
      %7998 = vmatprep.subr.bf16.mxu0 0
      %7999 = vmatpush2.bf16.msra.mxu0 0
      %8000 = vmatprep.mubr.bf16.mxu0 0
      %8001 = vmatmul.mubr.bf16.gmra.mxu0 %v7491
      %v8002 = vpop.f32.mrf.mxu0
      %v8003 = vadd.f32 0.0, %v8002
      %v8004 = vpop.f32.mrf.mxu0
      %v8005 = vpop.f32.mrf.mxu0
      %v8006 = vadd.f32 0.0, %v8005
      %v8007 = vpop.f32.mrf.mxu0
      %8008 = vmatprep.mubr.bf16.mxu0 0
      %8009 = vmatmul.mubr.bf16.gmra.mxu0 %v7494
      %v8010 = vpop.f32.mrf.mxu0
      %v8011 = vadd.f32 0.0, %v8010
      %v8012 = vpop.f32.mrf.mxu0
      %v8013 = vpop.f32.mrf.mxu0
      %v8014 = vadd.f32 0.0, %v8013
      %v8015 = vpop.f32.mrf.mxu0
      %8016 = vmatprep.mubr.bf16.mxu0 0
      %8017 = vmatmul.mubr.bf16.gmra.mxu0 %v7497
      %v8018 = vpop.f32.mrf.mxu0
      %v8019 = vadd.f32 0.0, %v8018
      %v8020 = vpop.f32.mrf.mxu0
      %v8021 = vpop.f32.mrf.mxu0
      %v8022 = vadd.f32 0.0, %v8021
      %v8023 = vpop.f32.mrf.mxu0
      %8024 = vmatprep.mubr.bf16.mxu0 0
      %8025 = vmatmul.mubr.bf16.gmra.mxu0 %v7500
      %v8026 = vpop.f32.mrf.mxu0
      %v8027 = vadd.f32 0.0, %v8026
      %v8028 = vpop.f32.mrf.mxu0
      %v8029 = vpop.f32.mrf.mxu0
      %v8030 = vadd.f32 0.0, %v8029
      %v8031 = vpop.f32.mrf.mxu0
      %8032 = vmatprep.mubr.bf16.mxu0 0
      %8033 = vmatmul.mubr.bf16.gmra.mxu0 %v7503
      %v8034 = vpop.f32.mrf.mxu0
      %v8035 = vadd.f32 0.0, %v8034
      %v8036 = vpop.f32.mrf.mxu0
      %v8037 = vpop.f32.mrf.mxu0
      %v8038 = vadd.f32 0.0, %v8037
      %v8039 = vpop.f32.mrf.mxu0
      %8040 = vmatprep.mubr.bf16.mxu0 0
      %8041 = vmatmul.mubr.bf16.gmra.mxu0 %v7506
      %v8042 = vpop.f32.mrf.mxu0
      %v8043 = vadd.f32 0.0, %v8042
      %v8044 = vpop.f32.mrf.mxu0
      %v8045 = vpop.f32.mrf.mxu0
      %v8046 = vadd.f32 0.0, %v8045
      %v8047 = vpop.f32.mrf.mxu0
      %8048 = vmatprep.mubr.bf16.mxu0 0
      %8049 = vmatmul.mubr.bf16.gmra.mxu0 %v7509
      %v8050 = vpop.f32.mrf.mxu0
      %v8051 = vadd.f32 0.0, %v8050
      %v8052 = vpop.f32.mrf.mxu0
      %v8053 = vpop.f32.mrf.mxu0
      %v8054 = vadd.f32 0.0, %v8053
      %v8055 = vpop.f32.mrf.mxu0
      %8056 = vmatprep.mubr.bf16.mxu0 0
      %8057 = vmatmul.mubr.bf16.gmra.mxu0 %v7512
      %v8058 = vpop.f32.mrf.mxu0
      %v8059 = vadd.f32 0.0, %v8058
      %v8060 = vpop.f32.mrf.mxu0
      %v8061 = vpop.f32.mrf.mxu0
      %v8062 = vadd.f32 0.0, %v8061
      %v8063 = vpop.f32.mrf.mxu0
      %8064 = vmatprep.mubr.bf16.mxu0 0
      %8065 = vmatmul.mubr.bf16.gmra.mxu0 %v7515
      %v8066 = vpop.f32.mrf.mxu0
      %v8067 = vadd.f32 0.0, %v8066
      %v8068 = vpop.f32.mrf.mxu0
      %v8069 = vpop.f32.mrf.mxu0
      %v8070 = vadd.f32 0.0, %v8069
      %v8071 = vpop.f32.mrf.mxu0
      %8072 = vmatprep.mubr.bf16.mxu0 0
      %8073 = vmatmul.mubr.bf16.gmra.mxu0 %v7518
      %v8074 = vpop.f32.mrf.mxu0
      %v8075 = vadd.f32 0.0, %v8074
      %v8076 = vpop.f32.mrf.mxu0
      %v8077 = vpop.f32.mrf.mxu0
      %v8078 = vadd.f32 0.0, %v8077
      %v8079 = vpop.f32.mrf.mxu0
      %8080 = vmatprep.mubr.bf16.mxu0 0
      %8081 = vmatmul.mubr.bf16.gmra.mxu0 %v7521
      %v8082 = vpop.f32.mrf.mxu0
      %v8083 = vadd.f32 0.0, %v8082
      %v8084 = vpop.f32.mrf.mxu0
      %v8085 = vpop.f32.mrf.mxu0
      %v8086 = vadd.f32 0.0, %v8085
      %v8087 = vpop.f32.mrf.mxu0
      %8088 = vmatprep.mubr.bf16.mxu0 0
      %8089 = vmatmul.mubr.bf16.gmra.mxu0 %v7524
      %v8090 = vpop.f32.mrf.mxu0
      %v8091 = vadd.f32 0.0, %v8090
      %v8092 = vpop.f32.mrf.mxu0
      %v8093 = vpop.f32.mrf.mxu0
      %v8094 = vadd.f32 0.0, %v8093
      %v8095 = vpop.f32.mrf.mxu0
      %8096 = vmatprep.mubr.bf16.mxu0 0
      %8097 = vmatmul.mubr.bf16.gmra.mxu0 %v7527
      %v8098 = vpop.f32.mrf.mxu0
      %v8099 = vadd.f32 0.0, %v8098
      %v8100 = vpop.f32.mrf.mxu0
      %v8101 = vpop.f32.mrf.mxu0
      %v8102 = vadd.f32 0.0, %v8101
      %v8103 = vpop.f32.mrf.mxu0
      %8104 = vmatprep.mubr.bf16.mxu0 0
      %8105 = vmatmul.mubr.bf16.gmra.mxu0 %v7530
      %v8106 = vpop.f32.mrf.mxu0
      %v8107 = vadd.f32 0.0, %v8106
      %v8108 = vpop.f32.mrf.mxu0
      %v8109 = vpop.f32.mrf.mxu0
      %v8110 = vadd.f32 0.0, %v8109
      %v8111 = vpop.f32.mrf.mxu0
      %8112 = vmatprep.mubr.bf16.mxu0 0
      %8113 = vmatmul.mubr.bf16.gmra.mxu0 %v7748
      %v8114 = vpop.f32.mrf.mxu0
      %v8115 = vadd.f32 0.0, %v8114
      %v8116 = vpop.f32.mrf.mxu0
      %v8117 = vpop.f32.mrf.mxu0
      %v8118 = vadd.f32 0.0, %v8117
      %v8119 = vpop.f32.mrf.mxu0
      %8120 = vmatprep.mubr.bf16.mxu0 0
      %8121 = vmatmul.mubr.bf16.gmra.mxu0 %v7966
      %v8122 = vpop.f32.mrf.mxu0
      %v8123 = vadd.f32 0.0, %v8122
      %v8124 = vpop.f32.mrf.mxu0
      %v8125 = vpop.f32.mrf.mxu0
      %v8126 = vadd.f32 0.0, %v8125
      %v8127 = vpop.f32.mrf.mxu0
      %8128 = vdwg.mxu0
      %v8129 = vadd.f32 %v7911, %v8003
      %v8130 = vadd.f32 %v7912, %v8006
      %v8131 = vadd.f32 %v7913, %v8011
      %v8132 = vadd.f32 %v7914, %v8014
      %v8133 = vadd.f32 %v7915, %v8019
      %v8134 = vadd.f32 %v7916, %v8022
      %v8135 = vadd.f32 %v7917, %v8027
      %v8136 = vadd.f32 %v7918, %v8030
      %v8137 = vadd.f32 %v7919, %v8035
      %v8138 = vadd.f32 %v7920, %v8038
      %v8139 = vadd.f32 %v7921, %v8043
      %v8140 = vadd.f32 %v7922, %v8046
      %v8141 = vadd.f32 %v7923, %v8051
      %v8142 = vadd.f32 %v7924, %v8054
      %v8143 = vadd.f32 %v7925, %v8059
      %v8144 = vadd.f32 %v7926, %v8062
      %v8145 = vadd.f32 %v7927, %v8067
      %v8146 = vadd.f32 %v7928, %v8070
      %v8147 = vadd.f32 %v7929, %v8075
      %v8148 = vadd.f32 %v7930, %v8078
      %v8149 = vadd.f32 %v7931, %v8083
      %v8150 = vadd.f32 %v7932, %v8086
      %v8151 = vadd.f32 %v7933, %v8091
      %v8152 = vadd.f32 %v7934, %v8094
      %v8153 = vadd.f32 %v7935, %v8099
      %v8154 = vadd.f32 %v7936, %v8102
      %v8155 = vadd.f32 %v7937, %v8107
      %v8156 = vadd.f32 %v7938, %v8110
      %v8157 = vadd.f32 %v7939, %v8115
      %v8158 = vadd.f32 %v7940, %v8118
      %v8159 = vadd.f32 %v7941, %v8123
      %v8160 = vadd.f32 %v7942, %v8126
      %8193 = vrot.lane.b32.xlu0 %v8129, 6
      %v8194 = vpop.permute.xlu0 %8193
      %8195 = vrot.lane.b32.xlu0 %v8130, 6
      %v8196 = vpop.permute.xlu0 %8195
      %8197 = vrot.lane.b32.xlu0 %v8131, 6
      %v8198 = vpop.permute.xlu0 %8197
      %8199 = vrot.lane.b32.xlu0 %v8132, 6
      %v8200 = vpop.permute.xlu0 %8199
      %8201 = vrot.lane.b32.xlu0 %v8133, 6
      %v8202 = vpop.permute.xlu0 %8201
      %8203 = vrot.lane.b32.xlu0 %v8134, 6
      %v8204 = vpop.permute.xlu0 %8203
      %8205 = vrot.lane.b32.xlu0 %v8135, 6
      %v8206 = vpop.permute.xlu0 %8205
      %8207 = vrot.lane.b32.xlu0 %v8136, 6
      %v8208 = vpop.permute.xlu0 %8207
      %8209 = vrot.lane.b32.xlu0 %v8137, 6
      %v8210 = vpop.permute.xlu0 %8209
      %8211 = vrot.lane.b32.xlu0 %v8138, 6
      %v8212 = vpop.permute.xlu0 %8211
      %8213 = vrot.lane.b32.xlu0 %v8139, 6
      %v8214 = vpop.permute.xlu0 %8213
      %8215 = vrot.lane.b32.xlu0 %v8140, 6
      %v8216 = vpop.permute.xlu0 %8215
      %8217 = vrot.lane.b32.xlu0 %v8141, 6
      %v8218 = vpop.permute.xlu0 %8217
      %8219 = vrot.lane.b32.xlu0 %v8142, 6
      %v8220 = vpop.permute.xlu0 %8219
      %8221 = vrot.lane.b32.xlu0 %v8143, 6
      %v8222 = vpop.permute.xlu0 %8221
      %8223 = vrot.lane.b32.xlu0 %v8144, 6
      %v8224 = vpop.permute.xlu0 %8223
      %8225 = vrot.lane.b32.xlu0 %v8145, 6
      %v8226 = vpop.permute.xlu0 %8225
      %8227 = vrot.lane.b32.xlu0 %v8146, 6
      %v8228 = vpop.permute.xlu0 %8227
      %8229 = vrot.lane.b32.xlu0 %v8147, 6
      %v8230 = vpop.permute.xlu0 %8229
      %8231 = vrot.lane.b32.xlu0 %v8148, 6
      %v8232 = vpop.permute.xlu0 %8231
      %8233 = vrot.lane.b32.xlu0 %v8149, 6
      %v8234 = vpop.permute.xlu0 %8233
      %8235 = vrot.lane.b32.xlu0 %v8150, 6
      %v8236 = vpop.permute.xlu0 %8235
      %8237 = vrot.lane.b32.xlu0 %v8151, 6
      %v8238 = vpop.permute.xlu0 %8237
      %8239 = vrot.lane.b32.xlu0 %v8152, 6
      %v8240 = vpop.permute.xlu0 %8239
      %8241 = vrot.lane.b32.xlu0 %v8153, 6
      %v8242 = vpop.permute.xlu0 %8241
      %8243 = vrot.lane.b32.xlu0 %v8154, 6
      %v8244 = vpop.permute.xlu0 %8243
      %8245 = vrot.lane.b32.xlu0 %v8155, 6
      %v8246 = vpop.permute.xlu0 %8245
      %8247 = vrot.lane.b32.xlu0 %v8156, 6
      %v8248 = vpop.permute.xlu0 %8247
      %8249 = vrot.lane.b32.xlu0 %v8157, 6
      %v8250 = vpop.permute.xlu0 %8249
      %8251 = vrot.lane.b32.xlu0 %v8158, 6
      %v8252 = vpop.permute.xlu0 %8251
      %8253 = vrot.lane.b32.xlu0 %v8159, 6
      %v8254 = vpop.permute.xlu0 %8253
      %8255 = vrot.lane.b32.xlu0 %v8160, 6
      %v8256 = vpop.permute.xlu0 %8255
      %vm8289 = vcmask 80944
      %8290 = vst.msk [vmem:[%s332] sm:$0xff] %vm8289, %v8194
      %8291 = vst.msk [vmem:[%s332 + $0x8] sm:$0xff] %vm8289, %v8196
      %8292 = vst.msk [vmem:[%s332 + $0x10] sm:$0xff] %vm8289, %v8198
      %8293 = vst.msk [vmem:[%s332 + $0x18] sm:$0xff] %vm8289, %v8200
      %8294 = vst.msk [vmem:[%s332 + $0x20] sm:$0xff] %vm8289, %v8202
      %8295 = vst.msk [vmem:[%s332 + $0x28] sm:$0xff] %vm8289, %v8204
      %8296 = vst.msk [vmem:[%s332 + $0x30] sm:$0xff] %vm8289, %v8206
      %8297 = vst.msk [vmem:[%s332 + $0x38] sm:$0xff] %vm8289, %v8208
      %8298 = vst.msk [vmem:[%s332 + $0x40] sm:$0xff] %vm8289, %v8210
      %8299 = vst.msk [vmem:[%s332 + $0x48] sm:$0xff] %vm8289, %v8212
      %8300 = vst.msk [vmem:[%s332 + $0x50] sm:$0xff] %vm8289, %v8214
      %8301 = vst.msk [vmem:[%s332 + $0x58] sm:$0xff] %vm8289, %v8216
      %8302 = vst.msk [vmem:[%s332 + $0x60] sm:$0xff] %vm8289, %v8218
      %8303 = vst.msk [vmem:[%s332 + $0x68] sm:$0xff] %vm8289, %v8220
      %8304 = vst.msk [vmem:[%s332 + $0x70] sm:$0xff] %vm8289, %v8222
      %8305 = vst.msk [vmem:[%s332 + $0x78] sm:$0xff] %vm8289, %v8224
      %8306 = vst.msk [vmem:[%s332 + $0x80] sm:$0xff] %vm8289, %v8226
      %8307 = vst.msk [vmem:[%s332 + $0x88] sm:$0xff] %vm8289, %v8228
      %8308 = vst.msk [vmem:[%s332 + $0x90] sm:$0xff] %vm8289, %v8230
      %8309 = vst.msk [vmem:[%s332 + $0x98] sm:$0xff] %vm8289, %v8232
      %8310 = vst.msk [vmem:[%s332 + $0xa0] sm:$0xff] %vm8289, %v8234
      %8311 = vst.msk [vmem:[%s332 + $0xa8] sm:$0xff] %vm8289, %v8236
      %8312 = vst.msk [vmem:[%s332 + $0xb0] sm:$0xff] %vm8289, %v8238
      %8313 = vst.msk [vmem:[%s332 + $0xb8] sm:$0xff] %vm8289, %v8240
      %8314 = vst.msk [vmem:[%s332 + $0xc0] sm:$0xff] %vm8289, %v8242
      %8315 = vst.msk [vmem:[%s332 + $0xc8] sm:$0xff] %vm8289, %v8244
      %8316 = vst.msk [vmem:[%s332 + $0xd0] sm:$0xff] %vm8289, %v8246
      %8317 = vst.msk [vmem:[%s332 + $0xd8] sm:$0xff] %vm8289, %v8248
      %8318 = vst.msk [vmem:[%s332 + $0xe0] sm:$0xff] %vm8289, %v8250
      %8319 = vst.msk [vmem:[%s332 + $0xe8] sm:$0xff] %vm8289, %v8252
      %8320 = vst.msk [vmem:[%s332 + $0xf0] sm:$0xff] %vm8289, %v8254
      %8321 = vst.msk [vmem:[%s332 + $0xf8] sm:$0xff] %vm8289, %v8256
      %p8322 = scmp.lt.s32.totalorder %s20, 1
      %s8323 = scalar_select %p8322, %s20, 1
      %s8324 = smul.addr %s8323, 32
      %s8325 = smul.addr %s8324, 8
      %s8326 = scalar_lea.vmem %s9, %s8325
      // Predicated region
      $region57: #{tpu_custom_call.1} parent=55 // pred_check
        %p8327 = pneg %p232
      $region58: #{tpu_custom_call.1} parent=55 // pred_check_branch
        %8329 = sbr.rel (%p8327) target = $region60
      $region59: #{tpu_custom_call.1} parent=55 // pred_region
        _
      $region60: #{tpu_custom_call.1} parent=55 // pred_fallthru
        _
    $region56: #{tpu_custom_call.1} parent=5 // pred_fallthru
      _
    %p8330 = scmp.le.s32.totalorder 2, %s15
    // Predicated region
    $region61: #{tpu_custom_call.1} parent=5 // pred_check
      %p8331 = pneg %p8330
    $region62: #{tpu_custom_call.1} parent=5 // pred_check_branch
      %8333 = sbr.rel (%p8331) target = $region64
    $region63: #{tpu_custom_call.1} parent=5 // pred_region
      %s8334 = ssub.s32 %s15, 2
      // Predicated region
      $region65: #{tpu_custom_call.1} parent=63 // pred_check
        %p8335 = pneg %p238
      $region66: #{tpu_custom_call.1} parent=63 // pred_check_branch
        %8337 = sbr.rel (%p8335) target = $region68
      $region67: #{tpu_custom_call.1} parent=63 // pred_region
        %p8338 = scmp.lt.s32.totalorder %s21, 1
        %s8339 = scalar_select %p8338, %s21, 1
        %s8340 = smul.addr %s8339, 32
        %s8341 = smul.addr %s8340, 8
        %s8342 = scalar_lea.vmem %s9, %s8341
      $region68: #{tpu_custom_call.1} parent=63 // pred_fallthru
        _
    $region64: #{tpu_custom_call.1} parent=5 // pred_fallthru
      _
  $region6: #{tpu_custom_call.1} parent=0 // loop_footer
    %s19 = sadd.s32 1, %s15
  $region7: #{tpu_custom_call.1} parent=0 // loop_footer_branch
    %14 = sbr.rel target = $region3
  $region8: #{tpu_custom_call.1} parent=0 // loop_exit
    _

</llo_original>
